<compile_context>
chip_gen: v5e
topology: v5e:2x2
jax: 0.10.0
libtpu: 0.0.40
codegen_flags: <defaults>
</compile_context>

<pallas_src>
from functools import partial

import jax
import jax.numpy as jnp
from jax.experimental import pallas as pl
from jax.experimental.pallas import tpu as pltpu

LEAKY_ALPHA = 0.1
BN_EPS = 1e-5


# ------------------------------- parameters --------------------------------

def make_params(key, Cin, Cout, Nh, V, eta, num_scale):
    """Deterministic synthetic parameters matching the module's shapes."""
    Cs = Cout // num_scale
    ks = jax.random.split(key, 12)

    def w(k, shape, fan):
        return jax.random.normal(k, shape, jnp.float32) * (2.0 / fan) ** 0.5

    p = {}
    # adjacency stack A (Nh, V, V), row-normalized random (deterministic)
    A = jax.random.uniform(ks[0], (Nh, V, V), jnp.float32)
    p["A"] = A / jnp.sum(A, axis=-1, keepdims=True)

    # ST_GC: Conv2d(Cin, Cout*Nh, 1);  residual1: Conv2d(Cin, Cout, 1)
    p["gcn_w"] = w(ks[1], (Cout * Nh, Cin), Cin)
    p["res1_w"] = w(ks[2], (Cout, Cin), Cin)

    # 4 PointWiseTCN heads: Conv2d(Cout, Cs, 1)
    for i in range(num_scale):
        p[f"pw_w{i}"] = w(ks[3 + i], (Cs, Cout), Cout)

    # Two DeTGC heads (kernel_size=5, dilation 1 and 2): tr (eta,), Conv3d(eta,1,1)
    for i, dil in enumerate((1, 2)):
        ref = (5 + (5 - 1) * (dil - 1) - 1) // 2
        tr = jnp.linspace(-float(ref), float(ref), eta)
        # small deterministic perturbation so the floor/ceil + alpha-blend
        # temporal interpolation path is actually exercised
        tr = tr + 0.3 * jax.random.uniform(ks[7 + i], (eta,), jnp.float32, -1.0, 1.0)
        p[f"tr{i}"] = tr.astype(jnp.float32)
        p[f"c3_w{i}"] = w(ks[9 + i], (Cs, Cs, eta), Cs * eta)   # (out, in, eta)
    return p


# -------------------- one-time constant preparation ------------------------
# Hoisted out of the jitted forward: runs once eagerly; results are passed in.

def prepare_constants(p, *, N, T, V, Cin, Cout, Nh, num_scale):
    f32 = jnp.float32
    Cs = Cout // num_scale
    CT = Cs * T
    NVp = 128                      # lane width (lane-dense)
    Vp = NVp // N                  # joints padded 25 -> 64
    assert Vp >= V

    eyeN = jnp.eye(N, dtype=f32)
    eyeT = jnp.eye(T, dtype=f32)

    # spatial aggregation as a lane-axis right-multiply: I_N (x) A_h^T, V padded
    a_pad = jnp.zeros((Nh, Vp, Vp), f32).at[:, :V, :V].set(
        jnp.transpose(p["A"], (0, 2, 1)))                          # [h,u,v]=A[h,v,u]
    a_lane = jnp.einsum("ab,huv->haubv", eyeN, a_pad).reshape(Nh, NVp, NVp)

    # 1x1 convs with I_T folded in so they act directly on rows=(channel, t)
    gcn_w3 = p["gcn_w"].reshape(Nh, Cout, Cin)                     # [h, co, ci]
    wg = jnp.einsum("hoc,ts->hotcs", gcn_w3, eyeT).reshape(Nh, Cout * T, Cin * T)
    wr = jnp.einsum("oc,ts->otcs", p["res1_w"], eyeT).reshape(Cout * T, Cin * T)
    w_pw = jnp.concatenate([p[f"pw_w{i}"] for i in range(num_scale)], axis=0)
    wpw = jnp.einsum("kc,ts->ktcs", w_pw, eyeT).reshape(Cout * T, Cout * T)

    # DeTGC: fold the temporal-interp matrix G and the Conv3d(eta,1,1) weight
    # into one (Cs*T, Cs*T) operator per branch; block-diag the two branches.
    def detgc_operator(tr, w3):
        t0 = jnp.arange(T, dtype=f32)
        t = jnp.clip(t0[None, :] + tr[:, None], 0.0, T - 1.0)      # (eta, T)
        tdn = jnp.clip(jnp.floor(t), 0, T - 1).astype(jnp.int32)
        tup = jnp.clip(jnp.ceil(t), 0, T - 1).astype(jnp.int32)
        alpha = jnp.clip(tup.astype(f32) - t, 0.0, 1.0)            # = tup - t (as in module)
        G = (jax.nn.one_hot(tdn, T, dtype=f32) * (1.0 - alpha)[..., None]
             + jax.nn.one_hot(tup, T, dtype=f32) * alpha[..., None])   # (e, to, ti)
        K = jnp.einsum("oce,eut->ouct", w3, G)                          # (o, to, c, ti)
        return K.reshape(Cs * T, Cs * T)

    k_op = jnp.zeros((2 * CT, 2 * CT), f32)
    k_op = k_op.at[:CT, :CT].set(detgc_operator(p["tr0"], p["c3_w0"]))
    k_op = k_op.at[CT:, CT:].set(detgc_operator(p["tr1"], p["c3_w1"]))

    # grouped-BatchNorm reduction matrices (one channel = T consecutive rows);
    # smaller BNs (8 / 4 channels) slice the top-left corner of these.
    grp = jnp.arange(Cout * T) // T
    s16 = (grp[None, :] == jnp.arange(Cout)[:, None]).astype(f32)   # (16, 256)
    s16t = s16.T                                                     # (256, 16)

    # lane validity mask (real joints only)
    lm = ((jnp.arange(NVp) % Vp) < V).astype(f32).reshape(1, NVp)

    # MaxPool2d((3,1), stride 1, pad (1,0)) over t as two row-shift matmuls
    # (within-channel only) plus a -inf bias at the temporal boundaries.
    t_idx = jnp.arange(CT) % T
    c_idx = jnp.arange(CT) // T
    same_c = c_idx[:, None] == c_idx[None, :]
    p_up = (same_c & (t_idx[None, :] == t_idx[:, None] - 1)).astype(f32)  # (CT, CT)
    p_dn = (same_c & (t_idx[None, :] == t_idx[:, None] + 1)).astype(f32)
    b_up = jnp.where(t_idx >= 1, 0.0, -1e30).astype(f32).reshape(CT, 1)
    b_dn = jnp.where(t_idx <= T - 2, 0.0, -1e30).astype(f32).reshape(CT, 1)

    return dict(a_lane=a_lane, wg=wg, wr=wr, wpw=wpw, k_op=k_op,
                s=s16, st=s16t, lm=lm,
                p_up=p_up, p_dn=p_dn, b_up=b_up, b_dn=b_dn)


# -------------------------------- forward ----------------------------------

def make_forward(*, N, Cin, T, V, Cout, Nh, num_scale):
    Cs = Cout // num_scale
    CT = Cs * T
    NVp = 128
    Vp = NVp // N
    count = float(N * T * V)       # real elements per channel for BN stats
    f32 = jnp.float32

    def fused_kernel(x_ref, a_ref, wg_ref, wr_ref, wpw_ref, k_ref,
                     s_ref, st_ref, lm_ref, pu_ref, pd_ref, bu_ref, bd_ref,
                     o_ref):
        lm = lm_ref[...]                                   # (1, 128)
        inv_cnt = 1.0 / count

        def bn(z, g):
            """Training-mode BatchNorm per channel; rows are (channel, t) in
            groups of T, lanes are (n, v) masked by lm."""
            S = s_ref[0:g, 0:g * T]                        # (g, g*T)
            St = st_ref[0:g * T, 0:g]                      # (g*T, g)
            rs = jnp.dot(S, z * lm, preferred_element_type=f32)
            mean = jnp.sum(jnp.dot(St, rs, preferred_element_type=f32),
                           axis=1, keepdims=True) * inv_cnt
            d = (z - mean) * lm
            rs2 = jnp.dot(S, d * d, preferred_element_type=f32)
            var = jnp.sum(jnp.dot(St, rs2, preferred_element_type=f32),
                          axis=1, keepdims=True) * inv_cnt
            return d * jax.lax.rsqrt(var + BN_EPS)

        def leaky(z):
            return jnp.where(z >= 0, z, LEAKY_ALPHA * z)

        def leaky2(z):   # final leaky(x + x): residual2 is None
            return jnp.where(z >= 0, 2.0 * z, 2.0 * LEAKY_ALPHA * z)

        x_l = x_ref[...]                                   # (Cin*T, 128)

        # ---- ST_GC: aggregate joints (lane right-mult by I_N (x) A_h^T),
        #      then the 1x1 conv (with I_T folded), accumulated per head ----
        gcn = jnp.dot(wg_ref[0],
                      jnp.dot(x_l, a_ref[0], preferred_element_type=f32),
                      preferred_element_type=f32)          # (Cout*T, 128)
        for h in range(1, Nh):
            gcn = gcn + jnp.dot(
                wg_ref[h],
                jnp.dot(x_l, a_ref[h], preferred_element_type=f32),
                preferred_element_type=f32)
        gcn = bn(gcn, Cout)                                # BN immediately (vreg hygiene)
        res = bn(jnp.dot(wr_ref[...], x_l, preferred_element_type=f32), Cout)
        y = leaky(gcn + res)                               # (Cout*T, 128)

        # ---- 4 PointWiseTCN heads in one matmul + per-channel BN ----------
        pw = bn(jnp.dot(wpw_ref[...], y, preferred_element_type=f32), Cout)

        # branch 4 (conv1x1 = PointWiseTCN only, no intermediate LeakyReLU):
        # write first so pw's live range ends as early as possible.
        o_ref[3 * CT:, :] = leaky2(pw[3 * CT:, :])

        # the other three branches get a LeakyReLU after their PointWiseTCN
        z12 = leaky(pw[0:2 * CT, :])                       # DeTGC inputs (128, 128)
        z3 = leaky(pw[2 * CT:3 * CT, :])                   # maxpool input (64, 128)

        # branch 3: MaxPool(3x1) over t via row-shift matmuls + boundary bias,
        # then BatchNorm2d(Cs) and the final leaky(x + x)
        za = jnp.dot(pu_ref[...], z3, preferred_element_type=f32) + bu_ref[...]
        zb = jnp.dot(pd_ref[...], z3, preferred_element_type=f32) + bd_ref[...]
        mp = jnp.maximum(z3, jnp.maximum(za, zb))
        o_ref[2 * CT:3 * CT, :] = leaky2(bn(mp, Cs))

        # branches 1 & 2: both DeTGCs as ONE block-diagonal (128,128) operator
        # (temporal interp folded into the Conv3d weight) + BatchNorm3d + final
        zi = jnp.dot(k_ref[...], z12, preferred_element_type=f32)   # (128, 128)
        o_ref[0:2 * CT, :] = leaky2(bn(zi, 2 * Cs))

    def _spec(shape):
        nd = len(shape)
        return pl.BlockSpec(shape, lambda i, _nd=nd: (0,) * _nd)

    def forward(x, consts):
        # input relayout (only XLA op before the kernel):
        # (N, Cin, T, V) -> rows=(ci, t), lanes=(n, v) with V zero-padded to Vp
        x_l = jnp.zeros((Cin, T, N, Vp), f32).at[..., :V].set(
            jnp.transpose(x, (1, 2, 0, 3))).reshape(Cin * T, NVp)

        args = (x_l, consts["a_lane"], consts["wg"], consts["wr"], consts["wpw"],
                consts["k_op"], consts["s"], consts["st"], consts["lm"],
                consts["p_up"], consts["p_dn"], consts["b_up"], consts["b_dn"])

        out = pl.pallas_call(
            fused_kernel,
            grid=(1,),
            in_specs=[_spec(a.shape) for a in args],
            out_specs=_spec((Cout * T, NVp)),
            out_shape=jax.ShapeDtypeStruct((Cout * T, NVp), f32),
            compiler_params=pltpu.CompilerParams(
                dimension_semantics=("arbitrary",)),
        )(*args)

        # single output relayout: (Cout*T, N*Vp) -> (N, Cout, T, V)
        out = out.reshape(Cout, T, N, Vp)[..., :V]
        return jnp.transpose(out, (2, 0, 1, 3))

    return forward


# ----------------------------------- main -----------------------------------

if __name__ == "__main__":
    N, Cin, T, V = 2, 3, 16, 25
    Cout, Nh, eta, num_scale = 16, 3, 3, 4

    key = jax.random.PRNGKey(0)
    kx, kp = jax.random.split(key)
    x = jax.random.normal(kx, (N, Cin, T, V), jnp.float32)
    params = make_params(kp, Cin, Cout, Nh, V, eta, num_scale)

    # one-time constant prep, hoisted out of the jitted forward path
    consts = prepare_constants(params, N=N, T=T, V=V, Cin=Cin, Cout=Cout,
                               Nh=Nh, num_scale=num_scale)

    fwd = jax.jit(make_forward(N=N, Cin=Cin, T=T, V=V, Cout=Cout, Nh=Nh,
                               num_scale=num_scale))
    y = fwd(x, consts)
    y = jax.block_until_ready(y)

    assert y.shape == (N, Cout, T, V), y.shape
    assert bool(jnp.all(jnp.isfinite(y)))
    print("KERNEL_OK")
</pallas_src>

<mosaic_0001>
module attributes {stable_mosaic.version = 11 : i64} {
  func.func @fused_kernel(%arg0: i32, %arg1: memref<48x128xf32, #tpu.memory_space<vmem>>, %arg2: memref<3x128x128xf32, #tpu.memory_space<vmem>>, %arg3: memref<3x256x48xf32, #tpu.memory_space<vmem>>, %arg4: memref<256x48xf32, #tpu.memory_space<vmem>>, %arg5: memref<256x256xf32, #tpu.memory_space<vmem>>, %arg6: memref<128x128xf32, #tpu.memory_space<vmem>>, %arg7: memref<16x256xf32, #tpu.memory_space<vmem>>, %arg8: memref<256x16xf32, #tpu.memory_space<vmem>>, %arg9: memref<1x128xf32, #tpu.memory_space<vmem>>, %arg10: memref<64x64xf32, #tpu.memory_space<vmem>>, %arg11: memref<64x64xf32, #tpu.memory_space<vmem>>, %arg12: memref<64x1xf32, #tpu.memory_space<vmem>>, %arg13: memref<64x1xf32, #tpu.memory_space<vmem>>, %arg14: memref<256x128xf32, #tpu.memory_space<vmem>>) attributes {dimension_semantics = [#tpu.dimension_semantics<arbitrary>], iteration_bounds = array<i64: 1>, scalar_prefetch = 0 : i64, scratch_operands = 0 : i64, tpu.core_type = #tpu.core_type<tc>, window_params = [{pipeline_mode = #tpu.pipeline_mode<synchronous>, transform_indices = @transform_0, window_bounds = array<i64: 48, 128>}, {pipeline_mode = #tpu.pipeline_mode<synchronous>, transform_indices = @transform_1, window_bounds = array<i64: 3, 128, 128>}, {pipeline_mode = #tpu.pipeline_mode<synchronous>, transform_indices = @transform_2, window_bounds = array<i64: 3, 256, 48>}, {pipeline_mode = #tpu.pipeline_mode<synchronous>, transform_indices = @transform_3, window_bounds = array<i64: 256, 48>}, {pipeline_mode = #tpu.pipeline_mode<synchronous>, transform_indices = @transform_4, window_bounds = array<i64: 256, 256>}, {pipeline_mode = #tpu.pipeline_mode<synchronous>, transform_indices = @transform_5, window_bounds = array<i64: 128, 128>}, {pipeline_mode = #tpu.pipeline_mode<synchronous>, transform_indices = @transform_6, window_bounds = array<i64: 16, 256>}, {pipeline_mode = #tpu.pipeline_mode<synchronous>, transform_indices = @transform_7, window_bounds = array<i64: 256, 16>}, {pipeline_mode = #tpu.pipeline_mode<synchronous>, transform_indices = @transform_8, window_bounds = array<i64: 1, 128>}, {pipeline_mode = #tpu.pipeline_mode<synchronous>, transform_indices = @transform_9, window_bounds = array<i64: 64, 64>}, {pipeline_mode = #tpu.pipeline_mode<synchronous>, transform_indices = @transform_10, window_bounds = array<i64: 64, 64>}, {pipeline_mode = #tpu.pipeline_mode<synchronous>, transform_indices = @transform_11, window_bounds = array<i64: 64, 1>}, {pipeline_mode = #tpu.pipeline_mode<synchronous>, transform_indices = @transform_12, window_bounds = array<i64: 64, 1>}, {pipeline_mode = #tpu.pipeline_mode<synchronous>, transform_indices = @transform_13, window_bounds = array<i64: 256, 128>}]} {
    %c0 = arith.constant 0 : index
    %c0_0 = arith.constant 0 : index
    %0 = vector.load %arg9[%c0, %c0_0] : memref<1x128xf32, #tpu.memory_space<vmem>>, vector<1x128xf32>
    %c0_1 = arith.constant 0 : index
    %c0_2 = arith.constant 0 : index
    %1 = vector.load %arg1[%c0_1, %c0_2] : memref<48x128xf32, #tpu.memory_space<vmem>>, vector<48x128xf32>
    %c0_3 = arith.constant 0 : index
    %c0_4 = arith.constant 0 : index
    %c0_5 = arith.constant 0 : index
    %2 = vector.load %arg3[%c0_3, %c0_4, %c0_5] : memref<3x256x48xf32, #tpu.memory_space<vmem>>, vector<1x256x48xf32>
    %3 = vector.shape_cast %2 : vector<1x256x48xf32> to vector<256x48xf32>
    %c0_6 = arith.constant 0 : index
    %c0_7 = arith.constant 0 : index
    %c0_8 = arith.constant 0 : index
    %4 = vector.load %arg2[%c0_6, %c0_7, %c0_8] : memref<3x128x128xf32, #tpu.memory_space<vmem>>, vector<1x128x128xf32>
    %5 = vector.shape_cast %4 : vector<1x128x128xf32> to vector<128x128xf32>
    %cst = arith.constant dense<0.000000e+00> : vector<48x128xf32>
    %6 = tpu.matmul %1, %5, %cst {dimension_numbers = #tpu.dot_dimension_numbers<[1], [0], [0], [1], [0, 0, 1, 1], [], []>} : vector<48x128xf32>, vector<128x128xf32>, vector<48x128xf32> -> vector<48x128xf32>
    %cst_9 = arith.constant dense<0.000000e+00> : vector<256x128xf32>
    %7 = tpu.matmul %3, %6, %cst_9 {dimension_numbers = #tpu.dot_dimension_numbers<[1], [0], [0], [1], [0, 0, 1, 1], [], []>} : vector<256x48xf32>, vector<48x128xf32>, vector<256x128xf32> -> vector<256x128xf32>
    %c1 = arith.constant 1 : index
    %c0_10 = arith.constant 0 : index
    %c0_11 = arith.constant 0 : index
    %8 = vector.load %arg3[%c1, %c0_10, %c0_11] : memref<3x256x48xf32, #tpu.memory_space<vmem>>, vector<1x256x48xf32>
    %9 = vector.shape_cast %8 : vector<1x256x48xf32> to vector<256x48xf32>
    %c1_12 = arith.constant 1 : index
    %c0_13 = arith.constant 0 : index
    %c0_14 = arith.constant 0 : index
    %10 = vector.load %arg2[%c1_12, %c0_13, %c0_14] : memref<3x128x128xf32, #tpu.memory_space<vmem>>, vector<1x128x128xf32>
    %11 = vector.shape_cast %10 : vector<1x128x128xf32> to vector<128x128xf32>
    %cst_15 = arith.constant dense<0.000000e+00> : vector<48x128xf32>
    %12 = tpu.matmul %1, %11, %cst_15 {dimension_numbers = #tpu.dot_dimension_numbers<[1], [0], [0], [1], [0, 0, 1, 1], [], []>} : vector<48x128xf32>, vector<128x128xf32>, vector<48x128xf32> -> vector<48x128xf32>
    %cst_16 = arith.constant dense<0.000000e+00> : vector<256x128xf32>
    %13 = tpu.matmul %9, %12, %cst_16 {dimension_numbers = #tpu.dot_dimension_numbers<[1], [0], [0], [1], [0, 0, 1, 1], [], []>} : vector<256x48xf32>, vector<48x128xf32>, vector<256x128xf32> -> vector<256x128xf32>
    %14 = arith.addf %7, %13 : vector<256x128xf32>
    %c2 = arith.constant 2 : index
    %c0_17 = arith.constant 0 : index
    %c0_18 = arith.constant 0 : index
    %15 = vector.load %arg3[%c2, %c0_17, %c0_18] : memref<3x256x48xf32, #tpu.memory_space<vmem>>, vector<1x256x48xf32>
    %16 = vector.shape_cast %15 : vector<1x256x48xf32> to vector<256x48xf32>
    %c2_19 = arith.constant 2 : index
    %c0_20 = arith.constant 0 : index
    %c0_21 = arith.constant 0 : index
    %17 = vector.load %arg2[%c2_19, %c0_20, %c0_21] : memref<3x128x128xf32, #tpu.memory_space<vmem>>, vector<1x128x128xf32>
    %18 = vector.shape_cast %17 : vector<1x128x128xf32> to vector<128x128xf32>
    %cst_22 = arith.constant dense<0.000000e+00> : vector<48x128xf32>
    %19 = tpu.matmul %1, %18, %cst_22 {dimension_numbers = #tpu.dot_dimension_numbers<[1], [0], [0], [1], [0, 0, 1, 1], [], []>} : vector<48x128xf32>, vector<128x128xf32>, vector<48x128xf32> -> vector<48x128xf32>
    %cst_23 = arith.constant dense<0.000000e+00> : vector<256x128xf32>
    %20 = tpu.matmul %16, %19, %cst_23 {dimension_numbers = #tpu.dot_dimension_numbers<[1], [0], [0], [1], [0, 0, 1, 1], [], []>} : vector<256x48xf32>, vector<48x128xf32>, vector<256x128xf32> -> vector<256x128xf32>
    %21 = arith.addf %14, %20 : vector<256x128xf32>
    %c0_24 = arith.constant 0 : index
    %c0_25 = arith.constant 0 : index
    %22 = vector.load %arg7[%c0_24, %c0_25] : memref<16x256xf32, #tpu.memory_space<vmem>>, vector<16x256xf32>
    %c0_26 = arith.constant 0 : index
    %c0_27 = arith.constant 0 : index
    %23 = vector.load %arg8[%c0_26, %c0_27] : memref<256x16xf32, #tpu.memory_space<vmem>>, vector<256x16xf32>
    %24 = vector.broadcast %0 : vector<1x128xf32> to vector<256x128xf32>
    %25 = arith.mulf %21, %24 : vector<256x128xf32>
    %cst_28 = arith.constant dense<0.000000e+00> : vector<16x128xf32>
    %26 = tpu.matmul %22, %25, %cst_28 {dimension_numbers = #tpu.dot_dimension_numbers<[1], [0], [0], [1], [0, 0, 1, 1], [], []>} : vector<16x256xf32>, vector<256x128xf32>, vector<16x128xf32> -> vector<16x128xf32>
    %cst_29 = arith.constant dense<0.000000e+00> : vector<256x128xf32>
    %27 = tpu.matmul %23, %26, %cst_29 {dimension_numbers = #tpu.dot_dimension_numbers<[1], [0], [0], [1], [0, 0, 1, 1], [], []>} : vector<256x16xf32>, vector<16x128xf32>, vector<256x128xf32> -> vector<256x128xf32>
    %cst_30 = arith.constant dense<0.000000e+00> : vector<256xf32>
    %28 = vector.multi_reduction <add>, %27, %cst_30 [1] : vector<256x128xf32> to vector<256xf32>
    %29 = vector.shape_cast %28 : vector<256xf32> to vector<256x1xf32>
    %cst_31 = arith.constant 1.250000e-03 : f32
    %30 = vector.broadcast %cst_31 : f32 to vector<256x1xf32>
    %31 = arith.mulf %29, %30 : vector<256x1xf32>
    %32 = vector.broadcast %31 : vector<256x1xf32> to vector<256x128xf32>
    %33 = arith.subf %21, %32 : vector<256x128xf32>
    %34 = vector.broadcast %0 : vector<1x128xf32> to vector<256x128xf32>
    %35 = arith.mulf %33, %34 : vector<256x128xf32>
    %36 = arith.mulf %35, %35 : vector<256x128xf32>
    %cst_32 = arith.constant dense<0.000000e+00> : vector<16x128xf32>
    %37 = tpu.matmul %22, %36, %cst_32 {dimension_numbers = #tpu.dot_dimension_numbers<[1], [0], [0], [1], [0, 0, 1, 1], [], []>} : vector<16x256xf32>, vector<256x128xf32>, vector<16x128xf32> -> vector<16x128xf32>
    %cst_33 = arith.constant dense<0.000000e+00> : vector<256x128xf32>
    %38 = tpu.matmul %23, %37, %cst_33 {dimension_numbers = #tpu.dot_dimension_numbers<[1], [0], [0], [1], [0, 0, 1, 1], [], []>} : vector<256x16xf32>, vector<16x128xf32>, vector<256x128xf32> -> vector<256x128xf32>
    %cst_34 = arith.constant dense<0.000000e+00> : vector<256xf32>
    %39 = vector.multi_reduction <add>, %38, %cst_34 [1] : vector<256x128xf32> to vector<256xf32>
    %40 = vector.shape_cast %39 : vector<256xf32> to vector<256x1xf32>
    %cst_35 = arith.constant 1.250000e-03 : f32
    %41 = vector.broadcast %cst_35 : f32 to vector<256x1xf32>
    %42 = arith.mulf %40, %41 : vector<256x1xf32>
    %cst_36 = arith.constant 9.99999974E-6 : f32
    %43 = vector.broadcast %cst_36 : f32 to vector<256x1xf32>
    %44 = arith.addf %42, %43 : vector<256x1xf32>
    %45 = math.rsqrt %44 : vector<256x1xf32>
    %46 = vector.broadcast %45 : vector<256x1xf32> to vector<256x128xf32>
    %47 = arith.mulf %35, %46 : vector<256x128xf32>
    %c0_37 = arith.constant 0 : index
    %c0_38 = arith.constant 0 : index
    %48 = vector.load %arg4[%c0_37, %c0_38] : memref<256x48xf32, #tpu.memory_space<vmem>>, vector<256x48xf32>
    %cst_39 = arith.constant dense<0.000000e+00> : vector<256x128xf32>
    %49 = tpu.matmul %48, %1, %cst_39 {dimension_numbers = #tpu.dot_dimension_numbers<[1], [0], [0], [1], [0, 0, 1, 1], [], []>} : vector<256x48xf32>, vector<48x128xf32>, vector<256x128xf32> -> vector<256x128xf32>
    %c0_40 = arith.constant 0 : index
    %c0_41 = arith.constant 0 : index
    %50 = vector.load %arg7[%c0_40, %c0_41] : memref<16x256xf32, #tpu.memory_space<vmem>>, vector<16x256xf32>
    %c0_42 = arith.constant 0 : index
    %c0_43 = arith.constant 0 : index
    %51 = vector.load %arg8[%c0_42, %c0_43] : memref<256x16xf32, #tpu.memory_space<vmem>>, vector<256x16xf32>
    %52 = vector.broadcast %0 : vector<1x128xf32> to vector<256x128xf32>
    %53 = arith.mulf %49, %52 : vector<256x128xf32>
    %cst_44 = arith.constant dense<0.000000e+00> : vector<16x128xf32>
    %54 = tpu.matmul %50, %53, %cst_44 {dimension_numbers = #tpu.dot_dimension_numbers<[1], [0], [0], [1], [0, 0, 1, 1], [], []>} : vector<16x256xf32>, vector<256x128xf32>, vector<16x128xf32> -> vector<16x128xf32>
    %cst_45 = arith.constant dense<0.000000e+00> : vector<256x128xf32>
    %55 = tpu.matmul %51, %54, %cst_45 {dimension_numbers = #tpu.dot_dimension_numbers<[1], [0], [0], [1], [0, 0, 1, 1], [], []>} : vector<256x16xf32>, vector<16x128xf32>, vector<256x128xf32> -> vector<256x128xf32>
    %cst_46 = arith.constant dense<0.000000e+00> : vector<256xf32>
    %56 = vector.multi_reduction <add>, %55, %cst_46 [1] : vector<256x128xf32> to vector<256xf32>
    %57 = vector.shape_cast %56 : vector<256xf32> to vector<256x1xf32>
    %cst_47 = arith.constant 1.250000e-03 : f32
    %58 = vector.broadcast %cst_47 : f32 to vector<256x1xf32>
    %59 = arith.mulf %57, %58 : vector<256x1xf32>
    %60 = vector.broadcast %59 : vector<256x1xf32> to vector<256x128xf32>
    %61 = arith.subf %49, %60 : vector<256x128xf32>
    %62 = vector.broadcast %0 : vector<1x128xf32> to vector<256x128xf32>
    %63 = arith.mulf %61, %62 : vector<256x128xf32>
    %64 = arith.mulf %63, %63 : vector<256x128xf32>
    %cst_48 = arith.constant dense<0.000000e+00> : vector<16x128xf32>
    %65 = tpu.matmul %50, %64, %cst_48 {dimension_numbers = #tpu.dot_dimension_numbers<[1], [0], [0], [1], [0, 0, 1, 1], [], []>} : vector<16x256xf32>, vector<256x128xf32>, vector<16x128xf32> -> vector<16x128xf32>
    %cst_49 = arith.constant dense<0.000000e+00> : vector<256x128xf32>
    %66 = tpu.matmul %51, %65, %cst_49 {dimension_numbers = #tpu.dot_dimension_numbers<[1], [0], [0], [1], [0, 0, 1, 1], [], []>} : vector<256x16xf32>, vector<16x128xf32>, vector<256x128xf32> -> vector<256x128xf32>
    %cst_50 = arith.constant dense<0.000000e+00> : vector<256xf32>
    %67 = vector.multi_reduction <add>, %66, %cst_50 [1] : vector<256x128xf32> to vector<256xf32>
    %68 = vector.shape_cast %67 : vector<256xf32> to vector<256x1xf32>
    %cst_51 = arith.constant 1.250000e-03 : f32
    %69 = vector.broadcast %cst_51 : f32 to vector<256x1xf32>
    %70 = arith.mulf %68, %69 : vector<256x1xf32>
    %cst_52 = arith.constant 9.99999974E-6 : f32
    %71 = vector.broadcast %cst_52 : f32 to vector<256x1xf32>
    %72 = arith.addf %70, %71 : vector<256x1xf32>
    %73 = math.rsqrt %72 : vector<256x1xf32>
    %74 = vector.broadcast %73 : vector<256x1xf32> to vector<256x128xf32>
    %75 = arith.mulf %63, %74 : vector<256x128xf32>
    %76 = arith.addf %47, %75 : vector<256x128xf32>
    %cst_53 = arith.constant 0.000000e+00 : f32
    %77 = vector.broadcast %cst_53 : f32 to vector<256x128xf32>
    %78 = arith.cmpf oge, %76, %77 : vector<256x128xf32>
    %cst_54 = arith.constant 1.000000e-01 : f32
    %79 = vector.broadcast %cst_54 : f32 to vector<256x128xf32>
    %80 = arith.mulf %79, %76 : vector<256x128xf32>
    %81 = arith.select %78, %76, %80 : vector<256x128xi1>, vector<256x128xf32>
    %c0_55 = arith.constant 0 : index
    %c0_56 = arith.constant 0 : index
    %82 = vector.load %arg5[%c0_55, %c0_56] : memref<256x256xf32, #tpu.memory_space<vmem>>, vector<256x256xf32>
    %cst_57 = arith.constant dense<0.000000e+00> : vector<256x128xf32>
    %83 = tpu.matmul %82, %81, %cst_57 {dimension_numbers = #tpu.dot_dimension_numbers<[1], [0], [0], [1], [0, 0, 1, 1], [], []>} : vector<256x256xf32>, vector<256x128xf32>, vector<256x128xf32> -> vector<256x128xf32>
    %c0_58 = arith.constant 0 : index
    %c0_59 = arith.constant 0 : index
    %84 = vector.load %arg7[%c0_58, %c0_59] : memref<16x256xf32, #tpu.memory_space<vmem>>, vector<16x256xf32>
    %c0_60 = arith.constant 0 : index
    %c0_61 = arith.constant 0 : index
    %85 = vector.load %arg8[%c0_60, %c0_61] : memref<256x16xf32, #tpu.memory_space<vmem>>, vector<256x16xf32>
    %86 = vector.broadcast %0 : vector<1x128xf32> to vector<256x128xf32>
    %87 = arith.mulf %83, %86 : vector<256x128xf32>
    %cst_62 = arith.constant dense<0.000000e+00> : vector<16x128xf32>
    %88 = tpu.matmul %84, %87, %cst_62 {dimension_numbers = #tpu.dot_dimension_numbers<[1], [0], [0], [1], [0, 0, 1, 1], [], []>} : vector<16x256xf32>, vector<256x128xf32>, vector<16x128xf32> -> vector<16x128xf32>
    %cst_63 = arith.constant dense<0.000000e+00> : vector<256x128xf32>
    %89 = tpu.matmul %85, %88, %cst_63 {dimension_numbers = #tpu.dot_dimension_numbers<[1], [0], [0], [1], [0, 0, 1, 1], [], []>} : vector<256x16xf32>, vector<16x128xf32>, vector<256x128xf32> -> vector<256x128xf32>
    %cst_64 = arith.constant dense<0.000000e+00> : vector<256xf32>
    %90 = vector.multi_reduction <add>, %89, %cst_64 [1] : vector<256x128xf32> to vector<256xf32>
    %91 = vector.shape_cast %90 : vector<256xf32> to vector<256x1xf32>
    %cst_65 = arith.constant 1.250000e-03 : f32
    %92 = vector.broadcast %cst_65 : f32 to vector<256x1xf32>
    %93 = arith.mulf %91, %92 : vector<256x1xf32>
    %94 = vector.broadcast %93 : vector<256x1xf32> to vector<256x128xf32>
    %95 = arith.subf %83, %94 : vector<256x128xf32>
    %96 = vector.broadcast %0 : vector<1x128xf32> to vector<256x128xf32>
    %97 = arith.mulf %95, %96 : vector<256x128xf32>
    %98 = arith.mulf %97, %97 : vector<256x128xf32>
    %cst_66 = arith.constant dense<0.000000e+00> : vector<16x128xf32>
    %99 = tpu.matmul %84, %98, %cst_66 {dimension_numbers = #tpu.dot_dimension_numbers<[1], [0], [0], [1], [0, 0, 1, 1], [], []>} : vector<16x256xf32>, vector<256x128xf32>, vector<16x128xf32> -> vector<16x128xf32>
    %cst_67 = arith.constant dense<0.000000e+00> : vector<256x128xf32>
    %100 = tpu.matmul %85, %99, %cst_67 {dimension_numbers = #tpu.dot_dimension_numbers<[1], [0], [0], [1], [0, 0, 1, 1], [], []>} : vector<256x16xf32>, vector<16x128xf32>, vector<256x128xf32> -> vector<256x128xf32>
    %cst_68 = arith.constant dense<0.000000e+00> : vector<256xf32>
    %101 = vector.multi_reduction <add>, %100, %cst_68 [1] : vector<256x128xf32> to vector<256xf32>
    %102 = vector.shape_cast %101 : vector<256xf32> to vector<256x1xf32>
    %cst_69 = arith.constant 1.250000e-03 : f32
    %103 = vector.broadcast %cst_69 : f32 to vector<256x1xf32>
    %104 = arith.mulf %102, %103 : vector<256x1xf32>
    %cst_70 = arith.constant 9.99999974E-6 : f32
    %105 = vector.broadcast %cst_70 : f32 to vector<256x1xf32>
    %106 = arith.addf %104, %105 : vector<256x1xf32>
    %107 = math.rsqrt %106 : vector<256x1xf32>
    %108 = vector.broadcast %107 : vector<256x1xf32> to vector<256x128xf32>
    %109 = arith.mulf %97, %108 : vector<256x128xf32>
    %110 = vector.extract_strided_slice %109 {offsets = [192, 0], sizes = [64, 128], strides = [1, 1]} : vector<256x128xf32> to vector<64x128xf32>
    %cst_71 = arith.constant 0.000000e+00 : f32
    %111 = vector.broadcast %cst_71 : f32 to vector<64x128xf32>
    %112 = arith.cmpf oge, %110, %111 : vector<64x128xf32>
    %cst_72 = arith.constant 2.000000e+00 : f32
    %113 = vector.broadcast %cst_72 : f32 to vector<64x128xf32>
    %114 = arith.mulf %113, %110 : vector<64x128xf32>
    %cst_73 = arith.constant 2.000000e-01 : f32
    %115 = vector.broadcast %cst_73 : f32 to vector<64x128xf32>
    %116 = arith.mulf %115, %110 : vector<64x128xf32>
    %117 = arith.select %112, %114, %116 : vector<64x128xi1>, vector<64x128xf32>
    %c192 = arith.constant 192 : index
    %c0_74 = arith.constant 0 : index
    %118 = vector.load %arg14[%c192, %c0_74] : memref<256x128xf32, #tpu.memory_space<vmem>>, vector<64x128xf32>
    tpu.vector_store %arg14[%c192, %c0_74], %117 {strides = array<i32>} : memref<256x128xf32, #tpu.memory_space<vmem>>, vector<64x128xf32>,
    %119 = vector.extract_strided_slice %109 {offsets = [0, 0], sizes = [128, 128], strides = [1, 1]} : vector<256x128xf32> to vector<128x128xf32>
    %cst_75 = arith.constant 0.000000e+00 : f32
    %120 = vector.broadcast %cst_75 : f32 to vector<128x128xf32>
    %121 = arith.cmpf oge, %119, %120 : vector<128x128xf32>
    %cst_76 = arith.constant 1.000000e-01 : f32
    %122 = vector.broadcast %cst_76 : f32 to vector<128x128xf32>
    %123 = arith.mulf %122, %119 : vector<128x128xf32>
    %124 = arith.select %121, %119, %123 : vector<128x128xi1>, vector<128x128xf32>
    %125 = vector.extract_strided_slice %109 {offsets = [128, 0], sizes = [64, 128], strides = [1, 1]} : vector<256x128xf32> to vector<64x128xf32>
    %cst_77 = arith.constant 0.000000e+00 : f32
    %126 = vector.broadcast %cst_77 : f32 to vector<64x128xf32>
    %127 = arith.cmpf oge, %125, %126 : vector<64x128xf32>
    %cst_78 = arith.constant 1.000000e-01 : f32
    %128 = vector.broadcast %cst_78 : f32 to vector<64x128xf32>
    %129 = arith.mulf %128, %125 : vector<64x128xf32>
    %130 = arith.select %127, %125, %129 : vector<64x128xi1>, vector<64x128xf32>
    %c0_79 = arith.constant 0 : index
    %c0_80 = arith.constant 0 : index
    %131 = vector.load %arg10[%c0_79, %c0_80] : memref<64x64xf32, #tpu.memory_space<vmem>>, vector<64x64xf32>
    %cst_81 = arith.constant dense<0.000000e+00> : vector<64x128xf32>
    %132 = tpu.matmul %131, %130, %cst_81 {dimension_numbers = #tpu.dot_dimension_numbers<[1], [0], [0], [1], [0, 0, 1, 1], [], []>} : vector<64x64xf32>, vector<64x128xf32>, vector<64x128xf32> -> vector<64x128xf32>
    %c0_82 = arith.constant 0 : index
    %c0_83 = arith.constant 0 : index
    %133 = vector.load %arg12[%c0_82, %c0_83] : memref<64x1xf32, #tpu.memory_space<vmem>>, vector<64x1xf32>
    %134 = vector.broadcast %133 : vector<64x1xf32> to vector<64x128xf32>
    %135 = arith.addf %132, %134 : vector<64x128xf32>
    %c0_84 = arith.constant 0 : index
    %c0_85 = arith.constant 0 : index
    %136 = vector.load %arg11[%c0_84, %c0_85] : memref<64x64xf32, #tpu.memory_space<vmem>>, vector<64x64xf32>
    %cst_86 = arith.constant dense<0.000000e+00> : vector<64x128xf32>
    %137 = tpu.matmul %136, %130, %cst_86 {dimension_numbers = #tpu.dot_dimension_numbers<[1], [0], [0], [1], [0, 0, 1, 1], [], []>} : vector<64x64xf32>, vector<64x128xf32>, vector<64x128xf32> -> vector<64x128xf32>
    %c0_87 = arith.constant 0 : index
    %c0_88 = arith.constant 0 : index
    %138 = vector.load %arg13[%c0_87, %c0_88] : memref<64x1xf32, #tpu.memory_space<vmem>>, vector<64x1xf32>
    %139 = vector.broadcast %138 : vector<64x1xf32> to vector<64x128xf32>
    %140 = arith.addf %137, %139 : vector<64x128xf32>
    %141 = arith.maximumf %135, %140 : vector<64x128xf32>
    %142 = arith.maximumf %130, %141 : vector<64x128xf32>
    %c0_89 = arith.constant 0 : index
    %c0_90 = arith.constant 0 : index
    %143 = vector.load %arg7[%c0_89, %c0_90] : memref<16x256xf32, #tpu.memory_space<vmem>>, vector<4x64xf32>
    %c0_91 = arith.constant 0 : index
    %c0_92 = arith.constant 0 : index
    %144 = vector.load %arg8[%c0_91, %c0_92] : memref<256x16xf32, #tpu.memory_space<vmem>>, vector<64x4xf32>
    %145 = vector.broadcast %0 : vector<1x128xf32> to vector<64x128xf32>
    %146 = arith.mulf %142, %145 : vector<64x128xf32>
    %cst_93 = arith.constant dense<0.000000e+00> : vector<4x128xf32>
    %147 = tpu.matmul %143, %146, %cst_93 {dimension_numbers = #tpu.dot_dimension_numbers<[1], [0], [0], [1], [0, 0, 1, 1], [], []>} : vector<4x64xf32>, vector<64x128xf32>, vector<4x128xf32> -> vector<4x128xf32>
    %cst_94 = arith.constant dense<0.000000e+00> : vector<64x128xf32>
    %148 = tpu.matmul %144, %147, %cst_94 {dimension_numbers = #tpu.dot_dimension_numbers<[1], [0], [0], [1], [0, 0, 1, 1], [], []>} : vector<64x4xf32>, vector<4x128xf32>, vector<64x128xf32> -> vector<64x128xf32>
    %cst_95 = arith.constant dense<0.000000e+00> : vector<64xf32>
    %149 = vector.multi_reduction <add>, %148, %cst_95 [1] : vector<64x128xf32> to vector<64xf32>
    %150 = vector.shape_cast %149 : vector<64xf32> to vector<64x1xf32>
    %cst_96 = arith.constant 1.250000e-03 : f32
    %151 = vector.broadcast %cst_96 : f32 to vector<64x1xf32>
    %152 = arith.mulf %150, %151 : vector<64x1xf32>
    %153 = vector.broadcast %152 : vector<64x1xf32> to vector<64x128xf32>
    %154 = arith.subf %142, %153 : vector<64x128xf32>
    %155 = vector.broadcast %0 : vector<1x128xf32> to vector<64x128xf32>
    %156 = arith.mulf %154, %155 : vector<64x128xf32>
    %157 = arith.mulf %156, %156 : vector<64x128xf32>
    %cst_97 = arith.constant dense<0.000000e+00> : vector<4x128xf32>
    %158 = tpu.matmul %143, %157, %cst_97 {dimension_numbers = #tpu.dot_dimension_numbers<[1], [0], [0], [1], [0, 0, 1, 1], [], []>} : vector<4x64xf32>, vector<64x128xf32>, vector<4x128xf32> -> vector<4x128xf32>
    %cst_98 = arith.constant dense<0.000000e+00> : vector<64x128xf32>
    %159 = tpu.matmul %144, %158, %cst_98 {dimension_numbers = #tpu.dot_dimension_numbers<[1], [0], [0], [1], [0, 0, 1, 1], [], []>} : vector<64x4xf32>, vector<4x128xf32>, vector<64x128xf32> -> vector<64x128xf32>
    %cst_99 = arith.constant dense<0.000000e+00> : vector<64xf32>
    %160 = vector.multi_reduction <add>, %159, %cst_99 [1] : vector<64x128xf32> to vector<64xf32>
    %161 = vector.shape_cast %160 : vector<64xf32> to vector<64x1xf32>
    %cst_100 = arith.constant 1.250000e-03 : f32
    %162 = vector.broadcast %cst_100 : f32 to vector<64x1xf32>
    %163 = arith.mulf %161, %162 : vector<64x1xf32>
    %cst_101 = arith.constant 9.99999974E-6 : f32
    %164 = vector.broadcast %cst_101 : f32 to vector<64x1xf32>
    %165 = arith.addf %163, %164 : vector<64x1xf32>
    %166 = math.rsqrt %165 : vector<64x1xf32>
    %167 = vector.broadcast %166 : vector<64x1xf32> to vector<64x128xf32>
    %168 = arith.mulf %156, %167 : vector<64x128xf32>
    %cst_102 = arith.constant 0.000000e+00 : f32
    %169 = vector.broadcast %cst_102 : f32 to vector<64x128xf32>
    %170 = arith.cmpf oge, %168, %169 : vector<64x128xf32>
    %cst_103 = arith.constant 2.000000e+00 : f32
    %171 = vector.broadcast %cst_103 : f32 to vector<64x128xf32>
    %172 = arith.mulf %171, %168 : vector<64x128xf32>
    %cst_104 = arith.constant 2.000000e-01 : f32
    %173 = vector.broadcast %cst_104 : f32 to vector<64x128xf32>
    %174 = arith.mulf %173, %168 : vector<64x128xf32>
    %175 = arith.select %170, %172, %174 : vector<64x128xi1>, vector<64x128xf32>
    %c128 = arith.constant 128 : index
    %c0_105 = arith.constant 0 : index
    %176 = vector.load %arg14[%c128, %c0_105] : memref<256x128xf32, #tpu.memory_space<vmem>>, vector<64x128xf32>
    tpu.vector_store %arg14[%c128, %c0_105], %175 {strides = array<i32>} : memref<256x128xf32, #tpu.memory_space<vmem>>, vector<64x128xf32>,
    %c0_106 = arith.constant 0 : index
    %c0_107 = arith.constant 0 : index
    %177 = vector.load %arg6[%c0_106, %c0_107] : memref<128x128xf32, #tpu.memory_space<vmem>>, vector<128x128xf32>
    %cst_108 = arith.constant dense<0.000000e+00> : vector<128x128xf32>
    %178 = tpu.matmul %177, %124, %cst_108 {dimension_numbers = #tpu.dot_dimension_numbers<[1], [0], [0], [1], [0, 0, 1, 1], [], []>} : vector<128x128xf32>, vector<128x128xf32>, vector<128x128xf32> -> vector<128x128xf32>
    %c0_109 = arith.constant 0 : index
    %c0_110 = arith.constant 0 : index
    %179 = vector.load %arg7[%c0_109, %c0_110] : memref<16x256xf32, #tpu.memory_space<vmem>>, vector<8x128xf32>
    %c0_111 = arith.constant 0 : index
    %c0_112 = arith.constant 0 : index
    %180 = vector.load %arg8[%c0_111, %c0_112] : memref<256x16xf32, #tpu.memory_space<vmem>>, vector<128x8xf32>
    %181 = vector.broadcast %0 : vector<1x128xf32> to vector<128x128xf32>
    %182 = arith.mulf %178, %181 : vector<128x128xf32>
    %cst_113 = arith.constant dense<0.000000e+00> : vector<8x128xf32>
    %183 = tpu.matmul %179, %182, %cst_113 {dimension_numbers = #tpu.dot_dimension_numbers<[1], [0], [0], [1], [0, 0, 1, 1], [], []>} : vector<8x128xf32>, vector<128x128xf32>, vector<8x128xf32> -> vector<8x128xf32>
    %cst_114 = arith.constant dense<0.000000e+00> : vector<128x128xf32>
    %184 = tpu.matmul %180, %183, %cst_114 {dimension_numbers = #tpu.dot_dimension_numbers<[1], [0], [0], [1], [0, 0, 1, 1], [], []>} : vector<128x8xf32>, vector<8x128xf32>, vector<128x128xf32> -> vector<128x128xf32>
    %cst_115 = arith.constant dense<0.000000e+00> : vector<128xf32>
    %185 = vector.multi_reduction <add>, %184, %cst_115 [1] : vector<128x128xf32> to vector<128xf32>
    %186 = vector.shape_cast %185 : vector<128xf32> to vector<128x1xf32>
    %cst_116 = arith.constant 1.250000e-03 : f32
    %187 = vector.broadcast %cst_116 : f32 to vector<128x1xf32>
    %188 = arith.mulf %186, %187 : vector<128x1xf32>
    %189 = vector.broadcast %188 : vector<128x1xf32> to vector<128x128xf32>
    %190 = arith.subf %178, %189 : vector<128x128xf32>
    %191 = vector.broadcast %0 : vector<1x128xf32> to vector<128x128xf32>
    %192 = arith.mulf %190, %191 : vector<128x128xf32>
    %193 = arith.mulf %192, %192 : vector<128x128xf32>
    %cst_117 = arith.constant dense<0.000000e+00> : vector<8x128xf32>
    %194 = tpu.matmul %179, %193, %cst_117 {dimension_numbers = #tpu.dot_dimension_numbers<[1], [0], [0], [1], [0, 0, 1, 1], [], []>} : vector<8x128xf32>, vector<128x128xf32>, vector<8x128xf32> -> vector<8x128xf32>
    %cst_118 = arith.constant dense<0.000000e+00> : vector<128x128xf32>
    %195 = tpu.matmul %180, %194, %cst_118 {dimension_numbers = #tpu.dot_dimension_numbers<[1], [0], [0], [1], [0, 0, 1, 1], [], []>} : vector<128x8xf32>, vector<8x128xf32>, vector<128x128xf32> -> vector<128x128xf32>
    %cst_119 = arith.constant dense<0.000000e+00> : vector<128xf32>
    %196 = vector.multi_reduction <add>, %195, %cst_119 [1] : vector<128x128xf32> to vector<128xf32>
    %197 = vector.shape_cast %196 : vector<128xf32> to vector<128x1xf32>
    %cst_120 = arith.constant 1.250000e-03 : f32
    %198 = vector.broadcast %cst_120 : f32 to vector<128x1xf32>
    %199 = arith.mulf %197, %198 : vector<128x1xf32>
    %cst_121 = arith.constant 9.99999974E-6 : f32
    %200 = vector.broadcast %cst_121 : f32 to vector<128x1xf32>
    %201 = arith.addf %199, %200 : vector<128x1xf32>
    %202 = math.rsqrt %201 : vector<128x1xf32>
    %203 = vector.broadcast %202 : vector<128x1xf32> to vector<128x128xf32>
    %204 = arith.mulf %192, %203 : vector<128x128xf32>
    %cst_122 = arith.constant 0.000000e+00 : f32
    %205 = vector.broadcast %cst_122 : f32 to vector<128x128xf32>
    %206 = arith.cmpf oge, %204, %205 : vector<128x128xf32>
    %cst_123 = arith.constant 2.000000e+00 : f32
    %207 = vector.broadcast %cst_123 : f32 to vector<128x128xf32>
    %208 = arith.mulf %207, %204 : vector<128x128xf32>
    %cst_124 = arith.constant 2.000000e-01 : f32
    %209 = vector.broadcast %cst_124 : f32 to vector<128x128xf32>
    %210 = arith.mulf %209, %204 : vector<128x128xf32>
    %211 = arith.select %206, %208, %210 : vector<128x128xi1>, vector<128x128xf32>
    %c0_125 = arith.constant 0 : index
    %c0_126 = arith.constant 0 : index
    %212 = vector.load %arg14[%c0_125, %c0_126] : memref<256x128xf32, #tpu.memory_space<vmem>>, vector<128x128xf32>
    tpu.vector_store %arg14[%c0_125, %c0_126], %211 {strides = array<i32>} : memref<256x128xf32, #tpu.memory_space<vmem>>, vector<128x128xf32>,
    return
  }
  func.func @transform_0(%arg0: i32) -> (i32, i32) {
    %c0_i32 = arith.constant 0 : i32
    %c0_i32_0 = arith.constant 0 : i32
    %c0_i32_1 = arith.constant 0 : i32
    return %c0_i32, %c0_i32_0 : i32, i32
  }
  func.func @transform_1(%arg0: i32) -> (i32, i32, i32) {
    %c0_i32 = arith.constant 0 : i32
    %c0_i32_0 = arith.constant 0 : i32
    %c0_i32_1 = arith.constant 0 : i32
    %c0_i32_2 = arith.constant 0 : i32
    return %c0_i32, %c0_i32_0, %c0_i32_1 : i32, i32, i32
  }
  func.func @transform_2(%arg0: i32) -> (i32, i32, i32) {
    %c0_i32 = arith.constant 0 : i32
    %c0_i32_0 = arith.constant 0 : i32
    %c0_i32_1 = arith.constant 0 : i32
    %c0_i32_2 = arith.constant 0 : i32
    return %c0_i32, %c0_i32_0, %c0_i32_1 : i32, i32, i32
  }
  func.func @transform_3(%arg0: i32) -> (i32, i32) {
    %c0_i32 = arith.constant 0 : i32
    %c0_i32_0 = arith.constant 0 : i32
    %c0_i32_1 = arith.constant 0 : i32
    return %c0_i32, %c0_i32_0 : i32, i32
  }
  func.func @transform_4(%arg0: i32) -> (i32, i32) {
    %c0_i32 = arith.constant 0 : i32
    %c0_i32_0 = arith.constant 0 : i32
    %c0_i32_1 = arith.constant 0 : i32
    return %c0_i32, %c0_i32_0 : i32, i32
  }
  func.func @transform_5(%arg0: i32) -> (i32, i32) {
    %c0_i32 = arith.constant 0 : i32
    %c0_i32_0 = arith.constant 0 : i32
    %c0_i32_1 = arith.constant 0 : i32
    return %c0_i32, %c0_i32_0 : i32, i32
  }
  func.func @transform_6(%arg0: i32) -> (i32, i32) {
    %c0_i32 = arith.constant 0 : i32
    %c0_i32_0 = arith.constant 0 : i32
    %c0_i32_1 = arith.constant 0 : i32
    return %c0_i32, %c0_i32_0 : i32, i32
  }
  func.func @transform_7(%arg0: i32) -> (i32, i32) {
    %c0_i32 = arith.constant 0 : i32
    %c0_i32_0 = arith.constant 0 : i32
    %c0_i32_1 = arith.constant 0 : i32
    return %c0_i32, %c0_i32_0 : i32, i32
  }
  func.func @transform_8(%arg0: i32) -> (i32, i32) {
    %c0_i32 = arith.constant 0 : i32
    %c0_i32_0 = arith.constant 0 : i32
    %c0_i32_1 = arith.constant 0 : i32
    return %c0_i32, %c0_i32_0 : i32, i32
  }
  func.func @transform_9(%arg0: i32) -> (i32, i32) {
    %c0_i32 = arith.constant 0 : i32
    %c0_i32_0 = arith.constant 0 : i32
    %c0_i32_1 = arith.constant 0 : i32
    return %c0_i32, %c0_i32_0 : i32, i32
  }
  func.func @transform_10(%arg0: i32) -> (i32, i32) {
    %c0_i32 = arith.constant 0 : i32
    %c0_i32_0 = arith.constant 0 : i32
    %c0_i32_1 = arith.constant 0 : i32
    return %c0_i32, %c0_i32_0 : i32, i32
  }
  func.func @transform_11(%arg0: i32) -> (i32, i32) {
    %c0_i32 = arith.constant 0 : i32
    %c0_i32_0 = arith.constant 0 : i32
    %c0_i32_1 = arith.constant 0 : i32
    return %c0_i32, %c0_i32_0 : i32, i32
  }
  func.func @transform_12(%arg0: i32) -> (i32, i32) {
    %c0_i32 = arith.constant 0 : i32
    %c0_i32_0 = arith.constant 0 : i32
    %c0_i32_1 = arith.constant 0 : i32
    return %c0_i32, %c0_i32_0 : i32, i32
  }
  func.func @transform_13(%arg0: i32) -> (i32, i32) {
    %c0_i32 = arith.constant 0 : i32
    %c0_i32_0 = arith.constant 0 : i32
    %c0_i32_1 = arith.constant 0 : i32
    return %c0_i32, %c0_i32_0 : i32, i32
  }
}

</mosaic_0001>

<llo_original>
// kernel: forward.1
$region0: #{forward.1}
  #allocation0 [shape = 'u32[]', space=smem, size = 0x4, offset = 0x4, fixed_abs, tag = 'smem constant byte address 0x4 - core index']
  #allocation1 [shape = 'u32[72,128]{1,0:T(1,128)}', space=vmem, size = 0x9000, scoped, tag = 'internal scratch']
  %s0 = inlined_call_operand.vmem [shape: f32[48,128], index: 0, kind: input, shape index: {}]
  %s1 = inlined_call_operand.vmem [shape: f32[3,128,128], index: 1, kind: input, shape index: {}]
  %s2 = inlined_call_operand.vmem [shape: f32[3,256,48], index: 2, kind: input, shape index: {}]
  %s3 = inlined_call_operand.vmem [shape: f32[256,48], index: 3, kind: input, shape index: {}]
  %s4 = inlined_call_operand.vmem [shape: f32[256,256], index: 4, kind: input, shape index: {}]
  %s5 = inlined_call_operand.vmem [shape: f32[128,128], index: 5, kind: input, shape index: {}]
  %s6 = inlined_call_operand.vmem [shape: f32[16,256], index: 6, kind: input, shape index: {}]
  %s7 = inlined_call_operand.vmem [shape: f32[256,16], index: 7, kind: input, shape index: {}]
  %s8 = inlined_call_operand.vmem [shape: f32[1,128], index: 8, kind: input, shape index: {}]
  %s9 = inlined_call_operand.vmem [shape: f32[64,64], index: 9, kind: input, shape index: {}]
  %s10 = inlined_call_operand.vmem [shape: f32[64,64], index: 10, kind: input, shape index: {}]
  %s11 = inlined_call_operand.vmem [shape: f32[64,1], index: 11, kind: input, shape index: {}]
  %s12 = inlined_call_operand.vmem [shape: f32[64,1], index: 12, kind: input, shape index: {}]
  %s13 = inlined_call_operand.vmem [shape: f32[256,128], index: 13, kind: output, shape index: {}]
  %s14 = sld [smem:[#allocation0]]
  $region62: #{forward.1} parent=0
    _
  %s16 = ssub.s32 1, %s14
  %s17 = scalar_select 0, %s16, %s14
  // Predicated region
  $region2: #{forward.1} parent=0 // pred_check
    _
  $region3: #{forward.1} parent=0 // pred_check_branch
    %19 = sbr.rel (0) target = $region5
  $region4: #{forward.1} parent=0 // pred_region
    _
  $region5: #{forward.1} parent=0 // pred_fallthru
    _
  // Predicated region
  $region6: #{forward.1} parent=0 // pred_check
    _
  $region7: #{forward.1} parent=0 // pred_check_branch
    %21 = sbr.rel (0) target = $region9
  $region8: #{forward.1} parent=0 // pred_region
    _
  $region9: #{forward.1} parent=0 // pred_fallthru
    _
  // Predicated region
  $region10: #{forward.1} parent=0 // pred_check
    _
  $region11: #{forward.1} parent=0 // pred_check_branch
    %23 = sbr.rel (0) target = $region13
  $region12: #{forward.1} parent=0 // pred_region
    _
  $region13: #{forward.1} parent=0 // pred_fallthru
    _
  // Predicated region
  $region14: #{forward.1} parent=0 // pred_check
    _
  $region15: #{forward.1} parent=0 // pred_check_branch
    %25 = sbr.rel (0) target = $region17
  $region16: #{forward.1} parent=0 // pred_region
    _
  $region17: #{forward.1} parent=0 // pred_fallthru
    _
  // Predicated region
  $region18: #{forward.1} parent=0 // pred_check
    _
  $region19: #{forward.1} parent=0 // pred_check_branch
    %27 = sbr.rel (0) target = $region21
  $region20: #{forward.1} parent=0 // pred_region
    _
  $region21: #{forward.1} parent=0 // pred_fallthru
    _
  // Predicated region
  $region22: #{forward.1} parent=0 // pred_check
    _
  $region23: #{forward.1} parent=0 // pred_check_branch
    %29 = sbr.rel (0) target = $region25
  $region24: #{forward.1} parent=0 // pred_region
    _
  $region25: #{forward.1} parent=0 // pred_fallthru
    _
  // Predicated region
  $region26: #{forward.1} parent=0 // pred_check
    _
  $region27: #{forward.1} parent=0 // pred_check_branch
    %31 = sbr.rel (0) target = $region29
  $region28: #{forward.1} parent=0 // pred_region
    _
  $region29: #{forward.1} parent=0 // pred_fallthru
    _
  // Predicated region
  $region30: #{forward.1} parent=0 // pred_check
    _
  $region31: #{forward.1} parent=0 // pred_check_branch
    %33 = sbr.rel (0) target = $region33
  $region32: #{forward.1} parent=0 // pred_region
    _
  $region33: #{forward.1} parent=0 // pred_fallthru
    _
  // Predicated region
  $region34: #{forward.1} parent=0 // pred_check
    _
  $region35: #{forward.1} parent=0 // pred_check_branch
    %35 = sbr.rel (0) target = $region37
  $region36: #{forward.1} parent=0 // pred_region
    _
  $region37: #{forward.1} parent=0 // pred_fallthru
    _
  // Predicated region
  $region38: #{forward.1} parent=0 // pred_check
    _
  $region39: #{forward.1} parent=0 // pred_check_branch
    %37 = sbr.rel (0) target = $region41
  $region40: #{forward.1} parent=0 // pred_region
    _
  $region41: #{forward.1} parent=0 // pred_fallthru
    _
  // Predicated region
  $region42: #{forward.1} parent=0 // pred_check
    _
  $region43: #{forward.1} parent=0 // pred_check_branch
    %39 = sbr.rel (0) target = $region45
  $region44: #{forward.1} parent=0 // pred_region
    _
  $region45: #{forward.1} parent=0 // pred_fallthru
    _
  // Predicated region
  $region46: #{forward.1} parent=0 // pred_check
    _
  $region47: #{forward.1} parent=0 // pred_check_branch
    %41 = sbr.rel (0) target = $region49
  $region48: #{forward.1} parent=0 // pred_region
    _
  $region49: #{forward.1} parent=0 // pred_fallthru
    _
  // Predicated region
  $region50: #{forward.1} parent=0 // pred_check
    _
  $region51: #{forward.1} parent=0 // pred_check_branch
    %43 = sbr.rel (0) target = $region53
  $region52: #{forward.1} parent=0 // pred_region
    _
  $region53: #{forward.1} parent=0 // pred_fallthru
    _
  %v44 = vld [vmem:[%s8] sm:$0x1]
  %v45 = vld [vmem:[%s0] sm:$0xff]
  %v46 = vld [vmem:[%s0 + $0x8] sm:$0xff]
  %v47 = vld [vmem:[%s0 + $0x10] sm:$0xff]
  %v48 = vld [vmem:[%s0 + $0x18] sm:$0xff]
  %v49 = vld [vmem:[%s0 + $0x20] sm:$0xff]
  %v50 = vld [vmem:[%s0 + $0x28] sm:$0xff]
  %v51 = vld [vmem:[%s2] sm:$0xff]
  %v52 = vld [vmem:[%s2 + $0x8] sm:$0xff]
  %v53 = vld [vmem:[%s2 + $0x10] sm:$0xff]
  %v54 = vld [vmem:[%s2 + $0x18] sm:$0xff]
  %v55 = vld [vmem:[%s2 + $0x20] sm:$0xff]
  %v56 = vld [vmem:[%s2 + $0x28] sm:$0xff]
  %v57 = vld [vmem:[%s2 + $0x30] sm:$0xff]
  %v58 = vld [vmem:[%s2 + $0x38] sm:$0xff]
  %v59 = vld [vmem:[%s2 + $0x40] sm:$0xff]
  %v60 = vld [vmem:[%s2 + $0x48] sm:$0xff]
  %v61 = vld [vmem:[%s2 + $0x50] sm:$0xff]
  %v62 = vld [vmem:[%s2 + $0x58] sm:$0xff]
  %v63 = vld [vmem:[%s2 + $0x60] sm:$0xff]
  %v64 = vld [vmem:[%s2 + $0x68] sm:$0xff]
  %v65 = vld [vmem:[%s2 + $0x70] sm:$0xff]
  %v66 = vld [vmem:[%s2 + $0x78] sm:$0xff]
  %v67 = vld [vmem:[%s2 + $0x80] sm:$0xff]
  %v68 = vld [vmem:[%s2 + $0x88] sm:$0xff]
  %v69 = vld [vmem:[%s2 + $0x90] sm:$0xff]
  %v70 = vld [vmem:[%s2 + $0x98] sm:$0xff]
  %v71 = vld [vmem:[%s2 + $0xa0] sm:$0xff]
  %v72 = vld [vmem:[%s2 + $0xa8] sm:$0xff]
  %v73 = vld [vmem:[%s2 + $0xb0] sm:$0xff]
  %v74 = vld [vmem:[%s2 + $0xb8] sm:$0xff]
  %v75 = vld [vmem:[%s2 + $0xc0] sm:$0xff]
  %v76 = vld [vmem:[%s2 + $0xc8] sm:$0xff]
  %v77 = vld [vmem:[%s2 + $0xd0] sm:$0xff]
  %v78 = vld [vmem:[%s2 + $0xd8] sm:$0xff]
  %v79 = vld [vmem:[%s2 + $0xe0] sm:$0xff]
  %v80 = vld [vmem:[%s2 + $0xe8] sm:$0xff]
  %v81 = vld [vmem:[%s2 + $0xf0] sm:$0xff]
  %v82 = vld [vmem:[%s2 + $0xf8] sm:$0xff]
  %v83 = vld [vmem:[%s1] sm:$0xff]
  %v84 = vld [vmem:[%s1 + $0x8] sm:$0xff]
  %v85 = vld [vmem:[%s1 + $0x10] sm:$0xff]
  %v86 = vld [vmem:[%s1 + $0x18] sm:$0xff]
  %v87 = vld [vmem:[%s1 + $0x20] sm:$0xff]
  %v88 = vld [vmem:[%s1 + $0x28] sm:$0xff]
  %v89 = vld [vmem:[%s1 + $0x30] sm:$0xff]
  %v90 = vld [vmem:[%s1 + $0x38] sm:$0xff]
  %v91 = vld [vmem:[%s1 + $0x40] sm:$0xff]
  %v92 = vld [vmem:[%s1 + $0x48] sm:$0xff]
  %v93 = vld [vmem:[%s1 + $0x50] sm:$0xff]
  %v94 = vld [vmem:[%s1 + $0x58] sm:$0xff]
  %v95 = vld [vmem:[%s1 + $0x60] sm:$0xff]
  %v96 = vld [vmem:[%s1 + $0x68] sm:$0xff]
  %v97 = vld [vmem:[%s1 + $0x70] sm:$0xff]
  %v98 = vld [vmem:[%s1 + $0x78] sm:$0xff]
  %99 = vmatpush.msra.mxu0 %v98
  %100 = vmatpush.msra.mxu0 %v97
  %101 = vmatpush.msra.mxu0 %v96
  %102 = vmatpush.msra.mxu0 %v95
  %103 = vmatpush.msra.mxu0 %v94
  %104 = vmatpush.msra.mxu0 %v93
  %105 = vmatpush.msra.mxu0 %v92
  %106 = vmatpush.msra.mxu0 %v91
  %107 = vmatpush.msra.mxu0 %v90
  %108 = vmatpush.msra.mxu0 %v89
  %109 = vmatpush.msra.mxu0 %v88
  %110 = vmatpush.msra.mxu0 %v87
  %111 = vmatpush.msra.mxu0 %v86
  %112 = vmatpush.msra.mxu0 %v85
  %113 = vmatpush.msra.mxu0 %v84
  %114 = vmatpush.msra.mxu0 %v83
  %115 = vmatmul.f32.gmra.mxu0 %v45
  %v116 = vpop.f32.mrf.mxu0
  %v117 = vadd.f32 0.0, %v116
  %118 = vmatmul.f32.gmra.mxu0 %v46
  %v119 = vpop.f32.mrf.mxu0
  %v120 = vadd.f32 0.0, %v119
  %121 = vmatmul.f32.gmra.mxu0 %v47
  %v122 = vpop.f32.mrf.mxu0
  %v123 = vadd.f32 0.0, %v122
  %124 = vmatmul.f32.gmra.mxu0 %v48
  %v125 = vpop.f32.mrf.mxu0
  %v126 = vadd.f32 0.0, %v125
  %127 = vmatmul.f32.gmra.mxu0 %v49
  %v128 = vpop.f32.mrf.mxu0
  %v129 = vadd.f32 0.0, %v128
  %130 = vmatmul.f32.gmra.mxu0 %v50
  %v131 = vpop.f32.mrf.mxu0
  %v132 = vadd.f32 0.0, %v131
  %133 = vdwg.mxu0
  %s134 = scalar_lea.vmem %s2, 256
  %v135 = vld [vmem:[%s134] sm:$0xff]
  %v136 = vld [vmem:[%s134 + $0x8] sm:$0xff]
  %v137 = vld [vmem:[%s134 + $0x10] sm:$0xff]
  %v138 = vld [vmem:[%s134 + $0x18] sm:$0xff]
  %v139 = vld [vmem:[%s134 + $0x20] sm:$0xff]
  %v140 = vld [vmem:[%s134 + $0x28] sm:$0xff]
  %v141 = vld [vmem:[%s134 + $0x30] sm:$0xff]
  %v142 = vld [vmem:[%s134 + $0x38] sm:$0xff]
  %v143 = vld [vmem:[%s134 + $0x40] sm:$0xff]
  %v144 = vld [vmem:[%s134 + $0x48] sm:$0xff]
  %v145 = vld [vmem:[%s134 + $0x50] sm:$0xff]
  %v146 = vld [vmem:[%s134 + $0x58] sm:$0xff]
  %v147 = vld [vmem:[%s134 + $0x60] sm:$0xff]
  %v148 = vld [vmem:[%s134 + $0x68] sm:$0xff]
  %v149 = vld [vmem:[%s134 + $0x70] sm:$0xff]
  %v150 = vld [vmem:[%s134 + $0x78] sm:$0xff]
  %v151 = vld [vmem:[%s134 + $0x80] sm:$0xff]
  %v152 = vld [vmem:[%s134 + $0x88] sm:$0xff]
  %v153 = vld [vmem:[%s134 + $0x90] sm:$0xff]
  %v154 = vld [vmem:[%s134 + $0x98] sm:$0xff]
  %v155 = vld [vmem:[%s134 + $0xa0] sm:$0xff]
  %v156 = vld [vmem:[%s134 + $0xa8] sm:$0xff]
  %v157 = vld [vmem:[%s134 + $0xb0] sm:$0xff]
  %v158 = vld [vmem:[%s134 + $0xb8] sm:$0xff]
  %v159 = vld [vmem:[%s134 + $0xc0] sm:$0xff]
  %v160 = vld [vmem:[%s134 + $0xc8] sm:$0xff]
  %v161 = vld [vmem:[%s134 + $0xd0] sm:$0xff]
  %v162 = vld [vmem:[%s134 + $0xd8] sm:$0xff]
  %v163 = vld [vmem:[%s134 + $0xe0] sm:$0xff]
  %v164 = vld [vmem:[%s134 + $0xe8] sm:$0xff]
  %v165 = vld [vmem:[%s134 + $0xf0] sm:$0xff]
  %v166 = vld [vmem:[%s134 + $0xf8] sm:$0xff]
  %s167 = scalar_lea.vmem %s1, 128
  %v168 = vld [vmem:[%s167] sm:$0xff]
  %v169 = vld [vmem:[%s167 + $0x8] sm:$0xff]
  %v170 = vld [vmem:[%s167 + $0x10] sm:$0xff]
  %v171 = vld [vmem:[%s167 + $0x18] sm:$0xff]
  %v172 = vld [vmem:[%s167 + $0x20] sm:$0xff]
  %v173 = vld [vmem:[%s167 + $0x28] sm:$0xff]
  %v174 = vld [vmem:[%s167 + $0x30] sm:$0xff]
  %v175 = vld [vmem:[%s167 + $0x38] sm:$0xff]
  %v176 = vld [vmem:[%s167 + $0x40] sm:$0xff]
  %v177 = vld [vmem:[%s167 + $0x48] sm:$0xff]
  %v178 = vld [vmem:[%s167 + $0x50] sm:$0xff]
  %v179 = vld [vmem:[%s167 + $0x58] sm:$0xff]
  %v180 = vld [vmem:[%s167 + $0x60] sm:$0xff]
  %v181 = vld [vmem:[%s167 + $0x68] sm:$0xff]
  %v182 = vld [vmem:[%s167 + $0x70] sm:$0xff]
  %v183 = vld [vmem:[%s167 + $0x78] sm:$0xff]
  %184 = vmatpush.msra.mxu0 %v183
  %185 = vmatpush.msra.mxu0 %v182
  %186 = vmatpush.msra.mxu0 %v181
  %187 = vmatpush.msra.mxu0 %v180
  %188 = vmatpush.msra.mxu0 %v179
  %189 = vmatpush.msra.mxu0 %v178
  %190 = vmatpush.msra.mxu0 %v177
  %191 = vmatpush.msra.mxu0 %v176
  %192 = vmatpush.msra.mxu0 %v175
  %193 = vmatpush.msra.mxu0 %v174
  %194 = vmatpush.msra.mxu0 %v173
  %195 = vmatpush.msra.mxu0 %v172
  %196 = vmatpush.msra.mxu0 %v171
  %197 = vmatpush.msra.mxu0 %v170
  %198 = vmatpush.msra.mxu0 %v169
  %199 = vmatpush.msra.mxu0 %v168
  %200 = vmatmul.f32.gmra.mxu0 %v45
  %v201 = vpop.f32.mrf.mxu0
  %v202 = vadd.f32 0.0, %v201
  %203 = vmatmul.f32.gmra.mxu0 %v46
  %v204 = vpop.f32.mrf.mxu0
  %v205 = vadd.f32 0.0, %v204
  %206 = vmatmul.f32.gmra.mxu0 %v47
  %v207 = vpop.f32.mrf.mxu0
  %v208 = vadd.f32 0.0, %v207
  %209 = vmatmul.f32.gmra.mxu0 %v48
  %v210 = vpop.f32.mrf.mxu0
  %v211 = vadd.f32 0.0, %v210
  %212 = vmatmul.f32.gmra.mxu0 %v49
  %v213 = vpop.f32.mrf.mxu0
  %v214 = vadd.f32 0.0, %v213
  %215 = vmatmul.f32.gmra.mxu0 %v50
  %v216 = vpop.f32.mrf.mxu0
  %v217 = vadd.f32 0.0, %v216
  %218 = vdwg.mxu0
  %vm219 = vcmask 392192
  %v221 = vsel %vm219, %v135, 0
  %v224 = vsel %vm219, %v136, 0
  %v227 = vsel %vm219, %v137, 0
  %v230 = vsel %vm219, %v138, 0
  %v233 = vsel %vm219, %v139, 0
  %v236 = vsel %vm219, %v140, 0
  %v239 = vsel %vm219, %v141, 0
  %v242 = vsel %vm219, %v142, 0
  %v245 = vsel %vm219, %v143, 0
  %v248 = vsel %vm219, %v144, 0
  %v251 = vsel %vm219, %v145, 0
  %v254 = vsel %vm219, %v146, 0
  %v257 = vsel %vm219, %v147, 0
  %v260 = vsel %vm219, %v148, 0
  %v263 = vsel %vm219, %v149, 0
  %v266 = vsel %vm219, %v150, 0
  %v269 = vsel %vm219, %v151, 0
  %v272 = vsel %vm219, %v152, 0
  %v275 = vsel %vm219, %v153, 0
  %v278 = vsel %vm219, %v154, 0
  %v281 = vsel %vm219, %v155, 0
  %v284 = vsel %vm219, %v156, 0
  %v287 = vsel %vm219, %v157, 0
  %v290 = vsel %vm219, %v158, 0
  %v293 = vsel %vm219, %v159, 0
  %v296 = vsel %vm219, %v160, 0
  %v299 = vsel %vm219, %v161, 0
  %v302 = vsel %vm219, %v162, 0
  %v305 = vsel %vm219, %v163, 0
  %v308 = vsel %vm219, %v164, 0
  %v311 = vsel %vm219, %v165, 0
  %v314 = vsel %vm219, %v166, 0
  %316 = vmatpush.msra.mxu0 0.0
  %317 = vmatpush.msra.mxu0 0.0
  %318 = vmatpush.msra.mxu0 0.0
  %319 = vmatpush.msra.mxu0 0.0
  %320 = vmatpush.msra.mxu0 0.0
  %321 = vmatpush.msra.mxu0 0.0
  %322 = vmatpush.msra.mxu0 0.0
  %323 = vmatpush.msra.mxu0 0.0
  %324 = vmatpush.msra.mxu0 0.0
  %325 = vmatpush.msra.mxu0 0.0
  %326 = vmatpush.msra.mxu0 %v217
  %327 = vmatpush.msra.mxu0 %v214
  %328 = vmatpush.msra.mxu0 %v211
  %329 = vmatpush.msra.mxu0 %v208
  %330 = vmatpush.msra.mxu0 %v205
  %331 = vmatpush.msra.mxu0 %v202
  %332 = vmatmul.f32.gmra.mxu0 %v221
  %v333 = vpop.f32.mrf.mxu0
  %v334 = vadd.f32 0.0, %v333
  %335 = vmatmul.f32.gmra.mxu0 %v224
  %v336 = vpop.f32.mrf.mxu0
  %v337 = vadd.f32 0.0, %v336
  %338 = vmatmul.f32.gmra.mxu0 %v227
  %v339 = vpop.f32.mrf.mxu0
  %v340 = vadd.f32 0.0, %v339
  %341 = vmatmul.f32.gmra.mxu0 %v230
  %v342 = vpop.f32.mrf.mxu0
  %v343 = vadd.f32 0.0, %v342
  %344 = vmatmul.f32.gmra.mxu0 %v233
  %v345 = vpop.f32.mrf.mxu0
  %v346 = vadd.f32 0.0, %v345
  %347 = vmatmul.f32.gmra.mxu0 %v236
  %v348 = vpop.f32.mrf.mxu0
  %v349 = vadd.f32 0.0, %v348
  %350 = vmatmul.f32.gmra.mxu0 %v239
  %v351 = vpop.f32.mrf.mxu0
  %v352 = vadd.f32 0.0, %v351
  %353 = vmatmul.f32.gmra.mxu0 %v242
  %v354 = vpop.f32.mrf.mxu0
  %v355 = vadd.f32 0.0, %v354
  %356 = vmatmul.f32.gmra.mxu0 %v245
  %v357 = vpop.f32.mrf.mxu0
  %v358 = vadd.f32 0.0, %v357
  %359 = vmatmul.f32.gmra.mxu0 %v248
  %v360 = vpop.f32.mrf.mxu0
  %v361 = vadd.f32 0.0, %v360
  %362 = vmatmul.f32.gmra.mxu0 %v251
  %v363 = vpop.f32.mrf.mxu0
  %v364 = vadd.f32 0.0, %v363
  %365 = vmatmul.f32.gmra.mxu0 %v254
  %v366 = vpop.f32.mrf.mxu0
  %v367 = vadd.f32 0.0, %v366
  %368 = vmatmul.f32.gmra.mxu0 %v257
  %v369 = vpop.f32.mrf.mxu0
  %v370 = vadd.f32 0.0, %v369
  %371 = vmatmul.f32.gmra.mxu0 %v260
  %v372 = vpop.f32.mrf.mxu0
  %v373 = vadd.f32 0.0, %v372
  %374 = vmatmul.f32.gmra.mxu0 %v263
  %v375 = vpop.f32.mrf.mxu0
  %v376 = vadd.f32 0.0, %v375
  %377 = vmatmul.f32.gmra.mxu0 %v266
  %v378 = vpop.f32.mrf.mxu0
  %v379 = vadd.f32 0.0, %v378
  %380 = vmatmul.f32.gmra.mxu0 %v269
  %v381 = vpop.f32.mrf.mxu0
  %v382 = vadd.f32 0.0, %v381
  %383 = vmatmul.f32.gmra.mxu0 %v272
  %v384 = vpop.f32.mrf.mxu0
  %v385 = vadd.f32 0.0, %v384
  %386 = vmatmul.f32.gmra.mxu0 %v275
  %v387 = vpop.f32.mrf.mxu0
  %v388 = vadd.f32 0.0, %v387
  %389 = vmatmul.f32.gmra.mxu0 %v278
  %v390 = vpop.f32.mrf.mxu0
  %v391 = vadd.f32 0.0, %v390
  %392 = vmatmul.f32.gmra.mxu0 %v281
  %v393 = vpop.f32.mrf.mxu0
  %v394 = vadd.f32 0.0, %v393
  %395 = vmatmul.f32.gmra.mxu0 %v284
  %v396 = vpop.f32.mrf.mxu0
  %v397 = vadd.f32 0.0, %v396
  %398 = vmatmul.f32.gmra.mxu0 %v287
  %v399 = vpop.f32.mrf.mxu0
  %v400 = vadd.f32 0.0, %v399
  %401 = vmatmul.f32.gmra.mxu0 %v290
  %v402 = vpop.f32.mrf.mxu0
  %v403 = vadd.f32 0.0, %v402
  %404 = vmatmul.f32.gmra.mxu0 %v293
  %v405 = vpop.f32.mrf.mxu0
  %v406 = vadd.f32 0.0, %v405
  %407 = vmatmul.f32.gmra.mxu0 %v296
  %v408 = vpop.f32.mrf.mxu0
  %v409 = vadd.f32 0.0, %v408
  %410 = vmatmul.f32.gmra.mxu0 %v299
  %v411 = vpop.f32.mrf.mxu0
  %v412 = vadd.f32 0.0, %v411
  %413 = vmatmul.f32.gmra.mxu0 %v302
  %v414 = vpop.f32.mrf.mxu0
  %v415 = vadd.f32 0.0, %v414
  %416 = vmatmul.f32.gmra.mxu0 %v305
  %v417 = vpop.f32.mrf.mxu0
  %v418 = vadd.f32 0.0, %v417
  %419 = vmatmul.f32.gmra.mxu0 %v308
  %v420 = vpop.f32.mrf.mxu0
  %v421 = vadd.f32 0.0, %v420
  %422 = vmatmul.f32.gmra.mxu0 %v311
  %v423 = vpop.f32.mrf.mxu0
  %v424 = vadd.f32 0.0, %v423
  %425 = vmatmul.f32.gmra.mxu0 %v314
  %v426 = vpop.f32.mrf.mxu0
  %v427 = vadd.f32 0.0, %v426
  %428 = vdwg.mxu0
  %v430 = vsel %vm219, %v51, 0
  %v433 = vsel %vm219, %v52, 0
  %v436 = vsel %vm219, %v53, 0
  %v439 = vsel %vm219, %v54, 0
  %v442 = vsel %vm219, %v55, 0
  %v445 = vsel %vm219, %v56, 0
  %v448 = vsel %vm219, %v57, 0
  %v451 = vsel %vm219, %v58, 0
  %v454 = vsel %vm219, %v59, 0
  %v457 = vsel %vm219, %v60, 0
  %v460 = vsel %vm219, %v61, 0
  %v463 = vsel %vm219, %v62, 0
  %v466 = vsel %vm219, %v63, 0
  %v469 = vsel %vm219, %v64, 0
  %v472 = vsel %vm219, %v65, 0
  %v475 = vsel %vm219, %v66, 0
  %v478 = vsel %vm219, %v67, 0
  %v481 = vsel %vm219, %v68, 0
  %v484 = vsel %vm219, %v69, 0
  %v487 = vsel %vm219, %v70, 0
  %v490 = vsel %vm219, %v71, 0
  %v493 = vsel %vm219, %v72, 0
  %v496 = vsel %vm219, %v73, 0
  %v499 = vsel %vm219, %v74, 0
  %v502 = vsel %vm219, %v75, 0
  %v505 = vsel %vm219, %v76, 0
  %v508 = vsel %vm219, %v77, 0
  %v511 = vsel %vm219, %v78, 0
  %v514 = vsel %vm219, %v79, 0
  %v517 = vsel %vm219, %v80, 0
  %v520 = vsel %vm219, %v81, 0
  %v523 = vsel %vm219, %v82, 0
  %525 = vmatpush.msra.mxu0 0.0
  %526 = vmatpush.msra.mxu0 0.0
  %527 = vmatpush.msra.mxu0 0.0
  %528 = vmatpush.msra.mxu0 0.0
  %529 = vmatpush.msra.mxu0 0.0
  %530 = vmatpush.msra.mxu0 0.0
  %531 = vmatpush.msra.mxu0 0.0
  %532 = vmatpush.msra.mxu0 0.0
  %533 = vmatpush.msra.mxu0 0.0
  %534 = vmatpush.msra.mxu0 0.0
  %535 = vmatpush.msra.mxu0 %v132
  %536 = vmatpush.msra.mxu0 %v129
  %537 = vmatpush.msra.mxu0 %v126
  %538 = vmatpush.msra.mxu0 %v123
  %539 = vmatpush.msra.mxu0 %v120
  %540 = vmatpush.msra.mxu0 %v117
  %541 = vmatmul.f32.gmra.mxu0 %v430
  %v542 = vpop.f32.mrf.mxu0
  %v543 = vadd.f32 %v334, %v542
  %544 = vmatmul.f32.gmra.mxu0 %v433
  %v545 = vpop.f32.mrf.mxu0
  %v546 = vadd.f32 %v337, %v545
  %547 = vmatmul.f32.gmra.mxu0 %v436
  %v548 = vpop.f32.mrf.mxu0
  %v549 = vadd.f32 %v340, %v548
  %550 = vmatmul.f32.gmra.mxu0 %v439
  %v551 = vpop.f32.mrf.mxu0
  %v552 = vadd.f32 %v343, %v551
  %553 = vmatmul.f32.gmra.mxu0 %v442
  %v554 = vpop.f32.mrf.mxu0
  %v555 = vadd.f32 %v346, %v554
  %556 = vmatmul.f32.gmra.mxu0 %v445
  %v557 = vpop.f32.mrf.mxu0
  %v558 = vadd.f32 %v349, %v557
  %559 = vmatmul.f32.gmra.mxu0 %v448
  %v560 = vpop.f32.mrf.mxu0
  %v561 = vadd.f32 %v352, %v560
  %562 = vmatmul.f32.gmra.mxu0 %v451
  %v563 = vpop.f32.mrf.mxu0
  %v564 = vadd.f32 %v355, %v563
  %565 = vmatmul.f32.gmra.mxu0 %v454
  %v566 = vpop.f32.mrf.mxu0
  %v567 = vadd.f32 %v358, %v566
  %568 = vmatmul.f32.gmra.mxu0 %v457
  %v569 = vpop.f32.mrf.mxu0
  %v570 = vadd.f32 %v361, %v569
  %571 = vmatmul.f32.gmra.mxu0 %v460
  %v572 = vpop.f32.mrf.mxu0
  %v573 = vadd.f32 %v364, %v572
  %574 = vmatmul.f32.gmra.mxu0 %v463
  %v575 = vpop.f32.mrf.mxu0
  %v576 = vadd.f32 %v367, %v575
  %577 = vmatmul.f32.gmra.mxu0 %v466
  %v578 = vpop.f32.mrf.mxu0
  %v579 = vadd.f32 %v370, %v578
  %580 = vmatmul.f32.gmra.mxu0 %v469
  %v581 = vpop.f32.mrf.mxu0
  %v582 = vadd.f32 %v373, %v581
  %583 = vmatmul.f32.gmra.mxu0 %v472
  %v584 = vpop.f32.mrf.mxu0
  %v585 = vadd.f32 %v376, %v584
  %586 = vmatmul.f32.gmra.mxu0 %v475
  %v587 = vpop.f32.mrf.mxu0
  %v588 = vadd.f32 %v379, %v587
  %589 = vmatmul.f32.gmra.mxu0 %v478
  %v590 = vpop.f32.mrf.mxu0
  %v591 = vadd.f32 %v382, %v590
  %592 = vmatmul.f32.gmra.mxu0 %v481
  %v593 = vpop.f32.mrf.mxu0
  %v594 = vadd.f32 %v385, %v593
  %595 = vmatmul.f32.gmra.mxu0 %v484
  %v596 = vpop.f32.mrf.mxu0
  %v597 = vadd.f32 %v388, %v596
  %598 = vmatmul.f32.gmra.mxu0 %v487
  %v599 = vpop.f32.mrf.mxu0
  %v600 = vadd.f32 %v391, %v599
  %601 = vmatmul.f32.gmra.mxu0 %v490
  %v602 = vpop.f32.mrf.mxu0
  %v603 = vadd.f32 %v394, %v602
  %604 = vmatmul.f32.gmra.mxu0 %v493
  %v605 = vpop.f32.mrf.mxu0
  %v606 = vadd.f32 %v397, %v605
  %607 = vmatmul.f32.gmra.mxu0 %v496
  %v608 = vpop.f32.mrf.mxu0
  %v609 = vadd.f32 %v400, %v608
  %610 = vmatmul.f32.gmra.mxu0 %v499
  %v611 = vpop.f32.mrf.mxu0
  %v612 = vadd.f32 %v403, %v611
  %613 = vmatmul.f32.gmra.mxu0 %v502
  %v614 = vpop.f32.mrf.mxu0
  %v615 = vadd.f32 %v406, %v614
  %616 = vmatmul.f32.gmra.mxu0 %v505
  %v617 = vpop.f32.mrf.mxu0
  %v618 = vadd.f32 %v409, %v617
  %619 = vmatmul.f32.gmra.mxu0 %v508
  %v620 = vpop.f32.mrf.mxu0
  %v621 = vadd.f32 %v412, %v620
  %622 = vmatmul.f32.gmra.mxu0 %v511
  %v623 = vpop.f32.mrf.mxu0
  %v624 = vadd.f32 %v415, %v623
  %625 = vmatmul.f32.gmra.mxu0 %v514
  %v626 = vpop.f32.mrf.mxu0
  %v627 = vadd.f32 %v418, %v626
  %628 = vmatmul.f32.gmra.mxu0 %v517
  %v629 = vpop.f32.mrf.mxu0
  %v630 = vadd.f32 %v421, %v629
  %631 = vmatmul.f32.gmra.mxu0 %v520
  %v632 = vpop.f32.mrf.mxu0
  %v633 = vadd.f32 %v424, %v632
  %634 = vmatmul.f32.gmra.mxu0 %v523
  %v635 = vpop.f32.mrf.mxu0
  %v636 = vadd.f32 %v427, %v635
  %637 = vdwg.mxu0
  %s638 = scalar_lea.vmem %s2, 512
  %v639 = vld [vmem:[%s638] sm:$0xff]
  %v640 = vld [vmem:[%s638 + $0x8] sm:$0xff]
  %v641 = vld [vmem:[%s638 + $0x10] sm:$0xff]
  %v642 = vld [vmem:[%s638 + $0x18] sm:$0xff]
  %v643 = vld [vmem:[%s638 + $0x20] sm:$0xff]
  %v644 = vld [vmem:[%s638 + $0x28] sm:$0xff]
  %v645 = vld [vmem:[%s638 + $0x30] sm:$0xff]
  %v646 = vld [vmem:[%s638 + $0x38] sm:$0xff]
  %v647 = vld [vmem:[%s638 + $0x40] sm:$0xff]
  %v648 = vld [vmem:[%s638 + $0x48] sm:$0xff]
  %v649 = vld [vmem:[%s638 + $0x50] sm:$0xff]
  %v650 = vld [vmem:[%s638 + $0x58] sm:$0xff]
  %v651 = vld [vmem:[%s638 + $0x60] sm:$0xff]
  %v652 = vld [vmem:[%s638 + $0x68] sm:$0xff]
  %v653 = vld [vmem:[%s638 + $0x70] sm:$0xff]
  %v654 = vld [vmem:[%s638 + $0x78] sm:$0xff]
  %v655 = vld [vmem:[%s638 + $0x80] sm:$0xff]
  %v656 = vld [vmem:[%s638 + $0x88] sm:$0xff]
  %v657 = vld [vmem:[%s638 + $0x90] sm:$0xff]
  %v658 = vld [vmem:[%s638 + $0x98] sm:$0xff]
  %v659 = vld [vmem:[%s638 + $0xa0] sm:$0xff]
  %v660 = vld [vmem:[%s638 + $0xa8] sm:$0xff]
  %v661 = vld [vmem:[%s638 + $0xb0] sm:$0xff]
  %v662 = vld [vmem:[%s638 + $0xb8] sm:$0xff]
  %v663 = vld [vmem:[%s638 + $0xc0] sm:$0xff]
  %v664 = vld [vmem:[%s638 + $0xc8] sm:$0xff]
  %v665 = vld [vmem:[%s638 + $0xd0] sm:$0xff]
  %v666 = vld [vmem:[%s638 + $0xd8] sm:$0xff]
  %v667 = vld [vmem:[%s638 + $0xe0] sm:$0xff]
  %v668 = vld [vmem:[%s638 + $0xe8] sm:$0xff]
  %v669 = vld [vmem:[%s638 + $0xf0] sm:$0xff]
  %v670 = vld [vmem:[%s638 + $0xf8] sm:$0xff]
  %s671 = scalar_lea.vmem %s1, 256
  %v672 = vld [vmem:[%s671] sm:$0xff]
  %v673 = vld [vmem:[%s671 + $0x8] sm:$0xff]
  %v674 = vld [vmem:[%s671 + $0x10] sm:$0xff]
  %v675 = vld [vmem:[%s671 + $0x18] sm:$0xff]
  %v676 = vld [vmem:[%s671 + $0x20] sm:$0xff]
  %v677 = vld [vmem:[%s671 + $0x28] sm:$0xff]
  %v678 = vld [vmem:[%s671 + $0x30] sm:$0xff]
  %v679 = vld [vmem:[%s671 + $0x38] sm:$0xff]
  %v680 = vld [vmem:[%s671 + $0x40] sm:$0xff]
  %v681 = vld [vmem:[%s671 + $0x48] sm:$0xff]
  %v682 = vld [vmem:[%s671 + $0x50] sm:$0xff]
  %v683 = vld [vmem:[%s671 + $0x58] sm:$0xff]
  %v684 = vld [vmem:[%s671 + $0x60] sm:$0xff]
  %v685 = vld [vmem:[%s671 + $0x68] sm:$0xff]
  %v686 = vld [vmem:[%s671 + $0x70] sm:$0xff]
  %v687 = vld [vmem:[%s671 + $0x78] sm:$0xff]
  %688 = vmatpush.msra.mxu0 %v687
  %689 = vmatpush.msra.mxu0 %v686
  %690 = vmatpush.msra.mxu0 %v685
  %691 = vmatpush.msra.mxu0 %v684
  %692 = vmatpush.msra.mxu0 %v683
  %693 = vmatpush.msra.mxu0 %v682
  %694 = vmatpush.msra.mxu0 %v681
  %695 = vmatpush.msra.mxu0 %v680
  %696 = vmatpush.msra.mxu0 %v679
  %697 = vmatpush.msra.mxu0 %v678
  %698 = vmatpush.msra.mxu0 %v677
  %699 = vmatpush.msra.mxu0 %v676
  %700 = vmatpush.msra.mxu0 %v675
  %701 = vmatpush.msra.mxu0 %v674
  %702 = vmatpush.msra.mxu0 %v673
  %703 = vmatpush.msra.mxu0 %v672
  %704 = vmatmul.f32.gmra.mxu0 %v45
  %v705 = vpop.f32.mrf.mxu0
  %v706 = vadd.f32 0.0, %v705
  %707 = vmatmul.f32.gmra.mxu0 %v46
  %v708 = vpop.f32.mrf.mxu0
  %v709 = vadd.f32 0.0, %v708
  %710 = vmatmul.f32.gmra.mxu0 %v47
  %v711 = vpop.f32.mrf.mxu0
  %v712 = vadd.f32 0.0, %v711
  %713 = vmatmul.f32.gmra.mxu0 %v48
  %v714 = vpop.f32.mrf.mxu0
  %v715 = vadd.f32 0.0, %v714
  %716 = vmatmul.f32.gmra.mxu0 %v49
  %v717 = vpop.f32.mrf.mxu0
  %v718 = vadd.f32 0.0, %v717
  %719 = vmatmul.f32.gmra.mxu0 %v50
  %v720 = vpop.f32.mrf.mxu0
  %v721 = vadd.f32 0.0, %v720
  %722 = vdwg.mxu0
  %v724 = vsel %vm219, %v639, 0
  %v727 = vsel %vm219, %v640, 0
  %v730 = vsel %vm219, %v641, 0
  %v733 = vsel %vm219, %v642, 0
  %v736 = vsel %vm219, %v643, 0
  %v739 = vsel %vm219, %v644, 0
  %v742 = vsel %vm219, %v645, 0
  %v745 = vsel %vm219, %v646, 0
  %v748 = vsel %vm219, %v647, 0
  %v751 = vsel %vm219, %v648, 0
  %v754 = vsel %vm219, %v649, 0
  %v757 = vsel %vm219, %v650, 0
  %v760 = vsel %vm219, %v651, 0
  %v763 = vsel %vm219, %v652, 0
  %v766 = vsel %vm219, %v653, 0
  %v769 = vsel %vm219, %v654, 0
  %v772 = vsel %vm219, %v655, 0
  %v775 = vsel %vm219, %v656, 0
  %v778 = vsel %vm219, %v657, 0
  %v781 = vsel %vm219, %v658, 0
  %v784 = vsel %vm219, %v659, 0
  %v787 = vsel %vm219, %v660, 0
  %v790 = vsel %vm219, %v661, 0
  %v793 = vsel %vm219, %v662, 0
  %v796 = vsel %vm219, %v663, 0
  %v799 = vsel %vm219, %v664, 0
  %v802 = vsel %vm219, %v665, 0
  %v805 = vsel %vm219, %v666, 0
  %v808 = vsel %vm219, %v667, 0
  %v811 = vsel %vm219, %v668, 0
  %v814 = vsel %vm219, %v669, 0
  %v817 = vsel %vm219, %v670, 0
  %819 = vmatpush.msra.mxu0 0.0
  %820 = vmatpush.msra.mxu0 0.0
  %821 = vmatpush.msra.mxu0 0.0
  %822 = vmatpush.msra.mxu0 0.0
  %823 = vmatpush.msra.mxu0 0.0
  %824 = vmatpush.msra.mxu0 0.0
  %825 = vmatpush.msra.mxu0 0.0
  %826 = vmatpush.msra.mxu0 0.0
  %827 = vmatpush.msra.mxu0 0.0
  %828 = vmatpush.msra.mxu0 0.0
  %829 = vmatpush.msra.mxu0 %v721
  %830 = vmatpush.msra.mxu0 %v718
  %831 = vmatpush.msra.mxu0 %v715
  %832 = vmatpush.msra.mxu0 %v712
  %833 = vmatpush.msra.mxu0 %v709
  %834 = vmatpush.msra.mxu0 %v706
  %835 = vmatmul.f32.gmra.mxu0 %v724
  %v836 = vpop.f32.mrf.mxu0
  %v837 = vadd.f32 0.0, %v836
  %838 = vmatmul.f32.gmra.mxu0 %v727
  %v839 = vpop.f32.mrf.mxu0
  %v840 = vadd.f32 0.0, %v839
  %841 = vmatmul.f32.gmra.mxu0 %v730
  %v842 = vpop.f32.mrf.mxu0
  %v843 = vadd.f32 0.0, %v842
  %844 = vmatmul.f32.gmra.mxu0 %v733
  %v845 = vpop.f32.mrf.mxu0
  %v846 = vadd.f32 0.0, %v845
  %847 = vmatmul.f32.gmra.mxu0 %v736
  %v848 = vpop.f32.mrf.mxu0
  %v849 = vadd.f32 0.0, %v848
  %850 = vmatmul.f32.gmra.mxu0 %v739
  %v851 = vpop.f32.mrf.mxu0
  %v852 = vadd.f32 0.0, %v851
  %853 = vmatmul.f32.gmra.mxu0 %v742
  %v854 = vpop.f32.mrf.mxu0
  %v855 = vadd.f32 0.0, %v854
  %856 = vmatmul.f32.gmra.mxu0 %v745
  %v857 = vpop.f32.mrf.mxu0
  %v858 = vadd.f32 0.0, %v857
  %859 = vmatmul.f32.gmra.mxu0 %v748
  %v860 = vpop.f32.mrf.mxu0
  %v861 = vadd.f32 0.0, %v860
  %862 = vmatmul.f32.gmra.mxu0 %v751
  %v863 = vpop.f32.mrf.mxu0
  %v864 = vadd.f32 0.0, %v863
  %865 = vmatmul.f32.gmra.mxu0 %v754
  %v866 = vpop.f32.mrf.mxu0
  %v867 = vadd.f32 0.0, %v866
  %868 = vmatmul.f32.gmra.mxu0 %v757
  %v869 = vpop.f32.mrf.mxu0
  %v870 = vadd.f32 0.0, %v869
  %871 = vmatmul.f32.gmra.mxu0 %v760
  %v872 = vpop.f32.mrf.mxu0
  %v873 = vadd.f32 0.0, %v872
  %874 = vmatmul.f32.gmra.mxu0 %v763
  %v875 = vpop.f32.mrf.mxu0
  %v876 = vadd.f32 0.0, %v875
  %877 = vmatmul.f32.gmra.mxu0 %v766
  %v878 = vpop.f32.mrf.mxu0
  %v879 = vadd.f32 0.0, %v878
  %880 = vmatmul.f32.gmra.mxu0 %v769
  %v881 = vpop.f32.mrf.mxu0
  %v882 = vadd.f32 0.0, %v881
  %883 = vmatmul.f32.gmra.mxu0 %v772
  %v884 = vpop.f32.mrf.mxu0
  %v885 = vadd.f32 0.0, %v884
  %886 = vmatmul.f32.gmra.mxu0 %v775
  %v887 = vpop.f32.mrf.mxu0
  %v888 = vadd.f32 0.0, %v887
  %889 = vmatmul.f32.gmra.mxu0 %v778
  %v890 = vpop.f32.mrf.mxu0
  %v891 = vadd.f32 0.0, %v890
  %892 = vmatmul.f32.gmra.mxu0 %v781
  %v893 = vpop.f32.mrf.mxu0
  %v894 = vadd.f32 0.0, %v893
  %895 = vmatmul.f32.gmra.mxu0 %v784
  %v896 = vpop.f32.mrf.mxu0
  %v897 = vadd.f32 0.0, %v896
  %898 = vmatmul.f32.gmra.mxu0 %v787
  %v899 = vpop.f32.mrf.mxu0
  %v900 = vadd.f32 0.0, %v899
  %901 = vmatmul.f32.gmra.mxu0 %v790
  %v902 = vpop.f32.mrf.mxu0
  %v903 = vadd.f32 0.0, %v902
  %904 = vmatmul.f32.gmra.mxu0 %v793
  %v905 = vpop.f32.mrf.mxu0
  %v906 = vadd.f32 0.0, %v905
  %907 = vmatmul.f32.gmra.mxu0 %v796
  %v908 = vpop.f32.mrf.mxu0
  %v909 = vadd.f32 0.0, %v908
  %910 = vmatmul.f32.gmra.mxu0 %v799
  %v911 = vpop.f32.mrf.mxu0
  %v912 = vadd.f32 0.0, %v911
  %913 = vmatmul.f32.gmra.mxu0 %v802
  %v914 = vpop.f32.mrf.mxu0
  %v915 = vadd.f32 0.0, %v914
  %916 = vmatmul.f32.gmra.mxu0 %v805
  %v917 = vpop.f32.mrf.mxu0
  %v918 = vadd.f32 0.0, %v917
  %919 = vmatmul.f32.gmra.mxu0 %v808
  %v920 = vpop.f32.mrf.mxu0
  %v921 = vadd.f32 0.0, %v920
  %922 = vmatmul.f32.gmra.mxu0 %v811
  %v923 = vpop.f32.mrf.mxu0
  %v924 = vadd.f32 0.0, %v923
  %925 = vmatmul.f32.gmra.mxu0 %v814
  %v926 = vpop.f32.mrf.mxu0
  %v927 = vadd.f32 0.0, %v926
  %928 = vmatmul.f32.gmra.mxu0 %v817
  %v929 = vpop.f32.mrf.mxu0
  %v930 = vadd.f32 0.0, %v929
  %931 = vdwg.mxu0
  %v932 = vadd.f32 %v543, %v837
  %v933 = vadd.f32 %v546, %v840
  %v934 = vadd.f32 %v549, %v843
  %v935 = vadd.f32 %v552, %v846
  %v936 = vadd.f32 %v555, %v849
  %v937 = vadd.f32 %v558, %v852
  %v938 = vadd.f32 %v561, %v855
  %v939 = vadd.f32 %v564, %v858
  %v940 = vadd.f32 %v567, %v861
  %v941 = vadd.f32 %v570, %v864
  %v942 = vadd.f32 %v573, %v867
  %v943 = vadd.f32 %v576, %v870
  %v944 = vadd.f32 %v579, %v873
  %v945 = vadd.f32 %v582, %v876
  %v946 = vadd.f32 %v585, %v879
  %v947 = vadd.f32 %v588, %v882
  %v948 = vadd.f32 %v591, %v885
  %v949 = vadd.f32 %v594, %v888
  %v950 = vadd.f32 %v597, %v891
  %v951 = vadd.f32 %v600, %v894
  %v952 = vadd.f32 %v603, %v897
  %v953 = vadd.f32 %v606, %v900
  %v954 = vadd.f32 %v609, %v903
  %v955 = vadd.f32 %v612, %v906
  %v956 = vadd.f32 %v615, %v909
  %v957 = vadd.f32 %v618, %v912
  %v958 = vadd.f32 %v621, %v915
  %v959 = vadd.f32 %v624, %v918
  %v960 = vadd.f32 %v627, %v921
  %v961 = vadd.f32 %v630, %v924
  %v962 = vadd.f32 %v633, %v927
  %v963 = vadd.f32 %v636, %v930
  %v964 = vld [vmem:[%s6] sm:$0xff]
  %v965 = vld [vmem:[%s6 + $0x8] sm:$0xff]
  %v966 = vld [vmem:[%s6 + $0x10] sm:$0xff]
  %v967 = vld [vmem:[%s6 + $0x18] sm:$0xff]
  %v968 = vld [vmem:[%s7] sm:$0xff]
  %v969 = vld [vmem:[%s7 + $0x8] sm:$0xff]
  %v970 = vld [vmem:[%s7 + $0x10] sm:$0xff]
  %v971 = vld [vmem:[%s7 + $0x18] sm:$0xff]
  %v972 = vld [vmem:[%s7 + $0x20] sm:$0xff]
  %v973 = vld [vmem:[%s7 + $0x28] sm:$0xff]
  %v974 = vld [vmem:[%s7 + $0x30] sm:$0xff]
  %v975 = vld [vmem:[%s7 + $0x38] sm:$0xff]
  %v976 = vld [vmem:[%s7 + $0x40] sm:$0xff]
  %v977 = vld [vmem:[%s7 + $0x48] sm:$0xff]
  %v978 = vld [vmem:[%s7 + $0x50] sm:$0xff]
  %v979 = vld [vmem:[%s7 + $0x58] sm:$0xff]
  %v980 = vld [vmem:[%s7 + $0x60] sm:$0xff]
  %v981 = vld [vmem:[%s7 + $0x68] sm:$0xff]
  %v982 = vld [vmem:[%s7 + $0x70] sm:$0xff]
  %v983 = vld [vmem:[%s7 + $0x78] sm:$0xff]
  %v984 = vld [vmem:[%s7 + $0x80] sm:$0xff]
  %v985 = vld [vmem:[%s7 + $0x88] sm:$0xff]
  %v986 = vld [vmem:[%s7 + $0x90] sm:$0xff]
  %v987 = vld [vmem:[%s7 + $0x98] sm:$0xff]
  %v988 = vld [vmem:[%s7 + $0xa0] sm:$0xff]
  %v989 = vld [vmem:[%s7 + $0xa8] sm:$0xff]
  %v990 = vld [vmem:[%s7 + $0xb0] sm:$0xff]
  %v991 = vld [vmem:[%s7 + $0xb8] sm:$0xff]
  %v992 = vld [vmem:[%s7 + $0xc0] sm:$0xff]
  %v993 = vld [vmem:[%s7 + $0xc8] sm:$0xff]
  %v994 = vld [vmem:[%s7 + $0xd0] sm:$0xff]
  %v995 = vld [vmem:[%s7 + $0xd8] sm:$0xff]
  %v996 = vld [vmem:[%s7 + $0xe0] sm:$0xff]
  %v997 = vld [vmem:[%s7 + $0xe8] sm:$0xff]
  %v998 = vld [vmem:[%s7 + $0xf0] sm:$0xff]
  %v999 = vld [vmem:[%s7 + $0xf8] sm:$0xff]
  %v1001 = vperm.slane %v44, 0
  %v1003 = vmul.f32 %v932, %v1001
  %v1004 = vmul.f32 %v933, %v1001
  %v1005 = vmul.f32 %v934, %v1001
  %v1006 = vmul.f32 %v935, %v1001
  %v1007 = vmul.f32 %v936, %v1001
  %v1008 = vmul.f32 %v937, %v1001
  %v1009 = vmul.f32 %v938, %v1001
  %v1010 = vmul.f32 %v939, %v1001
  %v1011 = vmul.f32 %v940, %v1001
  %v1012 = vmul.f32 %v941, %v1001
  %v1013 = vmul.f32 %v942, %v1001
  %v1014 = vmul.f32 %v943, %v1001
  %v1015 = vmul.f32 %v944, %v1001
  %v1016 = vmul.f32 %v945, %v1001
  %v1017 = vmul.f32 %v946, %v1001
  %v1018 = vmul.f32 %v947, %v1001
  %v1019 = vmul.f32 %v948, %v1001
  %v1020 = vmul.f32 %v949, %v1001
  %v1021 = vmul.f32 %v950, %v1001
  %v1022 = vmul.f32 %v951, %v1001
  %v1023 = vmul.f32 %v952, %v1001
  %v1024 = vmul.f32 %v953, %v1001
  %v1025 = vmul.f32 %v954, %v1001
  %v1026 = vmul.f32 %v955, %v1001
  %v1027 = vmul.f32 %v956, %v1001
  %v1028 = vmul.f32 %v957, %v1001
  %v1029 = vmul.f32 %v958, %v1001
  %v1030 = vmul.f32 %v959, %v1001
  %v1031 = vmul.f32 %v960, %v1001
  %v1032 = vmul.f32 %v961, %v1001
  %v1033 = vmul.f32 %v962, %v1001
  %v1034 = vmul.f32 %v963, %v1001
  %1035 = vmatpush.msra.mxu0 %v1018
  %1036 = vmatpush.msra.mxu0 %v1017
  %1037 = vmatpush.msra.mxu0 %v1016
  %1038 = vmatpush.msra.mxu0 %v1015
  %1039 = vmatpush.msra.mxu0 %v1014
  %1040 = vmatpush.msra.mxu0 %v1013
  %1041 = vmatpush.msra.mxu0 %v1012
  %1042 = vmatpush.msra.mxu0 %v1011
  %1043 = vmatpush.msra.mxu0 %v1010
  %1044 = vmatpush.msra.mxu0 %v1009
  %1045 = vmatpush.msra.mxu0 %v1008
  %1046 = vmatpush.msra.mxu0 %v1007
  %1047 = vmatpush.msra.mxu0 %v1006
  %1048 = vmatpush.msra.mxu0 %v1005
  %1049 = vmatpush.msra.mxu0 %v1004
  %1050 = vmatpush.msra.mxu0 %v1003
  %1051 = vmatmul.f32.gmra.mxu0 %v964
  %v1052 = vpop.f32.mrf.mxu0
  %v1053 = vadd.f32 0.0, %v1052
  %1054 = vmatmul.f32.gmra.mxu0 %v966
  %v1055 = vpop.f32.mrf.mxu0
  %v1056 = vadd.f32 0.0, %v1055
  %1057 = vdwg.mxu0
  %1058 = vmatpush.msra.mxu0 %v1034
  %1059 = vmatpush.msra.mxu0 %v1033
  %1060 = vmatpush.msra.mxu0 %v1032
  %1061 = vmatpush.msra.mxu0 %v1031
  %1062 = vmatpush.msra.mxu0 %v1030
  %1063 = vmatpush.msra.mxu0 %v1029
  %1064 = vmatpush.msra.mxu0 %v1028
  %1065 = vmatpush.msra.mxu0 %v1027
  %1066 = vmatpush.msra.mxu0 %v1026
  %1067 = vmatpush.msra.mxu0 %v1025
  %1068 = vmatpush.msra.mxu0 %v1024
  %1069 = vmatpush.msra.mxu0 %v1023
  %1070 = vmatpush.msra.mxu0 %v1022
  %1071 = vmatpush.msra.mxu0 %v1021
  %1072 = vmatpush.msra.mxu0 %v1020
  %1073 = vmatpush.msra.mxu0 %v1019
  %1074 = vmatmul.f32.gmra.mxu0 %v965
  %v1075 = vpop.f32.mrf.mxu0
  %v1076 = vadd.f32 %v1053, %v1075
  %1077 = vmatmul.f32.gmra.mxu0 %v967
  %v1078 = vpop.f32.mrf.mxu0
  %v1079 = vadd.f32 %v1056, %v1078
  %1080 = vdwg.mxu0
  %vm1081 = vcmask 130048
  %v1083 = vsel %vm1081, %v968, 0
  %v1086 = vsel %vm1081, %v969, 0
  %v1089 = vsel %vm1081, %v970, 0
  %v1092 = vsel %vm1081, %v971, 0
  %v1095 = vsel %vm1081, %v972, 0
  %v1098 = vsel %vm1081, %v973, 0
  %v1101 = vsel %vm1081, %v974, 0
  %v1104 = vsel %vm1081, %v975, 0
  %v1107 = vsel %vm1081, %v976, 0
  %v1110 = vsel %vm1081, %v977, 0
  %v1113 = vsel %vm1081, %v978, 0
  %v1116 = vsel %vm1081, %v979, 0
  %v1119 = vsel %vm1081, %v980, 0
  %v1122 = vsel %vm1081, %v981, 0
  %v1125 = vsel %vm1081, %v982, 0
  %v1128 = vsel %vm1081, %v983, 0
  %v1131 = vsel %vm1081, %v984, 0
  %v1134 = vsel %vm1081, %v985, 0
  %v1137 = vsel %vm1081, %v986, 0
  %v1140 = vsel %vm1081, %v987, 0
  %v1143 = vsel %vm1081, %v988, 0
  %v1146 = vsel %vm1081, %v989, 0
  %v1149 = vsel %vm1081, %v990, 0
  %v1152 = vsel %vm1081, %v991, 0
  %v1155 = vsel %vm1081, %v992, 0
  %v1158 = vsel %vm1081, %v993, 0
  %v1161 = vsel %vm1081, %v994, 0
  %v1164 = vsel %vm1081, %v995, 0
  %v1167 = vsel %vm1081, %v996, 0
  %v1170 = vsel %vm1081, %v997, 0
  %v1173 = vsel %vm1081, %v998, 0
  %v1176 = vsel %vm1081, %v999, 0
  %1178 = vmatpush.msra.mxu0 0.0
  %1179 = vmatpush.msra.mxu0 0.0
  %1180 = vmatpush.msra.mxu0 0.0
  %1181 = vmatpush.msra.mxu0 0.0
  %1182 = vmatpush.msra.mxu0 0.0
  %1183 = vmatpush.msra.mxu0 0.0
  %1184 = vmatpush.msra.mxu0 0.0
  %1185 = vmatpush.msra.mxu0 0.0
  %1186 = vmatpush.msra.mxu0 0.0
  %1187 = vmatpush.msra.mxu0 0.0
  %1188 = vmatpush.msra.mxu0 0.0
  %1189 = vmatpush.msra.mxu0 0.0
  %1190 = vmatpush.msra.mxu0 0.0
  %1191 = vmatpush.msra.mxu0 0.0
  %1192 = vmatpush.msra.mxu0 %v1079
  %1193 = vmatpush.msra.mxu0 %v1076
  %1194 = vmatmul.f32.gmra.mxu0 %v1083
  %v1195 = vpop.f32.mrf.mxu0
  %v1196 = vadd.f32 0.0, %v1195
  %1197 = vmatmul.f32.gmra.mxu0 %v1086
  %v1198 = vpop.f32.mrf.mxu0
  %v1199 = vadd.f32 0.0, %v1198
  %1200 = vmatmul.f32.gmra.mxu0 %v1089
  %v1201 = vpop.f32.mrf.mxu0
  %v1202 = vadd.f32 0.0, %v1201
  %1203 = vmatmul.f32.gmra.mxu0 %v1092
  %v1204 = vpop.f32.mrf.mxu0
  %v1205 = vadd.f32 0.0, %v1204
  %1206 = vmatmul.f32.gmra.mxu0 %v1095
  %v1207 = vpop.f32.mrf.mxu0
  %v1208 = vadd.f32 0.0, %v1207
  %1209 = vmatmul.f32.gmra.mxu0 %v1098
  %v1210 = vpop.f32.mrf.mxu0
  %v1211 = vadd.f32 0.0, %v1210
  %1212 = vmatmul.f32.gmra.mxu0 %v1101
  %v1213 = vpop.f32.mrf.mxu0
  %v1214 = vadd.f32 0.0, %v1213
  %1215 = vmatmul.f32.gmra.mxu0 %v1104
  %v1216 = vpop.f32.mrf.mxu0
  %v1217 = vadd.f32 0.0, %v1216
  %1218 = vmatmul.f32.gmra.mxu0 %v1107
  %v1219 = vpop.f32.mrf.mxu0
  %v1220 = vadd.f32 0.0, %v1219
  %1221 = vmatmul.f32.gmra.mxu0 %v1110
  %v1222 = vpop.f32.mrf.mxu0
  %v1223 = vadd.f32 0.0, %v1222
  %1224 = vmatmul.f32.gmra.mxu0 %v1113
  %v1225 = vpop.f32.mrf.mxu0
  %v1226 = vadd.f32 0.0, %v1225
  %1227 = vmatmul.f32.gmra.mxu0 %v1116
  %v1228 = vpop.f32.mrf.mxu0
  %v1229 = vadd.f32 0.0, %v1228
  %1230 = vmatmul.f32.gmra.mxu0 %v1119
  %v1231 = vpop.f32.mrf.mxu0
  %v1232 = vadd.f32 0.0, %v1231
  %1233 = vmatmul.f32.gmra.mxu0 %v1122
  %v1234 = vpop.f32.mrf.mxu0
  %v1235 = vadd.f32 0.0, %v1234
  %1236 = vmatmul.f32.gmra.mxu0 %v1125
  %v1237 = vpop.f32.mrf.mxu0
  %v1238 = vadd.f32 0.0, %v1237
  %1239 = vmatmul.f32.gmra.mxu0 %v1128
  %v1240 = vpop.f32.mrf.mxu0
  %v1241 = vadd.f32 0.0, %v1240
  %1242 = vmatmul.f32.gmra.mxu0 %v1131
  %v1243 = vpop.f32.mrf.mxu0
  %v1244 = vadd.f32 0.0, %v1243
  %1245 = vmatmul.f32.gmra.mxu0 %v1134
  %v1246 = vpop.f32.mrf.mxu0
  %v1247 = vadd.f32 0.0, %v1246
  %1248 = vmatmul.f32.gmra.mxu0 %v1137
  %v1249 = vpop.f32.mrf.mxu0
  %v1250 = vadd.f32 0.0, %v1249
  %1251 = vmatmul.f32.gmra.mxu0 %v1140
  %v1252 = vpop.f32.mrf.mxu0
  %v1253 = vadd.f32 0.0, %v1252
  %1254 = vmatmul.f32.gmra.mxu0 %v1143
  %v1255 = vpop.f32.mrf.mxu0
  %v1256 = vadd.f32 0.0, %v1255
  %1257 = vmatmul.f32.gmra.mxu0 %v1146
  %v1258 = vpop.f32.mrf.mxu0
  %v1259 = vadd.f32 0.0, %v1258
  %1260 = vmatmul.f32.gmra.mxu0 %v1149
  %v1261 = vpop.f32.mrf.mxu0
  %v1262 = vadd.f32 0.0, %v1261
  %1263 = vmatmul.f32.gmra.mxu0 %v1152
  %v1264 = vpop.f32.mrf.mxu0
  %v1265 = vadd.f32 0.0, %v1264
  %1266 = vmatmul.f32.gmra.mxu0 %v1155
  %v1267 = vpop.f32.mrf.mxu0
  %v1268 = vadd.f32 0.0, %v1267
  %1269 = vmatmul.f32.gmra.mxu0 %v1158
  %v1270 = vpop.f32.mrf.mxu0
  %v1271 = vadd.f32 0.0, %v1270
  %1272 = vmatmul.f32.gmra.mxu0 %v1161
  %v1273 = vpop.f32.mrf.mxu0
  %v1274 = vadd.f32 0.0, %v1273
  %1275 = vmatmul.f32.gmra.mxu0 %v1164
  %v1276 = vpop.f32.mrf.mxu0
  %v1277 = vadd.f32 0.0, %v1276
  %1278 = vmatmul.f32.gmra.mxu0 %v1167
  %v1279 = vpop.f32.mrf.mxu0
  %v1280 = vadd.f32 0.0, %v1279
  %1281 = vmatmul.f32.gmra.mxu0 %v1170
  %v1282 = vpop.f32.mrf.mxu0
  %v1283 = vadd.f32 0.0, %v1282
  %1284 = vmatmul.f32.gmra.mxu0 %v1173
  %v1285 = vpop.f32.mrf.mxu0
  %v1286 = vadd.f32 0.0, %v1285
  %1287 = vmatmul.f32.gmra.mxu0 %v1176
  %v1288 = vpop.f32.mrf.mxu0
  %v1289 = vadd.f32 0.0, %v1288
  %1290 = vdwg.mxu0
  %1291 = vadd.xlane.f32.xlu0 %v1196
  %v1292 = vpop.xlane.xlu0 %1291
  %1293 = vadd.xlane.f32.xlu0 %v1199
  %v1294 = vpop.xlane.xlu0 %1293
  %1295 = vadd.xlane.f32.xlu0 %v1202
  %v1296 = vpop.xlane.xlu0 %1295
  %1297 = vadd.xlane.f32.xlu0 %v1205
  %v1298 = vpop.xlane.xlu0 %1297
  %1299 = vadd.xlane.f32.xlu0 %v1208
  %v1300 = vpop.xlane.xlu0 %1299
  %1301 = vadd.xlane.f32.xlu0 %v1211
  %v1302 = vpop.xlane.xlu0 %1301
  %1303 = vadd.xlane.f32.xlu0 %v1214
  %v1304 = vpop.xlane.xlu0 %1303
  %1305 = vadd.xlane.f32.xlu0 %v1217
  %v1306 = vpop.xlane.xlu0 %1305
  %1307 = vadd.xlane.f32.xlu0 %v1220
  %v1308 = vpop.xlane.xlu0 %1307
  %1309 = vadd.xlane.f32.xlu0 %v1223
  %v1310 = vpop.xlane.xlu0 %1309
  %1311 = vadd.xlane.f32.xlu0 %v1226
  %v1312 = vpop.xlane.xlu0 %1311
  %1313 = vadd.xlane.f32.xlu0 %v1229
  %v1314 = vpop.xlane.xlu0 %1313
  %1315 = vadd.xlane.f32.xlu0 %v1232
  %v1316 = vpop.xlane.xlu0 %1315
  %1317 = vadd.xlane.f32.xlu0 %v1235
  %v1318 = vpop.xlane.xlu0 %1317
  %1319 = vadd.xlane.f32.xlu0 %v1238
  %v1320 = vpop.xlane.xlu0 %1319
  %1321 = vadd.xlane.f32.xlu0 %v1241
  %v1322 = vpop.xlane.xlu0 %1321
  %1323 = vadd.xlane.f32.xlu0 %v1244
  %v1324 = vpop.xlane.xlu0 %1323
  %1325 = vadd.xlane.f32.xlu0 %v1247
  %v1326 = vpop.xlane.xlu0 %1325
  %1327 = vadd.xlane.f32.xlu0 %v1250
  %v1328 = vpop.xlane.xlu0 %1327
  %1329 = vadd.xlane.f32.xlu0 %v1253
  %v1330 = vpop.xlane.xlu0 %1329
  %1331 = vadd.xlane.f32.xlu0 %v1256
  %v1332 = vpop.xlane.xlu0 %1331
  %1333 = vadd.xlane.f32.xlu0 %v1259
  %v1334 = vpop.xlane.xlu0 %1333
  %1335 = vadd.xlane.f32.xlu0 %v1262
  %v1336 = vpop.xlane.xlu0 %1335
  %1337 = vadd.xlane.f32.xlu0 %v1265
  %v1338 = vpop.xlane.xlu0 %1337
  %1339 = vadd.xlane.f32.xlu0 %v1268
  %v1340 = vpop.xlane.xlu0 %1339
  %1341 = vadd.xlane.f32.xlu0 %v1271
  %v1342 = vpop.xlane.xlu0 %1341
  %1343 = vadd.xlane.f32.xlu0 %v1274
  %v1344 = vpop.xlane.xlu0 %1343
  %1345 = vadd.xlane.f32.xlu0 %v1277
  %v1346 = vpop.xlane.xlu0 %1345
  %1347 = vadd.xlane.f32.xlu0 %v1280
  %v1348 = vpop.xlane.xlu0 %1347
  %1349 = vadd.xlane.f32.xlu0 %v1283
  %v1350 = vpop.xlane.xlu0 %1349
  %1351 = vadd.xlane.f32.xlu0 %v1286
  %v1352 = vpop.xlane.xlu0 %1351
  %1353 = vadd.xlane.f32.xlu0 %v1289
  %v1354 = vpop.xlane.xlu0 %1353
  %v1355 = vmul.f32 %v1292, 0.00125
  %v1356 = vmul.f32 %v1294, 0.00125
  %v1357 = vmul.f32 %v1296, 0.00125
  %v1358 = vmul.f32 %v1298, 0.00125
  %v1359 = vmul.f32 %v1300, 0.00125
  %v1360 = vmul.f32 %v1302, 0.00125
  %v1361 = vmul.f32 %v1304, 0.00125
  %v1362 = vmul.f32 %v1306, 0.00125
  %v1363 = vmul.f32 %v1308, 0.00125
  %v1364 = vmul.f32 %v1310, 0.00125
  %v1365 = vmul.f32 %v1312, 0.00125
  %v1366 = vmul.f32 %v1314, 0.00125
  %v1367 = vmul.f32 %v1316, 0.00125
  %v1368 = vmul.f32 %v1318, 0.00125
  %v1369 = vmul.f32 %v1320, 0.00125
  %v1370 = vmul.f32 %v1322, 0.00125
  %v1371 = vmul.f32 %v1324, 0.00125
  %v1372 = vmul.f32 %v1326, 0.00125
  %v1373 = vmul.f32 %v1328, 0.00125
  %v1374 = vmul.f32 %v1330, 0.00125
  %v1375 = vmul.f32 %v1332, 0.00125
  %v1376 = vmul.f32 %v1334, 0.00125
  %v1377 = vmul.f32 %v1336, 0.00125
  %v1378 = vmul.f32 %v1338, 0.00125
  %v1379 = vmul.f32 %v1340, 0.00125
  %v1380 = vmul.f32 %v1342, 0.00125
  %v1381 = vmul.f32 %v1344, 0.00125
  %v1382 = vmul.f32 %v1346, 0.00125
  %v1383 = vmul.f32 %v1348, 0.00125
  %v1384 = vmul.f32 %v1350, 0.00125
  %v1385 = vmul.f32 %v1352, 0.00125
  %v1386 = vmul.f32 %v1354, 0.00125
  %v1387 = vsub.f32 %v932, %v1355
  %v1388 = vsub.f32 %v933, %v1356
  %v1389 = vsub.f32 %v934, %v1357
  %v1390 = vsub.f32 %v935, %v1358
  %v1391 = vsub.f32 %v936, %v1359
  %v1392 = vsub.f32 %v937, %v1360
  %v1393 = vsub.f32 %v938, %v1361
  %v1394 = vsub.f32 %v939, %v1362
  %v1395 = vsub.f32 %v940, %v1363
  %v1396 = vsub.f32 %v941, %v1364
  %v1397 = vsub.f32 %v942, %v1365
  %v1398 = vsub.f32 %v943, %v1366
  %v1399 = vsub.f32 %v944, %v1367
  %v1400 = vsub.f32 %v945, %v1368
  %v1401 = vsub.f32 %v946, %v1369
  %v1402 = vsub.f32 %v947, %v1370
  %v1403 = vsub.f32 %v948, %v1371
  %v1404 = vsub.f32 %v949, %v1372
  %v1405 = vsub.f32 %v950, %v1373
  %v1406 = vsub.f32 %v951, %v1374
  %v1407 = vsub.f32 %v952, %v1375
  %v1408 = vsub.f32 %v953, %v1376
  %v1409 = vsub.f32 %v954, %v1377
  %v1410 = vsub.f32 %v955, %v1378
  %v1411 = vsub.f32 %v956, %v1379
  %v1412 = vsub.f32 %v957, %v1380
  %v1413 = vsub.f32 %v958, %v1381
  %v1414 = vsub.f32 %v959, %v1382
  %v1415 = vsub.f32 %v960, %v1383
  %v1416 = vsub.f32 %v961, %v1384
  %v1417 = vsub.f32 %v962, %v1385
  %v1418 = vsub.f32 %v963, %v1386
  %v1419 = vmul.f32 %v1387, %v1001
  %v1420 = vmul.f32 %v1388, %v1001
  %v1421 = vmul.f32 %v1389, %v1001
  %v1422 = vmul.f32 %v1390, %v1001
  %v1423 = vmul.f32 %v1391, %v1001
  %v1424 = vmul.f32 %v1392, %v1001
  %v1425 = vmul.f32 %v1393, %v1001
  %v1426 = vmul.f32 %v1394, %v1001
  %v1427 = vmul.f32 %v1395, %v1001
  %v1428 = vmul.f32 %v1396, %v1001
  %v1429 = vmul.f32 %v1397, %v1001
  %v1430 = vmul.f32 %v1398, %v1001
  %v1431 = vmul.f32 %v1399, %v1001
  %v1432 = vmul.f32 %v1400, %v1001
  %v1433 = vmul.f32 %v1401, %v1001
  %v1434 = vmul.f32 %v1402, %v1001
  %v1435 = vmul.f32 %v1403, %v1001
  %v1436 = vmul.f32 %v1404, %v1001
  %v1437 = vmul.f32 %v1405, %v1001
  %v1438 = vmul.f32 %v1406, %v1001
  %v1439 = vmul.f32 %v1407, %v1001
  %v1440 = vmul.f32 %v1408, %v1001
  %v1441 = vmul.f32 %v1409, %v1001
  %v1442 = vmul.f32 %v1410, %v1001
  %v1443 = vmul.f32 %v1411, %v1001
  %v1444 = vmul.f32 %v1412, %v1001
  %v1445 = vmul.f32 %v1413, %v1001
  %v1446 = vmul.f32 %v1414, %v1001
  %v1447 = vmul.f32 %v1415, %v1001
  %v1448 = vmul.f32 %v1416, %v1001
  %v1449 = vmul.f32 %v1417, %v1001
  %v1450 = vmul.f32 %v1418, %v1001
  %v1451 = vmul.f32 %v1419, %v1419
  %v1452 = vmul.f32 %v1420, %v1420
  %v1453 = vmul.f32 %v1421, %v1421
  %v1454 = vmul.f32 %v1422, %v1422
  %v1455 = vmul.f32 %v1423, %v1423
  %v1456 = vmul.f32 %v1424, %v1424
  %v1457 = vmul.f32 %v1425, %v1425
  %v1458 = vmul.f32 %v1426, %v1426
  %v1459 = vmul.f32 %v1427, %v1427
  %v1460 = vmul.f32 %v1428, %v1428
  %v1461 = vmul.f32 %v1429, %v1429
  %v1462 = vmul.f32 %v1430, %v1430
  %v1463 = vmul.f32 %v1431, %v1431
  %v1464 = vmul.f32 %v1432, %v1432
  %v1465 = vmul.f32 %v1433, %v1433
  %v1466 = vmul.f32 %v1434, %v1434
  %v1467 = vmul.f32 %v1435, %v1435
  %v1468 = vmul.f32 %v1436, %v1436
  %v1469 = vmul.f32 %v1437, %v1437
  %v1470 = vmul.f32 %v1438, %v1438
  %v1471 = vmul.f32 %v1439, %v1439
  %v1472 = vmul.f32 %v1440, %v1440
  %v1473 = vmul.f32 %v1441, %v1441
  %v1474 = vmul.f32 %v1442, %v1442
  %v1475 = vmul.f32 %v1443, %v1443
  %v1476 = vmul.f32 %v1444, %v1444
  %v1477 = vmul.f32 %v1445, %v1445
  %v1478 = vmul.f32 %v1446, %v1446
  %v1479 = vmul.f32 %v1447, %v1447
  %v1480 = vmul.f32 %v1448, %v1448
  %v1481 = vmul.f32 %v1449, %v1449
  %v1482 = vmul.f32 %v1450, %v1450
  %1483 = vmatpush.msra.mxu0 %v1466
  %1484 = vmatpush.msra.mxu0 %v1465
  %1485 = vmatpush.msra.mxu0 %v1464
  %1486 = vmatpush.msra.mxu0 %v1463
  %1487 = vmatpush.msra.mxu0 %v1462
  %1488 = vmatpush.msra.mxu0 %v1461
  %1489 = vmatpush.msra.mxu0 %v1460
  %1490 = vmatpush.msra.mxu0 %v1459
  %1491 = vmatpush.msra.mxu0 %v1458
  %1492 = vmatpush.msra.mxu0 %v1457
  %1493 = vmatpush.msra.mxu0 %v1456
  %1494 = vmatpush.msra.mxu0 %v1455
  %1495 = vmatpush.msra.mxu0 %v1454
  %1496 = vmatpush.msra.mxu0 %v1453
  %1497 = vmatpush.msra.mxu0 %v1452
  %1498 = vmatpush.msra.mxu0 %v1451
  %1499 = vmatmul.f32.gmra.mxu0 %v964
  %v1500 = vpop.f32.mrf.mxu0
  %v1501 = vadd.f32 0.0, %v1500
  %1502 = vmatmul.f32.gmra.mxu0 %v966
  %v1503 = vpop.f32.mrf.mxu0
  %v1504 = vadd.f32 0.0, %v1503
  %1505 = vdwg.mxu0
  %1506 = vmatpush.msra.mxu0 %v1482
  %1507 = vmatpush.msra.mxu0 %v1481
  %1508 = vmatpush.msra.mxu0 %v1480
  %1509 = vmatpush.msra.mxu0 %v1479
  %1510 = vmatpush.msra.mxu0 %v1478
  %1511 = vmatpush.msra.mxu0 %v1477
  %1512 = vmatpush.msra.mxu0 %v1476
  %1513 = vmatpush.msra.mxu0 %v1475
  %1514 = vmatpush.msra.mxu0 %v1474
  %1515 = vmatpush.msra.mxu0 %v1473
  %1516 = vmatpush.msra.mxu0 %v1472
  %1517 = vmatpush.msra.mxu0 %v1471
  %1518 = vmatpush.msra.mxu0 %v1470
  %1519 = vmatpush.msra.mxu0 %v1469
  %1520 = vmatpush.msra.mxu0 %v1468
  %1521 = vmatpush.msra.mxu0 %v1467
  %1522 = vmatmul.f32.gmra.mxu0 %v965
  %v1523 = vpop.f32.mrf.mxu0
  %v1524 = vadd.f32 %v1501, %v1523
  %1525 = vmatmul.f32.gmra.mxu0 %v967
  %v1526 = vpop.f32.mrf.mxu0
  %v1527 = vadd.f32 %v1504, %v1526
  %1528 = vdwg.mxu0
  %1529 = vmatpush.msra.mxu0 0.0
  %1530 = vmatpush.msra.mxu0 0.0
  %1531 = vmatpush.msra.mxu0 0.0
  %1532 = vmatpush.msra.mxu0 0.0
  %1533 = vmatpush.msra.mxu0 0.0
  %1534 = vmatpush.msra.mxu0 0.0
  %1535 = vmatpush.msra.mxu0 0.0
  %1536 = vmatpush.msra.mxu0 0.0
  %1537 = vmatpush.msra.mxu0 0.0
  %1538 = vmatpush.msra.mxu0 0.0
  %1539 = vmatpush.msra.mxu0 0.0
  %1540 = vmatpush.msra.mxu0 0.0
  %1541 = vmatpush.msra.mxu0 0.0
  %1542 = vmatpush.msra.mxu0 0.0
  %1543 = vmatpush.msra.mxu0 %v1527
  %1544 = vmatpush.msra.mxu0 %v1524
  %1545 = vmatmul.f32.gmra.mxu0 %v1083
  %v1546 = vpop.f32.mrf.mxu0
  %v1547 = vadd.f32 0.0, %v1546
  %1548 = vmatmul.f32.gmra.mxu0 %v1086
  %v1549 = vpop.f32.mrf.mxu0
  %v1550 = vadd.f32 0.0, %v1549
  %1551 = vmatmul.f32.gmra.mxu0 %v1089
  %v1552 = vpop.f32.mrf.mxu0
  %v1553 = vadd.f32 0.0, %v1552
  %1554 = vmatmul.f32.gmra.mxu0 %v1092
  %v1555 = vpop.f32.mrf.mxu0
  %v1556 = vadd.f32 0.0, %v1555
  %1557 = vmatmul.f32.gmra.mxu0 %v1095
  %v1558 = vpop.f32.mrf.mxu0
  %v1559 = vadd.f32 0.0, %v1558
  %1560 = vmatmul.f32.gmra.mxu0 %v1098
  %v1561 = vpop.f32.mrf.mxu0
  %v1562 = vadd.f32 0.0, %v1561
  %1563 = vmatmul.f32.gmra.mxu0 %v1101
  %v1564 = vpop.f32.mrf.mxu0
  %v1565 = vadd.f32 0.0, %v1564
  %1566 = vmatmul.f32.gmra.mxu0 %v1104
  %v1567 = vpop.f32.mrf.mxu0
  %v1568 = vadd.f32 0.0, %v1567
  %1569 = vmatmul.f32.gmra.mxu0 %v1107
  %v1570 = vpop.f32.mrf.mxu0
  %v1571 = vadd.f32 0.0, %v1570
  %1572 = vmatmul.f32.gmra.mxu0 %v1110
  %v1573 = vpop.f32.mrf.mxu0
  %v1574 = vadd.f32 0.0, %v1573
  %1575 = vmatmul.f32.gmra.mxu0 %v1113
  %v1576 = vpop.f32.mrf.mxu0
  %v1577 = vadd.f32 0.0, %v1576
  %1578 = vmatmul.f32.gmra.mxu0 %v1116
  %v1579 = vpop.f32.mrf.mxu0
  %v1580 = vadd.f32 0.0, %v1579
  %1581 = vmatmul.f32.gmra.mxu0 %v1119
  %v1582 = vpop.f32.mrf.mxu0
  %v1583 = vadd.f32 0.0, %v1582
  %1584 = vmatmul.f32.gmra.mxu0 %v1122
  %v1585 = vpop.f32.mrf.mxu0
  %v1586 = vadd.f32 0.0, %v1585
  %1587 = vmatmul.f32.gmra.mxu0 %v1125
  %v1588 = vpop.f32.mrf.mxu0
  %v1589 = vadd.f32 0.0, %v1588
  %1590 = vmatmul.f32.gmra.mxu0 %v1128
  %v1591 = vpop.f32.mrf.mxu0
  %v1592 = vadd.f32 0.0, %v1591
  %1593 = vmatmul.f32.gmra.mxu0 %v1131
  %v1594 = vpop.f32.mrf.mxu0
  %v1595 = vadd.f32 0.0, %v1594
  %1596 = vmatmul.f32.gmra.mxu0 %v1134
  %v1597 = vpop.f32.mrf.mxu0
  %v1598 = vadd.f32 0.0, %v1597
  %1599 = vmatmul.f32.gmra.mxu0 %v1137
  %v1600 = vpop.f32.mrf.mxu0
  %v1601 = vadd.f32 0.0, %v1600
  %1602 = vmatmul.f32.gmra.mxu0 %v1140
  %v1603 = vpop.f32.mrf.mxu0
  %v1604 = vadd.f32 0.0, %v1603
  %1605 = vmatmul.f32.gmra.mxu0 %v1143
  %v1606 = vpop.f32.mrf.mxu0
  %v1607 = vadd.f32 0.0, %v1606
  %1608 = vmatmul.f32.gmra.mxu0 %v1146
  %v1609 = vpop.f32.mrf.mxu0
  %v1610 = vadd.f32 0.0, %v1609
  %1611 = vmatmul.f32.gmra.mxu0 %v1149
  %v1612 = vpop.f32.mrf.mxu0
  %v1613 = vadd.f32 0.0, %v1612
  %1614 = vmatmul.f32.gmra.mxu0 %v1152
  %v1615 = vpop.f32.mrf.mxu0
  %v1616 = vadd.f32 0.0, %v1615
  %1617 = vmatmul.f32.gmra.mxu0 %v1155
  %v1618 = vpop.f32.mrf.mxu0
  %v1619 = vadd.f32 0.0, %v1618
  %1620 = vmatmul.f32.gmra.mxu0 %v1158
  %v1621 = vpop.f32.mrf.mxu0
  %v1622 = vadd.f32 0.0, %v1621
  %1623 = vmatmul.f32.gmra.mxu0 %v1161
  %v1624 = vpop.f32.mrf.mxu0
  %v1625 = vadd.f32 0.0, %v1624
  %1626 = vmatmul.f32.gmra.mxu0 %v1164
  %v1627 = vpop.f32.mrf.mxu0
  %v1628 = vadd.f32 0.0, %v1627
  %1629 = vmatmul.f32.gmra.mxu0 %v1167
  %v1630 = vpop.f32.mrf.mxu0
  %v1631 = vadd.f32 0.0, %v1630
  %1632 = vmatmul.f32.gmra.mxu0 %v1170
  %v1633 = vpop.f32.mrf.mxu0
  %v1634 = vadd.f32 0.0, %v1633
  %1635 = vmatmul.f32.gmra.mxu0 %v1173
  %v1636 = vpop.f32.mrf.mxu0
  %v1637 = vadd.f32 0.0, %v1636
  %1638 = vmatmul.f32.gmra.mxu0 %v1176
  %v1639 = vpop.f32.mrf.mxu0
  %v1640 = vadd.f32 0.0, %v1639
  %1641 = vdwg.mxu0
  %1642 = vadd.xlane.f32.xlu0 %v1547
  %v1643 = vpop.xlane.xlu0 %1642
  %1644 = vadd.xlane.f32.xlu0 %v1550
  %v1645 = vpop.xlane.xlu0 %1644
  %1646 = vadd.xlane.f32.xlu0 %v1553
  %v1647 = vpop.xlane.xlu0 %1646
  %1648 = vadd.xlane.f32.xlu0 %v1556
  %v1649 = vpop.xlane.xlu0 %1648
  %1650 = vadd.xlane.f32.xlu0 %v1559
  %v1651 = vpop.xlane.xlu0 %1650
  %1652 = vadd.xlane.f32.xlu0 %v1562
  %v1653 = vpop.xlane.xlu0 %1652
  %1654 = vadd.xlane.f32.xlu0 %v1565
  %v1655 = vpop.xlane.xlu0 %1654
  %1656 = vadd.xlane.f32.xlu0 %v1568
  %v1657 = vpop.xlane.xlu0 %1656
  %1658 = vadd.xlane.f32.xlu0 %v1571
  %v1659 = vpop.xlane.xlu0 %1658
  %1660 = vadd.xlane.f32.xlu0 %v1574
  %v1661 = vpop.xlane.xlu0 %1660
  %1662 = vadd.xlane.f32.xlu0 %v1577
  %v1663 = vpop.xlane.xlu0 %1662
  %1664 = vadd.xlane.f32.xlu0 %v1580
  %v1665 = vpop.xlane.xlu0 %1664
  %1666 = vadd.xlane.f32.xlu0 %v1583
  %v1667 = vpop.xlane.xlu0 %1666
  %1668 = vadd.xlane.f32.xlu0 %v1586
  %v1669 = vpop.xlane.xlu0 %1668
  %1670 = vadd.xlane.f32.xlu0 %v1589
  %v1671 = vpop.xlane.xlu0 %1670
  %1672 = vadd.xlane.f32.xlu0 %v1592
  %v1673 = vpop.xlane.xlu0 %1672
  %1674 = vadd.xlane.f32.xlu0 %v1595
  %v1675 = vpop.xlane.xlu0 %1674
  %1676 = vadd.xlane.f32.xlu0 %v1598
  %v1677 = vpop.xlane.xlu0 %1676
  %1678 = vadd.xlane.f32.xlu0 %v1601
  %v1679 = vpop.xlane.xlu0 %1678
  %1680 = vadd.xlane.f32.xlu0 %v1604
  %v1681 = vpop.xlane.xlu0 %1680
  %1682 = vadd.xlane.f32.xlu0 %v1607
  %v1683 = vpop.xlane.xlu0 %1682
  %1684 = vadd.xlane.f32.xlu0 %v1610
  %v1685 = vpop.xlane.xlu0 %1684
  %1686 = vadd.xlane.f32.xlu0 %v1613
  %v1687 = vpop.xlane.xlu0 %1686
  %1688 = vadd.xlane.f32.xlu0 %v1616
  %v1689 = vpop.xlane.xlu0 %1688
  %1690 = vadd.xlane.f32.xlu0 %v1619
  %v1691 = vpop.xlane.xlu0 %1690
  %1692 = vadd.xlane.f32.xlu0 %v1622
  %v1693 = vpop.xlane.xlu0 %1692
  %1694 = vadd.xlane.f32.xlu0 %v1625
  %v1695 = vpop.xlane.xlu0 %1694
  %1696 = vadd.xlane.f32.xlu0 %v1628
  %v1697 = vpop.xlane.xlu0 %1696
  %1698 = vadd.xlane.f32.xlu0 %v1631
  %v1699 = vpop.xlane.xlu0 %1698
  %1700 = vadd.xlane.f32.xlu0 %v1634
  %v1701 = vpop.xlane.xlu0 %1700
  %1702 = vadd.xlane.f32.xlu0 %v1637
  %v1703 = vpop.xlane.xlu0 %1702
  %1704 = vadd.xlane.f32.xlu0 %v1640
  %v1705 = vpop.xlane.xlu0 %1704
  %v1706 = vmul.f32 %v1643, 0.00125
  %v1707 = vmul.f32 %v1645, 0.00125
  %v1708 = vmul.f32 %v1647, 0.00125
  %v1709 = vmul.f32 %v1649, 0.00125
  %v1710 = vmul.f32 %v1651, 0.00125
  %v1711 = vmul.f32 %v1653, 0.00125
  %v1712 = vmul.f32 %v1655, 0.00125
  %v1713 = vmul.f32 %v1657, 0.00125
  %v1714 = vmul.f32 %v1659, 0.00125
  %v1715 = vmul.f32 %v1661, 0.00125
  %v1716 = vmul.f32 %v1663, 0.00125
  %v1717 = vmul.f32 %v1665, 0.00125
  %v1718 = vmul.f32 %v1667, 0.00125
  %v1719 = vmul.f32 %v1669, 0.00125
  %v1720 = vmul.f32 %v1671, 0.00125
  %v1721 = vmul.f32 %v1673, 0.00125
  %v1722 = vmul.f32 %v1675, 0.00125
  %v1723 = vmul.f32 %v1677, 0.00125
  %v1724 = vmul.f32 %v1679, 0.00125
  %v1725 = vmul.f32 %v1681, 0.00125
  %v1726 = vmul.f32 %v1683, 0.00125
  %v1727 = vmul.f32 %v1685, 0.00125
  %v1728 = vmul.f32 %v1687, 0.00125
  %v1729 = vmul.f32 %v1689, 0.00125
  %v1730 = vmul.f32 %v1691, 0.00125
  %v1731 = vmul.f32 %v1693, 0.00125
  %v1732 = vmul.f32 %v1695, 0.00125
  %v1733 = vmul.f32 %v1697, 0.00125
  %v1734 = vmul.f32 %v1699, 0.00125
  %v1735 = vmul.f32 %v1701, 0.00125
  %v1736 = vmul.f32 %v1703, 0.00125
  %v1737 = vmul.f32 %v1705, 0.00125
  %v1738 = vadd.f32 %v1706, 1e-05
  %v1739 = vadd.f32 %v1707, 1e-05
  %v1740 = vadd.f32 %v1708, 1e-05
  %v1741 = vadd.f32 %v1709, 1e-05
  %v1742 = vadd.f32 %v1710, 1e-05
  %v1743 = vadd.f32 %v1711, 1e-05
  %v1744 = vadd.f32 %v1712, 1e-05
  %v1745 = vadd.f32 %v1713, 1e-05
  %v1746 = vadd.f32 %v1714, 1e-05
  %v1747 = vadd.f32 %v1715, 1e-05
  %v1748 = vadd.f32 %v1716, 1e-05
  %v1749 = vadd.f32 %v1717, 1e-05
  %v1750 = vadd.f32 %v1718, 1e-05
  %v1751 = vadd.f32 %v1719, 1e-05
  %v1752 = vadd.f32 %v1720, 1e-05
  %v1753 = vadd.f32 %v1721, 1e-05
  %v1754 = vadd.f32 %v1722, 1e-05
  %v1755 = vadd.f32 %v1723, 1e-05
  %v1756 = vadd.f32 %v1724, 1e-05
  %v1757 = vadd.f32 %v1725, 1e-05
  %v1758 = vadd.f32 %v1726, 1e-05
  %v1759 = vadd.f32 %v1727, 1e-05
  %v1760 = vadd.f32 %v1728, 1e-05
  %v1761 = vadd.f32 %v1729, 1e-05
  %v1762 = vadd.f32 %v1730, 1e-05
  %v1763 = vadd.f32 %v1731, 1e-05
  %v1764 = vadd.f32 %v1732, 1e-05
  %v1765 = vadd.f32 %v1733, 1e-05
  %v1766 = vadd.f32 %v1734, 1e-05
  %v1767 = vadd.f32 %v1735, 1e-05
  %v1768 = vadd.f32 %v1736, 1e-05
  %v1769 = vadd.f32 %v1737, 1e-05
  %v1770 = vrsqrt.pop %v1738
  %v1771 = vmul.f32 %v1770, %v1738
  %v1772 = vmul.f32 %v1771, %v1770
  %v1773 = vmul.f32 0.5, %v1772
  %v1774 = vsub.f32 1.5, %v1773
  %v1775 = vmul.f32 %v1770, %v1774
  %vm1776 = vweird.f32 %v1738
  %vm1777 = vweird.f32 %v1770
  %vm1778 = vmor %vm1776, %vm1777
  %v1779 = vsel %vm1778, %v1770, %v1775
  %v1780 = vrsqrt.pop %v1739
  %v1781 = vmul.f32 %v1780, %v1739
  %v1782 = vmul.f32 %v1781, %v1780
  %v1783 = vmul.f32 0.5, %v1782
  %v1784 = vsub.f32 1.5, %v1783
  %v1785 = vmul.f32 %v1780, %v1784
  %vm1786 = vweird.f32 %v1739
  %vm1787 = vweird.f32 %v1780
  %vm1788 = vmor %vm1786, %vm1787
  %v1789 = vsel %vm1788, %v1780, %v1785
  %v1790 = vrsqrt.pop %v1740
  %v1791 = vmul.f32 %v1790, %v1740
  %v1792 = vmul.f32 %v1791, %v1790
  %v1793 = vmul.f32 0.5, %v1792
  %v1794 = vsub.f32 1.5, %v1793
  %v1795 = vmul.f32 %v1790, %v1794
  %vm1796 = vweird.f32 %v1740
  %vm1797 = vweird.f32 %v1790
  %vm1798 = vmor %vm1796, %vm1797
  %v1799 = vsel %vm1798, %v1790, %v1795
  %v1800 = vrsqrt.pop %v1741
  %v1801 = vmul.f32 %v1800, %v1741
  %v1802 = vmul.f32 %v1801, %v1800
  %v1803 = vmul.f32 0.5, %v1802
  %v1804 = vsub.f32 1.5, %v1803
  %v1805 = vmul.f32 %v1800, %v1804
  %vm1806 = vweird.f32 %v1741
  %vm1807 = vweird.f32 %v1800
  %vm1808 = vmor %vm1806, %vm1807
  %v1809 = vsel %vm1808, %v1800, %v1805
  %v1810 = vrsqrt.pop %v1742
  %v1811 = vmul.f32 %v1810, %v1742
  %v1812 = vmul.f32 %v1811, %v1810
  %v1813 = vmul.f32 0.5, %v1812
  %v1814 = vsub.f32 1.5, %v1813
  %v1815 = vmul.f32 %v1810, %v1814
  %vm1816 = vweird.f32 %v1742
  %vm1817 = vweird.f32 %v1810
  %vm1818 = vmor %vm1816, %vm1817
  %v1819 = vsel %vm1818, %v1810, %v1815
  %v1820 = vrsqrt.pop %v1743
  %v1821 = vmul.f32 %v1820, %v1743
  %v1822 = vmul.f32 %v1821, %v1820
  %v1823 = vmul.f32 0.5, %v1822
  %v1824 = vsub.f32 1.5, %v1823
  %v1825 = vmul.f32 %v1820, %v1824
  %vm1826 = vweird.f32 %v1743
  %vm1827 = vweird.f32 %v1820
  %vm1828 = vmor %vm1826, %vm1827
  %v1829 = vsel %vm1828, %v1820, %v1825
  %v1830 = vrsqrt.pop %v1744
  %v1831 = vmul.f32 %v1830, %v1744
  %v1832 = vmul.f32 %v1831, %v1830
  %v1833 = vmul.f32 0.5, %v1832
  %v1834 = vsub.f32 1.5, %v1833
  %v1835 = vmul.f32 %v1830, %v1834
  %vm1836 = vweird.f32 %v1744
  %vm1837 = vweird.f32 %v1830
  %vm1838 = vmor %vm1836, %vm1837
  %v1839 = vsel %vm1838, %v1830, %v1835
  %v1840 = vrsqrt.pop %v1745
  %v1841 = vmul.f32 %v1840, %v1745
  %v1842 = vmul.f32 %v1841, %v1840
  %v1843 = vmul.f32 0.5, %v1842
  %v1844 = vsub.f32 1.5, %v1843
  %v1845 = vmul.f32 %v1840, %v1844
  %vm1846 = vweird.f32 %v1745
  %vm1847 = vweird.f32 %v1840
  %vm1848 = vmor %vm1846, %vm1847
  %v1849 = vsel %vm1848, %v1840, %v1845
  %v1850 = vrsqrt.pop %v1746
  %v1851 = vmul.f32 %v1850, %v1746
  %v1852 = vmul.f32 %v1851, %v1850
  %v1853 = vmul.f32 0.5, %v1852
  %v1854 = vsub.f32 1.5, %v1853
  %v1855 = vmul.f32 %v1850, %v1854
  %vm1856 = vweird.f32 %v1746
  %vm1857 = vweird.f32 %v1850
  %vm1858 = vmor %vm1856, %vm1857
  %v1859 = vsel %vm1858, %v1850, %v1855
  %v1860 = vrsqrt.pop %v1747
  %v1861 = vmul.f32 %v1860, %v1747
  %v1862 = vmul.f32 %v1861, %v1860
  %v1863 = vmul.f32 0.5, %v1862
  %v1864 = vsub.f32 1.5, %v1863
  %v1865 = vmul.f32 %v1860, %v1864
  %vm1866 = vweird.f32 %v1747
  %vm1867 = vweird.f32 %v1860
  %vm1868 = vmor %vm1866, %vm1867
  %v1869 = vsel %vm1868, %v1860, %v1865
  %v1870 = vrsqrt.pop %v1748
  %v1871 = vmul.f32 %v1870, %v1748
  %v1872 = vmul.f32 %v1871, %v1870
  %v1873 = vmul.f32 0.5, %v1872
  %v1874 = vsub.f32 1.5, %v1873
  %v1875 = vmul.f32 %v1870, %v1874
  %vm1876 = vweird.f32 %v1748
  %vm1877 = vweird.f32 %v1870
  %vm1878 = vmor %vm1876, %vm1877
  %v1879 = vsel %vm1878, %v1870, %v1875
  %v1880 = vrsqrt.pop %v1749
  %v1881 = vmul.f32 %v1880, %v1749
  %v1882 = vmul.f32 %v1881, %v1880
  %v1883 = vmul.f32 0.5, %v1882
  %v1884 = vsub.f32 1.5, %v1883
  %v1885 = vmul.f32 %v1880, %v1884
  %vm1886 = vweird.f32 %v1749
  %vm1887 = vweird.f32 %v1880
  %vm1888 = vmor %vm1886, %vm1887
  %v1889 = vsel %vm1888, %v1880, %v1885
  %v1890 = vrsqrt.pop %v1750
  %v1891 = vmul.f32 %v1890, %v1750
  %v1892 = vmul.f32 %v1891, %v1890
  %v1893 = vmul.f32 0.5, %v1892
  %v1894 = vsub.f32 1.5, %v1893
  %v1895 = vmul.f32 %v1890, %v1894
  %vm1896 = vweird.f32 %v1750
  %vm1897 = vweird.f32 %v1890
  %vm1898 = vmor %vm1896, %vm1897
  %v1899 = vsel %vm1898, %v1890, %v1895
  %v1900 = vrsqrt.pop %v1751
  %v1901 = vmul.f32 %v1900, %v1751
  %v1902 = vmul.f32 %v1901, %v1900
  %v1903 = vmul.f32 0.5, %v1902
  %v1904 = vsub.f32 1.5, %v1903
  %v1905 = vmul.f32 %v1900, %v1904
  %vm1906 = vweird.f32 %v1751
  %vm1907 = vweird.f32 %v1900
  %vm1908 = vmor %vm1906, %vm1907
  %v1909 = vsel %vm1908, %v1900, %v1905
  %v1910 = vrsqrt.pop %v1752
  %v1911 = vmul.f32 %v1910, %v1752
  %v1912 = vmul.f32 %v1911, %v1910
  %v1913 = vmul.f32 0.5, %v1912
  %v1914 = vsub.f32 1.5, %v1913
  %v1915 = vmul.f32 %v1910, %v1914
  %vm1916 = vweird.f32 %v1752
  %vm1917 = vweird.f32 %v1910
  %vm1918 = vmor %vm1916, %vm1917
  %v1919 = vsel %vm1918, %v1910, %v1915
  %v1920 = vrsqrt.pop %v1753
  %v1921 = vmul.f32 %v1920, %v1753
  %v1922 = vmul.f32 %v1921, %v1920
  %v1923 = vmul.f32 0.5, %v1922
  %v1924 = vsub.f32 1.5, %v1923
  %v1925 = vmul.f32 %v1920, %v1924
  %vm1926 = vweird.f32 %v1753
  %vm1927 = vweird.f32 %v1920
  %vm1928 = vmor %vm1926, %vm1927
  %v1929 = vsel %vm1928, %v1920, %v1925
  %v1930 = vrsqrt.pop %v1754
  %v1931 = vmul.f32 %v1930, %v1754
  %v1932 = vmul.f32 %v1931, %v1930
  %v1933 = vmul.f32 0.5, %v1932
  %v1934 = vsub.f32 1.5, %v1933
  %v1935 = vmul.f32 %v1930, %v1934
  %vm1936 = vweird.f32 %v1754
  %vm1937 = vweird.f32 %v1930
  %vm1938 = vmor %vm1936, %vm1937
  %v1939 = vsel %vm1938, %v1930, %v1935
  %v1940 = vrsqrt.pop %v1755
  %v1941 = vmul.f32 %v1940, %v1755
  %v1942 = vmul.f32 %v1941, %v1940
  %v1943 = vmul.f32 0.5, %v1942
  %v1944 = vsub.f32 1.5, %v1943
  %v1945 = vmul.f32 %v1940, %v1944
  %vm1946 = vweird.f32 %v1755
  %vm1947 = vweird.f32 %v1940
  %vm1948 = vmor %vm1946, %vm1947
  %v1949 = vsel %vm1948, %v1940, %v1945
  %v1950 = vrsqrt.pop %v1756
  %v1951 = vmul.f32 %v1950, %v1756
  %v1952 = vmul.f32 %v1951, %v1950
  %v1953 = vmul.f32 0.5, %v1952
  %v1954 = vsub.f32 1.5, %v1953
  %v1955 = vmul.f32 %v1950, %v1954
  %vm1956 = vweird.f32 %v1756
  %vm1957 = vweird.f32 %v1950
  %vm1958 = vmor %vm1956, %vm1957
  %v1959 = vsel %vm1958, %v1950, %v1955
  %v1960 = vrsqrt.pop %v1757
  %v1961 = vmul.f32 %v1960, %v1757
  %v1962 = vmul.f32 %v1961, %v1960
  %v1963 = vmul.f32 0.5, %v1962
  %v1964 = vsub.f32 1.5, %v1963
  %v1965 = vmul.f32 %v1960, %v1964
  %vm1966 = vweird.f32 %v1757
  %vm1967 = vweird.f32 %v1960
  %vm1968 = vmor %vm1966, %vm1967
  %v1969 = vsel %vm1968, %v1960, %v1965
  %v1970 = vrsqrt.pop %v1758
  %v1971 = vmul.f32 %v1970, %v1758
  %v1972 = vmul.f32 %v1971, %v1970
  %v1973 = vmul.f32 0.5, %v1972
  %v1974 = vsub.f32 1.5, %v1973
  %v1975 = vmul.f32 %v1970, %v1974
  %vm1976 = vweird.f32 %v1758
  %vm1977 = vweird.f32 %v1970
  %vm1978 = vmor %vm1976, %vm1977
  %v1979 = vsel %vm1978, %v1970, %v1975
  %v1980 = vrsqrt.pop %v1759
  %v1981 = vmul.f32 %v1980, %v1759
  %v1982 = vmul.f32 %v1981, %v1980
  %v1983 = vmul.f32 0.5, %v1982
  %v1984 = vsub.f32 1.5, %v1983
  %v1985 = vmul.f32 %v1980, %v1984
  %vm1986 = vweird.f32 %v1759
  %vm1987 = vweird.f32 %v1980
  %vm1988 = vmor %vm1986, %vm1987
  %v1989 = vsel %vm1988, %v1980, %v1985
  %v1990 = vrsqrt.pop %v1760
  %v1991 = vmul.f32 %v1990, %v1760
  %v1992 = vmul.f32 %v1991, %v1990
  %v1993 = vmul.f32 0.5, %v1992
  %v1994 = vsub.f32 1.5, %v1993
  %v1995 = vmul.f32 %v1990, %v1994
  %vm1996 = vweird.f32 %v1760
  %vm1997 = vweird.f32 %v1990
  %vm1998 = vmor %vm1996, %vm1997
  %v1999 = vsel %vm1998, %v1990, %v1995
  %v2000 = vrsqrt.pop %v1761
  %v2001 = vmul.f32 %v2000, %v1761
  %v2002 = vmul.f32 %v2001, %v2000
  %v2003 = vmul.f32 0.5, %v2002
  %v2004 = vsub.f32 1.5, %v2003
  %v2005 = vmul.f32 %v2000, %v2004
  %vm2006 = vweird.f32 %v1761
  %vm2007 = vweird.f32 %v2000
  %vm2008 = vmor %vm2006, %vm2007
  %v2009 = vsel %vm2008, %v2000, %v2005
  %v2010 = vrsqrt.pop %v1762
  %v2011 = vmul.f32 %v2010, %v1762
  %v2012 = vmul.f32 %v2011, %v2010
  %v2013 = vmul.f32 0.5, %v2012
  %v2014 = vsub.f32 1.5, %v2013
  %v2015 = vmul.f32 %v2010, %v2014
  %vm2016 = vweird.f32 %v1762
  %vm2017 = vweird.f32 %v2010
  %vm2018 = vmor %vm2016, %vm2017
  %v2019 = vsel %vm2018, %v2010, %v2015
  %v2020 = vrsqrt.pop %v1763
  %v2021 = vmul.f32 %v2020, %v1763
  %v2022 = vmul.f32 %v2021, %v2020
  %v2023 = vmul.f32 0.5, %v2022
  %v2024 = vsub.f32 1.5, %v2023
  %v2025 = vmul.f32 %v2020, %v2024
  %vm2026 = vweird.f32 %v1763
  %vm2027 = vweird.f32 %v2020
  %vm2028 = vmor %vm2026, %vm2027
  %v2029 = vsel %vm2028, %v2020, %v2025
  %v2030 = vrsqrt.pop %v1764
  %v2031 = vmul.f32 %v2030, %v1764
  %v2032 = vmul.f32 %v2031, %v2030
  %v2033 = vmul.f32 0.5, %v2032
  %v2034 = vsub.f32 1.5, %v2033
  %v2035 = vmul.f32 %v2030, %v2034
  %vm2036 = vweird.f32 %v1764
  %vm2037 = vweird.f32 %v2030
  %vm2038 = vmor %vm2036, %vm2037
  %v2039 = vsel %vm2038, %v2030, %v2035
  %v2040 = vrsqrt.pop %v1765
  %v2041 = vmul.f32 %v2040, %v1765
  %v2042 = vmul.f32 %v2041, %v2040
  %v2043 = vmul.f32 0.5, %v2042
  %v2044 = vsub.f32 1.5, %v2043
  %v2045 = vmul.f32 %v2040, %v2044
  %vm2046 = vweird.f32 %v1765
  %vm2047 = vweird.f32 %v2040
  %vm2048 = vmor %vm2046, %vm2047
  %v2049 = vsel %vm2048, %v2040, %v2045
  %v2050 = vrsqrt.pop %v1766
  %v2051 = vmul.f32 %v2050, %v1766
  %v2052 = vmul.f32 %v2051, %v2050
  %v2053 = vmul.f32 0.5, %v2052
  %v2054 = vsub.f32 1.5, %v2053
  %v2055 = vmul.f32 %v2050, %v2054
  %vm2056 = vweird.f32 %v1766
  %vm2057 = vweird.f32 %v2050
  %vm2058 = vmor %vm2056, %vm2057
  %v2059 = vsel %vm2058, %v2050, %v2055
  %v2060 = vrsqrt.pop %v1767
  %v2061 = vmul.f32 %v2060, %v1767
  %v2062 = vmul.f32 %v2061, %v2060
  %v2063 = vmul.f32 0.5, %v2062
  %v2064 = vsub.f32 1.5, %v2063
  %v2065 = vmul.f32 %v2060, %v2064
  %vm2066 = vweird.f32 %v1767
  %vm2067 = vweird.f32 %v2060
  %vm2068 = vmor %vm2066, %vm2067
  %v2069 = vsel %vm2068, %v2060, %v2065
  %v2070 = vrsqrt.pop %v1768
  %v2071 = vmul.f32 %v2070, %v1768
  %v2072 = vmul.f32 %v2071, %v2070
  %v2073 = vmul.f32 0.5, %v2072
  %v2074 = vsub.f32 1.5, %v2073
  %v2075 = vmul.f32 %v2070, %v2074
  %vm2076 = vweird.f32 %v1768
  %vm2077 = vweird.f32 %v2070
  %vm2078 = vmor %vm2076, %vm2077
  %v2079 = vsel %vm2078, %v2070, %v2075
  %v2080 = vrsqrt.pop %v1769
  %v2081 = vmul.f32 %v2080, %v1769
  %v2082 = vmul.f32 %v2081, %v2080
  %v2083 = vmul.f32 0.5, %v2082
  %v2084 = vsub.f32 1.5, %v2083
  %v2085 = vmul.f32 %v2080, %v2084
  %vm2086 = vweird.f32 %v1769
  %vm2087 = vweird.f32 %v2080
  %vm2088 = vmor %vm2086, %vm2087
  %v2089 = vsel %vm2088, %v2080, %v2085
  %v2090 = vmul.f32 %v1419, %v1779
  %v2091 = vmul.f32 %v1420, %v1789
  %v2092 = vmul.f32 %v1421, %v1799
  %v2093 = vmul.f32 %v1422, %v1809
  %v2094 = vmul.f32 %v1423, %v1819
  %v2095 = vmul.f32 %v1424, %v1829
  %v2096 = vmul.f32 %v1425, %v1839
  %v2097 = vmul.f32 %v1426, %v1849
  %v2098 = vmul.f32 %v1427, %v1859
  %v2099 = vmul.f32 %v1428, %v1869
  %v2100 = vmul.f32 %v1429, %v1879
  %v2101 = vmul.f32 %v1430, %v1889
  %v2102 = vmul.f32 %v1431, %v1899
  %v2103 = vmul.f32 %v1432, %v1909
  %v2104 = vmul.f32 %v1433, %v1919
  %v2105 = vmul.f32 %v1434, %v1929
  %v2106 = vmul.f32 %v1435, %v1939
  %v2107 = vmul.f32 %v1436, %v1949
  %v2108 = vmul.f32 %v1437, %v1959
  %v2109 = vmul.f32 %v1438, %v1969
  %v2110 = vmul.f32 %v1439, %v1979
  %v2111 = vmul.f32 %v1440, %v1989
  %v2112 = vmul.f32 %v1441, %v1999
  %v2113 = vmul.f32 %v1442, %v2009
  %v2114 = vmul.f32 %v1443, %v2019
  %v2115 = vmul.f32 %v1444, %v2029
  %v2116 = vmul.f32 %v1445, %v2039
  %v2117 = vmul.f32 %v1446, %v2049
  %v2118 = vmul.f32 %v1447, %v2059
  %v2119 = vmul.f32 %v1448, %v2069
  %v2120 = vmul.f32 %v1449, %v2079
  %v2121 = vmul.f32 %v1450, %v2089
  %v2122 = vld [vmem:[%s3] sm:$0xff]
  %v2123 = vld [vmem:[%s3 + $0x8] sm:$0xff]
  %v2124 = vld [vmem:[%s3 + $0x10] sm:$0xff]
  %v2125 = vld [vmem:[%s3 + $0x18] sm:$0xff]
  %v2126 = vld [vmem:[%s3 + $0x20] sm:$0xff]
  %v2127 = vld [vmem:[%s3 + $0x28] sm:$0xff]
  %v2128 = vld [vmem:[%s3 + $0x30] sm:$0xff]
  %v2129 = vld [vmem:[%s3 + $0x38] sm:$0xff]
  %v2130 = vld [vmem:[%s3 + $0x40] sm:$0xff]
  %v2131 = vld [vmem:[%s3 + $0x48] sm:$0xff]
  %v2132 = vld [vmem:[%s3 + $0x50] sm:$0xff]
  %v2133 = vld [vmem:[%s3 + $0x58] sm:$0xff]
  %v2134 = vld [vmem:[%s3 + $0x60] sm:$0xff]
  %v2135 = vld [vmem:[%s3 + $0x68] sm:$0xff]
  %v2136 = vld [vmem:[%s3 + $0x70] sm:$0xff]
  %v2137 = vld [vmem:[%s3 + $0x78] sm:$0xff]
  %v2138 = vld [vmem:[%s3 + $0x80] sm:$0xff]
  %v2139 = vld [vmem:[%s3 + $0x88] sm:$0xff]
  %v2140 = vld [vmem:[%s3 + $0x90] sm:$0xff]
  %v2141 = vld [vmem:[%s3 + $0x98] sm:$0xff]
  %v2142 = vld [vmem:[%s3 + $0xa0] sm:$0xff]
  %v2143 = vld [vmem:[%s3 + $0xa8] sm:$0xff]
  %v2144 = vld [vmem:[%s3 + $0xb0] sm:$0xff]
  %v2145 = vld [vmem:[%s3 + $0xb8] sm:$0xff]
  %v2146 = vld [vmem:[%s3 + $0xc0] sm:$0xff]
  %v2147 = vld [vmem:[%s3 + $0xc8] sm:$0xff]
  %v2148 = vld [vmem:[%s3 + $0xd0] sm:$0xff]
  %v2149 = vld [vmem:[%s3 + $0xd8] sm:$0xff]
  %v2150 = vld [vmem:[%s3 + $0xe0] sm:$0xff]
  %v2151 = vld [vmem:[%s3 + $0xe8] sm:$0xff]
  %v2152 = vld [vmem:[%s3 + $0xf0] sm:$0xff]
  %v2153 = vld [vmem:[%s3 + $0xf8] sm:$0xff]
  %v2155 = vsel %vm219, %v2122, 0
  %v2158 = vsel %vm219, %v2123, 0
  %v2161 = vsel %vm219, %v2124, 0
  %v2164 = vsel %vm219, %v2125, 0
  %v2167 = vsel %vm219, %v2126, 0
  %v2170 = vsel %vm219, %v2127, 0
  %v2173 = vsel %vm219, %v2128, 0
  %v2176 = vsel %vm219, %v2129, 0
  %v2179 = vsel %vm219, %v2130, 0
  %v2182 = vsel %vm219, %v2131, 0
  %v2185 = vsel %vm219, %v2132, 0
  %v2188 = vsel %vm219, %v2133, 0
  %v2191 = vsel %vm219, %v2134, 0
  %v2194 = vsel %vm219, %v2135, 0
  %v2197 = vsel %vm219, %v2136, 0
  %v2200 = vsel %vm219, %v2137, 0
  %v2203 = vsel %vm219, %v2138, 0
  %v2206 = vsel %vm219, %v2139, 0
  %v2209 = vsel %vm219, %v2140, 0
  %v2212 = vsel %vm219, %v2141, 0
  %v2215 = vsel %vm219, %v2142, 0
  %v2218 = vsel %vm219, %v2143, 0
  %v2221 = vsel %vm219, %v2144, 0
  %v2224 = vsel %vm219, %v2145, 0
  %v2227 = vsel %vm219, %v2146, 0
  %v2230 = vsel %vm219, %v2147, 0
  %v2233 = vsel %vm219, %v2148, 0
  %v2236 = vsel %vm219, %v2149, 0
  %v2239 = vsel %vm219, %v2150, 0
  %v2242 = vsel %vm219, %v2151, 0
  %v2245 = vsel %vm219, %v2152, 0
  %v2248 = vsel %vm219, %v2153, 0
  %2250 = vmatpush.msra.mxu0 0.0
  %2251 = vmatpush.msra.mxu0 0.0
  %2252 = vmatpush.msra.mxu0 0.0
  %2253 = vmatpush.msra.mxu0 0.0
  %2254 = vmatpush.msra.mxu0 0.0
  %2255 = vmatpush.msra.mxu0 0.0
  %2256 = vmatpush.msra.mxu0 0.0
  %2257 = vmatpush.msra.mxu0 0.0
  %2258 = vmatpush.msra.mxu0 0.0
  %2259 = vmatpush.msra.mxu0 0.0
  %2260 = vmatpush.msra.mxu0 %v50
  %2261 = vmatpush.msra.mxu0 %v49
  %2262 = vmatpush.msra.mxu0 %v48
  %2263 = vmatpush.msra.mxu0 %v47
  %2264 = vmatpush.msra.mxu0 %v46
  %2265 = vmatpush.msra.mxu0 %v45
  %2266 = vmatmul.f32.gmra.mxu0 %v2155
  %v2267 = vpop.f32.mrf.mxu0
  %v2268 = vadd.f32 0.0, %v2267
  %2269 = vmatmul.f32.gmra.mxu0 %v2158
  %v2270 = vpop.f32.mrf.mxu0
  %v2271 = vadd.f32 0.0, %v2270
  %2272 = vmatmul.f32.gmra.mxu0 %v2161
  %v2273 = vpop.f32.mrf.mxu0
  %v2274 = vadd.f32 0.0, %v2273
  %2275 = vmatmul.f32.gmra.mxu0 %v2164
  %v2276 = vpop.f32.mrf.mxu0
  %v2277 = vadd.f32 0.0, %v2276
  %2278 = vmatmul.f32.gmra.mxu0 %v2167
  %v2279 = vpop.f32.mrf.mxu0
  %v2280 = vadd.f32 0.0, %v2279
  %2281 = vmatmul.f32.gmra.mxu0 %v2170
  %v2282 = vpop.f32.mrf.mxu0
  %v2283 = vadd.f32 0.0, %v2282
  %2284 = vmatmul.f32.gmra.mxu0 %v2173
  %v2285 = vpop.f32.mrf.mxu0
  %v2286 = vadd.f32 0.0, %v2285
  %2287 = vmatmul.f32.gmra.mxu0 %v2176
  %v2288 = vpop.f32.mrf.mxu0
  %v2289 = vadd.f32 0.0, %v2288
  %2290 = vmatmul.f32.gmra.mxu0 %v2179
  %v2291 = vpop.f32.mrf.mxu0
  %v2292 = vadd.f32 0.0, %v2291
  %2293 = vmatmul.f32.gmra.mxu0 %v2182
  %v2294 = vpop.f32.mrf.mxu0
  %v2295 = vadd.f32 0.0, %v2294
  %2296 = vmatmul.f32.gmra.mxu0 %v2185
  %v2297 = vpop.f32.mrf.mxu0
  %v2298 = vadd.f32 0.0, %v2297
  %2299 = vmatmul.f32.gmra.mxu0 %v2188
  %v2300 = vpop.f32.mrf.mxu0
  %v2301 = vadd.f32 0.0, %v2300
  %2302 = vmatmul.f32.gmra.mxu0 %v2191
  %v2303 = vpop.f32.mrf.mxu0
  %v2304 = vadd.f32 0.0, %v2303
  %2305 = vmatmul.f32.gmra.mxu0 %v2194
  %v2306 = vpop.f32.mrf.mxu0
  %v2307 = vadd.f32 0.0, %v2306
  %2308 = vmatmul.f32.gmra.mxu0 %v2197
  %v2309 = vpop.f32.mrf.mxu0
  %v2310 = vadd.f32 0.0, %v2309
  %2311 = vmatmul.f32.gmra.mxu0 %v2200
  %v2312 = vpop.f32.mrf.mxu0
  %v2313 = vadd.f32 0.0, %v2312
  %2314 = vmatmul.f32.gmra.mxu0 %v2203
  %v2315 = vpop.f32.mrf.mxu0
  %v2316 = vadd.f32 0.0, %v2315
  %2317 = vmatmul.f32.gmra.mxu0 %v2206
  %v2318 = vpop.f32.mrf.mxu0
  %v2319 = vadd.f32 0.0, %v2318
  %2320 = vmatmul.f32.gmra.mxu0 %v2209
  %v2321 = vpop.f32.mrf.mxu0
  %v2322 = vadd.f32 0.0, %v2321
  %2323 = vmatmul.f32.gmra.mxu0 %v2212
  %v2324 = vpop.f32.mrf.mxu0
  %v2325 = vadd.f32 0.0, %v2324
  %2326 = vmatmul.f32.gmra.mxu0 %v2215
  %v2327 = vpop.f32.mrf.mxu0
  %v2328 = vadd.f32 0.0, %v2327
  %2329 = vmatmul.f32.gmra.mxu0 %v2218
  %v2330 = vpop.f32.mrf.mxu0
  %v2331 = vadd.f32 0.0, %v2330
  %2332 = vmatmul.f32.gmra.mxu0 %v2221
  %v2333 = vpop.f32.mrf.mxu0
  %v2334 = vadd.f32 0.0, %v2333
  %2335 = vmatmul.f32.gmra.mxu0 %v2224
  %v2336 = vpop.f32.mrf.mxu0
  %v2337 = vadd.f32 0.0, %v2336
  %2338 = vmatmul.f32.gmra.mxu0 %v2227
  %v2339 = vpop.f32.mrf.mxu0
  %v2340 = vadd.f32 0.0, %v2339
  %2341 = vmatmul.f32.gmra.mxu0 %v2230
  %v2342 = vpop.f32.mrf.mxu0
  %v2343 = vadd.f32 0.0, %v2342
  %2344 = vmatmul.f32.gmra.mxu0 %v2233
  %v2345 = vpop.f32.mrf.mxu0
  %v2346 = vadd.f32 0.0, %v2345
  %2347 = vmatmul.f32.gmra.mxu0 %v2236
  %v2348 = vpop.f32.mrf.mxu0
  %v2349 = vadd.f32 0.0, %v2348
  %2350 = vmatmul.f32.gmra.mxu0 %v2239
  %v2351 = vpop.f32.mrf.mxu0
  %v2352 = vadd.f32 0.0, %v2351
  %2353 = vmatmul.f32.gmra.mxu0 %v2242
  %v2354 = vpop.f32.mrf.mxu0
  %v2355 = vadd.f32 0.0, %v2354
  %2356 = vmatmul.f32.gmra.mxu0 %v2245
  %v2357 = vpop.f32.mrf.mxu0
  %v2358 = vadd.f32 0.0, %v2357
  %2359 = vmatmul.f32.gmra.mxu0 %v2248
  %v2360 = vpop.f32.mrf.mxu0
  %v2361 = vadd.f32 0.0, %v2360
  %2362 = vdwg.mxu0
  %v2363 = vmul.f32 %v2268, %v1001
  %v2364 = vmul.f32 %v2271, %v1001
  %v2365 = vmul.f32 %v2274, %v1001
  %v2366 = vmul.f32 %v2277, %v1001
  %v2367 = vmul.f32 %v2280, %v1001
  %v2368 = vmul.f32 %v2283, %v1001
  %v2369 = vmul.f32 %v2286, %v1001
  %v2370 = vmul.f32 %v2289, %v1001
  %v2371 = vmul.f32 %v2292, %v1001
  %v2372 = vmul.f32 %v2295, %v1001
  %v2373 = vmul.f32 %v2298, %v1001
  %v2374 = vmul.f32 %v2301, %v1001
  %v2375 = vmul.f32 %v2304, %v1001
  %v2376 = vmul.f32 %v2307, %v1001
  %v2377 = vmul.f32 %v2310, %v1001
  %v2378 = vmul.f32 %v2313, %v1001
  %v2379 = vmul.f32 %v2316, %v1001
  %v2380 = vmul.f32 %v2319, %v1001
  %v2381 = vmul.f32 %v2322, %v1001
  %v2382 = vmul.f32 %v2325, %v1001
  %v2383 = vmul.f32 %v2328, %v1001
  %v2384 = vmul.f32 %v2331, %v1001
  %v2385 = vmul.f32 %v2334, %v1001
  %v2386 = vmul.f32 %v2337, %v1001
  %v2387 = vmul.f32 %v2340, %v1001
  %v2388 = vmul.f32 %v2343, %v1001
  %v2389 = vmul.f32 %v2346, %v1001
  %v2390 = vmul.f32 %v2349, %v1001
  %v2391 = vmul.f32 %v2352, %v1001
  %v2392 = vmul.f32 %v2355, %v1001
  %v2393 = vmul.f32 %v2358, %v1001
  %v2394 = vmul.f32 %v2361, %v1001
  %2395 = vmatpush.msra.mxu0 %v2378
  %2396 = vmatpush.msra.mxu0 %v2377
  %2397 = vmatpush.msra.mxu0 %v2376
  %2398 = vmatpush.msra.mxu0 %v2375
  %2399 = vmatpush.msra.mxu0 %v2374
  %2400 = vmatpush.msra.mxu0 %v2373
  %2401 = vmatpush.msra.mxu0 %v2372
  %2402 = vmatpush.msra.mxu0 %v2371
  %2403 = vmatpush.msra.mxu0 %v2370
  %2404 = vmatpush.msra.mxu0 %v2369
  %2405 = vmatpush.msra.mxu0 %v2368
  %2406 = vmatpush.msra.mxu0 %v2367
  %2407 = vmatpush.msra.mxu0 %v2366
  %2408 = vmatpush.msra.mxu0 %v2365
  %2409 = vmatpush.msra.mxu0 %v2364
  %2410 = vmatpush.msra.mxu0 %v2363
  %2411 = vmatmul.f32.gmra.mxu0 %v964
  %v2412 = vpop.f32.mrf.mxu0
  %v2413 = vadd.f32 0.0, %v2412
  %2414 = vmatmul.f32.gmra.mxu0 %v966
  %v2415 = vpop.f32.mrf.mxu0
  %v2416 = vadd.f32 0.0, %v2415
  %2417 = vdwg.mxu0
  %2418 = vmatpush.msra.mxu0 %v2394
  %2419 = vmatpush.msra.mxu0 %v2393
  %2420 = vmatpush.msra.mxu0 %v2392
  %2421 = vmatpush.msra.mxu0 %v2391
  %2422 = vmatpush.msra.mxu0 %v2390
  %2423 = vmatpush.msra.mxu0 %v2389
  %2424 = vmatpush.msra.mxu0 %v2388
  %2425 = vmatpush.msra.mxu0 %v2387
  %2426 = vmatpush.msra.mxu0 %v2386
  %2427 = vmatpush.msra.mxu0 %v2385
  %2428 = vmatpush.msra.mxu0 %v2384
  %2429 = vmatpush.msra.mxu0 %v2383
  %2430 = vmatpush.msra.mxu0 %v2382
  %2431 = vmatpush.msra.mxu0 %v2381
  %2432 = vmatpush.msra.mxu0 %v2380
  %2433 = vmatpush.msra.mxu0 %v2379
  %2434 = vmatmul.f32.gmra.mxu0 %v965
  %v2435 = vpop.f32.mrf.mxu0
  %v2436 = vadd.f32 %v2413, %v2435
  %2437 = vmatmul.f32.gmra.mxu0 %v967
  %v2438 = vpop.f32.mrf.mxu0
  %v2439 = vadd.f32 %v2416, %v2438
  %2440 = vdwg.mxu0
  %2441 = vmatpush.msra.mxu0 0.0
  %2442 = vmatpush.msra.mxu0 0.0
  %2443 = vmatpush.msra.mxu0 0.0
  %2444 = vmatpush.msra.mxu0 0.0
  %2445 = vmatpush.msra.mxu0 0.0
  %2446 = vmatpush.msra.mxu0 0.0
  %2447 = vmatpush.msra.mxu0 0.0
  %2448 = vmatpush.msra.mxu0 0.0
  %2449 = vmatpush.msra.mxu0 0.0
  %2450 = vmatpush.msra.mxu0 0.0
  %2451 = vmatpush.msra.mxu0 0.0
  %2452 = vmatpush.msra.mxu0 0.0
  %2453 = vmatpush.msra.mxu0 0.0
  %2454 = vmatpush.msra.mxu0 0.0
  %2455 = vmatpush.msra.mxu0 %v2439
  %2456 = vmatpush.msra.mxu0 %v2436
  %2457 = vmatmul.f32.gmra.mxu0 %v1083
  %v2458 = vpop.f32.mrf.mxu0
  %v2459 = vadd.f32 0.0, %v2458
  %2460 = vmatmul.f32.gmra.mxu0 %v1086
  %v2461 = vpop.f32.mrf.mxu0
  %v2462 = vadd.f32 0.0, %v2461
  %2463 = vmatmul.f32.gmra.mxu0 %v1089
  %v2464 = vpop.f32.mrf.mxu0
  %v2465 = vadd.f32 0.0, %v2464
  %2466 = vmatmul.f32.gmra.mxu0 %v1092
  %v2467 = vpop.f32.mrf.mxu0
  %v2468 = vadd.f32 0.0, %v2467
  %2469 = vmatmul.f32.gmra.mxu0 %v1095
  %v2470 = vpop.f32.mrf.mxu0
  %v2471 = vadd.f32 0.0, %v2470
  %2472 = vmatmul.f32.gmra.mxu0 %v1098
  %v2473 = vpop.f32.mrf.mxu0
  %v2474 = vadd.f32 0.0, %v2473
  %2475 = vmatmul.f32.gmra.mxu0 %v1101
  %v2476 = vpop.f32.mrf.mxu0
  %v2477 = vadd.f32 0.0, %v2476
  %2478 = vmatmul.f32.gmra.mxu0 %v1104
  %v2479 = vpop.f32.mrf.mxu0
  %v2480 = vadd.f32 0.0, %v2479
  %2481 = vmatmul.f32.gmra.mxu0 %v1107
  %v2482 = vpop.f32.mrf.mxu0
  %v2483 = vadd.f32 0.0, %v2482
  %2484 = vmatmul.f32.gmra.mxu0 %v1110
  %v2485 = vpop.f32.mrf.mxu0
  %v2486 = vadd.f32 0.0, %v2485
  %2487 = vmatmul.f32.gmra.mxu0 %v1113
  %v2488 = vpop.f32.mrf.mxu0
  %v2489 = vadd.f32 0.0, %v2488
  %2490 = vmatmul.f32.gmra.mxu0 %v1116
  %v2491 = vpop.f32.mrf.mxu0
  %v2492 = vadd.f32 0.0, %v2491
  %2493 = vmatmul.f32.gmra.mxu0 %v1119
  %v2494 = vpop.f32.mrf.mxu0
  %v2495 = vadd.f32 0.0, %v2494
  %2496 = vmatmul.f32.gmra.mxu0 %v1122
  %v2497 = vpop.f32.mrf.mxu0
  %v2498 = vadd.f32 0.0, %v2497
  %2499 = vmatmul.f32.gmra.mxu0 %v1125
  %v2500 = vpop.f32.mrf.mxu0
  %v2501 = vadd.f32 0.0, %v2500
  %2502 = vmatmul.f32.gmra.mxu0 %v1128
  %v2503 = vpop.f32.mrf.mxu0
  %v2504 = vadd.f32 0.0, %v2503
  %2505 = vmatmul.f32.gmra.mxu0 %v1131
  %v2506 = vpop.f32.mrf.mxu0
  %v2507 = vadd.f32 0.0, %v2506
  %2508 = vmatmul.f32.gmra.mxu0 %v1134
  %v2509 = vpop.f32.mrf.mxu0
  %v2510 = vadd.f32 0.0, %v2509
  %2511 = vmatmul.f32.gmra.mxu0 %v1137
  %v2512 = vpop.f32.mrf.mxu0
  %v2513 = vadd.f32 0.0, %v2512
  %2514 = vmatmul.f32.gmra.mxu0 %v1140
  %v2515 = vpop.f32.mrf.mxu0
  %v2516 = vadd.f32 0.0, %v2515
  %2517 = vmatmul.f32.gmra.mxu0 %v1143
  %v2518 = vpop.f32.mrf.mxu0
  %v2519 = vadd.f32 0.0, %v2518
  %2520 = vmatmul.f32.gmra.mxu0 %v1146
  %v2521 = vpop.f32.mrf.mxu0
  %v2522 = vadd.f32 0.0, %v2521
  %2523 = vmatmul.f32.gmra.mxu0 %v1149
  %v2524 = vpop.f32.mrf.mxu0
  %v2525 = vadd.f32 0.0, %v2524
  %2526 = vmatmul.f32.gmra.mxu0 %v1152
  %v2527 = vpop.f32.mrf.mxu0
  %v2528 = vadd.f32 0.0, %v2527
  %2529 = vmatmul.f32.gmra.mxu0 %v1155
  %v2530 = vpop.f32.mrf.mxu0
  %v2531 = vadd.f32 0.0, %v2530
  %2532 = vmatmul.f32.gmra.mxu0 %v1158
  %v2533 = vpop.f32.mrf.mxu0
  %v2534 = vadd.f32 0.0, %v2533
  %2535 = vmatmul.f32.gmra.mxu0 %v1161
  %v2536 = vpop.f32.mrf.mxu0
  %v2537 = vadd.f32 0.0, %v2536
  %2538 = vmatmul.f32.gmra.mxu0 %v1164
  %v2539 = vpop.f32.mrf.mxu0
  %v2540 = vadd.f32 0.0, %v2539
  %2541 = vmatmul.f32.gmra.mxu0 %v1167
  %v2542 = vpop.f32.mrf.mxu0
  %v2543 = vadd.f32 0.0, %v2542
  %2544 = vmatmul.f32.gmra.mxu0 %v1170
  %v2545 = vpop.f32.mrf.mxu0
  %v2546 = vadd.f32 0.0, %v2545
  %2547 = vmatmul.f32.gmra.mxu0 %v1173
  %v2548 = vpop.f32.mrf.mxu0
  %v2549 = vadd.f32 0.0, %v2548
  %2550 = vmatmul.f32.gmra.mxu0 %v1176
  %v2551 = vpop.f32.mrf.mxu0
  %v2552 = vadd.f32 0.0, %v2551
  %2553 = vdwg.mxu0
  %2554 = vadd.xlane.f32.xlu0 %v2459
  %v2555 = vpop.xlane.xlu0 %2554
  %2556 = vadd.xlane.f32.xlu0 %v2462
  %v2557 = vpop.xlane.xlu0 %2556
  %2558 = vadd.xlane.f32.xlu0 %v2465
  %v2559 = vpop.xlane.xlu0 %2558
  %2560 = vadd.xlane.f32.xlu0 %v2468
  %v2561 = vpop.xlane.xlu0 %2560
  %2562 = vadd.xlane.f32.xlu0 %v2471
  %v2563 = vpop.xlane.xlu0 %2562
  %2564 = vadd.xlane.f32.xlu0 %v2474
  %v2565 = vpop.xlane.xlu0 %2564
  %2566 = vadd.xlane.f32.xlu0 %v2477
  %v2567 = vpop.xlane.xlu0 %2566
  %2568 = vadd.xlane.f32.xlu0 %v2480
  %v2569 = vpop.xlane.xlu0 %2568
  %2570 = vadd.xlane.f32.xlu0 %v2483
  %v2571 = vpop.xlane.xlu0 %2570
  %2572 = vadd.xlane.f32.xlu0 %v2486
  %v2573 = vpop.xlane.xlu0 %2572
  %2574 = vadd.xlane.f32.xlu0 %v2489
  %v2575 = vpop.xlane.xlu0 %2574
  %2576 = vadd.xlane.f32.xlu0 %v2492
  %v2577 = vpop.xlane.xlu0 %2576
  %2578 = vadd.xlane.f32.xlu0 %v2495
  %v2579 = vpop.xlane.xlu0 %2578
  %2580 = vadd.xlane.f32.xlu0 %v2498
  %v2581 = vpop.xlane.xlu0 %2580
  %2582 = vadd.xlane.f32.xlu0 %v2501
  %v2583 = vpop.xlane.xlu0 %2582
  %2584 = vadd.xlane.f32.xlu0 %v2504
  %v2585 = vpop.xlane.xlu0 %2584
  %2586 = vadd.xlane.f32.xlu0 %v2507
  %v2587 = vpop.xlane.xlu0 %2586
  %2588 = vadd.xlane.f32.xlu0 %v2510
  %v2589 = vpop.xlane.xlu0 %2588
  %2590 = vadd.xlane.f32.xlu0 %v2513
  %v2591 = vpop.xlane.xlu0 %2590
  %2592 = vadd.xlane.f32.xlu0 %v2516
  %v2593 = vpop.xlane.xlu0 %2592
  %2594 = vadd.xlane.f32.xlu0 %v2519
  %v2595 = vpop.xlane.xlu0 %2594
  %2596 = vadd.xlane.f32.xlu0 %v2522
  %v2597 = vpop.xlane.xlu0 %2596
  %2598 = vadd.xlane.f32.xlu0 %v2525
  %v2599 = vpop.xlane.xlu0 %2598
  %2600 = vadd.xlane.f32.xlu0 %v2528
  %v2601 = vpop.xlane.xlu0 %2600
  %2602 = vadd.xlane.f32.xlu0 %v2531
  %v2603 = vpop.xlane.xlu0 %2602
  %2604 = vadd.xlane.f32.xlu0 %v2534
  %v2605 = vpop.xlane.xlu0 %2604
  %2606 = vadd.xlane.f32.xlu0 %v2537
  %v2607 = vpop.xlane.xlu0 %2606
  %2608 = vadd.xlane.f32.xlu0 %v2540
  %v2609 = vpop.xlane.xlu0 %2608
  %2610 = vadd.xlane.f32.xlu0 %v2543
  %v2611 = vpop.xlane.xlu0 %2610
  %2612 = vadd.xlane.f32.xlu0 %v2546
  %v2613 = vpop.xlane.xlu0 %2612
  %2614 = vadd.xlane.f32.xlu0 %v2549
  %v2615 = vpop.xlane.xlu0 %2614
  %2616 = vadd.xlane.f32.xlu0 %v2552
  %v2617 = vpop.xlane.xlu0 %2616
  %v2618 = vmul.f32 %v2555, 0.00125
  %v2619 = vmul.f32 %v2557, 0.00125
  %v2620 = vmul.f32 %v2559, 0.00125
  %v2621 = vmul.f32 %v2561, 0.00125
  %v2622 = vmul.f32 %v2563, 0.00125
  %v2623 = vmul.f32 %v2565, 0.00125
  %v2624 = vmul.f32 %v2567, 0.00125
  %v2625 = vmul.f32 %v2569, 0.00125
  %v2626 = vmul.f32 %v2571, 0.00125
  %v2627 = vmul.f32 %v2573, 0.00125
  %v2628 = vmul.f32 %v2575, 0.00125
  %v2629 = vmul.f32 %v2577, 0.00125
  %v2630 = vmul.f32 %v2579, 0.00125
  %v2631 = vmul.f32 %v2581, 0.00125
  %v2632 = vmul.f32 %v2583, 0.00125
  %v2633 = vmul.f32 %v2585, 0.00125
  %v2634 = vmul.f32 %v2587, 0.00125
  %v2635 = vmul.f32 %v2589, 0.00125
  %v2636 = vmul.f32 %v2591, 0.00125
  %v2637 = vmul.f32 %v2593, 0.00125
  %v2638 = vmul.f32 %v2595, 0.00125
  %v2639 = vmul.f32 %v2597, 0.00125
  %v2640 = vmul.f32 %v2599, 0.00125
  %v2641 = vmul.f32 %v2601, 0.00125
  %v2642 = vmul.f32 %v2603, 0.00125
  %v2643 = vmul.f32 %v2605, 0.00125
  %v2644 = vmul.f32 %v2607, 0.00125
  %v2645 = vmul.f32 %v2609, 0.00125
  %v2646 = vmul.f32 %v2611, 0.00125
  %v2647 = vmul.f32 %v2613, 0.00125
  %v2648 = vmul.f32 %v2615, 0.00125
  %v2649 = vmul.f32 %v2617, 0.00125
  %v2650 = vsub.f32 %v2268, %v2618
  %v2651 = vsub.f32 %v2271, %v2619
  %v2652 = vsub.f32 %v2274, %v2620
  %v2653 = vsub.f32 %v2277, %v2621
  %v2654 = vsub.f32 %v2280, %v2622
  %v2655 = vsub.f32 %v2283, %v2623
  %v2656 = vsub.f32 %v2286, %v2624
  %v2657 = vsub.f32 %v2289, %v2625
  %v2658 = vsub.f32 %v2292, %v2626
  %v2659 = vsub.f32 %v2295, %v2627
  %v2660 = vsub.f32 %v2298, %v2628
  %v2661 = vsub.f32 %v2301, %v2629
  %v2662 = vsub.f32 %v2304, %v2630
  %v2663 = vsub.f32 %v2307, %v2631
  %v2664 = vsub.f32 %v2310, %v2632
  %v2665 = vsub.f32 %v2313, %v2633
  %v2666 = vsub.f32 %v2316, %v2634
  %v2667 = vsub.f32 %v2319, %v2635
  %v2668 = vsub.f32 %v2322, %v2636
  %v2669 = vsub.f32 %v2325, %v2637
  %v2670 = vsub.f32 %v2328, %v2638
  %v2671 = vsub.f32 %v2331, %v2639
  %v2672 = vsub.f32 %v2334, %v2640
  %v2673 = vsub.f32 %v2337, %v2641
  %v2674 = vsub.f32 %v2340, %v2642
  %v2675 = vsub.f32 %v2343, %v2643
  %v2676 = vsub.f32 %v2346, %v2644
  %v2677 = vsub.f32 %v2349, %v2645
  %v2678 = vsub.f32 %v2352, %v2646
  %v2679 = vsub.f32 %v2355, %v2647
  %v2680 = vsub.f32 %v2358, %v2648
  %v2681 = vsub.f32 %v2361, %v2649
  %v2682 = vmul.f32 %v2650, %v1001
  %v2683 = vmul.f32 %v2651, %v1001
  %v2684 = vmul.f32 %v2652, %v1001
  %v2685 = vmul.f32 %v2653, %v1001
  %v2686 = vmul.f32 %v2654, %v1001
  %v2687 = vmul.f32 %v2655, %v1001
  %v2688 = vmul.f32 %v2656, %v1001
  %v2689 = vmul.f32 %v2657, %v1001
  %v2690 = vmul.f32 %v2658, %v1001
  %v2691 = vmul.f32 %v2659, %v1001
  %v2692 = vmul.f32 %v2660, %v1001
  %v2693 = vmul.f32 %v2661, %v1001
  %v2694 = vmul.f32 %v2662, %v1001
  %v2695 = vmul.f32 %v2663, %v1001
  %v2696 = vmul.f32 %v2664, %v1001
  %v2697 = vmul.f32 %v2665, %v1001
  %v2698 = vmul.f32 %v2666, %v1001
  %v2699 = vmul.f32 %v2667, %v1001
  %v2700 = vmul.f32 %v2668, %v1001
  %v2701 = vmul.f32 %v2669, %v1001
  %v2702 = vmul.f32 %v2670, %v1001
  %v2703 = vmul.f32 %v2671, %v1001
  %v2704 = vmul.f32 %v2672, %v1001
  %v2705 = vmul.f32 %v2673, %v1001
  %v2706 = vmul.f32 %v2674, %v1001
  %v2707 = vmul.f32 %v2675, %v1001
  %v2708 = vmul.f32 %v2676, %v1001
  %v2709 = vmul.f32 %v2677, %v1001
  %v2710 = vmul.f32 %v2678, %v1001
  %v2711 = vmul.f32 %v2679, %v1001
  %v2712 = vmul.f32 %v2680, %v1001
  %v2713 = vmul.f32 %v2681, %v1001
  %v2714 = vmul.f32 %v2682, %v2682
  %v2715 = vmul.f32 %v2683, %v2683
  %v2716 = vmul.f32 %v2684, %v2684
  %v2717 = vmul.f32 %v2685, %v2685
  %v2718 = vmul.f32 %v2686, %v2686
  %v2719 = vmul.f32 %v2687, %v2687
  %v2720 = vmul.f32 %v2688, %v2688
  %v2721 = vmul.f32 %v2689, %v2689
  %v2722 = vmul.f32 %v2690, %v2690
  %v2723 = vmul.f32 %v2691, %v2691
  %v2724 = vmul.f32 %v2692, %v2692
  %v2725 = vmul.f32 %v2693, %v2693
  %v2726 = vmul.f32 %v2694, %v2694
  %v2727 = vmul.f32 %v2695, %v2695
  %v2728 = vmul.f32 %v2696, %v2696
  %v2729 = vmul.f32 %v2697, %v2697
  %v2730 = vmul.f32 %v2698, %v2698
  %v2731 = vmul.f32 %v2699, %v2699
  %v2732 = vmul.f32 %v2700, %v2700
  %v2733 = vmul.f32 %v2701, %v2701
  %v2734 = vmul.f32 %v2702, %v2702
  %v2735 = vmul.f32 %v2703, %v2703
  %v2736 = vmul.f32 %v2704, %v2704
  %v2737 = vmul.f32 %v2705, %v2705
  %v2738 = vmul.f32 %v2706, %v2706
  %v2739 = vmul.f32 %v2707, %v2707
  %v2740 = vmul.f32 %v2708, %v2708
  %v2741 = vmul.f32 %v2709, %v2709
  %v2742 = vmul.f32 %v2710, %v2710
  %v2743 = vmul.f32 %v2711, %v2711
  %v2744 = vmul.f32 %v2712, %v2712
  %v2745 = vmul.f32 %v2713, %v2713
  %2746 = vmatpush.msra.mxu0 %v2729
  %2747 = vmatpush.msra.mxu0 %v2728
  %2748 = vmatpush.msra.mxu0 %v2727
  %2749 = vmatpush.msra.mxu0 %v2726
  %2750 = vmatpush.msra.mxu0 %v2725
  %2751 = vmatpush.msra.mxu0 %v2724
  %2752 = vmatpush.msra.mxu0 %v2723
  %2753 = vmatpush.msra.mxu0 %v2722
  %2754 = vmatpush.msra.mxu0 %v2721
  %2755 = vmatpush.msra.mxu0 %v2720
  %2756 = vmatpush.msra.mxu0 %v2719
  %2757 = vmatpush.msra.mxu0 %v2718
  %2758 = vmatpush.msra.mxu0 %v2717
  %2759 = vmatpush.msra.mxu0 %v2716
  %2760 = vmatpush.msra.mxu0 %v2715
  %2761 = vmatpush.msra.mxu0 %v2714
  %2762 = vmatmul.f32.gmra.mxu0 %v964
  %v2763 = vpop.f32.mrf.mxu0
  %v2764 = vadd.f32 0.0, %v2763
  %2765 = vmatmul.f32.gmra.mxu0 %v966
  %v2766 = vpop.f32.mrf.mxu0
  %v2767 = vadd.f32 0.0, %v2766
  %2768 = vdwg.mxu0
  %2769 = vmatpush.msra.mxu0 %v2745
  %2770 = vmatpush.msra.mxu0 %v2744
  %2771 = vmatpush.msra.mxu0 %v2743
  %2772 = vmatpush.msra.mxu0 %v2742
  %2773 = vmatpush.msra.mxu0 %v2741
  %2774 = vmatpush.msra.mxu0 %v2740
  %2775 = vmatpush.msra.mxu0 %v2739
  %2776 = vmatpush.msra.mxu0 %v2738
  %2777 = vmatpush.msra.mxu0 %v2737
  %2778 = vmatpush.msra.mxu0 %v2736
  %2779 = vmatpush.msra.mxu0 %v2735
  %2780 = vmatpush.msra.mxu0 %v2734
  %2781 = vmatpush.msra.mxu0 %v2733
  %2782 = vmatpush.msra.mxu0 %v2732
  %2783 = vmatpush.msra.mxu0 %v2731
  %2784 = vmatpush.msra.mxu0 %v2730
  %2785 = vmatmul.f32.gmra.mxu0 %v965
  %v2786 = vpop.f32.mrf.mxu0
  %v2787 = vadd.f32 %v2764, %v2786
  %2788 = vmatmul.f32.gmra.mxu0 %v967
  %v2789 = vpop.f32.mrf.mxu0
  %v2790 = vadd.f32 %v2767, %v2789
  %2791 = vdwg.mxu0
  %2792 = vmatpush.msra.mxu0 0.0
  %2793 = vmatpush.msra.mxu0 0.0
  %2794 = vmatpush.msra.mxu0 0.0
  %2795 = vmatpush.msra.mxu0 0.0
  %2796 = vmatpush.msra.mxu0 0.0
  %2797 = vmatpush.msra.mxu0 0.0
  %2798 = vmatpush.msra.mxu0 0.0
  %2799 = vmatpush.msra.mxu0 0.0
  %2800 = vmatpush.msra.mxu0 0.0
  %2801 = vmatpush.msra.mxu0 0.0
  %2802 = vmatpush.msra.mxu0 0.0
  %2803 = vmatpush.msra.mxu0 0.0
  %2804 = vmatpush.msra.mxu0 0.0
  %2805 = vmatpush.msra.mxu0 0.0
  %2806 = vmatpush.msra.mxu0 %v2790
  %2807 = vmatpush.msra.mxu0 %v2787
  %2808 = vmatmul.f32.gmra.mxu0 %v1083
  %v2809 = vpop.f32.mrf.mxu0
  %v2810 = vadd.f32 0.0, %v2809
  %2811 = vmatmul.f32.gmra.mxu0 %v1086
  %v2812 = vpop.f32.mrf.mxu0
  %v2813 = vadd.f32 0.0, %v2812
  %2814 = vmatmul.f32.gmra.mxu0 %v1089
  %v2815 = vpop.f32.mrf.mxu0
  %v2816 = vadd.f32 0.0, %v2815
  %2817 = vmatmul.f32.gmra.mxu0 %v1092
  %v2818 = vpop.f32.mrf.mxu0
  %v2819 = vadd.f32 0.0, %v2818
  %2820 = vmatmul.f32.gmra.mxu0 %v1095
  %v2821 = vpop.f32.mrf.mxu0
  %v2822 = vadd.f32 0.0, %v2821
  %2823 = vmatmul.f32.gmra.mxu0 %v1098
  %v2824 = vpop.f32.mrf.mxu0
  %v2825 = vadd.f32 0.0, %v2824
  %2826 = vmatmul.f32.gmra.mxu0 %v1101
  %v2827 = vpop.f32.mrf.mxu0
  %v2828 = vadd.f32 0.0, %v2827
  %2829 = vmatmul.f32.gmra.mxu0 %v1104
  %v2830 = vpop.f32.mrf.mxu0
  %v2831 = vadd.f32 0.0, %v2830
  %2832 = vmatmul.f32.gmra.mxu0 %v1107
  %v2833 = vpop.f32.mrf.mxu0
  %v2834 = vadd.f32 0.0, %v2833
  %2835 = vmatmul.f32.gmra.mxu0 %v1110
  %v2836 = vpop.f32.mrf.mxu0
  %v2837 = vadd.f32 0.0, %v2836
  %2838 = vmatmul.f32.gmra.mxu0 %v1113
  %v2839 = vpop.f32.mrf.mxu0
  %v2840 = vadd.f32 0.0, %v2839
  %2841 = vmatmul.f32.gmra.mxu0 %v1116
  %v2842 = vpop.f32.mrf.mxu0
  %v2843 = vadd.f32 0.0, %v2842
  %2844 = vmatmul.f32.gmra.mxu0 %v1119
  %v2845 = vpop.f32.mrf.mxu0
  %v2846 = vadd.f32 0.0, %v2845
  %2847 = vmatmul.f32.gmra.mxu0 %v1122
  %v2848 = vpop.f32.mrf.mxu0
  %v2849 = vadd.f32 0.0, %v2848
  %2850 = vmatmul.f32.gmra.mxu0 %v1125
  %v2851 = vpop.f32.mrf.mxu0
  %v2852 = vadd.f32 0.0, %v2851
  %2853 = vmatmul.f32.gmra.mxu0 %v1128
  %v2854 = vpop.f32.mrf.mxu0
  %v2855 = vadd.f32 0.0, %v2854
  %2856 = vmatmul.f32.gmra.mxu0 %v1131
  %v2857 = vpop.f32.mrf.mxu0
  %v2858 = vadd.f32 0.0, %v2857
  %2859 = vmatmul.f32.gmra.mxu0 %v1134
  %v2860 = vpop.f32.mrf.mxu0
  %v2861 = vadd.f32 0.0, %v2860
  %2862 = vmatmul.f32.gmra.mxu0 %v1137
  %v2863 = vpop.f32.mrf.mxu0
  %v2864 = vadd.f32 0.0, %v2863
  %2865 = vmatmul.f32.gmra.mxu0 %v1140
  %v2866 = vpop.f32.mrf.mxu0
  %v2867 = vadd.f32 0.0, %v2866
  %2868 = vmatmul.f32.gmra.mxu0 %v1143
  %v2869 = vpop.f32.mrf.mxu0
  %v2870 = vadd.f32 0.0, %v2869
  %2871 = vmatmul.f32.gmra.mxu0 %v1146
  %v2872 = vpop.f32.mrf.mxu0
  %v2873 = vadd.f32 0.0, %v2872
  %2874 = vmatmul.f32.gmra.mxu0 %v1149
  %v2875 = vpop.f32.mrf.mxu0
  %v2876 = vadd.f32 0.0, %v2875
  %2877 = vmatmul.f32.gmra.mxu0 %v1152
  %v2878 = vpop.f32.mrf.mxu0
  %v2879 = vadd.f32 0.0, %v2878
  %2880 = vmatmul.f32.gmra.mxu0 %v1155
  %v2881 = vpop.f32.mrf.mxu0
  %v2882 = vadd.f32 0.0, %v2881
  %2883 = vmatmul.f32.gmra.mxu0 %v1158
  %v2884 = vpop.f32.mrf.mxu0
  %v2885 = vadd.f32 0.0, %v2884
  %2886 = vmatmul.f32.gmra.mxu0 %v1161
  %v2887 = vpop.f32.mrf.mxu0
  %v2888 = vadd.f32 0.0, %v2887
  %2889 = vmatmul.f32.gmra.mxu0 %v1164
  %v2890 = vpop.f32.mrf.mxu0
  %v2891 = vadd.f32 0.0, %v2890
  %2892 = vmatmul.f32.gmra.mxu0 %v1167
  %v2893 = vpop.f32.mrf.mxu0
  %v2894 = vadd.f32 0.0, %v2893
  %2895 = vmatmul.f32.gmra.mxu0 %v1170
  %v2896 = vpop.f32.mrf.mxu0
  %v2897 = vadd.f32 0.0, %v2896
  %2898 = vmatmul.f32.gmra.mxu0 %v1173
  %v2899 = vpop.f32.mrf.mxu0
  %v2900 = vadd.f32 0.0, %v2899
  %2901 = vmatmul.f32.gmra.mxu0 %v1176
  %v2902 = vpop.f32.mrf.mxu0
  %v2903 = vadd.f32 0.0, %v2902
  %2904 = vdwg.mxu0
  %2905 = vadd.xlane.f32.xlu0 %v2810
  %v2906 = vpop.xlane.xlu0 %2905
  %2907 = vadd.xlane.f32.xlu0 %v2813
  %v2908 = vpop.xlane.xlu0 %2907
  %2909 = vadd.xlane.f32.xlu0 %v2816
  %v2910 = vpop.xlane.xlu0 %2909
  %2911 = vadd.xlane.f32.xlu0 %v2819
  %v2912 = vpop.xlane.xlu0 %2911
  %2913 = vadd.xlane.f32.xlu0 %v2822
  %v2914 = vpop.xlane.xlu0 %2913
  %2915 = vadd.xlane.f32.xlu0 %v2825
  %v2916 = vpop.xlane.xlu0 %2915
  %2917 = vadd.xlane.f32.xlu0 %v2828
  %v2918 = vpop.xlane.xlu0 %2917
  %2919 = vadd.xlane.f32.xlu0 %v2831
  %v2920 = vpop.xlane.xlu0 %2919
  %2921 = vadd.xlane.f32.xlu0 %v2834
  %v2922 = vpop.xlane.xlu0 %2921
  %2923 = vadd.xlane.f32.xlu0 %v2837
  %v2924 = vpop.xlane.xlu0 %2923
  %2925 = vadd.xlane.f32.xlu0 %v2840
  %v2926 = vpop.xlane.xlu0 %2925
  %2927 = vadd.xlane.f32.xlu0 %v2843
  %v2928 = vpop.xlane.xlu0 %2927
  %2929 = vadd.xlane.f32.xlu0 %v2846
  %v2930 = vpop.xlane.xlu0 %2929
  %2931 = vadd.xlane.f32.xlu0 %v2849
  %v2932 = vpop.xlane.xlu0 %2931
  %2933 = vadd.xlane.f32.xlu0 %v2852
  %v2934 = vpop.xlane.xlu0 %2933
  %2935 = vadd.xlane.f32.xlu0 %v2855
  %v2936 = vpop.xlane.xlu0 %2935
  %2937 = vadd.xlane.f32.xlu0 %v2858
  %v2938 = vpop.xlane.xlu0 %2937
  %2939 = vadd.xlane.f32.xlu0 %v2861
  %v2940 = vpop.xlane.xlu0 %2939
  %2941 = vadd.xlane.f32.xlu0 %v2864
  %v2942 = vpop.xlane.xlu0 %2941
  %2943 = vadd.xlane.f32.xlu0 %v2867
  %v2944 = vpop.xlane.xlu0 %2943
  %2945 = vadd.xlane.f32.xlu0 %v2870
  %v2946 = vpop.xlane.xlu0 %2945
  %2947 = vadd.xlane.f32.xlu0 %v2873
  %v2948 = vpop.xlane.xlu0 %2947
  %2949 = vadd.xlane.f32.xlu0 %v2876
  %v2950 = vpop.xlane.xlu0 %2949
  %2951 = vadd.xlane.f32.xlu0 %v2879
  %v2952 = vpop.xlane.xlu0 %2951
  %2953 = vadd.xlane.f32.xlu0 %v2882
  %v2954 = vpop.xlane.xlu0 %2953
  %2955 = vadd.xlane.f32.xlu0 %v2885
  %v2956 = vpop.xlane.xlu0 %2955
  %2957 = vadd.xlane.f32.xlu0 %v2888
  %v2958 = vpop.xlane.xlu0 %2957
  %2959 = vadd.xlane.f32.xlu0 %v2891
  %v2960 = vpop.xlane.xlu0 %2959
  %2961 = vadd.xlane.f32.xlu0 %v2894
  %v2962 = vpop.xlane.xlu0 %2961
  %2963 = vadd.xlane.f32.xlu0 %v2897
  %v2964 = vpop.xlane.xlu0 %2963
  %2965 = vadd.xlane.f32.xlu0 %v2900
  %v2966 = vpop.xlane.xlu0 %2965
  %2967 = vadd.xlane.f32.xlu0 %v2903
  %v2968 = vpop.xlane.xlu0 %2967
  %v2969 = vmul.f32 %v2906, 0.00125
  %v2970 = vmul.f32 %v2908, 0.00125
  %v2971 = vmul.f32 %v2910, 0.00125
  %v2972 = vmul.f32 %v2912, 0.00125
  %v2973 = vmul.f32 %v2914, 0.00125
  %v2974 = vmul.f32 %v2916, 0.00125
  %v2975 = vmul.f32 %v2918, 0.00125
  %v2976 = vmul.f32 %v2920, 0.00125
  %v2977 = vmul.f32 %v2922, 0.00125
  %v2978 = vmul.f32 %v2924, 0.00125
  %v2979 = vmul.f32 %v2926, 0.00125
  %v2980 = vmul.f32 %v2928, 0.00125
  %v2981 = vmul.f32 %v2930, 0.00125
  %v2982 = vmul.f32 %v2932, 0.00125
  %v2983 = vmul.f32 %v2934, 0.00125
  %v2984 = vmul.f32 %v2936, 0.00125
  %v2985 = vmul.f32 %v2938, 0.00125
  %v2986 = vmul.f32 %v2940, 0.00125
  %v2987 = vmul.f32 %v2942, 0.00125
  %v2988 = vmul.f32 %v2944, 0.00125
  %v2989 = vmul.f32 %v2946, 0.00125
  %v2990 = vmul.f32 %v2948, 0.00125
  %v2991 = vmul.f32 %v2950, 0.00125
  %v2992 = vmul.f32 %v2952, 0.00125
  %v2993 = vmul.f32 %v2954, 0.00125
  %v2994 = vmul.f32 %v2956, 0.00125
  %v2995 = vmul.f32 %v2958, 0.00125
  %v2996 = vmul.f32 %v2960, 0.00125
  %v2997 = vmul.f32 %v2962, 0.00125
  %v2998 = vmul.f32 %v2964, 0.00125
  %v2999 = vmul.f32 %v2966, 0.00125
  %v3000 = vmul.f32 %v2968, 0.00125
  %v3001 = vadd.f32 %v2969, 1e-05
  %v3002 = vadd.f32 %v2970, 1e-05
  %v3003 = vadd.f32 %v2971, 1e-05
  %v3004 = vadd.f32 %v2972, 1e-05
  %v3005 = vadd.f32 %v2973, 1e-05
  %v3006 = vadd.f32 %v2974, 1e-05
  %v3007 = vadd.f32 %v2975, 1e-05
  %v3008 = vadd.f32 %v2976, 1e-05
  %v3009 = vadd.f32 %v2977, 1e-05
  %v3010 = vadd.f32 %v2978, 1e-05
  %v3011 = vadd.f32 %v2979, 1e-05
  %v3012 = vadd.f32 %v2980, 1e-05
  %v3013 = vadd.f32 %v2981, 1e-05
  %v3014 = vadd.f32 %v2982, 1e-05
  %v3015 = vadd.f32 %v2983, 1e-05
  %v3016 = vadd.f32 %v2984, 1e-05
  %v3017 = vadd.f32 %v2985, 1e-05
  %v3018 = vadd.f32 %v2986, 1e-05
  %v3019 = vadd.f32 %v2987, 1e-05
  %v3020 = vadd.f32 %v2988, 1e-05
  %v3021 = vadd.f32 %v2989, 1e-05
  %v3022 = vadd.f32 %v2990, 1e-05
  %v3023 = vadd.f32 %v2991, 1e-05
  %v3024 = vadd.f32 %v2992, 1e-05
  %v3025 = vadd.f32 %v2993, 1e-05
  %v3026 = vadd.f32 %v2994, 1e-05
  %v3027 = vadd.f32 %v2995, 1e-05
  %v3028 = vadd.f32 %v2996, 1e-05
  %v3029 = vadd.f32 %v2997, 1e-05
  %v3030 = vadd.f32 %v2998, 1e-05
  %v3031 = vadd.f32 %v2999, 1e-05
  %v3032 = vadd.f32 %v3000, 1e-05
  %v3033 = vrsqrt.pop %v3001
  %v3034 = vmul.f32 %v3033, %v3001
  %v3035 = vmul.f32 %v3034, %v3033
  %v3036 = vmul.f32 0.5, %v3035
  %v3037 = vsub.f32 1.5, %v3036
  %v3038 = vmul.f32 %v3033, %v3037
  %vm3039 = vweird.f32 %v3001
  %vm3040 = vweird.f32 %v3033
  %vm3041 = vmor %vm3039, %vm3040
  %v3042 = vsel %vm3041, %v3033, %v3038
  %v3043 = vrsqrt.pop %v3002
  %v3044 = vmul.f32 %v3043, %v3002
  %v3045 = vmul.f32 %v3044, %v3043
  %v3046 = vmul.f32 0.5, %v3045
  %v3047 = vsub.f32 1.5, %v3046
  %v3048 = vmul.f32 %v3043, %v3047
  %vm3049 = vweird.f32 %v3002
  %vm3050 = vweird.f32 %v3043
  %vm3051 = vmor %vm3049, %vm3050
  %v3052 = vsel %vm3051, %v3043, %v3048
  %v3053 = vrsqrt.pop %v3003
  %v3054 = vmul.f32 %v3053, %v3003
  %v3055 = vmul.f32 %v3054, %v3053
  %v3056 = vmul.f32 0.5, %v3055
  %v3057 = vsub.f32 1.5, %v3056
  %v3058 = vmul.f32 %v3053, %v3057
  %vm3059 = vweird.f32 %v3003
  %vm3060 = vweird.f32 %v3053
  %vm3061 = vmor %vm3059, %vm3060
  %v3062 = vsel %vm3061, %v3053, %v3058
  %v3063 = vrsqrt.pop %v3004
  %v3064 = vmul.f32 %v3063, %v3004
  %v3065 = vmul.f32 %v3064, %v3063
  %v3066 = vmul.f32 0.5, %v3065
  %v3067 = vsub.f32 1.5, %v3066
  %v3068 = vmul.f32 %v3063, %v3067
  %vm3069 = vweird.f32 %v3004
  %vm3070 = vweird.f32 %v3063
  %vm3071 = vmor %vm3069, %vm3070
  %v3072 = vsel %vm3071, %v3063, %v3068
  %v3073 = vrsqrt.pop %v3005
  %v3074 = vmul.f32 %v3073, %v3005
  %v3075 = vmul.f32 %v3074, %v3073
  %v3076 = vmul.f32 0.5, %v3075
  %v3077 = vsub.f32 1.5, %v3076
  %v3078 = vmul.f32 %v3073, %v3077
  %vm3079 = vweird.f32 %v3005
  %vm3080 = vweird.f32 %v3073
  %vm3081 = vmor %vm3079, %vm3080
  %v3082 = vsel %vm3081, %v3073, %v3078
  %v3083 = vrsqrt.pop %v3006
  %v3084 = vmul.f32 %v3083, %v3006
  %v3085 = vmul.f32 %v3084, %v3083
  %v3086 = vmul.f32 0.5, %v3085
  %v3087 = vsub.f32 1.5, %v3086
  %v3088 = vmul.f32 %v3083, %v3087
  %vm3089 = vweird.f32 %v3006
  %vm3090 = vweird.f32 %v3083
  %vm3091 = vmor %vm3089, %vm3090
  %v3092 = vsel %vm3091, %v3083, %v3088
  %v3093 = vrsqrt.pop %v3007
  %v3094 = vmul.f32 %v3093, %v3007
  %v3095 = vmul.f32 %v3094, %v3093
  %v3096 = vmul.f32 0.5, %v3095
  %v3097 = vsub.f32 1.5, %v3096
  %v3098 = vmul.f32 %v3093, %v3097
  %vm3099 = vweird.f32 %v3007
  %vm3100 = vweird.f32 %v3093
  %vm3101 = vmor %vm3099, %vm3100
  %v3102 = vsel %vm3101, %v3093, %v3098
  %v3103 = vrsqrt.pop %v3008
  %v3104 = vmul.f32 %v3103, %v3008
  %v3105 = vmul.f32 %v3104, %v3103
  %v3106 = vmul.f32 0.5, %v3105
  %v3107 = vsub.f32 1.5, %v3106
  %v3108 = vmul.f32 %v3103, %v3107
  %vm3109 = vweird.f32 %v3008
  %vm3110 = vweird.f32 %v3103
  %vm3111 = vmor %vm3109, %vm3110
  %v3112 = vsel %vm3111, %v3103, %v3108
  %v3113 = vrsqrt.pop %v3009
  %v3114 = vmul.f32 %v3113, %v3009
  %v3115 = vmul.f32 %v3114, %v3113
  %v3116 = vmul.f32 0.5, %v3115
  %v3117 = vsub.f32 1.5, %v3116
  %v3118 = vmul.f32 %v3113, %v3117
  %vm3119 = vweird.f32 %v3009
  %vm3120 = vweird.f32 %v3113
  %vm3121 = vmor %vm3119, %vm3120
  %v3122 = vsel %vm3121, %v3113, %v3118
  %v3123 = vrsqrt.pop %v3010
  %v3124 = vmul.f32 %v3123, %v3010
  %v3125 = vmul.f32 %v3124, %v3123
  %v3126 = vmul.f32 0.5, %v3125
  %v3127 = vsub.f32 1.5, %v3126
  %v3128 = vmul.f32 %v3123, %v3127
  %vm3129 = vweird.f32 %v3010
  %vm3130 = vweird.f32 %v3123
  %vm3131 = vmor %vm3129, %vm3130
  %v3132 = vsel %vm3131, %v3123, %v3128
  %v3133 = vrsqrt.pop %v3011
  %v3134 = vmul.f32 %v3133, %v3011
  %v3135 = vmul.f32 %v3134, %v3133
  %v3136 = vmul.f32 0.5, %v3135
  %v3137 = vsub.f32 1.5, %v3136
  %v3138 = vmul.f32 %v3133, %v3137
  %vm3139 = vweird.f32 %v3011
  %vm3140 = vweird.f32 %v3133
  %vm3141 = vmor %vm3139, %vm3140
  %v3142 = vsel %vm3141, %v3133, %v3138
  %v3143 = vrsqrt.pop %v3012
  %v3144 = vmul.f32 %v3143, %v3012
  %v3145 = vmul.f32 %v3144, %v3143
  %v3146 = vmul.f32 0.5, %v3145
  %v3147 = vsub.f32 1.5, %v3146
  %v3148 = vmul.f32 %v3143, %v3147
  %vm3149 = vweird.f32 %v3012
  %vm3150 = vweird.f32 %v3143
  %vm3151 = vmor %vm3149, %vm3150
  %v3152 = vsel %vm3151, %v3143, %v3148
  %v3153 = vrsqrt.pop %v3013
  %v3154 = vmul.f32 %v3153, %v3013
  %v3155 = vmul.f32 %v3154, %v3153
  %v3156 = vmul.f32 0.5, %v3155
  %v3157 = vsub.f32 1.5, %v3156
  %v3158 = vmul.f32 %v3153, %v3157
  %vm3159 = vweird.f32 %v3013
  %vm3160 = vweird.f32 %v3153
  %vm3161 = vmor %vm3159, %vm3160
  %v3162 = vsel %vm3161, %v3153, %v3158
  %v3163 = vrsqrt.pop %v3014
  %v3164 = vmul.f32 %v3163, %v3014
  %v3165 = vmul.f32 %v3164, %v3163
  %v3166 = vmul.f32 0.5, %v3165
  %v3167 = vsub.f32 1.5, %v3166
  %v3168 = vmul.f32 %v3163, %v3167
  %vm3169 = vweird.f32 %v3014
  %vm3170 = vweird.f32 %v3163
  %vm3171 = vmor %vm3169, %vm3170
  %v3172 = vsel %vm3171, %v3163, %v3168
  %v3173 = vrsqrt.pop %v3015
  %v3174 = vmul.f32 %v3173, %v3015
  %v3175 = vmul.f32 %v3174, %v3173
  %v3176 = vmul.f32 0.5, %v3175
  %v3177 = vsub.f32 1.5, %v3176
  %v3178 = vmul.f32 %v3173, %v3177
  %vm3179 = vweird.f32 %v3015
  %vm3180 = vweird.f32 %v3173
  %vm3181 = vmor %vm3179, %vm3180
  %v3182 = vsel %vm3181, %v3173, %v3178
  %v3183 = vrsqrt.pop %v3016
  %v3184 = vmul.f32 %v3183, %v3016
  %v3185 = vmul.f32 %v3184, %v3183
  %v3186 = vmul.f32 0.5, %v3185
  %v3187 = vsub.f32 1.5, %v3186
  %v3188 = vmul.f32 %v3183, %v3187
  %vm3189 = vweird.f32 %v3016
  %vm3190 = vweird.f32 %v3183
  %vm3191 = vmor %vm3189, %vm3190
  %v3192 = vsel %vm3191, %v3183, %v3188
  %v3193 = vrsqrt.pop %v3017
  %v3194 = vmul.f32 %v3193, %v3017
  %v3195 = vmul.f32 %v3194, %v3193
  %v3196 = vmul.f32 0.5, %v3195
  %v3197 = vsub.f32 1.5, %v3196
  %v3198 = vmul.f32 %v3193, %v3197
  %vm3199 = vweird.f32 %v3017
  %vm3200 = vweird.f32 %v3193
  %vm3201 = vmor %vm3199, %vm3200
  %v3202 = vsel %vm3201, %v3193, %v3198
  %v3203 = vrsqrt.pop %v3018
  %v3204 = vmul.f32 %v3203, %v3018
  %v3205 = vmul.f32 %v3204, %v3203
  %v3206 = vmul.f32 0.5, %v3205
  %v3207 = vsub.f32 1.5, %v3206
  %v3208 = vmul.f32 %v3203, %v3207
  %vm3209 = vweird.f32 %v3018
  %vm3210 = vweird.f32 %v3203
  %vm3211 = vmor %vm3209, %vm3210
  %v3212 = vsel %vm3211, %v3203, %v3208
  %v3213 = vrsqrt.pop %v3019
  %v3214 = vmul.f32 %v3213, %v3019
  %v3215 = vmul.f32 %v3214, %v3213
  %v3216 = vmul.f32 0.5, %v3215
  %v3217 = vsub.f32 1.5, %v3216
  %v3218 = vmul.f32 %v3213, %v3217
  %vm3219 = vweird.f32 %v3019
  %vm3220 = vweird.f32 %v3213
  %vm3221 = vmor %vm3219, %vm3220
  %v3222 = vsel %vm3221, %v3213, %v3218
  %v3223 = vrsqrt.pop %v3020
  %v3224 = vmul.f32 %v3223, %v3020
  %v3225 = vmul.f32 %v3224, %v3223
  %v3226 = vmul.f32 0.5, %v3225
  %v3227 = vsub.f32 1.5, %v3226
  %v3228 = vmul.f32 %v3223, %v3227
  %vm3229 = vweird.f32 %v3020
  %vm3230 = vweird.f32 %v3223
  %vm3231 = vmor %vm3229, %vm3230
  %v3232 = vsel %vm3231, %v3223, %v3228
  %v3233 = vrsqrt.pop %v3021
  %v3234 = vmul.f32 %v3233, %v3021
  %v3235 = vmul.f32 %v3234, %v3233
  %v3236 = vmul.f32 0.5, %v3235
  %v3237 = vsub.f32 1.5, %v3236
  %v3238 = vmul.f32 %v3233, %v3237
  %vm3239 = vweird.f32 %v3021
  %vm3240 = vweird.f32 %v3233
  %vm3241 = vmor %vm3239, %vm3240
  %v3242 = vsel %vm3241, %v3233, %v3238
  %v3243 = vrsqrt.pop %v3022
  %v3244 = vmul.f32 %v3243, %v3022
  %v3245 = vmul.f32 %v3244, %v3243
  %v3246 = vmul.f32 0.5, %v3245
  %v3247 = vsub.f32 1.5, %v3246
  %v3248 = vmul.f32 %v3243, %v3247
  %vm3249 = vweird.f32 %v3022
  %vm3250 = vweird.f32 %v3243
  %vm3251 = vmor %vm3249, %vm3250
  %v3252 = vsel %vm3251, %v3243, %v3248
  %v3253 = vrsqrt.pop %v3023
  %v3254 = vmul.f32 %v3253, %v3023
  %v3255 = vmul.f32 %v3254, %v3253
  %v3256 = vmul.f32 0.5, %v3255
  %v3257 = vsub.f32 1.5, %v3256
  %v3258 = vmul.f32 %v3253, %v3257
  %vm3259 = vweird.f32 %v3023
  %vm3260 = vweird.f32 %v3253
  %vm3261 = vmor %vm3259, %vm3260
  %v3262 = vsel %vm3261, %v3253, %v3258
  %v3263 = vrsqrt.pop %v3024
  %v3264 = vmul.f32 %v3263, %v3024
  %v3265 = vmul.f32 %v3264, %v3263
  %v3266 = vmul.f32 0.5, %v3265
  %v3267 = vsub.f32 1.5, %v3266
  %v3268 = vmul.f32 %v3263, %v3267
  %vm3269 = vweird.f32 %v3024
  %vm3270 = vweird.f32 %v3263
  %vm3271 = vmor %vm3269, %vm3270
  %v3272 = vsel %vm3271, %v3263, %v3268
  %v3273 = vrsqrt.pop %v3025
  %v3274 = vmul.f32 %v3273, %v3025
  %v3275 = vmul.f32 %v3274, %v3273
  %v3276 = vmul.f32 0.5, %v3275
  %v3277 = vsub.f32 1.5, %v3276
  %v3278 = vmul.f32 %v3273, %v3277
  %vm3279 = vweird.f32 %v3025
  %vm3280 = vweird.f32 %v3273
  %vm3281 = vmor %vm3279, %vm3280
  %v3282 = vsel %vm3281, %v3273, %v3278
  %v3283 = vrsqrt.pop %v3026
  %v3284 = vmul.f32 %v3283, %v3026
  %v3285 = vmul.f32 %v3284, %v3283
  %v3286 = vmul.f32 0.5, %v3285
  %v3287 = vsub.f32 1.5, %v3286
  %v3288 = vmul.f32 %v3283, %v3287
  %vm3289 = vweird.f32 %v3026
  %vm3290 = vweird.f32 %v3283
  %vm3291 = vmor %vm3289, %vm3290
  %v3292 = vsel %vm3291, %v3283, %v3288
  %v3293 = vrsqrt.pop %v3027
  %v3294 = vmul.f32 %v3293, %v3027
  %v3295 = vmul.f32 %v3294, %v3293
  %v3296 = vmul.f32 0.5, %v3295
  %v3297 = vsub.f32 1.5, %v3296
  %v3298 = vmul.f32 %v3293, %v3297
  %vm3299 = vweird.f32 %v3027
  %vm3300 = vweird.f32 %v3293
  %vm3301 = vmor %vm3299, %vm3300
  %v3302 = vsel %vm3301, %v3293, %v3298
  %v3303 = vrsqrt.pop %v3028
  %v3304 = vmul.f32 %v3303, %v3028
  %v3305 = vmul.f32 %v3304, %v3303
  %v3306 = vmul.f32 0.5, %v3305
  %v3307 = vsub.f32 1.5, %v3306
  %v3308 = vmul.f32 %v3303, %v3307
  %vm3309 = vweird.f32 %v3028
  %vm3310 = vweird.f32 %v3303
  %vm3311 = vmor %vm3309, %vm3310
  %v3312 = vsel %vm3311, %v3303, %v3308
  %v3313 = vrsqrt.pop %v3029
  %v3314 = vmul.f32 %v3313, %v3029
  %v3315 = vmul.f32 %v3314, %v3313
  %v3316 = vmul.f32 0.5, %v3315
  %v3317 = vsub.f32 1.5, %v3316
  %v3318 = vmul.f32 %v3313, %v3317
  %vm3319 = vweird.f32 %v3029
  %vm3320 = vweird.f32 %v3313
  %vm3321 = vmor %vm3319, %vm3320
  %v3322 = vsel %vm3321, %v3313, %v3318
  %v3323 = vrsqrt.pop %v3030
  %v3324 = vmul.f32 %v3323, %v3030
  %v3325 = vmul.f32 %v3324, %v3323
  %v3326 = vmul.f32 0.5, %v3325
  %v3327 = vsub.f32 1.5, %v3326
  %v3328 = vmul.f32 %v3323, %v3327
  %vm3329 = vweird.f32 %v3030
  %vm3330 = vweird.f32 %v3323
  %vm3331 = vmor %vm3329, %vm3330
  %v3332 = vsel %vm3331, %v3323, %v3328
  %v3333 = vrsqrt.pop %v3031
  %v3334 = vmul.f32 %v3333, %v3031
  %v3335 = vmul.f32 %v3334, %v3333
  %v3336 = vmul.f32 0.5, %v3335
  %v3337 = vsub.f32 1.5, %v3336
  %v3338 = vmul.f32 %v3333, %v3337
  %vm3339 = vweird.f32 %v3031
  %vm3340 = vweird.f32 %v3333
  %vm3341 = vmor %vm3339, %vm3340
  %v3342 = vsel %vm3341, %v3333, %v3338
  %v3343 = vrsqrt.pop %v3032
  %v3344 = vmul.f32 %v3343, %v3032
  %v3345 = vmul.f32 %v3344, %v3343
  %v3346 = vmul.f32 0.5, %v3345
  %v3347 = vsub.f32 1.5, %v3346
  %v3348 = vmul.f32 %v3343, %v3347
  %vm3349 = vweird.f32 %v3032
  %vm3350 = vweird.f32 %v3343
  %vm3351 = vmor %vm3349, %vm3350
  %v3352 = vsel %vm3351, %v3343, %v3348
  %v3353 = vmul.f32 %v2682, %v3042
  %v3354 = vmul.f32 %v2683, %v3052
  %v3355 = vmul.f32 %v2684, %v3062
  %v3356 = vmul.f32 %v2685, %v3072
  %v3357 = vmul.f32 %v2686, %v3082
  %v3358 = vmul.f32 %v2687, %v3092
  %v3359 = vmul.f32 %v2688, %v3102
  %v3360 = vmul.f32 %v2689, %v3112
  %v3361 = vmul.f32 %v2690, %v3122
  %v3362 = vmul.f32 %v2691, %v3132
  %v3363 = vmul.f32 %v2692, %v3142
  %v3364 = vmul.f32 %v2693, %v3152
  %v3365 = vmul.f32 %v2694, %v3162
  %v3366 = vmul.f32 %v2695, %v3172
  %v3367 = vmul.f32 %v2696, %v3182
  %v3368 = vmul.f32 %v2697, %v3192
  %v3369 = vmul.f32 %v2698, %v3202
  %v3370 = vmul.f32 %v2699, %v3212
  %v3371 = vmul.f32 %v2700, %v3222
  %v3372 = vmul.f32 %v2701, %v3232
  %v3373 = vmul.f32 %v2702, %v3242
  %v3374 = vmul.f32 %v2703, %v3252
  %v3375 = vmul.f32 %v2704, %v3262
  %v3376 = vmul.f32 %v2705, %v3272
  %v3377 = vmul.f32 %v2706, %v3282
  %v3378 = vmul.f32 %v2707, %v3292
  %v3379 = vmul.f32 %v2708, %v3302
  %v3380 = vmul.f32 %v2709, %v3312
  %v3381 = vmul.f32 %v2710, %v3322
  %v3382 = vmul.f32 %v2711, %v3332
  %v3383 = vmul.f32 %v2712, %v3342
  %v3384 = vmul.f32 %v2713, %v3352
  %v3385 = vadd.f32 %v2090, %v3353
  %v3386 = vadd.f32 %v2091, %v3354
  %v3387 = vadd.f32 %v2092, %v3355
  %v3388 = vadd.f32 %v2093, %v3356
  %v3389 = vadd.f32 %v2094, %v3357
  %v3390 = vadd.f32 %v2095, %v3358
  %v3391 = vadd.f32 %v2096, %v3359
  %v3392 = vadd.f32 %v2097, %v3360
  %v3393 = vadd.f32 %v2098, %v3361
  %v3394 = vadd.f32 %v2099, %v3362
  %v3395 = vadd.f32 %v2100, %v3363
  %v3396 = vadd.f32 %v2101, %v3364
  %v3397 = vadd.f32 %v2102, %v3365
  %v3398 = vadd.f32 %v2103, %v3366
  %v3399 = vadd.f32 %v2104, %v3367
  %v3400 = vadd.f32 %v2105, %v3368
  %v3401 = vadd.f32 %v2106, %v3369
  %v3402 = vadd.f32 %v2107, %v3370
  %v3403 = vadd.f32 %v2108, %v3371
  %v3404 = vadd.f32 %v2109, %v3372
  %v3405 = vadd.f32 %v2110, %v3373
  %v3406 = vadd.f32 %v2111, %v3374
  %v3407 = vadd.f32 %v2112, %v3375
  %v3408 = vadd.f32 %v2113, %v3376
  %v3409 = vadd.f32 %v2114, %v3377
  %v3410 = vadd.f32 %v2115, %v3378
  %v3411 = vadd.f32 %v2116, %v3379
  %v3412 = vadd.f32 %v2117, %v3380
  %v3413 = vadd.f32 %v2118, %v3381
  %v3414 = vadd.f32 %v2119, %v3382
  %v3415 = vadd.f32 %v2120, %v3383
  %v3416 = vadd.f32 %v2121, %v3384
  %vm3417 = vcmp.ge.f32.partialorder %v3385, 0.0
  %vm3418 = vcmp.ge.f32.partialorder %v3386, 0.0
  %vm3419 = vcmp.ge.f32.partialorder %v3387, 0.0
  %vm3420 = vcmp.ge.f32.partialorder %v3388, 0.0
  %vm3421 = vcmp.ge.f32.partialorder %v3389, 0.0
  %vm3422 = vcmp.ge.f32.partialorder %v3390, 0.0
  %vm3423 = vcmp.ge.f32.partialorder %v3391, 0.0
  %vm3424 = vcmp.ge.f32.partialorder %v3392, 0.0
  %vm3425 = vcmp.ge.f32.partialorder %v3393, 0.0
  %vm3426 = vcmp.ge.f32.partialorder %v3394, 0.0
  %vm3427 = vcmp.ge.f32.partialorder %v3395, 0.0
  %vm3428 = vcmp.ge.f32.partialorder %v3396, 0.0
  %vm3429 = vcmp.ge.f32.partialorder %v3397, 0.0
  %vm3430 = vcmp.ge.f32.partialorder %v3398, 0.0
  %vm3431 = vcmp.ge.f32.partialorder %v3399, 0.0
  %vm3432 = vcmp.ge.f32.partialorder %v3400, 0.0
  %vm3433 = vcmp.ge.f32.partialorder %v3401, 0.0
  %vm3434 = vcmp.ge.f32.partialorder %v3402, 0.0
  %vm3435 = vcmp.ge.f32.partialorder %v3403, 0.0
  %vm3436 = vcmp.ge.f32.partialorder %v3404, 0.0
  %vm3437 = vcmp.ge.f32.partialorder %v3405, 0.0
  %vm3438 = vcmp.ge.f32.partialorder %v3406, 0.0
  %vm3439 = vcmp.ge.f32.partialorder %v3407, 0.0
  %vm3440 = vcmp.ge.f32.partialorder %v3408, 0.0
  %vm3441 = vcmp.ge.f32.partialorder %v3409, 0.0
  %vm3442 = vcmp.ge.f32.partialorder %v3410, 0.0
  %vm3443 = vcmp.ge.f32.partialorder %v3411, 0.0
  %vm3444 = vcmp.ge.f32.partialorder %v3412, 0.0
  %vm3445 = vcmp.ge.f32.partialorder %v3413, 0.0
  %vm3446 = vcmp.ge.f32.partialorder %v3414, 0.0
  %vm3447 = vcmp.ge.f32.partialorder %v3415, 0.0
  %vm3448 = vcmp.ge.f32.partialorder %v3416, 0.0
  %v3449 = vmul.f32 %v3385, 0.1
  %v3450 = vmul.f32 %v3386, 0.1
  %v3451 = vmul.f32 %v3387, 0.1
  %v3452 = vmul.f32 %v3388, 0.1
  %v3453 = vmul.f32 %v3389, 0.1
  %v3454 = vmul.f32 %v3390, 0.1
  %v3455 = vmul.f32 %v3391, 0.1
  %v3456 = vmul.f32 %v3392, 0.1
  %v3457 = vmul.f32 %v3393, 0.1
  %v3458 = vmul.f32 %v3394, 0.1
  %v3459 = vmul.f32 %v3395, 0.1
  %v3460 = vmul.f32 %v3396, 0.1
  %v3461 = vmul.f32 %v3397, 0.1
  %v3462 = vmul.f32 %v3398, 0.1
  %v3463 = vmul.f32 %v3399, 0.1
  %v3464 = vmul.f32 %v3400, 0.1
  %v3465 = vmul.f32 %v3401, 0.1
  %v3466 = vmul.f32 %v3402, 0.1
  %v3467 = vmul.f32 %v3403, 0.1
  %v3468 = vmul.f32 %v3404, 0.1
  %v3469 = vmul.f32 %v3405, 0.1
  %v3470 = vmul.f32 %v3406, 0.1
  %v3471 = vmul.f32 %v3407, 0.1
  %v3472 = vmul.f32 %v3408, 0.1
  %v3473 = vmul.f32 %v3409, 0.1
  %v3474 = vmul.f32 %v3410, 0.1
  %v3475 = vmul.f32 %v3411, 0.1
  %v3476 = vmul.f32 %v3412, 0.1
  %v3477 = vmul.f32 %v3413, 0.1
  %v3478 = vmul.f32 %v3414, 0.1
  %v3479 = vmul.f32 %v3415, 0.1
  %v3480 = vmul.f32 %v3416, 0.1
  %v3481 = vsel %vm3417, %v3385, %v3449
  %v3482 = vsel %vm3418, %v3386, %v3450
  %v3483 = vsel %vm3419, %v3387, %v3451
  %v3484 = vsel %vm3420, %v3388, %v3452
  %v3485 = vsel %vm3421, %v3389, %v3453
  %v3486 = vsel %vm3422, %v3390, %v3454
  %v3487 = vsel %vm3423, %v3391, %v3455
  %v3488 = vsel %vm3424, %v3392, %v3456
  %v3489 = vsel %vm3425, %v3393, %v3457
  %v3490 = vsel %vm3426, %v3394, %v3458
  %v3491 = vsel %vm3427, %v3395, %v3459
  %v3492 = vsel %vm3428, %v3396, %v3460
  %v3493 = vsel %vm3429, %v3397, %v3461
  %v3494 = vsel %vm3430, %v3398, %v3462
  %v3495 = vsel %vm3431, %v3399, %v3463
  %v3496 = vsel %vm3432, %v3400, %v3464
  %v3497 = vsel %vm3433, %v3401, %v3465
  %v3498 = vsel %vm3434, %v3402, %v3466
  %v3499 = vsel %vm3435, %v3403, %v3467
  %v3500 = vsel %vm3436, %v3404, %v3468
  %v3501 = vsel %vm3437, %v3405, %v3469
  %v3502 = vsel %vm3438, %v3406, %v3470
  %v3503 = vsel %vm3439, %v3407, %v3471
  %v3504 = vsel %vm3440, %v3408, %v3472
  %v3505 = vsel %vm3441, %v3409, %v3473
  %v3506 = vsel %vm3442, %v3410, %v3474
  %v3507 = vsel %vm3443, %v3411, %v3475
  %v3508 = vsel %vm3444, %v3412, %v3476
  %v3509 = vsel %vm3445, %v3413, %v3477
  %v3510 = vsel %vm3446, %v3414, %v3478
  %v3511 = vsel %vm3447, %v3415, %v3479
  %v3512 = vsel %vm3448, %v3416, %v3480
  %v3513 = vld [vmem:[%s4] sm:$0xff]
  %v3514 = vld [vmem:[%s4 + $0x8] sm:$0xff]
  %v3515 = vld [vmem:[%s4 + $0x10] sm:$0xff]
  %v3516 = vld [vmem:[%s4 + $0x18] sm:$0xff]
  %v3517 = vld [vmem:[%s4 + $0x20] sm:$0xff]
  %v3518 = vld [vmem:[%s4 + $0x28] sm:$0xff]
  %v3519 = vld [vmem:[%s4 + $0x30] sm:$0xff]
  %v3520 = vld [vmem:[%s4 + $0x38] sm:$0xff]
  %v3521 = vld [vmem:[%s4 + $0x40] sm:$0xff]
  %v3522 = vld [vmem:[%s4 + $0x48] sm:$0xff]
  %v3523 = vld [vmem:[%s4 + $0x50] sm:$0xff]
  %v3524 = vld [vmem:[%s4 + $0x58] sm:$0xff]
  %v3525 = vld [vmem:[%s4 + $0x60] sm:$0xff]
  %v3526 = vld [vmem:[%s4 + $0x68] sm:$0xff]
  %v3527 = vld [vmem:[%s4 + $0x70] sm:$0xff]
  %v3528 = vld [vmem:[%s4 + $0x78] sm:$0xff]
  %v3529 = vld [vmem:[%s4 + $0x80] sm:$0xff]
  %v3530 = vld [vmem:[%s4 + $0x88] sm:$0xff]
  %v3531 = vld [vmem:[%s4 + $0x90] sm:$0xff]
  %v3532 = vld [vmem:[%s4 + $0x98] sm:$0xff]
  %v3533 = vld [vmem:[%s4 + $0xa0] sm:$0xff]
  %v3534 = vld [vmem:[%s4 + $0xa8] sm:$0xff]
  %v3535 = vld [vmem:[%s4 + $0xb0] sm:$0xff]
  %v3536 = vld [vmem:[%s4 + $0xb8] sm:$0xff]
  %v3537 = vld [vmem:[%s4 + $0xc0] sm:$0xff]
  %v3538 = vld [vmem:[%s4 + $0xc8] sm:$0xff]
  %v3539 = vld [vmem:[%s4 + $0xd0] sm:$0xff]
  %v3540 = vld [vmem:[%s4 + $0xd8] sm:$0xff]
  %v3541 = vld [vmem:[%s4 + $0xe0] sm:$0xff]
  %v3542 = vld [vmem:[%s4 + $0xe8] sm:$0xff]
  %v3543 = vld [vmem:[%s4 + $0xf0] sm:$0xff]
  %v3544 = vld [vmem:[%s4 + $0xf8] sm:$0xff]
  %v3545 = vld [vmem:[%s4 + $0x100] sm:$0xff]
  %v3546 = vld [vmem:[%s4 + $0x108] sm:$0xff]
  %v3547 = vld [vmem:[%s4 + $0x110] sm:$0xff]
  %v3548 = vld [vmem:[%s4 + $0x118] sm:$0xff]
  %v3549 = vld [vmem:[%s4 + $0x120] sm:$0xff]
  %v3550 = vld [vmem:[%s4 + $0x128] sm:$0xff]
  %v3551 = vld [vmem:[%s4 + $0x130] sm:$0xff]
  %v3552 = vld [vmem:[%s4 + $0x138] sm:$0xff]
  %v3553 = vld [vmem:[%s4 + $0x140] sm:$0xff]
  %v3554 = vld [vmem:[%s4 + $0x148] sm:$0xff]
  %v3555 = vld [vmem:[%s4 + $0x150] sm:$0xff]
  %v3556 = vld [vmem:[%s4 + $0x158] sm:$0xff]
  %v3557 = vld [vmem:[%s4 + $0x160] sm:$0xff]
  %v3558 = vld [vmem:[%s4 + $0x168] sm:$0xff]
  %v3559 = vld [vmem:[%s4 + $0x170] sm:$0xff]
  %v3560 = vld [vmem:[%s4 + $0x178] sm:$0xff]
  %v3561 = vld [vmem:[%s4 + $0x180] sm:$0xff]
  %v3562 = vld [vmem:[%s4 + $0x188] sm:$0xff]
  %v3563 = vld [vmem:[%s4 + $0x190] sm:$0xff]
  %v3564 = vld [vmem:[%s4 + $0x198] sm:$0xff]
  %v3565 = vld [vmem:[%s4 + $0x1a0] sm:$0xff]
  %v3566 = vld [vmem:[%s4 + $0x1a8] sm:$0xff]
  %v3567 = vld [vmem:[%s4 + $0x1b0] sm:$0xff]
  %v3568 = vld [vmem:[%s4 + $0x1b8] sm:$0xff]
  %v3569 = vld [vmem:[%s4 + $0x1c0] sm:$0xff]
  %v3570 = vld [vmem:[%s4 + $0x1c8] sm:$0xff]
  %v3571 = vld [vmem:[%s4 + $0x1d0] sm:$0xff]
  %v3572 = vld [vmem:[%s4 + $0x1d8] sm:$0xff]
  %v3573 = vld [vmem:[%s4 + $0x1e0] sm:$0xff]
  %v3574 = vld [vmem:[%s4 + $0x1e8] sm:$0xff]
  %v3575 = vld [vmem:[%s4 + $0x1f0] sm:$0xff]
  %v3576 = vld [vmem:[%s4 + $0x1f8] sm:$0xff]
  %3577 = vmatpush.msra.mxu0 %v3496
  %3578 = vmatpush.msra.mxu0 %v3495
  %3579 = vmatpush.msra.mxu0 %v3494
  %3580 = vmatpush.msra.mxu0 %v3493
  %3581 = vmatpush.msra.mxu0 %v3492
  %3582 = vmatpush.msra.mxu0 %v3491
  %3583 = vmatpush.msra.mxu0 %v3490
  %3584 = vmatpush.msra.mxu0 %v3489
  %3585 = vmatpush.msra.mxu0 %v3488
  %3586 = vmatpush.msra.mxu0 %v3487
  %3587 = vmatpush.msra.mxu0 %v3486
  %3588 = vmatpush.msra.mxu0 %v3485
  %3589 = vmatpush.msra.mxu0 %v3484
  %3590 = vmatpush.msra.mxu0 %v3483
  %3591 = vmatpush.msra.mxu0 %v3482
  %3592 = vmatpush.msra.mxu0 %v3481
  %3593 = vmatmul.f32.gmra.mxu0 %v3513
  %v3594 = vpop.f32.mrf.mxu0
  %v3595 = vadd.f32 0.0, %v3594
  %3596 = vmatmul.f32.gmra.mxu0 %v3515
  %v3597 = vpop.f32.mrf.mxu0
  %v3598 = vadd.f32 0.0, %v3597
  %3599 = vmatmul.f32.gmra.mxu0 %v3517
  %v3600 = vpop.f32.mrf.mxu0
  %v3601 = vadd.f32 0.0, %v3600
  %3602 = vmatmul.f32.gmra.mxu0 %v3519
  %v3603 = vpop.f32.mrf.mxu0
  %v3604 = vadd.f32 0.0, %v3603
  %3605 = vmatmul.f32.gmra.mxu0 %v3521
  %v3606 = vpop.f32.mrf.mxu0
  %v3607 = vadd.f32 0.0, %v3606
  %3608 = vmatmul.f32.gmra.mxu0 %v3523
  %v3609 = vpop.f32.mrf.mxu0
  %v3610 = vadd.f32 0.0, %v3609
  %3611 = vmatmul.f32.gmra.mxu0 %v3525
  %v3612 = vpop.f32.mrf.mxu0
  %v3613 = vadd.f32 0.0, %v3612
  %3614 = vmatmul.f32.gmra.mxu0 %v3527
  %v3615 = vpop.f32.mrf.mxu0
  %v3616 = vadd.f32 0.0, %v3615
  %3617 = vmatmul.f32.gmra.mxu0 %v3529
  %v3618 = vpop.f32.mrf.mxu0
  %v3619 = vadd.f32 0.0, %v3618
  %3620 = vmatmul.f32.gmra.mxu0 %v3531
  %v3621 = vpop.f32.mrf.mxu0
  %v3622 = vadd.f32 0.0, %v3621
  %3623 = vmatmul.f32.gmra.mxu0 %v3533
  %v3624 = vpop.f32.mrf.mxu0
  %v3625 = vadd.f32 0.0, %v3624
  %3626 = vmatmul.f32.gmra.mxu0 %v3535
  %v3627 = vpop.f32.mrf.mxu0
  %v3628 = vadd.f32 0.0, %v3627
  %3629 = vmatmul.f32.gmra.mxu0 %v3537
  %v3630 = vpop.f32.mrf.mxu0
  %v3631 = vadd.f32 0.0, %v3630
  %3632 = vmatmul.f32.gmra.mxu0 %v3539
  %v3633 = vpop.f32.mrf.mxu0
  %v3634 = vadd.f32 0.0, %v3633
  %3635 = vmatmul.f32.gmra.mxu0 %v3541
  %v3636 = vpop.f32.mrf.mxu0
  %v3637 = vadd.f32 0.0, %v3636
  %3638 = vmatmul.f32.gmra.mxu0 %v3543
  %v3639 = vpop.f32.mrf.mxu0
  %v3640 = vadd.f32 0.0, %v3639
  %3641 = vmatmul.f32.gmra.mxu0 %v3545
  %v3642 = vpop.f32.mrf.mxu0
  %v3643 = vadd.f32 0.0, %v3642
  %3644 = vmatmul.f32.gmra.mxu0 %v3547
  %v3645 = vpop.f32.mrf.mxu0
  %v3646 = vadd.f32 0.0, %v3645
  %3647 = vmatmul.f32.gmra.mxu0 %v3549
  %v3648 = vpop.f32.mrf.mxu0
  %v3649 = vadd.f32 0.0, %v3648
  %3650 = vmatmul.f32.gmra.mxu0 %v3551
  %v3651 = vpop.f32.mrf.mxu0
  %v3652 = vadd.f32 0.0, %v3651
  %3653 = vmatmul.f32.gmra.mxu0 %v3553
  %v3654 = vpop.f32.mrf.mxu0
  %v3655 = vadd.f32 0.0, %v3654
  %3656 = vmatmul.f32.gmra.mxu0 %v3555
  %v3657 = vpop.f32.mrf.mxu0
  %v3658 = vadd.f32 0.0, %v3657
  %3659 = vmatmul.f32.gmra.mxu0 %v3557
  %v3660 = vpop.f32.mrf.mxu0
  %v3661 = vadd.f32 0.0, %v3660
  %3662 = vmatmul.f32.gmra.mxu0 %v3559
  %v3663 = vpop.f32.mrf.mxu0
  %v3664 = vadd.f32 0.0, %v3663
  %3665 = vmatmul.f32.gmra.mxu0 %v3561
  %v3666 = vpop.f32.mrf.mxu0
  %v3667 = vadd.f32 0.0, %v3666
  %3668 = vmatmul.f32.gmra.mxu0 %v3563
  %v3669 = vpop.f32.mrf.mxu0
  %v3670 = vadd.f32 0.0, %v3669
  %3671 = vmatmul.f32.gmra.mxu0 %v3565
  %v3672 = vpop.f32.mrf.mxu0
  %v3673 = vadd.f32 0.0, %v3672
  %3674 = vmatmul.f32.gmra.mxu0 %v3567
  %v3675 = vpop.f32.mrf.mxu0
  %v3676 = vadd.f32 0.0, %v3675
  %3677 = vmatmul.f32.gmra.mxu0 %v3569
  %v3678 = vpop.f32.mrf.mxu0
  %v3679 = vadd.f32 0.0, %v3678
  %3680 = vmatmul.f32.gmra.mxu0 %v3571
  %v3681 = vpop.f32.mrf.mxu0
  %v3682 = vadd.f32 0.0, %v3681
  %3683 = vmatmul.f32.gmra.mxu0 %v3573
  %v3684 = vpop.f32.mrf.mxu0
  %v3685 = vadd.f32 0.0, %v3684
  %3686 = vmatmul.f32.gmra.mxu0 %v3575
  %v3687 = vpop.f32.mrf.mxu0
  %v3688 = vadd.f32 0.0, %v3687
  %3689 = vdwg.mxu0
  %3690 = vmatpush.msra.mxu0 %v3512
  %3691 = vmatpush.msra.mxu0 %v3511
  %3692 = vmatpush.msra.mxu0 %v3510
  %3693 = vmatpush.msra.mxu0 %v3509
  %3694 = vmatpush.msra.mxu0 %v3508
  %3695 = vmatpush.msra.mxu0 %v3507
  %3696 = vmatpush.msra.mxu0 %v3506
  %3697 = vmatpush.msra.mxu0 %v3505
  %3698 = vmatpush.msra.mxu0 %v3504
  %3699 = vmatpush.msra.mxu0 %v3503
  %3700 = vmatpush.msra.mxu0 %v3502
  %3701 = vmatpush.msra.mxu0 %v3501
  %3702 = vmatpush.msra.mxu0 %v3500
  %3703 = vmatpush.msra.mxu0 %v3499
  %3704 = vmatpush.msra.mxu0 %v3498
  %3705 = vmatpush.msra.mxu0 %v3497
  %3706 = vmatmul.f32.gmra.mxu0 %v3514
  %v3707 = vpop.f32.mrf.mxu0
  %v3708 = vadd.f32 %v3595, %v3707
  %3709 = vmatmul.f32.gmra.mxu0 %v3516
  %v3710 = vpop.f32.mrf.mxu0
  %v3711 = vadd.f32 %v3598, %v3710
  %3712 = vmatmul.f32.gmra.mxu0 %v3518
  %v3713 = vpop.f32.mrf.mxu0
  %v3714 = vadd.f32 %v3601, %v3713
  %3715 = vmatmul.f32.gmra.mxu0 %v3520
  %v3716 = vpop.f32.mrf.mxu0
  %v3717 = vadd.f32 %v3604, %v3716
  %3718 = vmatmul.f32.gmra.mxu0 %v3522
  %v3719 = vpop.f32.mrf.mxu0
  %v3720 = vadd.f32 %v3607, %v3719
  %3721 = vmatmul.f32.gmra.mxu0 %v3524
  %v3722 = vpop.f32.mrf.mxu0
  %v3723 = vadd.f32 %v3610, %v3722
  %3724 = vmatmul.f32.gmra.mxu0 %v3526
  %v3725 = vpop.f32.mrf.mxu0
  %v3726 = vadd.f32 %v3613, %v3725
  %3727 = vmatmul.f32.gmra.mxu0 %v3528
  %v3728 = vpop.f32.mrf.mxu0
  %v3729 = vadd.f32 %v3616, %v3728
  %3730 = vmatmul.f32.gmra.mxu0 %v3530
  %v3731 = vpop.f32.mrf.mxu0
  %v3732 = vadd.f32 %v3619, %v3731
  %3733 = vmatmul.f32.gmra.mxu0 %v3532
  %v3734 = vpop.f32.mrf.mxu0
  %v3735 = vadd.f32 %v3622, %v3734
  %3736 = vmatmul.f32.gmra.mxu0 %v3534
  %v3737 = vpop.f32.mrf.mxu0
  %v3738 = vadd.f32 %v3625, %v3737
  %3739 = vmatmul.f32.gmra.mxu0 %v3536
  %v3740 = vpop.f32.mrf.mxu0
  %v3741 = vadd.f32 %v3628, %v3740
  %3742 = vmatmul.f32.gmra.mxu0 %v3538
  %v3743 = vpop.f32.mrf.mxu0
  %v3744 = vadd.f32 %v3631, %v3743
  %3745 = vmatmul.f32.gmra.mxu0 %v3540
  %v3746 = vpop.f32.mrf.mxu0
  %v3747 = vadd.f32 %v3634, %v3746
  %3748 = vmatmul.f32.gmra.mxu0 %v3542
  %v3749 = vpop.f32.mrf.mxu0
  %v3750 = vadd.f32 %v3637, %v3749
  %3751 = vmatmul.f32.gmra.mxu0 %v3544
  %v3752 = vpop.f32.mrf.mxu0
  %v3753 = vadd.f32 %v3640, %v3752
  %3754 = vmatmul.f32.gmra.mxu0 %v3546
  %v3755 = vpop.f32.mrf.mxu0
  %v3756 = vadd.f32 %v3643, %v3755
  %3757 = vmatmul.f32.gmra.mxu0 %v3548
  %v3758 = vpop.f32.mrf.mxu0
  %v3759 = vadd.f32 %v3646, %v3758
  %3760 = vmatmul.f32.gmra.mxu0 %v3550
  %v3761 = vpop.f32.mrf.mxu0
  %v3762 = vadd.f32 %v3649, %v3761
  %3763 = vmatmul.f32.gmra.mxu0 %v3552
  %v3764 = vpop.f32.mrf.mxu0
  %v3765 = vadd.f32 %v3652, %v3764
  %3766 = vmatmul.f32.gmra.mxu0 %v3554
  %v3767 = vpop.f32.mrf.mxu0
  %v3768 = vadd.f32 %v3655, %v3767
  %3769 = vmatmul.f32.gmra.mxu0 %v3556
  %v3770 = vpop.f32.mrf.mxu0
  %v3771 = vadd.f32 %v3658, %v3770
  %3772 = vmatmul.f32.gmra.mxu0 %v3558
  %v3773 = vpop.f32.mrf.mxu0
  %v3774 = vadd.f32 %v3661, %v3773
  %3775 = vmatmul.f32.gmra.mxu0 %v3560
  %v3776 = vpop.f32.mrf.mxu0
  %v3777 = vadd.f32 %v3664, %v3776
  %3778 = vmatmul.f32.gmra.mxu0 %v3562
  %v3779 = vpop.f32.mrf.mxu0
  %v3780 = vadd.f32 %v3667, %v3779
  %3781 = vmatmul.f32.gmra.mxu0 %v3564
  %v3782 = vpop.f32.mrf.mxu0
  %v3783 = vadd.f32 %v3670, %v3782
  %3784 = vmatmul.f32.gmra.mxu0 %v3566
  %v3785 = vpop.f32.mrf.mxu0
  %v3786 = vadd.f32 %v3673, %v3785
  %3787 = vmatmul.f32.gmra.mxu0 %v3568
  %v3788 = vpop.f32.mrf.mxu0
  %v3789 = vadd.f32 %v3676, %v3788
  %3790 = vmatmul.f32.gmra.mxu0 %v3570
  %v3791 = vpop.f32.mrf.mxu0
  %v3792 = vadd.f32 %v3679, %v3791
  %3793 = vmatmul.f32.gmra.mxu0 %v3572
  %v3794 = vpop.f32.mrf.mxu0
  %v3795 = vadd.f32 %v3682, %v3794
  %3796 = vmatmul.f32.gmra.mxu0 %v3574
  %v3797 = vpop.f32.mrf.mxu0
  %v3798 = vadd.f32 %v3685, %v3797
  %3799 = vmatmul.f32.gmra.mxu0 %v3576
  %v3800 = vpop.f32.mrf.mxu0
  %v3801 = vadd.f32 %v3688, %v3800
  %3802 = vdwg.mxu0
  %v3803 = vmul.f32 %v3708, %v1001
  %v3804 = vmul.f32 %v3711, %v1001
  %v3805 = vmul.f32 %v3714, %v1001
  %v3806 = vmul.f32 %v3717, %v1001
  %v3807 = vmul.f32 %v3720, %v1001
  %v3808 = vmul.f32 %v3723, %v1001
  %v3809 = vmul.f32 %v3726, %v1001
  %v3810 = vmul.f32 %v3729, %v1001
  %v3811 = vmul.f32 %v3732, %v1001
  %v3812 = vmul.f32 %v3735, %v1001
  %v3813 = vmul.f32 %v3738, %v1001
  %v3814 = vmul.f32 %v3741, %v1001
  %v3815 = vmul.f32 %v3744, %v1001
  %v3816 = vmul.f32 %v3747, %v1001
  %v3817 = vmul.f32 %v3750, %v1001
  %v3818 = vmul.f32 %v3753, %v1001
  %v3819 = vmul.f32 %v3756, %v1001
  %v3820 = vmul.f32 %v3759, %v1001
  %v3821 = vmul.f32 %v3762, %v1001
  %v3822 = vmul.f32 %v3765, %v1001
  %v3823 = vmul.f32 %v3768, %v1001
  %v3824 = vmul.f32 %v3771, %v1001
  %v3825 = vmul.f32 %v3774, %v1001
  %v3826 = vmul.f32 %v3777, %v1001
  %v3827 = vmul.f32 %v3780, %v1001
  %v3828 = vmul.f32 %v3783, %v1001
  %v3829 = vmul.f32 %v3786, %v1001
  %v3830 = vmul.f32 %v3789, %v1001
  %v3831 = vmul.f32 %v3792, %v1001
  %v3832 = vmul.f32 %v3795, %v1001
  %v3833 = vmul.f32 %v3798, %v1001
  %v3834 = vmul.f32 %v3801, %v1001
  %3835 = vmatpush.msra.mxu0 %v3818
  %3836 = vmatpush.msra.mxu0 %v3817
  %3837 = vmatpush.msra.mxu0 %v3816
  %3838 = vmatpush.msra.mxu0 %v3815
  %3839 = vmatpush.msra.mxu0 %v3814
  %3840 = vmatpush.msra.mxu0 %v3813
  %3841 = vmatpush.msra.mxu0 %v3812
  %3842 = vmatpush.msra.mxu0 %v3811
  %3843 = vmatpush.msra.mxu0 %v3810
  %3844 = vmatpush.msra.mxu0 %v3809
  %3845 = vmatpush.msra.mxu0 %v3808
  %3846 = vmatpush.msra.mxu0 %v3807
  %3847 = vmatpush.msra.mxu0 %v3806
  %3848 = vmatpush.msra.mxu0 %v3805
  %3849 = vmatpush.msra.mxu0 %v3804
  %3850 = vmatpush.msra.mxu0 %v3803
  %3851 = vmatmul.f32.gmra.mxu0 %v964
  %v3852 = vpop.f32.mrf.mxu0
  %v3853 = vadd.f32 0.0, %v3852
  %3854 = vmatmul.f32.gmra.mxu0 %v966
  %v3855 = vpop.f32.mrf.mxu0
  %v3856 = vadd.f32 0.0, %v3855
  %3857 = vdwg.mxu0
  %3858 = vmatpush.msra.mxu0 %v3834
  %3859 = vmatpush.msra.mxu0 %v3833
  %3860 = vmatpush.msra.mxu0 %v3832
  %3861 = vmatpush.msra.mxu0 %v3831
  %3862 = vmatpush.msra.mxu0 %v3830
  %3863 = vmatpush.msra.mxu0 %v3829
  %3864 = vmatpush.msra.mxu0 %v3828
  %3865 = vmatpush.msra.mxu0 %v3827
  %3866 = vmatpush.msra.mxu0 %v3826
  %3867 = vmatpush.msra.mxu0 %v3825
  %3868 = vmatpush.msra.mxu0 %v3824
  %3869 = vmatpush.msra.mxu0 %v3823
  %3870 = vmatpush.msra.mxu0 %v3822
  %3871 = vmatpush.msra.mxu0 %v3821
  %3872 = vmatpush.msra.mxu0 %v3820
  %3873 = vmatpush.msra.mxu0 %v3819
  %3874 = vmatmul.f32.gmra.mxu0 %v965
  %v3875 = vpop.f32.mrf.mxu0
  %v3876 = vadd.f32 %v3853, %v3875
  %3877 = vmatmul.f32.gmra.mxu0 %v967
  %v3878 = vpop.f32.mrf.mxu0
  %v3879 = vadd.f32 %v3856, %v3878
  %3880 = vdwg.mxu0
  %3881 = vmatpush.msra.mxu0 0.0
  %3882 = vmatpush.msra.mxu0 0.0
  %3883 = vmatpush.msra.mxu0 0.0
  %3884 = vmatpush.msra.mxu0 0.0
  %3885 = vmatpush.msra.mxu0 0.0
  %3886 = vmatpush.msra.mxu0 0.0
  %3887 = vmatpush.msra.mxu0 0.0
  %3888 = vmatpush.msra.mxu0 0.0
  %3889 = vmatpush.msra.mxu0 0.0
  %3890 = vmatpush.msra.mxu0 0.0
  %3891 = vmatpush.msra.mxu0 0.0
  %3892 = vmatpush.msra.mxu0 0.0
  %3893 = vmatpush.msra.mxu0 0.0
  %3894 = vmatpush.msra.mxu0 0.0
  %3895 = vmatpush.msra.mxu0 %v3879
  %3896 = vmatpush.msra.mxu0 %v3876
  %3897 = vmatmul.f32.gmra.mxu0 %v1083
  %v3898 = vpop.f32.mrf.mxu0
  %v3899 = vadd.f32 0.0, %v3898
  %3900 = vmatmul.f32.gmra.mxu0 %v1086
  %v3901 = vpop.f32.mrf.mxu0
  %v3902 = vadd.f32 0.0, %v3901
  %3903 = vmatmul.f32.gmra.mxu0 %v1089
  %v3904 = vpop.f32.mrf.mxu0
  %v3905 = vadd.f32 0.0, %v3904
  %3906 = vmatmul.f32.gmra.mxu0 %v1092
  %v3907 = vpop.f32.mrf.mxu0
  %v3908 = vadd.f32 0.0, %v3907
  %3909 = vmatmul.f32.gmra.mxu0 %v1095
  %v3910 = vpop.f32.mrf.mxu0
  %v3911 = vadd.f32 0.0, %v3910
  %3912 = vmatmul.f32.gmra.mxu0 %v1098
  %v3913 = vpop.f32.mrf.mxu0
  %v3914 = vadd.f32 0.0, %v3913
  %3915 = vmatmul.f32.gmra.mxu0 %v1101
  %v3916 = vpop.f32.mrf.mxu0
  %v3917 = vadd.f32 0.0, %v3916
  %3918 = vmatmul.f32.gmra.mxu0 %v1104
  %v3919 = vpop.f32.mrf.mxu0
  %v3920 = vadd.f32 0.0, %v3919
  %3921 = vmatmul.f32.gmra.mxu0 %v1107
  %v3922 = vpop.f32.mrf.mxu0
  %v3923 = vadd.f32 0.0, %v3922
  %3924 = vmatmul.f32.gmra.mxu0 %v1110
  %v3925 = vpop.f32.mrf.mxu0
  %v3926 = vadd.f32 0.0, %v3925
  %3927 = vmatmul.f32.gmra.mxu0 %v1113
  %v3928 = vpop.f32.mrf.mxu0
  %v3929 = vadd.f32 0.0, %v3928
  %3930 = vmatmul.f32.gmra.mxu0 %v1116
  %v3931 = vpop.f32.mrf.mxu0
  %v3932 = vadd.f32 0.0, %v3931
  %3933 = vmatmul.f32.gmra.mxu0 %v1119
  %v3934 = vpop.f32.mrf.mxu0
  %v3935 = vadd.f32 0.0, %v3934
  %3936 = vmatmul.f32.gmra.mxu0 %v1122
  %v3937 = vpop.f32.mrf.mxu0
  %v3938 = vadd.f32 0.0, %v3937
  %3939 = vmatmul.f32.gmra.mxu0 %v1125
  %v3940 = vpop.f32.mrf.mxu0
  %v3941 = vadd.f32 0.0, %v3940
  %3942 = vmatmul.f32.gmra.mxu0 %v1128
  %v3943 = vpop.f32.mrf.mxu0
  %v3944 = vadd.f32 0.0, %v3943
  %3945 = vmatmul.f32.gmra.mxu0 %v1131
  %v3946 = vpop.f32.mrf.mxu0
  %v3947 = vadd.f32 0.0, %v3946
  %3948 = vmatmul.f32.gmra.mxu0 %v1134
  %v3949 = vpop.f32.mrf.mxu0
  %v3950 = vadd.f32 0.0, %v3949
  %3951 = vmatmul.f32.gmra.mxu0 %v1137
  %v3952 = vpop.f32.mrf.mxu0
  %v3953 = vadd.f32 0.0, %v3952
  %3954 = vmatmul.f32.gmra.mxu0 %v1140
  %v3955 = vpop.f32.mrf.mxu0
  %v3956 = vadd.f32 0.0, %v3955
  %3957 = vmatmul.f32.gmra.mxu0 %v1143
  %v3958 = vpop.f32.mrf.mxu0
  %v3959 = vadd.f32 0.0, %v3958
  %3960 = vmatmul.f32.gmra.mxu0 %v1146
  %v3961 = vpop.f32.mrf.mxu0
  %v3962 = vadd.f32 0.0, %v3961
  %3963 = vmatmul.f32.gmra.mxu0 %v1149
  %v3964 = vpop.f32.mrf.mxu0
  %v3965 = vadd.f32 0.0, %v3964
  %3966 = vmatmul.f32.gmra.mxu0 %v1152
  %v3967 = vpop.f32.mrf.mxu0
  %v3968 = vadd.f32 0.0, %v3967
  %3969 = vmatmul.f32.gmra.mxu0 %v1155
  %v3970 = vpop.f32.mrf.mxu0
  %v3971 = vadd.f32 0.0, %v3970
  %3972 = vmatmul.f32.gmra.mxu0 %v1158
  %v3973 = vpop.f32.mrf.mxu0
  %v3974 = vadd.f32 0.0, %v3973
  %3975 = vmatmul.f32.gmra.mxu0 %v1161
  %v3976 = vpop.f32.mrf.mxu0
  %v3977 = vadd.f32 0.0, %v3976
  %3978 = vmatmul.f32.gmra.mxu0 %v1164
  %v3979 = vpop.f32.mrf.mxu0
  %v3980 = vadd.f32 0.0, %v3979
  %3981 = vmatmul.f32.gmra.mxu0 %v1167
  %v3982 = vpop.f32.mrf.mxu0
  %v3983 = vadd.f32 0.0, %v3982
  %3984 = vmatmul.f32.gmra.mxu0 %v1170
  %v3985 = vpop.f32.mrf.mxu0
  %v3986 = vadd.f32 0.0, %v3985
  %3987 = vmatmul.f32.gmra.mxu0 %v1173
  %v3988 = vpop.f32.mrf.mxu0
  %v3989 = vadd.f32 0.0, %v3988
  %3990 = vmatmul.f32.gmra.mxu0 %v1176
  %v3991 = vpop.f32.mrf.mxu0
  %v3992 = vadd.f32 0.0, %v3991
  %3993 = vdwg.mxu0
  %3994 = vadd.xlane.f32.xlu0 %v3899
  %v3995 = vpop.xlane.xlu0 %3994
  %3996 = vadd.xlane.f32.xlu0 %v3902
  %v3997 = vpop.xlane.xlu0 %3996
  %3998 = vadd.xlane.f32.xlu0 %v3905
  %v3999 = vpop.xlane.xlu0 %3998
  %4000 = vadd.xlane.f32.xlu0 %v3908
  %v4001 = vpop.xlane.xlu0 %4000
  %4002 = vadd.xlane.f32.xlu0 %v3911
  %v4003 = vpop.xlane.xlu0 %4002
  %4004 = vadd.xlane.f32.xlu0 %v3914
  %v4005 = vpop.xlane.xlu0 %4004
  %4006 = vadd.xlane.f32.xlu0 %v3917
  %v4007 = vpop.xlane.xlu0 %4006
  %4008 = vadd.xlane.f32.xlu0 %v3920
  %v4009 = vpop.xlane.xlu0 %4008
  %4010 = vadd.xlane.f32.xlu0 %v3923
  %v4011 = vpop.xlane.xlu0 %4010
  %4012 = vadd.xlane.f32.xlu0 %v3926
  %v4013 = vpop.xlane.xlu0 %4012
  %4014 = vadd.xlane.f32.xlu0 %v3929
  %v4015 = vpop.xlane.xlu0 %4014
  %4016 = vadd.xlane.f32.xlu0 %v3932
  %v4017 = vpop.xlane.xlu0 %4016
  %4018 = vadd.xlane.f32.xlu0 %v3935
  %v4019 = vpop.xlane.xlu0 %4018
  %4020 = vadd.xlane.f32.xlu0 %v3938
  %v4021 = vpop.xlane.xlu0 %4020
  %4022 = vadd.xlane.f32.xlu0 %v3941
  %v4023 = vpop.xlane.xlu0 %4022
  %4024 = vadd.xlane.f32.xlu0 %v3944
  %v4025 = vpop.xlane.xlu0 %4024
  %4026 = vadd.xlane.f32.xlu0 %v3947
  %v4027 = vpop.xlane.xlu0 %4026
  %4028 = vadd.xlane.f32.xlu0 %v3950
  %v4029 = vpop.xlane.xlu0 %4028
  %4030 = vadd.xlane.f32.xlu0 %v3953
  %v4031 = vpop.xlane.xlu0 %4030
  %4032 = vadd.xlane.f32.xlu0 %v3956
  %v4033 = vpop.xlane.xlu0 %4032
  %4034 = vadd.xlane.f32.xlu0 %v3959
  %v4035 = vpop.xlane.xlu0 %4034
  %4036 = vadd.xlane.f32.xlu0 %v3962
  %v4037 = vpop.xlane.xlu0 %4036
  %4038 = vadd.xlane.f32.xlu0 %v3965
  %v4039 = vpop.xlane.xlu0 %4038
  %4040 = vadd.xlane.f32.xlu0 %v3968
  %v4041 = vpop.xlane.xlu0 %4040
  %4042 = vadd.xlane.f32.xlu0 %v3971
  %v4043 = vpop.xlane.xlu0 %4042
  %4044 = vadd.xlane.f32.xlu0 %v3974
  %v4045 = vpop.xlane.xlu0 %4044
  %4046 = vadd.xlane.f32.xlu0 %v3977
  %v4047 = vpop.xlane.xlu0 %4046
  %4048 = vadd.xlane.f32.xlu0 %v3980
  %v4049 = vpop.xlane.xlu0 %4048
  %4050 = vadd.xlane.f32.xlu0 %v3983
  %v4051 = vpop.xlane.xlu0 %4050
  %4052 = vadd.xlane.f32.xlu0 %v3986
  %v4053 = vpop.xlane.xlu0 %4052
  %4054 = vadd.xlane.f32.xlu0 %v3989
  %v4055 = vpop.xlane.xlu0 %4054
  %4056 = vadd.xlane.f32.xlu0 %v3992
  %v4057 = vpop.xlane.xlu0 %4056
  %v4058 = vmul.f32 %v3995, 0.00125
  %v4059 = vmul.f32 %v3997, 0.00125
  %v4060 = vmul.f32 %v3999, 0.00125
  %v4061 = vmul.f32 %v4001, 0.00125
  %v4062 = vmul.f32 %v4003, 0.00125
  %v4063 = vmul.f32 %v4005, 0.00125
  %v4064 = vmul.f32 %v4007, 0.00125
  %v4065 = vmul.f32 %v4009, 0.00125
  %v4066 = vmul.f32 %v4011, 0.00125
  %v4067 = vmul.f32 %v4013, 0.00125
  %v4068 = vmul.f32 %v4015, 0.00125
  %v4069 = vmul.f32 %v4017, 0.00125
  %v4070 = vmul.f32 %v4019, 0.00125
  %v4071 = vmul.f32 %v4021, 0.00125
  %v4072 = vmul.f32 %v4023, 0.00125
  %v4073 = vmul.f32 %v4025, 0.00125
  %v4074 = vmul.f32 %v4027, 0.00125
  %v4075 = vmul.f32 %v4029, 0.00125
  %v4076 = vmul.f32 %v4031, 0.00125
  %v4077 = vmul.f32 %v4033, 0.00125
  %v4078 = vmul.f32 %v4035, 0.00125
  %v4079 = vmul.f32 %v4037, 0.00125
  %v4080 = vmul.f32 %v4039, 0.00125
  %v4081 = vmul.f32 %v4041, 0.00125
  %v4082 = vmul.f32 %v4043, 0.00125
  %v4083 = vmul.f32 %v4045, 0.00125
  %v4084 = vmul.f32 %v4047, 0.00125
  %v4085 = vmul.f32 %v4049, 0.00125
  %v4086 = vmul.f32 %v4051, 0.00125
  %v4087 = vmul.f32 %v4053, 0.00125
  %v4088 = vmul.f32 %v4055, 0.00125
  %v4089 = vmul.f32 %v4057, 0.00125
  %v4090 = vsub.f32 %v3708, %v4058
  %v4091 = vsub.f32 %v3711, %v4059
  %v4092 = vsub.f32 %v3714, %v4060
  %v4093 = vsub.f32 %v3717, %v4061
  %v4094 = vsub.f32 %v3720, %v4062
  %v4095 = vsub.f32 %v3723, %v4063
  %v4096 = vsub.f32 %v3726, %v4064
  %v4097 = vsub.f32 %v3729, %v4065
  %v4098 = vsub.f32 %v3732, %v4066
  %v4099 = vsub.f32 %v3735, %v4067
  %v4100 = vsub.f32 %v3738, %v4068
  %v4101 = vsub.f32 %v3741, %v4069
  %v4102 = vsub.f32 %v3744, %v4070
  %v4103 = vsub.f32 %v3747, %v4071
  %v4104 = vsub.f32 %v3750, %v4072
  %v4105 = vsub.f32 %v3753, %v4073
  %v4106 = vsub.f32 %v3756, %v4074
  %v4107 = vsub.f32 %v3759, %v4075
  %v4108 = vsub.f32 %v3762, %v4076
  %v4109 = vsub.f32 %v3765, %v4077
  %v4110 = vsub.f32 %v3768, %v4078
  %v4111 = vsub.f32 %v3771, %v4079
  %v4112 = vsub.f32 %v3774, %v4080
  %v4113 = vsub.f32 %v3777, %v4081
  %v4114 = vsub.f32 %v3780, %v4082
  %v4115 = vsub.f32 %v3783, %v4083
  %v4116 = vsub.f32 %v3786, %v4084
  %v4117 = vsub.f32 %v3789, %v4085
  %v4118 = vsub.f32 %v3792, %v4086
  %v4119 = vsub.f32 %v3795, %v4087
  %v4120 = vsub.f32 %v3798, %v4088
  %v4121 = vsub.f32 %v3801, %v4089
  %v4122 = vmul.f32 %v4090, %v1001
  %v4123 = vmul.f32 %v4091, %v1001
  %v4124 = vmul.f32 %v4092, %v1001
  %v4125 = vmul.f32 %v4093, %v1001
  %v4126 = vmul.f32 %v4094, %v1001
  %v4127 = vmul.f32 %v4095, %v1001
  %v4128 = vmul.f32 %v4096, %v1001
  %v4129 = vmul.f32 %v4097, %v1001
  %v4130 = vmul.f32 %v4098, %v1001
  %v4131 = vmul.f32 %v4099, %v1001
  %v4132 = vmul.f32 %v4100, %v1001
  %v4133 = vmul.f32 %v4101, %v1001
  %v4134 = vmul.f32 %v4102, %v1001
  %v4135 = vmul.f32 %v4103, %v1001
  %v4136 = vmul.f32 %v4104, %v1001
  %v4137 = vmul.f32 %v4105, %v1001
  %v4138 = vmul.f32 %v4106, %v1001
  %v4139 = vmul.f32 %v4107, %v1001
  %v4140 = vmul.f32 %v4108, %v1001
  %v4141 = vmul.f32 %v4109, %v1001
  %v4142 = vmul.f32 %v4110, %v1001
  %v4143 = vmul.f32 %v4111, %v1001
  %v4144 = vmul.f32 %v4112, %v1001
  %v4145 = vmul.f32 %v4113, %v1001
  %v4146 = vmul.f32 %v4114, %v1001
  %v4147 = vmul.f32 %v4115, %v1001
  %v4148 = vmul.f32 %v4116, %v1001
  %v4149 = vmul.f32 %v4117, %v1001
  %v4150 = vmul.f32 %v4118, %v1001
  %v4151 = vmul.f32 %v4119, %v1001
  %v4152 = vmul.f32 %v4120, %v1001
  %v4153 = vmul.f32 %v4121, %v1001
  %v4154 = vmul.f32 %v4122, %v4122
  %v4155 = vmul.f32 %v4123, %v4123
  %v4156 = vmul.f32 %v4124, %v4124
  %v4157 = vmul.f32 %v4125, %v4125
  %v4158 = vmul.f32 %v4126, %v4126
  %v4159 = vmul.f32 %v4127, %v4127
  %v4160 = vmul.f32 %v4128, %v4128
  %v4161 = vmul.f32 %v4129, %v4129
  %v4162 = vmul.f32 %v4130, %v4130
  %v4163 = vmul.f32 %v4131, %v4131
  %v4164 = vmul.f32 %v4132, %v4132
  %v4165 = vmul.f32 %v4133, %v4133
  %v4166 = vmul.f32 %v4134, %v4134
  %v4167 = vmul.f32 %v4135, %v4135
  %v4168 = vmul.f32 %v4136, %v4136
  %v4169 = vmul.f32 %v4137, %v4137
  %v4170 = vmul.f32 %v4138, %v4138
  %v4171 = vmul.f32 %v4139, %v4139
  %v4172 = vmul.f32 %v4140, %v4140
  %v4173 = vmul.f32 %v4141, %v4141
  %v4174 = vmul.f32 %v4142, %v4142
  %v4175 = vmul.f32 %v4143, %v4143
  %v4176 = vmul.f32 %v4144, %v4144
  %v4177 = vmul.f32 %v4145, %v4145
  %v4178 = vmul.f32 %v4146, %v4146
  %v4179 = vmul.f32 %v4147, %v4147
  %v4180 = vmul.f32 %v4148, %v4148
  %v4181 = vmul.f32 %v4149, %v4149
  %v4182 = vmul.f32 %v4150, %v4150
  %v4183 = vmul.f32 %v4151, %v4151
  %v4184 = vmul.f32 %v4152, %v4152
  %v4185 = vmul.f32 %v4153, %v4153
  %4186 = vmatpush.msra.mxu0 %v4169
  %4187 = vmatpush.msra.mxu0 %v4168
  %4188 = vmatpush.msra.mxu0 %v4167
  %4189 = vmatpush.msra.mxu0 %v4166
  %4190 = vmatpush.msra.mxu0 %v4165
  %4191 = vmatpush.msra.mxu0 %v4164
  %4192 = vmatpush.msra.mxu0 %v4163
  %4193 = vmatpush.msra.mxu0 %v4162
  %4194 = vmatpush.msra.mxu0 %v4161
  %4195 = vmatpush.msra.mxu0 %v4160
  %4196 = vmatpush.msra.mxu0 %v4159
  %4197 = vmatpush.msra.mxu0 %v4158
  %4198 = vmatpush.msra.mxu0 %v4157
  %4199 = vmatpush.msra.mxu0 %v4156
  %4200 = vmatpush.msra.mxu0 %v4155
  %4201 = vmatpush.msra.mxu0 %v4154
  %4202 = vmatmul.f32.gmra.mxu0 %v964
  %v4203 = vpop.f32.mrf.mxu0
  %v4204 = vadd.f32 0.0, %v4203
  %4205 = vmatmul.f32.gmra.mxu0 %v966
  %v4206 = vpop.f32.mrf.mxu0
  %v4207 = vadd.f32 0.0, %v4206
  %4208 = vdwg.mxu0
  %4209 = vmatpush.msra.mxu0 %v4185
  %4210 = vmatpush.msra.mxu0 %v4184
  %4211 = vmatpush.msra.mxu0 %v4183
  %4212 = vmatpush.msra.mxu0 %v4182
  %4213 = vmatpush.msra.mxu0 %v4181
  %4214 = vmatpush.msra.mxu0 %v4180
  %4215 = vmatpush.msra.mxu0 %v4179
  %4216 = vmatpush.msra.mxu0 %v4178
  %4217 = vmatpush.msra.mxu0 %v4177
  %4218 = vmatpush.msra.mxu0 %v4176
  %4219 = vmatpush.msra.mxu0 %v4175
  %4220 = vmatpush.msra.mxu0 %v4174
  %4221 = vmatpush.msra.mxu0 %v4173
  %4222 = vmatpush.msra.mxu0 %v4172
  %4223 = vmatpush.msra.mxu0 %v4171
  %4224 = vmatpush.msra.mxu0 %v4170
  %4225 = vmatmul.f32.gmra.mxu0 %v965
  %v4226 = vpop.f32.mrf.mxu0
  %v4227 = vadd.f32 %v4204, %v4226
  %4228 = vmatmul.f32.gmra.mxu0 %v967
  %v4229 = vpop.f32.mrf.mxu0
  %v4230 = vadd.f32 %v4207, %v4229
  %4231 = vdwg.mxu0
  %4232 = vmatpush.msra.mxu0 0.0
  %4233 = vmatpush.msra.mxu0 0.0
  %4234 = vmatpush.msra.mxu0 0.0
  %4235 = vmatpush.msra.mxu0 0.0
  %4236 = vmatpush.msra.mxu0 0.0
  %4237 = vmatpush.msra.mxu0 0.0
  %4238 = vmatpush.msra.mxu0 0.0
  %4239 = vmatpush.msra.mxu0 0.0
  %4240 = vmatpush.msra.mxu0 0.0
  %4241 = vmatpush.msra.mxu0 0.0
  %4242 = vmatpush.msra.mxu0 0.0
  %4243 = vmatpush.msra.mxu0 0.0
  %4244 = vmatpush.msra.mxu0 0.0
  %4245 = vmatpush.msra.mxu0 0.0
  %4246 = vmatpush.msra.mxu0 %v4230
  %4247 = vmatpush.msra.mxu0 %v4227
  %4248 = vmatmul.f32.gmra.mxu0 %v1083
  %v4249 = vpop.f32.mrf.mxu0
  %v4250 = vadd.f32 0.0, %v4249
  %4251 = vmatmul.f32.gmra.mxu0 %v1086
  %v4252 = vpop.f32.mrf.mxu0
  %v4253 = vadd.f32 0.0, %v4252
  %4254 = vmatmul.f32.gmra.mxu0 %v1089
  %v4255 = vpop.f32.mrf.mxu0
  %v4256 = vadd.f32 0.0, %v4255
  %4257 = vmatmul.f32.gmra.mxu0 %v1092
  %v4258 = vpop.f32.mrf.mxu0
  %v4259 = vadd.f32 0.0, %v4258
  %4260 = vmatmul.f32.gmra.mxu0 %v1095
  %v4261 = vpop.f32.mrf.mxu0
  %v4262 = vadd.f32 0.0, %v4261
  %4263 = vmatmul.f32.gmra.mxu0 %v1098
  %v4264 = vpop.f32.mrf.mxu0
  %v4265 = vadd.f32 0.0, %v4264
  %4266 = vmatmul.f32.gmra.mxu0 %v1101
  %v4267 = vpop.f32.mrf.mxu0
  %v4268 = vadd.f32 0.0, %v4267
  %4269 = vmatmul.f32.gmra.mxu0 %v1104
  %v4270 = vpop.f32.mrf.mxu0
  %v4271 = vadd.f32 0.0, %v4270
  %4272 = vmatmul.f32.gmra.mxu0 %v1107
  %v4273 = vpop.f32.mrf.mxu0
  %v4274 = vadd.f32 0.0, %v4273
  %4275 = vmatmul.f32.gmra.mxu0 %v1110
  %v4276 = vpop.f32.mrf.mxu0
  %v4277 = vadd.f32 0.0, %v4276
  %4278 = vmatmul.f32.gmra.mxu0 %v1113
  %v4279 = vpop.f32.mrf.mxu0
  %v4280 = vadd.f32 0.0, %v4279
  %4281 = vmatmul.f32.gmra.mxu0 %v1116
  %v4282 = vpop.f32.mrf.mxu0
  %v4283 = vadd.f32 0.0, %v4282
  %4284 = vmatmul.f32.gmra.mxu0 %v1119
  %v4285 = vpop.f32.mrf.mxu0
  %v4286 = vadd.f32 0.0, %v4285
  %4287 = vmatmul.f32.gmra.mxu0 %v1122
  %v4288 = vpop.f32.mrf.mxu0
  %v4289 = vadd.f32 0.0, %v4288
  %4290 = vmatmul.f32.gmra.mxu0 %v1125
  %v4291 = vpop.f32.mrf.mxu0
  %v4292 = vadd.f32 0.0, %v4291
  %4293 = vmatmul.f32.gmra.mxu0 %v1128
  %v4294 = vpop.f32.mrf.mxu0
  %v4295 = vadd.f32 0.0, %v4294
  %4296 = vmatmul.f32.gmra.mxu0 %v1131
  %v4297 = vpop.f32.mrf.mxu0
  %v4298 = vadd.f32 0.0, %v4297
  %4299 = vmatmul.f32.gmra.mxu0 %v1134
  %v4300 = vpop.f32.mrf.mxu0
  %v4301 = vadd.f32 0.0, %v4300
  %4302 = vmatmul.f32.gmra.mxu0 %v1137
  %v4303 = vpop.f32.mrf.mxu0
  %v4304 = vadd.f32 0.0, %v4303
  %4305 = vmatmul.f32.gmra.mxu0 %v1140
  %v4306 = vpop.f32.mrf.mxu0
  %v4307 = vadd.f32 0.0, %v4306
  %4308 = vmatmul.f32.gmra.mxu0 %v1143
  %v4309 = vpop.f32.mrf.mxu0
  %v4310 = vadd.f32 0.0, %v4309
  %4311 = vmatmul.f32.gmra.mxu0 %v1146
  %v4312 = vpop.f32.mrf.mxu0
  %v4313 = vadd.f32 0.0, %v4312
  %4314 = vmatmul.f32.gmra.mxu0 %v1149
  %v4315 = vpop.f32.mrf.mxu0
  %v4316 = vadd.f32 0.0, %v4315
  %4317 = vmatmul.f32.gmra.mxu0 %v1152
  %v4318 = vpop.f32.mrf.mxu0
  %v4319 = vadd.f32 0.0, %v4318
  %4320 = vmatmul.f32.gmra.mxu0 %v1155
  %v4321 = vpop.f32.mrf.mxu0
  %v4322 = vadd.f32 0.0, %v4321
  %4323 = vmatmul.f32.gmra.mxu0 %v1158
  %v4324 = vpop.f32.mrf.mxu0
  %v4325 = vadd.f32 0.0, %v4324
  %4326 = vmatmul.f32.gmra.mxu0 %v1161
  %v4327 = vpop.f32.mrf.mxu0
  %v4328 = vadd.f32 0.0, %v4327
  %4329 = vmatmul.f32.gmra.mxu0 %v1164
  %v4330 = vpop.f32.mrf.mxu0
  %v4331 = vadd.f32 0.0, %v4330
  %4332 = vmatmul.f32.gmra.mxu0 %v1167
  %v4333 = vpop.f32.mrf.mxu0
  %v4334 = vadd.f32 0.0, %v4333
  %4335 = vmatmul.f32.gmra.mxu0 %v1170
  %v4336 = vpop.f32.mrf.mxu0
  %v4337 = vadd.f32 0.0, %v4336
  %4338 = vmatmul.f32.gmra.mxu0 %v1173
  %v4339 = vpop.f32.mrf.mxu0
  %v4340 = vadd.f32 0.0, %v4339
  %4341 = vmatmul.f32.gmra.mxu0 %v1176
  %v4342 = vpop.f32.mrf.mxu0
  %v4343 = vadd.f32 0.0, %v4342
  %4344 = vdwg.mxu0
  %4345 = vadd.xlane.f32.xlu0 %v4250
  %v4346 = vpop.xlane.xlu0 %4345
  %4347 = vadd.xlane.f32.xlu0 %v4253
  %v4348 = vpop.xlane.xlu0 %4347
  %4349 = vadd.xlane.f32.xlu0 %v4256
  %v4350 = vpop.xlane.xlu0 %4349
  %4351 = vadd.xlane.f32.xlu0 %v4259
  %v4352 = vpop.xlane.xlu0 %4351
  %4353 = vadd.xlane.f32.xlu0 %v4262
  %v4354 = vpop.xlane.xlu0 %4353
  %4355 = vadd.xlane.f32.xlu0 %v4265
  %v4356 = vpop.xlane.xlu0 %4355
  %4357 = vadd.xlane.f32.xlu0 %v4268
  %v4358 = vpop.xlane.xlu0 %4357
  %4359 = vadd.xlane.f32.xlu0 %v4271
  %v4360 = vpop.xlane.xlu0 %4359
  %4361 = vadd.xlane.f32.xlu0 %v4274
  %v4362 = vpop.xlane.xlu0 %4361
  %4363 = vadd.xlane.f32.xlu0 %v4277
  %v4364 = vpop.xlane.xlu0 %4363
  %4365 = vadd.xlane.f32.xlu0 %v4280
  %v4366 = vpop.xlane.xlu0 %4365
  %4367 = vadd.xlane.f32.xlu0 %v4283
  %v4368 = vpop.xlane.xlu0 %4367
  %4369 = vadd.xlane.f32.xlu0 %v4286
  %v4370 = vpop.xlane.xlu0 %4369
  %4371 = vadd.xlane.f32.xlu0 %v4289
  %v4372 = vpop.xlane.xlu0 %4371
  %4373 = vadd.xlane.f32.xlu0 %v4292
  %v4374 = vpop.xlane.xlu0 %4373
  %4375 = vadd.xlane.f32.xlu0 %v4295
  %v4376 = vpop.xlane.xlu0 %4375
  %4377 = vadd.xlane.f32.xlu0 %v4298
  %v4378 = vpop.xlane.xlu0 %4377
  %4379 = vadd.xlane.f32.xlu0 %v4301
  %v4380 = vpop.xlane.xlu0 %4379
  %4381 = vadd.xlane.f32.xlu0 %v4304
  %v4382 = vpop.xlane.xlu0 %4381
  %4383 = vadd.xlane.f32.xlu0 %v4307
  %v4384 = vpop.xlane.xlu0 %4383
  %4385 = vadd.xlane.f32.xlu0 %v4310
  %v4386 = vpop.xlane.xlu0 %4385
  %4387 = vadd.xlane.f32.xlu0 %v4313
  %v4388 = vpop.xlane.xlu0 %4387
  %4389 = vadd.xlane.f32.xlu0 %v4316
  %v4390 = vpop.xlane.xlu0 %4389
  %4391 = vadd.xlane.f32.xlu0 %v4319
  %v4392 = vpop.xlane.xlu0 %4391
  %4393 = vadd.xlane.f32.xlu0 %v4322
  %v4394 = vpop.xlane.xlu0 %4393
  %4395 = vadd.xlane.f32.xlu0 %v4325
  %v4396 = vpop.xlane.xlu0 %4395
  %4397 = vadd.xlane.f32.xlu0 %v4328
  %v4398 = vpop.xlane.xlu0 %4397
  %4399 = vadd.xlane.f32.xlu0 %v4331
  %v4400 = vpop.xlane.xlu0 %4399
  %4401 = vadd.xlane.f32.xlu0 %v4334
  %v4402 = vpop.xlane.xlu0 %4401
  %4403 = vadd.xlane.f32.xlu0 %v4337
  %v4404 = vpop.xlane.xlu0 %4403
  %4405 = vadd.xlane.f32.xlu0 %v4340
  %v4406 = vpop.xlane.xlu0 %4405
  %4407 = vadd.xlane.f32.xlu0 %v4343
  %v4408 = vpop.xlane.xlu0 %4407
  %v4409 = vmul.f32 %v4346, 0.00125
  %v4410 = vmul.f32 %v4348, 0.00125
  %v4411 = vmul.f32 %v4350, 0.00125
  %v4412 = vmul.f32 %v4352, 0.00125
  %v4413 = vmul.f32 %v4354, 0.00125
  %v4414 = vmul.f32 %v4356, 0.00125
  %v4415 = vmul.f32 %v4358, 0.00125
  %v4416 = vmul.f32 %v4360, 0.00125
  %v4417 = vmul.f32 %v4362, 0.00125
  %v4418 = vmul.f32 %v4364, 0.00125
  %v4419 = vmul.f32 %v4366, 0.00125
  %v4420 = vmul.f32 %v4368, 0.00125
  %v4421 = vmul.f32 %v4370, 0.00125
  %v4422 = vmul.f32 %v4372, 0.00125
  %v4423 = vmul.f32 %v4374, 0.00125
  %v4424 = vmul.f32 %v4376, 0.00125
  %v4425 = vmul.f32 %v4378, 0.00125
  %v4426 = vmul.f32 %v4380, 0.00125
  %v4427 = vmul.f32 %v4382, 0.00125
  %v4428 = vmul.f32 %v4384, 0.00125
  %v4429 = vmul.f32 %v4386, 0.00125
  %v4430 = vmul.f32 %v4388, 0.00125
  %v4431 = vmul.f32 %v4390, 0.00125
  %v4432 = vmul.f32 %v4392, 0.00125
  %v4433 = vmul.f32 %v4394, 0.00125
  %v4434 = vmul.f32 %v4396, 0.00125
  %v4435 = vmul.f32 %v4398, 0.00125
  %v4436 = vmul.f32 %v4400, 0.00125
  %v4437 = vmul.f32 %v4402, 0.00125
  %v4438 = vmul.f32 %v4404, 0.00125
  %v4439 = vmul.f32 %v4406, 0.00125
  %v4440 = vmul.f32 %v4408, 0.00125
  %v4441 = vadd.f32 %v4409, 1e-05
  %v4442 = vadd.f32 %v4410, 1e-05
  %v4443 = vadd.f32 %v4411, 1e-05
  %v4444 = vadd.f32 %v4412, 1e-05
  %v4445 = vadd.f32 %v4413, 1e-05
  %v4446 = vadd.f32 %v4414, 1e-05
  %v4447 = vadd.f32 %v4415, 1e-05
  %v4448 = vadd.f32 %v4416, 1e-05
  %v4449 = vadd.f32 %v4417, 1e-05
  %v4450 = vadd.f32 %v4418, 1e-05
  %v4451 = vadd.f32 %v4419, 1e-05
  %v4452 = vadd.f32 %v4420, 1e-05
  %v4453 = vadd.f32 %v4421, 1e-05
  %v4454 = vadd.f32 %v4422, 1e-05
  %v4455 = vadd.f32 %v4423, 1e-05
  %v4456 = vadd.f32 %v4424, 1e-05
  %v4457 = vadd.f32 %v4425, 1e-05
  %v4458 = vadd.f32 %v4426, 1e-05
  %v4459 = vadd.f32 %v4427, 1e-05
  %v4460 = vadd.f32 %v4428, 1e-05
  %v4461 = vadd.f32 %v4429, 1e-05
  %v4462 = vadd.f32 %v4430, 1e-05
  %v4463 = vadd.f32 %v4431, 1e-05
  %v4464 = vadd.f32 %v4432, 1e-05
  %v4465 = vadd.f32 %v4433, 1e-05
  %v4466 = vadd.f32 %v4434, 1e-05
  %v4467 = vadd.f32 %v4435, 1e-05
  %v4468 = vadd.f32 %v4436, 1e-05
  %v4469 = vadd.f32 %v4437, 1e-05
  %v4470 = vadd.f32 %v4438, 1e-05
  %v4471 = vadd.f32 %v4439, 1e-05
  %v4472 = vadd.f32 %v4440, 1e-05
  %v4473 = vrsqrt.pop %v4441
  %v4474 = vmul.f32 %v4473, %v4441
  %v4475 = vmul.f32 %v4474, %v4473
  %v4476 = vmul.f32 0.5, %v4475
  %v4477 = vsub.f32 1.5, %v4476
  %v4478 = vmul.f32 %v4473, %v4477
  %vm4479 = vweird.f32 %v4441
  %vm4480 = vweird.f32 %v4473
  %vm4481 = vmor %vm4479, %vm4480
  %v4482 = vsel %vm4481, %v4473, %v4478
  %v4483 = vrsqrt.pop %v4442
  %v4484 = vmul.f32 %v4483, %v4442
  %v4485 = vmul.f32 %v4484, %v4483
  %v4486 = vmul.f32 0.5, %v4485
  %v4487 = vsub.f32 1.5, %v4486
  %v4488 = vmul.f32 %v4483, %v4487
  %vm4489 = vweird.f32 %v4442
  %vm4490 = vweird.f32 %v4483
  %vm4491 = vmor %vm4489, %vm4490
  %v4492 = vsel %vm4491, %v4483, %v4488
  %v4493 = vrsqrt.pop %v4443
  %v4494 = vmul.f32 %v4493, %v4443
  %v4495 = vmul.f32 %v4494, %v4493
  %v4496 = vmul.f32 0.5, %v4495
  %v4497 = vsub.f32 1.5, %v4496
  %v4498 = vmul.f32 %v4493, %v4497
  %vm4499 = vweird.f32 %v4443
  %vm4500 = vweird.f32 %v4493
  %vm4501 = vmor %vm4499, %vm4500
  %v4502 = vsel %vm4501, %v4493, %v4498
  %v4503 = vrsqrt.pop %v4444
  %v4504 = vmul.f32 %v4503, %v4444
  %v4505 = vmul.f32 %v4504, %v4503
  %v4506 = vmul.f32 0.5, %v4505
  %v4507 = vsub.f32 1.5, %v4506
  %v4508 = vmul.f32 %v4503, %v4507
  %vm4509 = vweird.f32 %v4444
  %vm4510 = vweird.f32 %v4503
  %vm4511 = vmor %vm4509, %vm4510
  %v4512 = vsel %vm4511, %v4503, %v4508
  %v4513 = vrsqrt.pop %v4445
  %v4514 = vmul.f32 %v4513, %v4445
  %v4515 = vmul.f32 %v4514, %v4513
  %v4516 = vmul.f32 0.5, %v4515
  %v4517 = vsub.f32 1.5, %v4516
  %v4518 = vmul.f32 %v4513, %v4517
  %vm4519 = vweird.f32 %v4445
  %vm4520 = vweird.f32 %v4513
  %vm4521 = vmor %vm4519, %vm4520
  %v4522 = vsel %vm4521, %v4513, %v4518
  %v4523 = vrsqrt.pop %v4446
  %v4524 = vmul.f32 %v4523, %v4446
  %v4525 = vmul.f32 %v4524, %v4523
  %v4526 = vmul.f32 0.5, %v4525
  %v4527 = vsub.f32 1.5, %v4526
  %v4528 = vmul.f32 %v4523, %v4527
  %vm4529 = vweird.f32 %v4446
  %vm4530 = vweird.f32 %v4523
  %vm4531 = vmor %vm4529, %vm4530
  %v4532 = vsel %vm4531, %v4523, %v4528
  %v4533 = vrsqrt.pop %v4447
  %v4534 = vmul.f32 %v4533, %v4447
  %v4535 = vmul.f32 %v4534, %v4533
  %v4536 = vmul.f32 0.5, %v4535
  %v4537 = vsub.f32 1.5, %v4536
  %v4538 = vmul.f32 %v4533, %v4537
  %vm4539 = vweird.f32 %v4447
  %vm4540 = vweird.f32 %v4533
  %vm4541 = vmor %vm4539, %vm4540
  %v4542 = vsel %vm4541, %v4533, %v4538
  %v4543 = vrsqrt.pop %v4448
  %v4544 = vmul.f32 %v4543, %v4448
  %v4545 = vmul.f32 %v4544, %v4543
  %v4546 = vmul.f32 0.5, %v4545
  %v4547 = vsub.f32 1.5, %v4546
  %v4548 = vmul.f32 %v4543, %v4547
  %vm4549 = vweird.f32 %v4448
  %vm4550 = vweird.f32 %v4543
  %vm4551 = vmor %vm4549, %vm4550
  %v4552 = vsel %vm4551, %v4543, %v4548
  %v4553 = vrsqrt.pop %v4449
  %v4554 = vmul.f32 %v4553, %v4449
  %v4555 = vmul.f32 %v4554, %v4553
  %v4556 = vmul.f32 0.5, %v4555
  %v4557 = vsub.f32 1.5, %v4556
  %v4558 = vmul.f32 %v4553, %v4557
  %vm4559 = vweird.f32 %v4449
  %vm4560 = vweird.f32 %v4553
  %vm4561 = vmor %vm4559, %vm4560
  %v4562 = vsel %vm4561, %v4553, %v4558
  %v4563 = vrsqrt.pop %v4450
  %v4564 = vmul.f32 %v4563, %v4450
  %v4565 = vmul.f32 %v4564, %v4563
  %v4566 = vmul.f32 0.5, %v4565
  %v4567 = vsub.f32 1.5, %v4566
  %v4568 = vmul.f32 %v4563, %v4567
  %vm4569 = vweird.f32 %v4450
  %vm4570 = vweird.f32 %v4563
  %vm4571 = vmor %vm4569, %vm4570
  %v4572 = vsel %vm4571, %v4563, %v4568
  %v4573 = vrsqrt.pop %v4451
  %v4574 = vmul.f32 %v4573, %v4451
  %v4575 = vmul.f32 %v4574, %v4573
  %v4576 = vmul.f32 0.5, %v4575
  %v4577 = vsub.f32 1.5, %v4576
  %v4578 = vmul.f32 %v4573, %v4577
  %vm4579 = vweird.f32 %v4451
  %vm4580 = vweird.f32 %v4573
  %vm4581 = vmor %vm4579, %vm4580
  %v4582 = vsel %vm4581, %v4573, %v4578
  %v4583 = vrsqrt.pop %v4452
  %v4584 = vmul.f32 %v4583, %v4452
  %v4585 = vmul.f32 %v4584, %v4583
  %v4586 = vmul.f32 0.5, %v4585
  %v4587 = vsub.f32 1.5, %v4586
  %v4588 = vmul.f32 %v4583, %v4587
  %vm4589 = vweird.f32 %v4452
  %vm4590 = vweird.f32 %v4583
  %vm4591 = vmor %vm4589, %vm4590
  %v4592 = vsel %vm4591, %v4583, %v4588
  %v4593 = vrsqrt.pop %v4453
  %v4594 = vmul.f32 %v4593, %v4453
  %v4595 = vmul.f32 %v4594, %v4593
  %v4596 = vmul.f32 0.5, %v4595
  %v4597 = vsub.f32 1.5, %v4596
  %v4598 = vmul.f32 %v4593, %v4597
  %vm4599 = vweird.f32 %v4453
  %vm4600 = vweird.f32 %v4593
  %vm4601 = vmor %vm4599, %vm4600
  %v4602 = vsel %vm4601, %v4593, %v4598
  %v4603 = vrsqrt.pop %v4454
  %v4604 = vmul.f32 %v4603, %v4454
  %v4605 = vmul.f32 %v4604, %v4603
  %v4606 = vmul.f32 0.5, %v4605
  %v4607 = vsub.f32 1.5, %v4606
  %v4608 = vmul.f32 %v4603, %v4607
  %vm4609 = vweird.f32 %v4454
  %vm4610 = vweird.f32 %v4603
  %vm4611 = vmor %vm4609, %vm4610
  %v4612 = vsel %vm4611, %v4603, %v4608
  %v4613 = vrsqrt.pop %v4455
  %v4614 = vmul.f32 %v4613, %v4455
  %v4615 = vmul.f32 %v4614, %v4613
  %v4616 = vmul.f32 0.5, %v4615
  %v4617 = vsub.f32 1.5, %v4616
  %v4618 = vmul.f32 %v4613, %v4617
  %vm4619 = vweird.f32 %v4455
  %vm4620 = vweird.f32 %v4613
  %vm4621 = vmor %vm4619, %vm4620
  %v4622 = vsel %vm4621, %v4613, %v4618
  %v4623 = vrsqrt.pop %v4456
  %v4624 = vmul.f32 %v4623, %v4456
  %v4625 = vmul.f32 %v4624, %v4623
  %v4626 = vmul.f32 0.5, %v4625
  %v4627 = vsub.f32 1.5, %v4626
  %v4628 = vmul.f32 %v4623, %v4627
  %vm4629 = vweird.f32 %v4456
  %vm4630 = vweird.f32 %v4623
  %vm4631 = vmor %vm4629, %vm4630
  %v4632 = vsel %vm4631, %v4623, %v4628
  %v4633 = vrsqrt.pop %v4457
  %v4634 = vmul.f32 %v4633, %v4457
  %v4635 = vmul.f32 %v4634, %v4633
  %v4636 = vmul.f32 0.5, %v4635
  %v4637 = vsub.f32 1.5, %v4636
  %v4638 = vmul.f32 %v4633, %v4637
  %vm4639 = vweird.f32 %v4457
  %vm4640 = vweird.f32 %v4633
  %vm4641 = vmor %vm4639, %vm4640
  %v4642 = vsel %vm4641, %v4633, %v4638
  %v4643 = vrsqrt.pop %v4458
  %v4644 = vmul.f32 %v4643, %v4458
  %v4645 = vmul.f32 %v4644, %v4643
  %v4646 = vmul.f32 0.5, %v4645
  %v4647 = vsub.f32 1.5, %v4646
  %v4648 = vmul.f32 %v4643, %v4647
  %vm4649 = vweird.f32 %v4458
  %vm4650 = vweird.f32 %v4643
  %vm4651 = vmor %vm4649, %vm4650
  %v4652 = vsel %vm4651, %v4643, %v4648
  %v4653 = vrsqrt.pop %v4459
  %v4654 = vmul.f32 %v4653, %v4459
  %v4655 = vmul.f32 %v4654, %v4653
  %v4656 = vmul.f32 0.5, %v4655
  %v4657 = vsub.f32 1.5, %v4656
  %v4658 = vmul.f32 %v4653, %v4657
  %vm4659 = vweird.f32 %v4459
  %vm4660 = vweird.f32 %v4653
  %vm4661 = vmor %vm4659, %vm4660
  %v4662 = vsel %vm4661, %v4653, %v4658
  %v4663 = vrsqrt.pop %v4460
  %v4664 = vmul.f32 %v4663, %v4460
  %v4665 = vmul.f32 %v4664, %v4663
  %v4666 = vmul.f32 0.5, %v4665
  %v4667 = vsub.f32 1.5, %v4666
  %v4668 = vmul.f32 %v4663, %v4667
  %vm4669 = vweird.f32 %v4460
  %vm4670 = vweird.f32 %v4663
  %vm4671 = vmor %vm4669, %vm4670
  %v4672 = vsel %vm4671, %v4663, %v4668
  %v4673 = vrsqrt.pop %v4461
  %v4674 = vmul.f32 %v4673, %v4461
  %v4675 = vmul.f32 %v4674, %v4673
  %v4676 = vmul.f32 0.5, %v4675
  %v4677 = vsub.f32 1.5, %v4676
  %v4678 = vmul.f32 %v4673, %v4677
  %vm4679 = vweird.f32 %v4461
  %vm4680 = vweird.f32 %v4673
  %vm4681 = vmor %vm4679, %vm4680
  %v4682 = vsel %vm4681, %v4673, %v4678
  %v4683 = vrsqrt.pop %v4462
  %v4684 = vmul.f32 %v4683, %v4462
  %v4685 = vmul.f32 %v4684, %v4683
  %v4686 = vmul.f32 0.5, %v4685
  %v4687 = vsub.f32 1.5, %v4686
  %v4688 = vmul.f32 %v4683, %v4687
  %vm4689 = vweird.f32 %v4462
  %vm4690 = vweird.f32 %v4683
  %vm4691 = vmor %vm4689, %vm4690
  %v4692 = vsel %vm4691, %v4683, %v4688
  %v4693 = vrsqrt.pop %v4463
  %v4694 = vmul.f32 %v4693, %v4463
  %v4695 = vmul.f32 %v4694, %v4693
  %v4696 = vmul.f32 0.5, %v4695
  %v4697 = vsub.f32 1.5, %v4696
  %v4698 = vmul.f32 %v4693, %v4697
  %vm4699 = vweird.f32 %v4463
  %vm4700 = vweird.f32 %v4693
  %vm4701 = vmor %vm4699, %vm4700
  %v4702 = vsel %vm4701, %v4693, %v4698
  %v4703 = vrsqrt.pop %v4464
  %v4704 = vmul.f32 %v4703, %v4464
  %v4705 = vmul.f32 %v4704, %v4703
  %v4706 = vmul.f32 0.5, %v4705
  %v4707 = vsub.f32 1.5, %v4706
  %v4708 = vmul.f32 %v4703, %v4707
  %vm4709 = vweird.f32 %v4464
  %vm4710 = vweird.f32 %v4703
  %vm4711 = vmor %vm4709, %vm4710
  %v4712 = vsel %vm4711, %v4703, %v4708
  %v4713 = vrsqrt.pop %v4465
  %v4714 = vmul.f32 %v4713, %v4465
  %v4715 = vmul.f32 %v4714, %v4713
  %v4716 = vmul.f32 0.5, %v4715
  %v4717 = vsub.f32 1.5, %v4716
  %v4718 = vmul.f32 %v4713, %v4717
  %vm4719 = vweird.f32 %v4465
  %vm4720 = vweird.f32 %v4713
  %vm4721 = vmor %vm4719, %vm4720
  %v4722 = vsel %vm4721, %v4713, %v4718
  %v4723 = vrsqrt.pop %v4466
  %v4724 = vmul.f32 %v4723, %v4466
  %v4725 = vmul.f32 %v4724, %v4723
  %v4726 = vmul.f32 0.5, %v4725
  %v4727 = vsub.f32 1.5, %v4726
  %v4728 = vmul.f32 %v4723, %v4727
  %vm4729 = vweird.f32 %v4466
  %vm4730 = vweird.f32 %v4723
  %vm4731 = vmor %vm4729, %vm4730
  %v4732 = vsel %vm4731, %v4723, %v4728
  %v4733 = vrsqrt.pop %v4467
  %v4734 = vmul.f32 %v4733, %v4467
  %v4735 = vmul.f32 %v4734, %v4733
  %v4736 = vmul.f32 0.5, %v4735
  %v4737 = vsub.f32 1.5, %v4736
  %v4738 = vmul.f32 %v4733, %v4737
  %vm4739 = vweird.f32 %v4467
  %vm4740 = vweird.f32 %v4733
  %vm4741 = vmor %vm4739, %vm4740
  %v4742 = vsel %vm4741, %v4733, %v4738
  %v4743 = vrsqrt.pop %v4468
  %v4744 = vmul.f32 %v4743, %v4468
  %v4745 = vmul.f32 %v4744, %v4743
  %v4746 = vmul.f32 0.5, %v4745
  %v4747 = vsub.f32 1.5, %v4746
  %v4748 = vmul.f32 %v4743, %v4747
  %vm4749 = vweird.f32 %v4468
  %vm4750 = vweird.f32 %v4743
  %vm4751 = vmor %vm4749, %vm4750
  %v4752 = vsel %vm4751, %v4743, %v4748
  %v4753 = vrsqrt.pop %v4469
  %v4754 = vmul.f32 %v4753, %v4469
  %v4755 = vmul.f32 %v4754, %v4753
  %v4756 = vmul.f32 0.5, %v4755
  %v4757 = vsub.f32 1.5, %v4756
  %v4758 = vmul.f32 %v4753, %v4757
  %vm4759 = vweird.f32 %v4469
  %vm4760 = vweird.f32 %v4753
  %vm4761 = vmor %vm4759, %vm4760
  %v4762 = vsel %vm4761, %v4753, %v4758
  %v4763 = vrsqrt.pop %v4470
  %v4764 = vmul.f32 %v4763, %v4470
  %v4765 = vmul.f32 %v4764, %v4763
  %v4766 = vmul.f32 0.5, %v4765
  %v4767 = vsub.f32 1.5, %v4766
  %v4768 = vmul.f32 %v4763, %v4767
  %vm4769 = vweird.f32 %v4470
  %vm4770 = vweird.f32 %v4763
  %vm4771 = vmor %vm4769, %vm4770
  %v4772 = vsel %vm4771, %v4763, %v4768
  %v4773 = vrsqrt.pop %v4471
  %v4774 = vmul.f32 %v4773, %v4471
  %v4775 = vmul.f32 %v4774, %v4773
  %v4776 = vmul.f32 0.5, %v4775
  %v4777 = vsub.f32 1.5, %v4776
  %v4778 = vmul.f32 %v4773, %v4777
  %vm4779 = vweird.f32 %v4471
  %vm4780 = vweird.f32 %v4773
  %vm4781 = vmor %vm4779, %vm4780
  %v4782 = vsel %vm4781, %v4773, %v4778
  %v4783 = vrsqrt.pop %v4472
  %v4784 = vmul.f32 %v4783, %v4472
  %v4785 = vmul.f32 %v4784, %v4783
  %v4786 = vmul.f32 0.5, %v4785
  %v4787 = vsub.f32 1.5, %v4786
  %v4788 = vmul.f32 %v4783, %v4787
  %vm4789 = vweird.f32 %v4472
  %vm4790 = vweird.f32 %v4783
  %vm4791 = vmor %vm4789, %vm4790
  %v4792 = vsel %vm4791, %v4783, %v4788
  %v4793 = vmul.f32 %v4122, %v4482
  %v4794 = vmul.f32 %v4123, %v4492
  %v4795 = vmul.f32 %v4124, %v4502
  %v4796 = vmul.f32 %v4125, %v4512
  %v4797 = vmul.f32 %v4126, %v4522
  %v4798 = vmul.f32 %v4127, %v4532
  %v4799 = vmul.f32 %v4128, %v4542
  %v4800 = vmul.f32 %v4129, %v4552
  %v4801 = vmul.f32 %v4130, %v4562
  %v4802 = vmul.f32 %v4131, %v4572
  %v4803 = vmul.f32 %v4132, %v4582
  %v4804 = vmul.f32 %v4133, %v4592
  %v4805 = vmul.f32 %v4134, %v4602
  %v4806 = vmul.f32 %v4135, %v4612
  %v4807 = vmul.f32 %v4136, %v4622
  %v4808 = vmul.f32 %v4137, %v4632
  %v4809 = vmul.f32 %v4138, %v4642
  %v4810 = vmul.f32 %v4139, %v4652
  %v4811 = vmul.f32 %v4140, %v4662
  %v4812 = vmul.f32 %v4141, %v4672
  %v4813 = vmul.f32 %v4142, %v4682
  %v4814 = vmul.f32 %v4143, %v4692
  %v4815 = vmul.f32 %v4144, %v4702
  %v4816 = vmul.f32 %v4145, %v4712
  %v4817 = vmul.f32 %v4146, %v4722
  %v4818 = vmul.f32 %v4147, %v4732
  %v4819 = vmul.f32 %v4148, %v4742
  %v4820 = vmul.f32 %v4149, %v4752
  %v4821 = vmul.f32 %v4150, %v4762
  %v4822 = vmul.f32 %v4151, %v4772
  %v4823 = vmul.f32 %v4152, %v4782
  %v4824 = vmul.f32 %v4153, %v4792
  %vm4825 = vcmp.ge.f32.partialorder %v4817, 0.0
  %vm4826 = vcmp.ge.f32.partialorder %v4818, 0.0
  %vm4827 = vcmp.ge.f32.partialorder %v4819, 0.0
  %vm4828 = vcmp.ge.f32.partialorder %v4820, 0.0
  %vm4829 = vcmp.ge.f32.partialorder %v4821, 0.0
  %vm4830 = vcmp.ge.f32.partialorder %v4822, 0.0
  %vm4831 = vcmp.ge.f32.partialorder %v4823, 0.0
  %vm4832 = vcmp.ge.f32.partialorder %v4824, 0.0
  %v4833 = vmul.f32 %v4817, 2.0
  %v4834 = vmul.f32 %v4818, 2.0
  %v4835 = vmul.f32 %v4819, 2.0
  %v4836 = vmul.f32 %v4820, 2.0
  %v4837 = vmul.f32 %v4821, 2.0
  %v4838 = vmul.f32 %v4822, 2.0
  %v4839 = vmul.f32 %v4823, 2.0
  %v4840 = vmul.f32 %v4824, 2.0
  %v4841 = vmul.f32 %v4817, 0.2
  %v4842 = vmul.f32 %v4818, 0.2
  %v4843 = vmul.f32 %v4819, 0.2
  %v4844 = vmul.f32 %v4820, 0.2
  %v4845 = vmul.f32 %v4821, 0.2
  %v4846 = vmul.f32 %v4822, 0.2
  %v4847 = vmul.f32 %v4823, 0.2
  %v4848 = vmul.f32 %v4824, 0.2
  %v4849 = vsel %vm4825, %v4833, %v4841
  %v4850 = vsel %vm4826, %v4834, %v4842
  %v4851 = vsel %vm4827, %v4835, %v4843
  %v4852 = vsel %vm4828, %v4836, %v4844
  %v4853 = vsel %vm4829, %v4837, %v4845
  %v4854 = vsel %vm4830, %v4838, %v4846
  %v4855 = vsel %vm4831, %v4839, %v4847
  %v4856 = vsel %vm4832, %v4840, %v4848
  %4857 = vst [vmem:[%s13 + $0xc0] sm:$0xff] %v4849
  %4858 = vst [vmem:[%s13 + $0xc8] sm:$0xff] %v4850
  %4859 = vst [vmem:[%s13 + $0xd0] sm:$0xff] %v4851
  %4860 = vst [vmem:[%s13 + $0xd8] sm:$0xff] %v4852
  %4861 = vst [vmem:[%s13 + $0xe0] sm:$0xff] %v4853
  %4862 = vst [vmem:[%s13 + $0xe8] sm:$0xff] %v4854
  %4863 = vst [vmem:[%s13 + $0xf0] sm:$0xff] %v4855
  %4864 = vst [vmem:[%s13 + $0xf8] sm:$0xff] %v4856
  %vm4865 = vcmp.ge.f32.partialorder %v4793, 0.0
  %vm4866 = vcmp.ge.f32.partialorder %v4794, 0.0
  %vm4867 = vcmp.ge.f32.partialorder %v4795, 0.0
  %vm4868 = vcmp.ge.f32.partialorder %v4796, 0.0
  %vm4869 = vcmp.ge.f32.partialorder %v4797, 0.0
  %vm4870 = vcmp.ge.f32.partialorder %v4798, 0.0
  %vm4871 = vcmp.ge.f32.partialorder %v4799, 0.0
  %vm4872 = vcmp.ge.f32.partialorder %v4800, 0.0
  %vm4873 = vcmp.ge.f32.partialorder %v4801, 0.0
  %vm4874 = vcmp.ge.f32.partialorder %v4802, 0.0
  %vm4875 = vcmp.ge.f32.partialorder %v4803, 0.0
  %vm4876 = vcmp.ge.f32.partialorder %v4804, 0.0
  %vm4877 = vcmp.ge.f32.partialorder %v4805, 0.0
  %vm4878 = vcmp.ge.f32.partialorder %v4806, 0.0
  %vm4879 = vcmp.ge.f32.partialorder %v4807, 0.0
  %vm4880 = vcmp.ge.f32.partialorder %v4808, 0.0
  %v4881 = vmul.f32 %v4793, 0.1
  %v4882 = vmul.f32 %v4794, 0.1
  %v4883 = vmul.f32 %v4795, 0.1
  %v4884 = vmul.f32 %v4796, 0.1
  %v4885 = vmul.f32 %v4797, 0.1
  %v4886 = vmul.f32 %v4798, 0.1
  %v4887 = vmul.f32 %v4799, 0.1
  %v4888 = vmul.f32 %v4800, 0.1
  %v4889 = vmul.f32 %v4801, 0.1
  %v4890 = vmul.f32 %v4802, 0.1
  %v4891 = vmul.f32 %v4803, 0.1
  %v4892 = vmul.f32 %v4804, 0.1
  %v4893 = vmul.f32 %v4805, 0.1
  %v4894 = vmul.f32 %v4806, 0.1
  %v4895 = vmul.f32 %v4807, 0.1
  %v4896 = vmul.f32 %v4808, 0.1
  %v4897 = vsel %vm4865, %v4793, %v4881
  %v4898 = vsel %vm4866, %v4794, %v4882
  %v4899 = vsel %vm4867, %v4795, %v4883
  %v4900 = vsel %vm4868, %v4796, %v4884
  %v4901 = vsel %vm4869, %v4797, %v4885
  %v4902 = vsel %vm4870, %v4798, %v4886
  %v4903 = vsel %vm4871, %v4799, %v4887
  %v4904 = vsel %vm4872, %v4800, %v4888
  %v4905 = vsel %vm4873, %v4801, %v4889
  %v4906 = vsel %vm4874, %v4802, %v4890
  %v4907 = vsel %vm4875, %v4803, %v4891
  %v4908 = vsel %vm4876, %v4804, %v4892
  %v4909 = vsel %vm4877, %v4805, %v4893
  %v4910 = vsel %vm4878, %v4806, %v4894
  %v4911 = vsel %vm4879, %v4807, %v4895
  %v4912 = vsel %vm4880, %v4808, %v4896
  %vm4913 = vcmp.ge.f32.partialorder %v4809, 0.0
  %vm4914 = vcmp.ge.f32.partialorder %v4810, 0.0
  %vm4915 = vcmp.ge.f32.partialorder %v4811, 0.0
  %vm4916 = vcmp.ge.f32.partialorder %v4812, 0.0
  %vm4917 = vcmp.ge.f32.partialorder %v4813, 0.0
  %vm4918 = vcmp.ge.f32.partialorder %v4814, 0.0
  %vm4919 = vcmp.ge.f32.partialorder %v4815, 0.0
  %vm4920 = vcmp.ge.f32.partialorder %v4816, 0.0
  %v4921 = vmul.f32 %v4809, 0.1
  %v4922 = vmul.f32 %v4810, 0.1
  %v4923 = vmul.f32 %v4811, 0.1
  %v4924 = vmul.f32 %v4812, 0.1
  %v4925 = vmul.f32 %v4813, 0.1
  %v4926 = vmul.f32 %v4814, 0.1
  %v4927 = vmul.f32 %v4815, 0.1
  %v4928 = vmul.f32 %v4816, 0.1
  %v4929 = vsel %vm4913, %v4809, %v4921
  %v4930 = vsel %vm4914, %v4810, %v4922
  %v4931 = vsel %vm4915, %v4811, %v4923
  %v4932 = vsel %vm4916, %v4812, %v4924
  %v4933 = vsel %vm4917, %v4813, %v4925
  %v4934 = vsel %vm4918, %v4814, %v4926
  %v4935 = vsel %vm4919, %v4815, %v4927
  %v4936 = vsel %vm4920, %v4816, %v4928
  %v4937 = vld [vmem:[%s9] sm:$0xff]
  %v4938 = vld [vmem:[%s9 + $0x8] sm:$0xff]
  %v4939 = vld [vmem:[%s9 + $0x10] sm:$0xff]
  %v4940 = vld [vmem:[%s9 + $0x18] sm:$0xff]
  %v4941 = vld [vmem:[%s9 + $0x20] sm:$0xff]
  %v4942 = vld [vmem:[%s9 + $0x28] sm:$0xff]
  %v4943 = vld [vmem:[%s9 + $0x30] sm:$0xff]
  %v4944 = vld [vmem:[%s9 + $0x38] sm:$0xff]
  %v4945 = vld [vmem:[%s11] sm:$0xff]
  %v4946 = vld [vmem:[%s11 + $0x8] sm:$0xff]
  %v4947 = vld [vmem:[%s11 + $0x10] sm:$0xff]
  %v4948 = vld [vmem:[%s11 + $0x18] sm:$0xff]
  %v4949 = vld [vmem:[%s11 + $0x20] sm:$0xff]
  %v4950 = vld [vmem:[%s11 + $0x28] sm:$0xff]
  %v4951 = vld [vmem:[%s11 + $0x30] sm:$0xff]
  %v4952 = vld [vmem:[%s11 + $0x38] sm:$0xff]
  %4954 = vset.pattern.permute.xlu0 0
  %4955 = vperm.xlu0 %4954, %v4945
  %v4956 = vpop.permute.xlu0 %4955
  %4959 = vset.pattern.permute.xlu0 0
  %4960 = vperm.xlu0 %4959, %v4946
  %v4961 = vpop.permute.xlu0 %4960
  %4964 = vset.pattern.permute.xlu0 0
  %4965 = vperm.xlu0 %4964, %v4947
  %v4966 = vpop.permute.xlu0 %4965
  %4969 = vset.pattern.permute.xlu0 0
  %4970 = vperm.xlu0 %4969, %v4948
  %v4971 = vpop.permute.xlu0 %4970
  %4974 = vset.pattern.permute.xlu0 0
  %4975 = vperm.xlu0 %4974, %v4949
  %v4976 = vpop.permute.xlu0 %4975
  %4979 = vset.pattern.permute.xlu0 0
  %4980 = vperm.xlu0 %4979, %v4950
  %v4981 = vpop.permute.xlu0 %4980
  %4984 = vset.pattern.permute.xlu0 0
  %4985 = vperm.xlu0 %4984, %v4951
  %v4986 = vpop.permute.xlu0 %4985
  %4989 = vset.pattern.permute.xlu0 0
  %4990 = vperm.xlu0 %4989, %v4952
  %v4991 = vpop.permute.xlu0 %4990
  %vm4993 = vcmask 523264
  %v4995 = vsel %vm4993, %v4937, 0
  %v4998 = vsel %vm4993, %v4938, 0
  %v5001 = vsel %vm4993, %v4939, 0
  %v5004 = vsel %vm4993, %v4940, 0
  %v5007 = vsel %vm4993, %v4941, 0
  %v5010 = vsel %vm4993, %v4942, 0
  %v5013 = vsel %vm4993, %v4943, 0
  %v5016 = vsel %vm4993, %v4944, 0
  %5018 = vmatpush.msra.mxu0 0.0
  %5019 = vmatpush.msra.mxu0 0.0
  %5020 = vmatpush.msra.mxu0 0.0
  %5021 = vmatpush.msra.mxu0 0.0
  %5022 = vmatpush.msra.mxu0 0.0
  %5023 = vmatpush.msra.mxu0 0.0
  %5024 = vmatpush.msra.mxu0 0.0
  %5025 = vmatpush.msra.mxu0 0.0
  %5026 = vmatpush.msra.mxu0 %v4936
  %5027 = vmatpush.msra.mxu0 %v4935
  %5028 = vmatpush.msra.mxu0 %v4934
  %5029 = vmatpush.msra.mxu0 %v4933
  %5030 = vmatpush.msra.mxu0 %v4932
  %5031 = vmatpush.msra.mxu0 %v4931
  %5032 = vmatpush.msra.mxu0 %v4930
  %5033 = vmatpush.msra.mxu0 %v4929
  %5034 = vmatmul.f32.gmra.mxu0 %v4995
  %v5035 = vpop.f32.mrf.mxu0
  %v5036 = vadd.f32 %v4956, %v5035
  %5037 = vmatmul.f32.gmra.mxu0 %v4998
  %v5038 = vpop.f32.mrf.mxu0
  %v5039 = vadd.f32 %v4961, %v5038
  %5040 = vmatmul.f32.gmra.mxu0 %v5001
  %v5041 = vpop.f32.mrf.mxu0
  %v5042 = vadd.f32 %v4966, %v5041
  %5043 = vmatmul.f32.gmra.mxu0 %v5004
  %v5044 = vpop.f32.mrf.mxu0
  %v5045 = vadd.f32 %v4971, %v5044
  %5046 = vmatmul.f32.gmra.mxu0 %v5007
  %v5047 = vpop.f32.mrf.mxu0
  %v5048 = vadd.f32 %v4976, %v5047
  %5049 = vmatmul.f32.gmra.mxu0 %v5010
  %v5050 = vpop.f32.mrf.mxu0
  %v5051 = vadd.f32 %v4981, %v5050
  %5052 = vmatmul.f32.gmra.mxu0 %v5013
  %v5053 = vpop.f32.mrf.mxu0
  %v5054 = vadd.f32 %v4986, %v5053
  %5055 = vmatmul.f32.gmra.mxu0 %v5016
  %v5056 = vpop.f32.mrf.mxu0
  %v5057 = vadd.f32 %v4991, %v5056
  %5058 = vdwg.mxu0
  %v5059 = vld [vmem:[%s10] sm:$0xff]
  %v5060 = vld [vmem:[%s10 + $0x8] sm:$0xff]
  %v5061 = vld [vmem:[%s10 + $0x10] sm:$0xff]
  %v5062 = vld [vmem:[%s10 + $0x18] sm:$0xff]
  %v5063 = vld [vmem:[%s10 + $0x20] sm:$0xff]
  %v5064 = vld [vmem:[%s10 + $0x28] sm:$0xff]
  %v5065 = vld [vmem:[%s10 + $0x30] sm:$0xff]
  %v5066 = vld [vmem:[%s10 + $0x38] sm:$0xff]
  %v5067 = vld [vmem:[%s12] sm:$0xff]
  %v5068 = vld [vmem:[%s12 + $0x8] sm:$0xff]
  %v5069 = vld [vmem:[%s12 + $0x10] sm:$0xff]
  %v5070 = vld [vmem:[%s12 + $0x18] sm:$0xff]
  %v5071 = vld [vmem:[%s12 + $0x20] sm:$0xff]
  %v5072 = vld [vmem:[%s12 + $0x28] sm:$0xff]
  %v5073 = vld [vmem:[%s12 + $0x30] sm:$0xff]
  %v5074 = vld [vmem:[%s12 + $0x38] sm:$0xff]
  %5076 = vset.pattern.permute.xlu0 0
  %5077 = vperm.xlu0 %5076, %v5067
  %v5078 = vpop.permute.xlu0 %5077
  %5081 = vset.pattern.permute.xlu0 0
  %5082 = vperm.xlu0 %5081, %v5068
  %v5083 = vpop.permute.xlu0 %5082
  %5086 = vset.pattern.permute.xlu0 0
  %5087 = vperm.xlu0 %5086, %v5069
  %v5088 = vpop.permute.xlu0 %5087
  %5091 = vset.pattern.permute.xlu0 0
  %5092 = vperm.xlu0 %5091, %v5070
  %v5093 = vpop.permute.xlu0 %5092
  %5096 = vset.pattern.permute.xlu0 0
  %5097 = vperm.xlu0 %5096, %v5071
  %v5098 = vpop.permute.xlu0 %5097
  %5101 = vset.pattern.permute.xlu0 0
  %5102 = vperm.xlu0 %5101, %v5072
  %v5103 = vpop.permute.xlu0 %5102
  %5106 = vset.pattern.permute.xlu0 0
  %5107 = vperm.xlu0 %5106, %v5073
  %v5108 = vpop.permute.xlu0 %5107
  %5111 = vset.pattern.permute.xlu0 0
  %5112 = vperm.xlu0 %5111, %v5074
  %v5113 = vpop.permute.xlu0 %5112
  %v5116 = vsel %vm4993, %v5059, 0
  %v5119 = vsel %vm4993, %v5060, 0
  %v5122 = vsel %vm4993, %v5061, 0
  %v5125 = vsel %vm4993, %v5062, 0
  %v5128 = vsel %vm4993, %v5063, 0
  %v5131 = vsel %vm4993, %v5064, 0
  %v5134 = vsel %vm4993, %v5065, 0
  %v5137 = vsel %vm4993, %v5066, 0
  %5139 = vmatpush.msra.mxu0 0.0
  %5140 = vmatpush.msra.mxu0 0.0
  %5141 = vmatpush.msra.mxu0 0.0
  %5142 = vmatpush.msra.mxu0 0.0
  %5143 = vmatpush.msra.mxu0 0.0
  %5144 = vmatpush.msra.mxu0 0.0
  %5145 = vmatpush.msra.mxu0 0.0
  %5146 = vmatpush.msra.mxu0 0.0
  %5147 = vmatpush.msra.mxu0 %v4936
  %5148 = vmatpush.msra.mxu0 %v4935
  %5149 = vmatpush.msra.mxu0 %v4934
  %5150 = vmatpush.msra.mxu0 %v4933
  %5151 = vmatpush.msra.mxu0 %v4932
  %5152 = vmatpush.msra.mxu0 %v4931
  %5153 = vmatpush.msra.mxu0 %v4930
  %5154 = vmatpush.msra.mxu0 %v4929
  %5155 = vmatmul.f32.gmra.mxu0 %v5116
  %v5156 = vpop.f32.mrf.mxu0
  %v5157 = vadd.f32 %v5078, %v5156
  %5158 = vmatmul.f32.gmra.mxu0 %v5119
  %v5159 = vpop.f32.mrf.mxu0
  %v5160 = vadd.f32 %v5083, %v5159
  %5161 = vmatmul.f32.gmra.mxu0 %v5122
  %v5162 = vpop.f32.mrf.mxu0
  %v5163 = vadd.f32 %v5088, %v5162
  %5164 = vmatmul.f32.gmra.mxu0 %v5125
  %v5165 = vpop.f32.mrf.mxu0
  %v5166 = vadd.f32 %v5093, %v5165
  %5167 = vmatmul.f32.gmra.mxu0 %v5128
  %v5168 = vpop.f32.mrf.mxu0
  %v5169 = vadd.f32 %v5098, %v5168
  %5170 = vmatmul.f32.gmra.mxu0 %v5131
  %v5171 = vpop.f32.mrf.mxu0
  %v5172 = vadd.f32 %v5103, %v5171
  %5173 = vmatmul.f32.gmra.mxu0 %v5134
  %v5174 = vpop.f32.mrf.mxu0
  %v5175 = vadd.f32 %v5108, %v5174
  %5176 = vmatmul.f32.gmra.mxu0 %v5137
  %v5177 = vpop.f32.mrf.mxu0
  %v5178 = vadd.f32 %v5113, %v5177
  %5179 = vdwg.mxu0
  %v5180 = vmax.f32 %v5036, %v5157
  %v5181 = vmax.f32 %v5039, %v5160
  %v5182 = vmax.f32 %v5042, %v5163
  %v5183 = vmax.f32 %v5045, %v5166
  %v5184 = vmax.f32 %v5048, %v5169
  %v5185 = vmax.f32 %v5051, %v5172
  %v5186 = vmax.f32 %v5054, %v5175
  %v5187 = vmax.f32 %v5057, %v5178
  %v5188 = vmax.f32 %v4929, %v5180
  %v5189 = vmax.f32 %v4930, %v5181
  %v5190 = vmax.f32 %v4931, %v5182
  %v5191 = vmax.f32 %v4932, %v5183
  %v5192 = vmax.f32 %v4933, %v5184
  %v5193 = vmax.f32 %v4934, %v5185
  %v5194 = vmax.f32 %v4935, %v5186
  %v5195 = vmax.f32 %v4936, %v5187
  %v5196 = vld [vmem:[%s6] sm:$0xf]
  %v5197 = vld [vmem:[%s7] sm:$0xff]
  %v5198 = vld [vmem:[%s7 + $0x8] sm:$0xff]
  %v5199 = vld [vmem:[%s7 + $0x10] sm:$0xff]
  %v5200 = vld [vmem:[%s7 + $0x18] sm:$0xff]
  %v5201 = vld [vmem:[%s7 + $0x20] sm:$0xff]
  %v5202 = vld [vmem:[%s7 + $0x28] sm:$0xff]
  %v5203 = vld [vmem:[%s7 + $0x30] sm:$0xff]
  %v5204 = vld [vmem:[%s7 + $0x38] sm:$0xff]
  %v5205 = vmul.f32 %v5188, %v1001
  %v5206 = vmul.f32 %v5189, %v1001
  %v5207 = vmul.f32 %v5190, %v1001
  %v5208 = vmul.f32 %v5191, %v1001
  %v5209 = vmul.f32 %v5192, %v1001
  %v5210 = vmul.f32 %v5193, %v1001
  %v5211 = vmul.f32 %v5194, %v1001
  %v5212 = vmul.f32 %v5195, %v1001
  %v5214 = vsel %vm4993, %v5196, 0
  %5216 = vmatpush.msra.mxu0 0.0
  %5217 = vmatpush.msra.mxu0 0.0
  %5218 = vmatpush.msra.mxu0 0.0
  %5219 = vmatpush.msra.mxu0 0.0
  %5220 = vmatpush.msra.mxu0 0.0
  %5221 = vmatpush.msra.mxu0 0.0
  %5222 = vmatpush.msra.mxu0 0.0
  %5223 = vmatpush.msra.mxu0 0.0
  %5224 = vmatpush.msra.mxu0 %v5212
  %5225 = vmatpush.msra.mxu0 %v5211
  %5226 = vmatpush.msra.mxu0 %v5210
  %5227 = vmatpush.msra.mxu0 %v5209
  %5228 = vmatpush.msra.mxu0 %v5208
  %5229 = vmatpush.msra.mxu0 %v5207
  %5230 = vmatpush.msra.mxu0 %v5206
  %5231 = vmatpush.msra.mxu0 %v5205
  %5232 = vmatmul.f32.gmra.mxu0 %v5214
  %v5233 = vpop.f32.mrf.mxu0
  %v5234 = vadd.f32 0.0, %v5233
  %5235 = vdwg.mxu0
  %vm5236 = vcmask 31744
  %v5238 = vsel %vm5236, %v5197, 0
  %v5241 = vsel %vm5236, %v5198, 0
  %v5244 = vsel %vm5236, %v5199, 0
  %v5247 = vsel %vm5236, %v5200, 0
  %v5250 = vsel %vm5236, %v5201, 0
  %v5253 = vsel %vm5236, %v5202, 0
  %v5256 = vsel %vm5236, %v5203, 0
  %v5259 = vsel %vm5236, %v5204, 0
  %vm5261 = vcmask 1043456
  %v5263 = vsel %vm5261, %v5234, 0
  %5265 = vmatpush.msra.mxu0 0.0
  %5266 = vmatpush.msra.mxu0 0.0
  %5267 = vmatpush.msra.mxu0 0.0
  %5268 = vmatpush.msra.mxu0 0.0
  %5269 = vmatpush.msra.mxu0 0.0
  %5270 = vmatpush.msra.mxu0 0.0
  %5271 = vmatpush.msra.mxu0 0.0
  %5272 = vmatpush.msra.mxu0 0.0
  %5273 = vmatpush.msra.mxu0 0.0
  %5274 = vmatpush.msra.mxu0 0.0
  %5275 = vmatpush.msra.mxu0 0.0
  %5276 = vmatpush.msra.mxu0 0.0
  %5277 = vmatpush.msra.mxu0 0.0
  %5278 = vmatpush.msra.mxu0 0.0
  %5279 = vmatpush.msra.mxu0 0.0
  %5280 = vmatpush.msra.mxu0 %v5263
  %5281 = vmatmul.f32.gmra.mxu0 %v5238
  %v5282 = vpop.f32.mrf.mxu0
  %v5283 = vadd.f32 0.0, %v5282
  %5284 = vmatmul.f32.gmra.mxu0 %v5241
  %v5285 = vpop.f32.mrf.mxu0
  %v5286 = vadd.f32 0.0, %v5285
  %5287 = vmatmul.f32.gmra.mxu0 %v5244
  %v5288 = vpop.f32.mrf.mxu0
  %v5289 = vadd.f32 0.0, %v5288
  %5290 = vmatmul.f32.gmra.mxu0 %v5247
  %v5291 = vpop.f32.mrf.mxu0
  %v5292 = vadd.f32 0.0, %v5291
  %5293 = vmatmul.f32.gmra.mxu0 %v5250
  %v5294 = vpop.f32.mrf.mxu0
  %v5295 = vadd.f32 0.0, %v5294
  %5296 = vmatmul.f32.gmra.mxu0 %v5253
  %v5297 = vpop.f32.mrf.mxu0
  %v5298 = vadd.f32 0.0, %v5297
  %5299 = vmatmul.f32.gmra.mxu0 %v5256
  %v5300 = vpop.f32.mrf.mxu0
  %v5301 = vadd.f32 0.0, %v5300
  %5302 = vmatmul.f32.gmra.mxu0 %v5259
  %v5303 = vpop.f32.mrf.mxu0
  %v5304 = vadd.f32 0.0, %v5303
  %5305 = vdwg.mxu0
  %5306 = vadd.xlane.f32.xlu0 %v5283
  %v5307 = vpop.xlane.xlu0 %5306
  %5308 = vadd.xlane.f32.xlu0 %v5286
  %v5309 = vpop.xlane.xlu0 %5308
  %5310 = vadd.xlane.f32.xlu0 %v5289
  %v5311 = vpop.xlane.xlu0 %5310
  %5312 = vadd.xlane.f32.xlu0 %v5292
  %v5313 = vpop.xlane.xlu0 %5312
  %5314 = vadd.xlane.f32.xlu0 %v5295
  %v5315 = vpop.xlane.xlu0 %5314
  %5316 = vadd.xlane.f32.xlu0 %v5298
  %v5317 = vpop.xlane.xlu0 %5316
  %5318 = vadd.xlane.f32.xlu0 %v5301
  %v5319 = vpop.xlane.xlu0 %5318
  %5320 = vadd.xlane.f32.xlu0 %v5304
  %v5321 = vpop.xlane.xlu0 %5320
  %v5322 = vmul.f32 %v5307, 0.00125
  %v5323 = vmul.f32 %v5309, 0.00125
  %v5324 = vmul.f32 %v5311, 0.00125
  %v5325 = vmul.f32 %v5313, 0.00125
  %v5326 = vmul.f32 %v5315, 0.00125
  %v5327 = vmul.f32 %v5317, 0.00125
  %v5328 = vmul.f32 %v5319, 0.00125
  %v5329 = vmul.f32 %v5321, 0.00125
  %v5330 = vsub.f32 %v5188, %v5322
  %v5331 = vsub.f32 %v5189, %v5323
  %v5332 = vsub.f32 %v5190, %v5324
  %v5333 = vsub.f32 %v5191, %v5325
  %v5334 = vsub.f32 %v5192, %v5326
  %v5335 = vsub.f32 %v5193, %v5327
  %v5336 = vsub.f32 %v5194, %v5328
  %v5337 = vsub.f32 %v5195, %v5329
  %v5338 = vmul.f32 %v5330, %v1001
  %v5339 = vmul.f32 %v5331, %v1001
  %v5340 = vmul.f32 %v5332, %v1001
  %v5341 = vmul.f32 %v5333, %v1001
  %v5342 = vmul.f32 %v5334, %v1001
  %v5343 = vmul.f32 %v5335, %v1001
  %v5344 = vmul.f32 %v5336, %v1001
  %v5345 = vmul.f32 %v5337, %v1001
  %v5346 = vmul.f32 %v5338, %v5338
  %v5347 = vmul.f32 %v5339, %v5339
  %v5348 = vmul.f32 %v5340, %v5340
  %v5349 = vmul.f32 %v5341, %v5341
  %v5350 = vmul.f32 %v5342, %v5342
  %v5351 = vmul.f32 %v5343, %v5343
  %v5352 = vmul.f32 %v5344, %v5344
  %v5353 = vmul.f32 %v5345, %v5345
  %5354 = vmatpush.msra.mxu0 0.0
  %5355 = vmatpush.msra.mxu0 0.0
  %5356 = vmatpush.msra.mxu0 0.0
  %5357 = vmatpush.msra.mxu0 0.0
  %5358 = vmatpush.msra.mxu0 0.0
  %5359 = vmatpush.msra.mxu0 0.0
  %5360 = vmatpush.msra.mxu0 0.0
  %5361 = vmatpush.msra.mxu0 0.0
  %5362 = vmatpush.msra.mxu0 %v5353
  %5363 = vmatpush.msra.mxu0 %v5352
  %5364 = vmatpush.msra.mxu0 %v5351
  %5365 = vmatpush.msra.mxu0 %v5350
  %5366 = vmatpush.msra.mxu0 %v5349
  %5367 = vmatpush.msra.mxu0 %v5348
  %5368 = vmatpush.msra.mxu0 %v5347
  %5369 = vmatpush.msra.mxu0 %v5346
  %5370 = vmatmul.f32.gmra.mxu0 %v5214
  %v5371 = vpop.f32.mrf.mxu0
  %v5372 = vadd.f32 0.0, %v5371
  %5373 = vdwg.mxu0
  %v5375 = vsel %vm5261, %v5372, 0
  %5377 = vmatpush.msra.mxu0 0.0
  %5378 = vmatpush.msra.mxu0 0.0
  %5379 = vmatpush.msra.mxu0 0.0
  %5380 = vmatpush.msra.mxu0 0.0
  %5381 = vmatpush.msra.mxu0 0.0
  %5382 = vmatpush.msra.mxu0 0.0
  %5383 = vmatpush.msra.mxu0 0.0
  %5384 = vmatpush.msra.mxu0 0.0
  %5385 = vmatpush.msra.mxu0 0.0
  %5386 = vmatpush.msra.mxu0 0.0
  %5387 = vmatpush.msra.mxu0 0.0
  %5388 = vmatpush.msra.mxu0 0.0
  %5389 = vmatpush.msra.mxu0 0.0
  %5390 = vmatpush.msra.mxu0 0.0
  %5391 = vmatpush.msra.mxu0 0.0
  %5392 = vmatpush.msra.mxu0 %v5375
  %5393 = vmatmul.f32.gmra.mxu0 %v5238
  %v5394 = vpop.f32.mrf.mxu0
  %v5395 = vadd.f32 0.0, %v5394
  %5396 = vmatmul.f32.gmra.mxu0 %v5241
  %v5397 = vpop.f32.mrf.mxu0
  %v5398 = vadd.f32 0.0, %v5397
  %5399 = vmatmul.f32.gmra.mxu0 %v5244
  %v5400 = vpop.f32.mrf.mxu0
  %v5401 = vadd.f32 0.0, %v5400
  %5402 = vmatmul.f32.gmra.mxu0 %v5247
  %v5403 = vpop.f32.mrf.mxu0
  %v5404 = vadd.f32 0.0, %v5403
  %5405 = vmatmul.f32.gmra.mxu0 %v5250
  %v5406 = vpop.f32.mrf.mxu0
  %v5407 = vadd.f32 0.0, %v5406
  %5408 = vmatmul.f32.gmra.mxu0 %v5253
  %v5409 = vpop.f32.mrf.mxu0
  %v5410 = vadd.f32 0.0, %v5409
  %5411 = vmatmul.f32.gmra.mxu0 %v5256
  %v5412 = vpop.f32.mrf.mxu0
  %v5413 = vadd.f32 0.0, %v5412
  %5414 = vmatmul.f32.gmra.mxu0 %v5259
  %v5415 = vpop.f32.mrf.mxu0
  %v5416 = vadd.f32 0.0, %v5415
  %5417 = vdwg.mxu0
  %5418 = vadd.xlane.f32.xlu0 %v5395
  %v5419 = vpop.xlane.xlu0 %5418
  %5420 = vadd.xlane.f32.xlu0 %v5398
  %v5421 = vpop.xlane.xlu0 %5420
  %5422 = vadd.xlane.f32.xlu0 %v5401
  %v5423 = vpop.xlane.xlu0 %5422
  %5424 = vadd.xlane.f32.xlu0 %v5404
  %v5425 = vpop.xlane.xlu0 %5424
  %5426 = vadd.xlane.f32.xlu0 %v5407
  %v5427 = vpop.xlane.xlu0 %5426
  %5428 = vadd.xlane.f32.xlu0 %v5410
  %v5429 = vpop.xlane.xlu0 %5428
  %5430 = vadd.xlane.f32.xlu0 %v5413
  %v5431 = vpop.xlane.xlu0 %5430
  %5432 = vadd.xlane.f32.xlu0 %v5416
  %v5433 = vpop.xlane.xlu0 %5432
  %v5434 = vmul.f32 %v5419, 0.00125
  %v5435 = vmul.f32 %v5421, 0.00125
  %v5436 = vmul.f32 %v5423, 0.00125
  %v5437 = vmul.f32 %v5425, 0.00125
  %v5438 = vmul.f32 %v5427, 0.00125
  %v5439 = vmul.f32 %v5429, 0.00125
  %v5440 = vmul.f32 %v5431, 0.00125
  %v5441 = vmul.f32 %v5433, 0.00125
  %v5442 = vadd.f32 %v5434, 1e-05
  %v5443 = vadd.f32 %v5435, 1e-05
  %v5444 = vadd.f32 %v5436, 1e-05
  %v5445 = vadd.f32 %v5437, 1e-05
  %v5446 = vadd.f32 %v5438, 1e-05
  %v5447 = vadd.f32 %v5439, 1e-05
  %v5448 = vadd.f32 %v5440, 1e-05
  %v5449 = vadd.f32 %v5441, 1e-05
  %v5450 = vrsqrt.pop %v5442
  %v5451 = vmul.f32 %v5450, %v5442
  %v5452 = vmul.f32 %v5451, %v5450
  %v5453 = vmul.f32 0.5, %v5452
  %v5454 = vsub.f32 1.5, %v5453
  %v5455 = vmul.f32 %v5450, %v5454
  %vm5456 = vweird.f32 %v5442
  %vm5457 = vweird.f32 %v5450
  %vm5458 = vmor %vm5456, %vm5457
  %v5459 = vsel %vm5458, %v5450, %v5455
  %v5460 = vrsqrt.pop %v5443
  %v5461 = vmul.f32 %v5460, %v5443
  %v5462 = vmul.f32 %v5461, %v5460
  %v5463 = vmul.f32 0.5, %v5462
  %v5464 = vsub.f32 1.5, %v5463
  %v5465 = vmul.f32 %v5460, %v5464
  %vm5466 = vweird.f32 %v5443
  %vm5467 = vweird.f32 %v5460
  %vm5468 = vmor %vm5466, %vm5467
  %v5469 = vsel %vm5468, %v5460, %v5465
  %v5470 = vrsqrt.pop %v5444
  %v5471 = vmul.f32 %v5470, %v5444
  %v5472 = vmul.f32 %v5471, %v5470
  %v5473 = vmul.f32 0.5, %v5472
  %v5474 = vsub.f32 1.5, %v5473
  %v5475 = vmul.f32 %v5470, %v5474
  %vm5476 = vweird.f32 %v5444
  %vm5477 = vweird.f32 %v5470
  %vm5478 = vmor %vm5476, %vm5477
  %v5479 = vsel %vm5478, %v5470, %v5475
  %v5480 = vrsqrt.pop %v5445
  %v5481 = vmul.f32 %v5480, %v5445
  %v5482 = vmul.f32 %v5481, %v5480
  %v5483 = vmul.f32 0.5, %v5482
  %v5484 = vsub.f32 1.5, %v5483
  %v5485 = vmul.f32 %v5480, %v5484
  %vm5486 = vweird.f32 %v5445
  %vm5487 = vweird.f32 %v5480
  %vm5488 = vmor %vm5486, %vm5487
  %v5489 = vsel %vm5488, %v5480, %v5485
  %v5490 = vrsqrt.pop %v5446
  %v5491 = vmul.f32 %v5490, %v5446
  %v5492 = vmul.f32 %v5491, %v5490
  %v5493 = vmul.f32 0.5, %v5492
  %v5494 = vsub.f32 1.5, %v5493
  %v5495 = vmul.f32 %v5490, %v5494
  %vm5496 = vweird.f32 %v5446
  %vm5497 = vweird.f32 %v5490
  %vm5498 = vmor %vm5496, %vm5497
  %v5499 = vsel %vm5498, %v5490, %v5495
  %v5500 = vrsqrt.pop %v5447
  %v5501 = vmul.f32 %v5500, %v5447
  %v5502 = vmul.f32 %v5501, %v5500
  %v5503 = vmul.f32 0.5, %v5502
  %v5504 = vsub.f32 1.5, %v5503
  %v5505 = vmul.f32 %v5500, %v5504
  %vm5506 = vweird.f32 %v5447
  %vm5507 = vweird.f32 %v5500
  %vm5508 = vmor %vm5506, %vm5507
  %v5509 = vsel %vm5508, %v5500, %v5505
  %v5510 = vrsqrt.pop %v5448
  %v5511 = vmul.f32 %v5510, %v5448
  %v5512 = vmul.f32 %v5511, %v5510
  %v5513 = vmul.f32 0.5, %v5512
  %v5514 = vsub.f32 1.5, %v5513
  %v5515 = vmul.f32 %v5510, %v5514
  %vm5516 = vweird.f32 %v5448
  %vm5517 = vweird.f32 %v5510
  %vm5518 = vmor %vm5516, %vm5517
  %v5519 = vsel %vm5518, %v5510, %v5515
  %v5520 = vrsqrt.pop %v5449
  %v5521 = vmul.f32 %v5520, %v5449
  %v5522 = vmul.f32 %v5521, %v5520
  %v5523 = vmul.f32 0.5, %v5522
  %v5524 = vsub.f32 1.5, %v5523
  %v5525 = vmul.f32 %v5520, %v5524
  %vm5526 = vweird.f32 %v5449
  %vm5527 = vweird.f32 %v5520
  %vm5528 = vmor %vm5526, %vm5527
  %v5529 = vsel %vm5528, %v5520, %v5525
  %v5530 = vmul.f32 %v5338, %v5459
  %v5531 = vmul.f32 %v5339, %v5469
  %v5532 = vmul.f32 %v5340, %v5479
  %v5533 = vmul.f32 %v5341, %v5489
  %v5534 = vmul.f32 %v5342, %v5499
  %v5535 = vmul.f32 %v5343, %v5509
  %v5536 = vmul.f32 %v5344, %v5519
  %v5537 = vmul.f32 %v5345, %v5529
  %vm5538 = vcmp.ge.f32.partialorder %v5530, 0.0
  %vm5539 = vcmp.ge.f32.partialorder %v5531, 0.0
  %vm5540 = vcmp.ge.f32.partialorder %v5532, 0.0
  %vm5541 = vcmp.ge.f32.partialorder %v5533, 0.0
  %vm5542 = vcmp.ge.f32.partialorder %v5534, 0.0
  %vm5543 = vcmp.ge.f32.partialorder %v5535, 0.0
  %vm5544 = vcmp.ge.f32.partialorder %v5536, 0.0
  %vm5545 = vcmp.ge.f32.partialorder %v5537, 0.0
  %v5546 = vmul.f32 %v5530, 2.0
  %v5547 = vmul.f32 %v5531, 2.0
  %v5548 = vmul.f32 %v5532, 2.0
  %v5549 = vmul.f32 %v5533, 2.0
  %v5550 = vmul.f32 %v5534, 2.0
  %v5551 = vmul.f32 %v5535, 2.0
  %v5552 = vmul.f32 %v5536, 2.0
  %v5553 = vmul.f32 %v5537, 2.0
  %v5554 = vmul.f32 %v5530, 0.2
  %v5555 = vmul.f32 %v5531, 0.2
  %v5556 = vmul.f32 %v5532, 0.2
  %v5557 = vmul.f32 %v5533, 0.2
  %v5558 = vmul.f32 %v5534, 0.2
  %v5559 = vmul.f32 %v5535, 0.2
  %v5560 = vmul.f32 %v5536, 0.2
  %v5561 = vmul.f32 %v5537, 0.2
  %v5562 = vsel %vm5538, %v5546, %v5554
  %v5563 = vsel %vm5539, %v5547, %v5555
  %v5564 = vsel %vm5540, %v5548, %v5556
  %v5565 = vsel %vm5541, %v5549, %v5557
  %v5566 = vsel %vm5542, %v5550, %v5558
  %v5567 = vsel %vm5543, %v5551, %v5559
  %v5568 = vsel %vm5544, %v5552, %v5560
  %v5569 = vsel %vm5545, %v5553, %v5561
  %5570 = vst [vmem:[%s13 + $0x80] sm:$0xff] %v5562
  %5571 = vst [vmem:[%s13 + $0x88] sm:$0xff] %v5563
  %5572 = vst [vmem:[%s13 + $0x90] sm:$0xff] %v5564
  %5573 = vst [vmem:[%s13 + $0x98] sm:$0xff] %v5565
  %5574 = vst [vmem:[%s13 + $0xa0] sm:$0xff] %v5566
  %5575 = vst [vmem:[%s13 + $0xa8] sm:$0xff] %v5567
  %5576 = vst [vmem:[%s13 + $0xb0] sm:$0xff] %v5568
  %5577 = vst [vmem:[%s13 + $0xb8] sm:$0xff] %v5569
  %v5578 = vld [vmem:[%s5] sm:$0xff]
  %v5579 = vld [vmem:[%s5 + $0x8] sm:$0xff]
  %v5580 = vld [vmem:[%s5 + $0x10] sm:$0xff]
  %v5581 = vld [vmem:[%s5 + $0x18] sm:$0xff]
  %v5582 = vld [vmem:[%s5 + $0x20] sm:$0xff]
  %v5583 = vld [vmem:[%s5 + $0x28] sm:$0xff]
  %v5584 = vld [vmem:[%s5 + $0x30] sm:$0xff]
  %v5585 = vld [vmem:[%s5 + $0x38] sm:$0xff]
  %v5586 = vld [vmem:[%s5 + $0x40] sm:$0xff]
  %v5587 = vld [vmem:[%s5 + $0x48] sm:$0xff]
  %v5588 = vld [vmem:[%s5 + $0x50] sm:$0xff]
  %v5589 = vld [vmem:[%s5 + $0x58] sm:$0xff]
  %v5590 = vld [vmem:[%s5 + $0x60] sm:$0xff]
  %v5591 = vld [vmem:[%s5 + $0x68] sm:$0xff]
  %v5592 = vld [vmem:[%s5 + $0x70] sm:$0xff]
  %v5593 = vld [vmem:[%s5 + $0x78] sm:$0xff]
  %5594 = vmatpush.msra.mxu0 %v4912
  %5595 = vmatpush.msra.mxu0 %v4911
  %5596 = vmatpush.msra.mxu0 %v4910
  %5597 = vmatpush.msra.mxu0 %v4909
  %5598 = vmatpush.msra.mxu0 %v4908
  %5599 = vmatpush.msra.mxu0 %v4907
  %5600 = vmatpush.msra.mxu0 %v4906
  %5601 = vmatpush.msra.mxu0 %v4905
  %5602 = vmatpush.msra.mxu0 %v4904
  %5603 = vmatpush.msra.mxu0 %v4903
  %5604 = vmatpush.msra.mxu0 %v4902
  %5605 = vmatpush.msra.mxu0 %v4901
  %5606 = vmatpush.msra.mxu0 %v4900
  %5607 = vmatpush.msra.mxu0 %v4899
  %5608 = vmatpush.msra.mxu0 %v4898
  %5609 = vmatpush.msra.mxu0 %v4897
  %5610 = vmatmul.f32.gmra.mxu0 %v5578
  %v5611 = vpop.f32.mrf.mxu0
  %v5612 = vadd.f32 0.0, %v5611
  %5613 = vmatmul.f32.gmra.mxu0 %v5579
  %v5614 = vpop.f32.mrf.mxu0
  %v5615 = vadd.f32 0.0, %v5614
  %5616 = vmatmul.f32.gmra.mxu0 %v5580
  %v5617 = vpop.f32.mrf.mxu0
  %v5618 = vadd.f32 0.0, %v5617
  %5619 = vmatmul.f32.gmra.mxu0 %v5581
  %v5620 = vpop.f32.mrf.mxu0
  %v5621 = vadd.f32 0.0, %v5620
  %5622 = vmatmul.f32.gmra.mxu0 %v5582
  %v5623 = vpop.f32.mrf.mxu0
  %v5624 = vadd.f32 0.0, %v5623
  %5625 = vmatmul.f32.gmra.mxu0 %v5583
  %v5626 = vpop.f32.mrf.mxu0
  %v5627 = vadd.f32 0.0, %v5626
  %5628 = vmatmul.f32.gmra.mxu0 %v5584
  %v5629 = vpop.f32.mrf.mxu0
  %v5630 = vadd.f32 0.0, %v5629
  %5631 = vmatmul.f32.gmra.mxu0 %v5585
  %v5632 = vpop.f32.mrf.mxu0
  %v5633 = vadd.f32 0.0, %v5632
  %5634 = vmatmul.f32.gmra.mxu0 %v5586
  %v5635 = vpop.f32.mrf.mxu0
  %v5636 = vadd.f32 0.0, %v5635
  %5637 = vmatmul.f32.gmra.mxu0 %v5587
  %v5638 = vpop.f32.mrf.mxu0
  %v5639 = vadd.f32 0.0, %v5638
  %5640 = vmatmul.f32.gmra.mxu0 %v5588
  %v5641 = vpop.f32.mrf.mxu0
  %v5642 = vadd.f32 0.0, %v5641
  %5643 = vmatmul.f32.gmra.mxu0 %v5589
  %v5644 = vpop.f32.mrf.mxu0
  %v5645 = vadd.f32 0.0, %v5644
  %5646 = vmatmul.f32.gmra.mxu0 %v5590
  %v5647 = vpop.f32.mrf.mxu0
  %v5648 = vadd.f32 0.0, %v5647
  %5649 = vmatmul.f32.gmra.mxu0 %v5591
  %v5650 = vpop.f32.mrf.mxu0
  %v5651 = vadd.f32 0.0, %v5650
  %5652 = vmatmul.f32.gmra.mxu0 %v5592
  %v5653 = vpop.f32.mrf.mxu0
  %v5654 = vadd.f32 0.0, %v5653
  %5655 = vmatmul.f32.gmra.mxu0 %v5593
  %v5656 = vpop.f32.mrf.mxu0
  %v5657 = vadd.f32 0.0, %v5656
  %5658 = vdwg.mxu0
  %v5659 = vld [vmem:[%s6] sm:$0xff]
  %v5660 = vld [vmem:[%s7] sm:$0xff]
  %v5661 = vld [vmem:[%s7 + $0x8] sm:$0xff]
  %v5662 = vld [vmem:[%s7 + $0x10] sm:$0xff]
  %v5663 = vld [vmem:[%s7 + $0x18] sm:$0xff]
  %v5664 = vld [vmem:[%s7 + $0x20] sm:$0xff]
  %v5665 = vld [vmem:[%s7 + $0x28] sm:$0xff]
  %v5666 = vld [vmem:[%s7 + $0x30] sm:$0xff]
  %v5667 = vld [vmem:[%s7 + $0x38] sm:$0xff]
  %v5668 = vld [vmem:[%s7 + $0x40] sm:$0xff]
  %v5669 = vld [vmem:[%s7 + $0x48] sm:$0xff]
  %v5670 = vld [vmem:[%s7 + $0x50] sm:$0xff]
  %v5671 = vld [vmem:[%s7 + $0x58] sm:$0xff]
  %v5672 = vld [vmem:[%s7 + $0x60] sm:$0xff]
  %v5673 = vld [vmem:[%s7 + $0x68] sm:$0xff]
  %v5674 = vld [vmem:[%s7 + $0x70] sm:$0xff]
  %v5675 = vld [vmem:[%s7 + $0x78] sm:$0xff]
  %v5676 = vmul.f32 %v5612, %v1001
  %v5677 = vmul.f32 %v5615, %v1001
  %v5678 = vmul.f32 %v5618, %v1001
  %v5679 = vmul.f32 %v5621, %v1001
  %v5680 = vmul.f32 %v5624, %v1001
  %v5681 = vmul.f32 %v5627, %v1001
  %v5682 = vmul.f32 %v5630, %v1001
  %v5683 = vmul.f32 %v5633, %v1001
  %v5684 = vmul.f32 %v5636, %v1001
  %v5685 = vmul.f32 %v5639, %v1001
  %v5686 = vmul.f32 %v5642, %v1001
  %v5687 = vmul.f32 %v5645, %v1001
  %v5688 = vmul.f32 %v5648, %v1001
  %v5689 = vmul.f32 %v5651, %v1001
  %v5690 = vmul.f32 %v5654, %v1001
  %v5691 = vmul.f32 %v5657, %v1001
  %5692 = vmatpush.msra.mxu0 %v5691
  %5693 = vmatpush.msra.mxu0 %v5690
  %5694 = vmatpush.msra.mxu0 %v5689
  %5695 = vmatpush.msra.mxu0 %v5688
  %5696 = vmatpush.msra.mxu0 %v5687
  %5697 = vmatpush.msra.mxu0 %v5686
  %5698 = vmatpush.msra.mxu0 %v5685
  %5699 = vmatpush.msra.mxu0 %v5684
  %5700 = vmatpush.msra.mxu0 %v5683
  %5701 = vmatpush.msra.mxu0 %v5682
  %5702 = vmatpush.msra.mxu0 %v5681
  %5703 = vmatpush.msra.mxu0 %v5680
  %5704 = vmatpush.msra.mxu0 %v5679
  %5705 = vmatpush.msra.mxu0 %v5678
  %5706 = vmatpush.msra.mxu0 %v5677
  %5707 = vmatpush.msra.mxu0 %v5676
  %5708 = vmatmul.f32.gmra.mxu0 %v5659
  %v5709 = vpop.f32.mrf.mxu0
  %v5710 = vadd.f32 0.0, %v5709
  %5711 = vdwg.mxu0
  %vm5712 = vcmask 64512
  %v5714 = vsel %vm5712, %v5660, 0
  %v5717 = vsel %vm5712, %v5661, 0
  %v5720 = vsel %vm5712, %v5662, 0
  %v5723 = vsel %vm5712, %v5663, 0
  %v5726 = vsel %vm5712, %v5664, 0
  %v5729 = vsel %vm5712, %v5665, 0
  %v5732 = vsel %vm5712, %v5666, 0
  %v5735 = vsel %vm5712, %v5667, 0
  %v5738 = vsel %vm5712, %v5668, 0
  %v5741 = vsel %vm5712, %v5669, 0
  %v5744 = vsel %vm5712, %v5670, 0
  %v5747 = vsel %vm5712, %v5671, 0
  %v5750 = vsel %vm5712, %v5672, 0
  %v5753 = vsel %vm5712, %v5673, 0
  %v5756 = vsel %vm5712, %v5674, 0
  %v5759 = vsel %vm5712, %v5675, 0
  %5761 = vmatpush.msra.mxu0 0.0
  %5762 = vmatpush.msra.mxu0 0.0
  %5763 = vmatpush.msra.mxu0 0.0
  %5764 = vmatpush.msra.mxu0 0.0
  %5765 = vmatpush.msra.mxu0 0.0
  %5766 = vmatpush.msra.mxu0 0.0
  %5767 = vmatpush.msra.mxu0 0.0
  %5768 = vmatpush.msra.mxu0 0.0
  %5769 = vmatpush.msra.mxu0 0.0
  %5770 = vmatpush.msra.mxu0 0.0
  %5771 = vmatpush.msra.mxu0 0.0
  %5772 = vmatpush.msra.mxu0 0.0
  %5773 = vmatpush.msra.mxu0 0.0
  %5774 = vmatpush.msra.mxu0 0.0
  %5775 = vmatpush.msra.mxu0 0.0
  %5776 = vmatpush.msra.mxu0 %v5710
  %5777 = vmatmul.f32.gmra.mxu0 %v5714
  %v5778 = vpop.f32.mrf.mxu0
  %v5779 = vadd.f32 0.0, %v5778
  %5780 = vmatmul.f32.gmra.mxu0 %v5717
  %v5781 = vpop.f32.mrf.mxu0
  %v5782 = vadd.f32 0.0, %v5781
  %5783 = vmatmul.f32.gmra.mxu0 %v5720
  %v5784 = vpop.f32.mrf.mxu0
  %v5785 = vadd.f32 0.0, %v5784
  %5786 = vmatmul.f32.gmra.mxu0 %v5723
  %v5787 = vpop.f32.mrf.mxu0
  %v5788 = vadd.f32 0.0, %v5787
  %5789 = vmatmul.f32.gmra.mxu0 %v5726
  %v5790 = vpop.f32.mrf.mxu0
  %v5791 = vadd.f32 0.0, %v5790
  %5792 = vmatmul.f32.gmra.mxu0 %v5729
  %v5793 = vpop.f32.mrf.mxu0
  %v5794 = vadd.f32 0.0, %v5793
  %5795 = vmatmul.f32.gmra.mxu0 %v5732
  %v5796 = vpop.f32.mrf.mxu0
  %v5797 = vadd.f32 0.0, %v5796
  %5798 = vmatmul.f32.gmra.mxu0 %v5735
  %v5799 = vpop.f32.mrf.mxu0
  %v5800 = vadd.f32 0.0, %v5799
  %5801 = vmatmul.f32.gmra.mxu0 %v5738
  %v5802 = vpop.f32.mrf.mxu0
  %v5803 = vadd.f32 0.0, %v5802
  %5804 = vmatmul.f32.gmra.mxu0 %v5741
  %v5805 = vpop.f32.mrf.mxu0
  %v5806 = vadd.f32 0.0, %v5805
  %5807 = vmatmul.f32.gmra.mxu0 %v5744
  %v5808 = vpop.f32.mrf.mxu0
  %v5809 = vadd.f32 0.0, %v5808
  %5810 = vmatmul.f32.gmra.mxu0 %v5747
  %v5811 = vpop.f32.mrf.mxu0
  %v5812 = vadd.f32 0.0, %v5811
  %5813 = vmatmul.f32.gmra.mxu0 %v5750
  %v5814 = vpop.f32.mrf.mxu0
  %v5815 = vadd.f32 0.0, %v5814
  %5816 = vmatmul.f32.gmra.mxu0 %v5753
  %v5817 = vpop.f32.mrf.mxu0
  %v5818 = vadd.f32 0.0, %v5817
  %5819 = vmatmul.f32.gmra.mxu0 %v5756
  %v5820 = vpop.f32.mrf.mxu0
  %v5821 = vadd.f32 0.0, %v5820
  %5822 = vmatmul.f32.gmra.mxu0 %v5759
  %v5823 = vpop.f32.mrf.mxu0
  %v5824 = vadd.f32 0.0, %v5823
  %5825 = vdwg.mxu0
  %5826 = vadd.xlane.f32.xlu0 %v5779
  %v5827 = vpop.xlane.xlu0 %5826
  %5828 = vadd.xlane.f32.xlu0 %v5782
  %v5829 = vpop.xlane.xlu0 %5828
  %5830 = vadd.xlane.f32.xlu0 %v5785
  %v5831 = vpop.xlane.xlu0 %5830
  %5832 = vadd.xlane.f32.xlu0 %v5788
  %v5833 = vpop.xlane.xlu0 %5832
  %5834 = vadd.xlane.f32.xlu0 %v5791
  %v5835 = vpop.xlane.xlu0 %5834
  %5836 = vadd.xlane.f32.xlu0 %v5794
  %v5837 = vpop.xlane.xlu0 %5836
  %5838 = vadd.xlane.f32.xlu0 %v5797
  %v5839 = vpop.xlane.xlu0 %5838
  %5840 = vadd.xlane.f32.xlu0 %v5800
  %v5841 = vpop.xlane.xlu0 %5840
  %5842 = vadd.xlane.f32.xlu0 %v5803
  %v5843 = vpop.xlane.xlu0 %5842
  %5844 = vadd.xlane.f32.xlu0 %v5806
  %v5845 = vpop.xlane.xlu0 %5844
  %5846 = vadd.xlane.f32.xlu0 %v5809
  %v5847 = vpop.xlane.xlu0 %5846
  %5848 = vadd.xlane.f32.xlu0 %v5812
  %v5849 = vpop.xlane.xlu0 %5848
  %5850 = vadd.xlane.f32.xlu0 %v5815
  %v5851 = vpop.xlane.xlu0 %5850
  %5852 = vadd.xlane.f32.xlu0 %v5818
  %v5853 = vpop.xlane.xlu0 %5852
  %5854 = vadd.xlane.f32.xlu0 %v5821
  %v5855 = vpop.xlane.xlu0 %5854
  %5856 = vadd.xlane.f32.xlu0 %v5824
  %v5857 = vpop.xlane.xlu0 %5856
  %v5858 = vmul.f32 %v5827, 0.00125
  %v5859 = vmul.f32 %v5829, 0.00125
  %v5860 = vmul.f32 %v5831, 0.00125
  %v5861 = vmul.f32 %v5833, 0.00125
  %v5862 = vmul.f32 %v5835, 0.00125
  %v5863 = vmul.f32 %v5837, 0.00125
  %v5864 = vmul.f32 %v5839, 0.00125
  %v5865 = vmul.f32 %v5841, 0.00125
  %v5866 = vmul.f32 %v5843, 0.00125
  %v5867 = vmul.f32 %v5845, 0.00125
  %v5868 = vmul.f32 %v5847, 0.00125
  %v5869 = vmul.f32 %v5849, 0.00125
  %v5870 = vmul.f32 %v5851, 0.00125
  %v5871 = vmul.f32 %v5853, 0.00125
  %v5872 = vmul.f32 %v5855, 0.00125
  %v5873 = vmul.f32 %v5857, 0.00125
  %v5874 = vsub.f32 %v5612, %v5858
  %v5875 = vsub.f32 %v5615, %v5859
  %v5876 = vsub.f32 %v5618, %v5860
  %v5877 = vsub.f32 %v5621, %v5861
  %v5878 = vsub.f32 %v5624, %v5862
  %v5879 = vsub.f32 %v5627, %v5863
  %v5880 = vsub.f32 %v5630, %v5864
  %v5881 = vsub.f32 %v5633, %v5865
  %v5882 = vsub.f32 %v5636, %v5866
  %v5883 = vsub.f32 %v5639, %v5867
  %v5884 = vsub.f32 %v5642, %v5868
  %v5885 = vsub.f32 %v5645, %v5869
  %v5886 = vsub.f32 %v5648, %v5870
  %v5887 = vsub.f32 %v5651, %v5871
  %v5888 = vsub.f32 %v5654, %v5872
  %v5889 = vsub.f32 %v5657, %v5873
  %v5890 = vmul.f32 %v5874, %v1001
  %v5891 = vmul.f32 %v5875, %v1001
  %v5892 = vmul.f32 %v5876, %v1001
  %v5893 = vmul.f32 %v5877, %v1001
  %v5894 = vmul.f32 %v5878, %v1001
  %v5895 = vmul.f32 %v5879, %v1001
  %v5896 = vmul.f32 %v5880, %v1001
  %v5897 = vmul.f32 %v5881, %v1001
  %v5898 = vmul.f32 %v5882, %v1001
  %v5899 = vmul.f32 %v5883, %v1001
  %v5900 = vmul.f32 %v5884, %v1001
  %v5901 = vmul.f32 %v5885, %v1001
  %v5902 = vmul.f32 %v5886, %v1001
  %v5903 = vmul.f32 %v5887, %v1001
  %v5904 = vmul.f32 %v5888, %v1001
  %v5905 = vmul.f32 %v5889, %v1001
  %v5906 = vmul.f32 %v5890, %v5890
  %v5907 = vmul.f32 %v5891, %v5891
  %v5908 = vmul.f32 %v5892, %v5892
  %v5909 = vmul.f32 %v5893, %v5893
  %v5910 = vmul.f32 %v5894, %v5894
  %v5911 = vmul.f32 %v5895, %v5895
  %v5912 = vmul.f32 %v5896, %v5896
  %v5913 = vmul.f32 %v5897, %v5897
  %v5914 = vmul.f32 %v5898, %v5898
  %v5915 = vmul.f32 %v5899, %v5899
  %v5916 = vmul.f32 %v5900, %v5900
  %v5917 = vmul.f32 %v5901, %v5901
  %v5918 = vmul.f32 %v5902, %v5902
  %v5919 = vmul.f32 %v5903, %v5903
  %v5920 = vmul.f32 %v5904, %v5904
  %v5921 = vmul.f32 %v5905, %v5905
  %5922 = vmatpush.msra.mxu0 %v5921
  %5923 = vmatpush.msra.mxu0 %v5920
  %5924 = vmatpush.msra.mxu0 %v5919
  %5925 = vmatpush.msra.mxu0 %v5918
  %5926 = vmatpush.msra.mxu0 %v5917
  %5927 = vmatpush.msra.mxu0 %v5916
  %5928 = vmatpush.msra.mxu0 %v5915
  %5929 = vmatpush.msra.mxu0 %v5914
  %5930 = vmatpush.msra.mxu0 %v5913
  %5931 = vmatpush.msra.mxu0 %v5912
  %5932 = vmatpush.msra.mxu0 %v5911
  %5933 = vmatpush.msra.mxu0 %v5910
  %5934 = vmatpush.msra.mxu0 %v5909
  %5935 = vmatpush.msra.mxu0 %v5908
  %5936 = vmatpush.msra.mxu0 %v5907
  %5937 = vmatpush.msra.mxu0 %v5906
  %5938 = vmatmul.f32.gmra.mxu0 %v5659
  %v5939 = vpop.f32.mrf.mxu0
  %v5940 = vadd.f32 0.0, %v5939
  %5941 = vdwg.mxu0
  %5942 = vmatpush.msra.mxu0 0.0
  %5943 = vmatpush.msra.mxu0 0.0
  %5944 = vmatpush.msra.mxu0 0.0
  %5945 = vmatpush.msra.mxu0 0.0
  %5946 = vmatpush.msra.mxu0 0.0
  %5947 = vmatpush.msra.mxu0 0.0
  %5948 = vmatpush.msra.mxu0 0.0
  %5949 = vmatpush.msra.mxu0 0.0
  %5950 = vmatpush.msra.mxu0 0.0
  %5951 = vmatpush.msra.mxu0 0.0
  %5952 = vmatpush.msra.mxu0 0.0
  %5953 = vmatpush.msra.mxu0 0.0
  %5954 = vmatpush.msra.mxu0 0.0
  %5955 = vmatpush.msra.mxu0 0.0
  %5956 = vmatpush.msra.mxu0 0.0
  %5957 = vmatpush.msra.mxu0 %v5940
  %5958 = vmatmul.f32.gmra.mxu0 %v5714
  %v5959 = vpop.f32.mrf.mxu0
  %v5960 = vadd.f32 0.0, %v5959
  %5961 = vmatmul.f32.gmra.mxu0 %v5717
  %v5962 = vpop.f32.mrf.mxu0
  %v5963 = vadd.f32 0.0, %v5962
  %5964 = vmatmul.f32.gmra.mxu0 %v5720
  %v5965 = vpop.f32.mrf.mxu0
  %v5966 = vadd.f32 0.0, %v5965
  %5967 = vmatmul.f32.gmra.mxu0 %v5723
  %v5968 = vpop.f32.mrf.mxu0
  %v5969 = vadd.f32 0.0, %v5968
  %5970 = vmatmul.f32.gmra.mxu0 %v5726
  %v5971 = vpop.f32.mrf.mxu0
  %v5972 = vadd.f32 0.0, %v5971
  %5973 = vmatmul.f32.gmra.mxu0 %v5729
  %v5974 = vpop.f32.mrf.mxu0
  %v5975 = vadd.f32 0.0, %v5974
  %5976 = vmatmul.f32.gmra.mxu0 %v5732
  %v5977 = vpop.f32.mrf.mxu0
  %v5978 = vadd.f32 0.0, %v5977
  %5979 = vmatmul.f32.gmra.mxu0 %v5735
  %v5980 = vpop.f32.mrf.mxu0
  %v5981 = vadd.f32 0.0, %v5980
  %5982 = vmatmul.f32.gmra.mxu0 %v5738
  %v5983 = vpop.f32.mrf.mxu0
  %v5984 = vadd.f32 0.0, %v5983
  %5985 = vmatmul.f32.gmra.mxu0 %v5741
  %v5986 = vpop.f32.mrf.mxu0
  %v5987 = vadd.f32 0.0, %v5986
  %5988 = vmatmul.f32.gmra.mxu0 %v5744
  %v5989 = vpop.f32.mrf.mxu0
  %v5990 = vadd.f32 0.0, %v5989
  %5991 = vmatmul.f32.gmra.mxu0 %v5747
  %v5992 = vpop.f32.mrf.mxu0
  %v5993 = vadd.f32 0.0, %v5992
  %5994 = vmatmul.f32.gmra.mxu0 %v5750
  %v5995 = vpop.f32.mrf.mxu0
  %v5996 = vadd.f32 0.0, %v5995
  %5997 = vmatmul.f32.gmra.mxu0 %v5753
  %v5998 = vpop.f32.mrf.mxu0
  %v5999 = vadd.f32 0.0, %v5998
  %6000 = vmatmul.f32.gmra.mxu0 %v5756
  %v6001 = vpop.f32.mrf.mxu0
  %v6002 = vadd.f32 0.0, %v6001
  %6003 = vmatmul.f32.gmra.mxu0 %v5759
  %v6004 = vpop.f32.mrf.mxu0
  %v6005 = vadd.f32 0.0, %v6004
  %6006 = vdwg.mxu0
  %6007 = vadd.xlane.f32.xlu0 %v5960
  %v6008 = vpop.xlane.xlu0 %6007
  %6009 = vadd.xlane.f32.xlu0 %v5963
  %v6010 = vpop.xlane.xlu0 %6009
  %6011 = vadd.xlane.f32.xlu0 %v5966
  %v6012 = vpop.xlane.xlu0 %6011
  %6013 = vadd.xlane.f32.xlu0 %v5969
  %v6014 = vpop.xlane.xlu0 %6013
  %6015 = vadd.xlane.f32.xlu0 %v5972
  %v6016 = vpop.xlane.xlu0 %6015
  %6017 = vadd.xlane.f32.xlu0 %v5975
  %v6018 = vpop.xlane.xlu0 %6017
  %6019 = vadd.xlane.f32.xlu0 %v5978
  %v6020 = vpop.xlane.xlu0 %6019
  %6021 = vadd.xlane.f32.xlu0 %v5981
  %v6022 = vpop.xlane.xlu0 %6021
  %6023 = vadd.xlane.f32.xlu0 %v5984
  %v6024 = vpop.xlane.xlu0 %6023
  %6025 = vadd.xlane.f32.xlu0 %v5987
  %v6026 = vpop.xlane.xlu0 %6025
  %6027 = vadd.xlane.f32.xlu0 %v5990
  %v6028 = vpop.xlane.xlu0 %6027
  %6029 = vadd.xlane.f32.xlu0 %v5993
  %v6030 = vpop.xlane.xlu0 %6029
  %6031 = vadd.xlane.f32.xlu0 %v5996
  %v6032 = vpop.xlane.xlu0 %6031
  %6033 = vadd.xlane.f32.xlu0 %v5999
  %v6034 = vpop.xlane.xlu0 %6033
  %6035 = vadd.xlane.f32.xlu0 %v6002
  %v6036 = vpop.xlane.xlu0 %6035
  %6037 = vadd.xlane.f32.xlu0 %v6005
  %v6038 = vpop.xlane.xlu0 %6037
  %v6039 = vmul.f32 %v6008, 0.00125
  %v6040 = vmul.f32 %v6010, 0.00125
  %v6041 = vmul.f32 %v6012, 0.00125
  %v6042 = vmul.f32 %v6014, 0.00125
  %v6043 = vmul.f32 %v6016, 0.00125
  %v6044 = vmul.f32 %v6018, 0.00125
  %v6045 = vmul.f32 %v6020, 0.00125
  %v6046 = vmul.f32 %v6022, 0.00125
  %v6047 = vmul.f32 %v6024, 0.00125
  %v6048 = vmul.f32 %v6026, 0.00125
  %v6049 = vmul.f32 %v6028, 0.00125
  %v6050 = vmul.f32 %v6030, 0.00125
  %v6051 = vmul.f32 %v6032, 0.00125
  %v6052 = vmul.f32 %v6034, 0.00125
  %v6053 = vmul.f32 %v6036, 0.00125
  %v6054 = vmul.f32 %v6038, 0.00125
  %v6055 = vadd.f32 %v6039, 1e-05
  %v6056 = vadd.f32 %v6040, 1e-05
  %v6057 = vadd.f32 %v6041, 1e-05
  %v6058 = vadd.f32 %v6042, 1e-05
  %v6059 = vadd.f32 %v6043, 1e-05
  %v6060 = vadd.f32 %v6044, 1e-05
  %v6061 = vadd.f32 %v6045, 1e-05
  %v6062 = vadd.f32 %v6046, 1e-05
  %v6063 = vadd.f32 %v6047, 1e-05
  %v6064 = vadd.f32 %v6048, 1e-05
  %v6065 = vadd.f32 %v6049, 1e-05
  %v6066 = vadd.f32 %v6050, 1e-05
  %v6067 = vadd.f32 %v6051, 1e-05
  %v6068 = vadd.f32 %v6052, 1e-05
  %v6069 = vadd.f32 %v6053, 1e-05
  %v6070 = vadd.f32 %v6054, 1e-05
  %v6071 = vrsqrt.pop %v6055
  %v6072 = vmul.f32 %v6071, %v6055
  %v6073 = vmul.f32 %v6072, %v6071
  %v6074 = vmul.f32 0.5, %v6073
  %v6075 = vsub.f32 1.5, %v6074
  %v6076 = vmul.f32 %v6071, %v6075
  %vm6077 = vweird.f32 %v6055
  %vm6078 = vweird.f32 %v6071
  %vm6079 = vmor %vm6077, %vm6078
  %v6080 = vsel %vm6079, %v6071, %v6076
  %v6081 = vrsqrt.pop %v6056
  %v6082 = vmul.f32 %v6081, %v6056
  %v6083 = vmul.f32 %v6082, %v6081
  %v6084 = vmul.f32 0.5, %v6083
  %v6085 = vsub.f32 1.5, %v6084
  %v6086 = vmul.f32 %v6081, %v6085
  %vm6087 = vweird.f32 %v6056
  %vm6088 = vweird.f32 %v6081
  %vm6089 = vmor %vm6087, %vm6088
  %v6090 = vsel %vm6089, %v6081, %v6086
  %v6091 = vrsqrt.pop %v6057
  %v6092 = vmul.f32 %v6091, %v6057
  %v6093 = vmul.f32 %v6092, %v6091
  %v6094 = vmul.f32 0.5, %v6093
  %v6095 = vsub.f32 1.5, %v6094
  %v6096 = vmul.f32 %v6091, %v6095
  %vm6097 = vweird.f32 %v6057
  %vm6098 = vweird.f32 %v6091
  %vm6099 = vmor %vm6097, %vm6098
  %v6100 = vsel %vm6099, %v6091, %v6096
  %v6101 = vrsqrt.pop %v6058
  %v6102 = vmul.f32 %v6101, %v6058
  %v6103 = vmul.f32 %v6102, %v6101
  %v6104 = vmul.f32 0.5, %v6103
  %v6105 = vsub.f32 1.5, %v6104
  %v6106 = vmul.f32 %v6101, %v6105
  %vm6107 = vweird.f32 %v6058
  %vm6108 = vweird.f32 %v6101
  %vm6109 = vmor %vm6107, %vm6108
  %v6110 = vsel %vm6109, %v6101, %v6106
  %v6111 = vrsqrt.pop %v6059
  %v6112 = vmul.f32 %v6111, %v6059
  %v6113 = vmul.f32 %v6112, %v6111
  %v6114 = vmul.f32 0.5, %v6113
  %v6115 = vsub.f32 1.5, %v6114
  %v6116 = vmul.f32 %v6111, %v6115
  %vm6117 = vweird.f32 %v6059
  %vm6118 = vweird.f32 %v6111
  %vm6119 = vmor %vm6117, %vm6118
  %v6120 = vsel %vm6119, %v6111, %v6116
  %v6121 = vrsqrt.pop %v6060
  %v6122 = vmul.f32 %v6121, %v6060
  %v6123 = vmul.f32 %v6122, %v6121
  %v6124 = vmul.f32 0.5, %v6123
  %v6125 = vsub.f32 1.5, %v6124
  %v6126 = vmul.f32 %v6121, %v6125
  %vm6127 = vweird.f32 %v6060
  %vm6128 = vweird.f32 %v6121
  %vm6129 = vmor %vm6127, %vm6128
  %v6130 = vsel %vm6129, %v6121, %v6126
  %v6131 = vrsqrt.pop %v6061
  %v6132 = vmul.f32 %v6131, %v6061
  %v6133 = vmul.f32 %v6132, %v6131
  %v6134 = vmul.f32 0.5, %v6133
  %v6135 = vsub.f32 1.5, %v6134
  %v6136 = vmul.f32 %v6131, %v6135
  %vm6137 = vweird.f32 %v6061
  %vm6138 = vweird.f32 %v6131
  %vm6139 = vmor %vm6137, %vm6138
  %v6140 = vsel %vm6139, %v6131, %v6136
  %v6141 = vrsqrt.pop %v6062
  %v6142 = vmul.f32 %v6141, %v6062
  %v6143 = vmul.f32 %v6142, %v6141
  %v6144 = vmul.f32 0.5, %v6143
  %v6145 = vsub.f32 1.5, %v6144
  %v6146 = vmul.f32 %v6141, %v6145
  %vm6147 = vweird.f32 %v6062
  %vm6148 = vweird.f32 %v6141
  %vm6149 = vmor %vm6147, %vm6148
  %v6150 = vsel %vm6149, %v6141, %v6146
  %v6151 = vrsqrt.pop %v6063
  %v6152 = vmul.f32 %v6151, %v6063
  %v6153 = vmul.f32 %v6152, %v6151
  %v6154 = vmul.f32 0.5, %v6153
  %v6155 = vsub.f32 1.5, %v6154
  %v6156 = vmul.f32 %v6151, %v6155
  %vm6157 = vweird.f32 %v6063
  %vm6158 = vweird.f32 %v6151
  %vm6159 = vmor %vm6157, %vm6158
  %v6160 = vsel %vm6159, %v6151, %v6156
  %v6161 = vrsqrt.pop %v6064
  %v6162 = vmul.f32 %v6161, %v6064
  %v6163 = vmul.f32 %v6162, %v6161
  %v6164 = vmul.f32 0.5, %v6163
  %v6165 = vsub.f32 1.5, %v6164
  %v6166 = vmul.f32 %v6161, %v6165
  %vm6167 = vweird.f32 %v6064
  %vm6168 = vweird.f32 %v6161
  %vm6169 = vmor %vm6167, %vm6168
  %v6170 = vsel %vm6169, %v6161, %v6166
  %v6171 = vrsqrt.pop %v6065
  %v6172 = vmul.f32 %v6171, %v6065
  %v6173 = vmul.f32 %v6172, %v6171
  %v6174 = vmul.f32 0.5, %v6173
  %v6175 = vsub.f32 1.5, %v6174
  %v6176 = vmul.f32 %v6171, %v6175
  %vm6177 = vweird.f32 %v6065
  %vm6178 = vweird.f32 %v6171
  %vm6179 = vmor %vm6177, %vm6178
  %v6180 = vsel %vm6179, %v6171, %v6176
  %v6181 = vrsqrt.pop %v6066
  %v6182 = vmul.f32 %v6181, %v6066
  %v6183 = vmul.f32 %v6182, %v6181
  %v6184 = vmul.f32 0.5, %v6183
  %v6185 = vsub.f32 1.5, %v6184
  %v6186 = vmul.f32 %v6181, %v6185
  %vm6187 = vweird.f32 %v6066
  %vm6188 = vweird.f32 %v6181
  %vm6189 = vmor %vm6187, %vm6188
  %v6190 = vsel %vm6189, %v6181, %v6186
  %v6191 = vrsqrt.pop %v6067
  %v6192 = vmul.f32 %v6191, %v6067
  %v6193 = vmul.f32 %v6192, %v6191
  %v6194 = vmul.f32 0.5, %v6193
  %v6195 = vsub.f32 1.5, %v6194
  %v6196 = vmul.f32 %v6191, %v6195
  %vm6197 = vweird.f32 %v6067
  %vm6198 = vweird.f32 %v6191
  %vm6199 = vmor %vm6197, %vm6198
  %v6200 = vsel %vm6199, %v6191, %v6196
  %v6201 = vrsqrt.pop %v6068
  %v6202 = vmul.f32 %v6201, %v6068
  %v6203 = vmul.f32 %v6202, %v6201
  %v6204 = vmul.f32 0.5, %v6203
  %v6205 = vsub.f32 1.5, %v6204
  %v6206 = vmul.f32 %v6201, %v6205
  %vm6207 = vweird.f32 %v6068
  %vm6208 = vweird.f32 %v6201
  %vm6209 = vmor %vm6207, %vm6208
  %v6210 = vsel %vm6209, %v6201, %v6206
  %v6211 = vrsqrt.pop %v6069
  %v6212 = vmul.f32 %v6211, %v6069
  %v6213 = vmul.f32 %v6212, %v6211
  %v6214 = vmul.f32 0.5, %v6213
  %v6215 = vsub.f32 1.5, %v6214
  %v6216 = vmul.f32 %v6211, %v6215
  %vm6217 = vweird.f32 %v6069
  %vm6218 = vweird.f32 %v6211
  %vm6219 = vmor %vm6217, %vm6218
  %v6220 = vsel %vm6219, %v6211, %v6216
  %v6221 = vrsqrt.pop %v6070
  %v6222 = vmul.f32 %v6221, %v6070
  %v6223 = vmul.f32 %v6222, %v6221
  %v6224 = vmul.f32 0.5, %v6223
  %v6225 = vsub.f32 1.5, %v6224
  %v6226 = vmul.f32 %v6221, %v6225
  %vm6227 = vweird.f32 %v6070
  %vm6228 = vweird.f32 %v6221
  %vm6229 = vmor %vm6227, %vm6228
  %v6230 = vsel %vm6229, %v6221, %v6226
  %v6231 = vmul.f32 %v5890, %v6080
  %v6232 = vmul.f32 %v5891, %v6090
  %v6233 = vmul.f32 %v5892, %v6100
  %v6234 = vmul.f32 %v5893, %v6110
  %v6235 = vmul.f32 %v5894, %v6120
  %v6236 = vmul.f32 %v5895, %v6130
  %v6237 = vmul.f32 %v5896, %v6140
  %v6238 = vmul.f32 %v5897, %v6150
  %v6239 = vmul.f32 %v5898, %v6160
  %v6240 = vmul.f32 %v5899, %v6170
  %v6241 = vmul.f32 %v5900, %v6180
  %v6242 = vmul.f32 %v5901, %v6190
  %v6243 = vmul.f32 %v5902, %v6200
  %v6244 = vmul.f32 %v5903, %v6210
  %v6245 = vmul.f32 %v5904, %v6220
  %v6246 = vmul.f32 %v5905, %v6230
  %vm6247 = vcmp.ge.f32.partialorder %v6231, 0.0
  %vm6248 = vcmp.ge.f32.partialorder %v6232, 0.0
  %vm6249 = vcmp.ge.f32.partialorder %v6233, 0.0
  %vm6250 = vcmp.ge.f32.partialorder %v6234, 0.0
  %vm6251 = vcmp.ge.f32.partialorder %v6235, 0.0
  %vm6252 = vcmp.ge.f32.partialorder %v6236, 0.0
  %vm6253 = vcmp.ge.f32.partialorder %v6237, 0.0
  %vm6254 = vcmp.ge.f32.partialorder %v6238, 0.0
  %vm6255 = vcmp.ge.f32.partialorder %v6239, 0.0
  %vm6256 = vcmp.ge.f32.partialorder %v6240, 0.0
  %vm6257 = vcmp.ge.f32.partialorder %v6241, 0.0
  %vm6258 = vcmp.ge.f32.partialorder %v6242, 0.0
  %vm6259 = vcmp.ge.f32.partialorder %v6243, 0.0
  %vm6260 = vcmp.ge.f32.partialorder %v6244, 0.0
  %vm6261 = vcmp.ge.f32.partialorder %v6245, 0.0
  %vm6262 = vcmp.ge.f32.partialorder %v6246, 0.0
  %v6263 = vmul.f32 %v6231, 2.0
  %v6264 = vmul.f32 %v6232, 2.0
  %v6265 = vmul.f32 %v6233, 2.0
  %v6266 = vmul.f32 %v6234, 2.0
  %v6267 = vmul.f32 %v6235, 2.0
  %v6268 = vmul.f32 %v6236, 2.0
  %v6269 = vmul.f32 %v6237, 2.0
  %v6270 = vmul.f32 %v6238, 2.0
  %v6271 = vmul.f32 %v6239, 2.0
  %v6272 = vmul.f32 %v6240, 2.0
  %v6273 = vmul.f32 %v6241, 2.0
  %v6274 = vmul.f32 %v6242, 2.0
  %v6275 = vmul.f32 %v6243, 2.0
  %v6276 = vmul.f32 %v6244, 2.0
  %v6277 = vmul.f32 %v6245, 2.0
  %v6278 = vmul.f32 %v6246, 2.0
  %v6279 = vmul.f32 %v6231, 0.2
  %v6280 = vmul.f32 %v6232, 0.2
  %v6281 = vmul.f32 %v6233, 0.2
  %v6282 = vmul.f32 %v6234, 0.2
  %v6283 = vmul.f32 %v6235, 0.2
  %v6284 = vmul.f32 %v6236, 0.2
  %v6285 = vmul.f32 %v6237, 0.2
  %v6286 = vmul.f32 %v6238, 0.2
  %v6287 = vmul.f32 %v6239, 0.2
  %v6288 = vmul.f32 %v6240, 0.2
  %v6289 = vmul.f32 %v6241, 0.2
  %v6290 = vmul.f32 %v6242, 0.2
  %v6291 = vmul.f32 %v6243, 0.2
  %v6292 = vmul.f32 %v6244, 0.2
  %v6293 = vmul.f32 %v6245, 0.2
  %v6294 = vmul.f32 %v6246, 0.2
  %v6295 = vsel %vm6247, %v6263, %v6279
  %v6296 = vsel %vm6248, %v6264, %v6280
  %v6297 = vsel %vm6249, %v6265, %v6281
  %v6298 = vsel %vm6250, %v6266, %v6282
  %v6299 = vsel %vm6251, %v6267, %v6283
  %v6300 = vsel %vm6252, %v6268, %v6284
  %v6301 = vsel %vm6253, %v6269, %v6285
  %v6302 = vsel %vm6254, %v6270, %v6286
  %v6303 = vsel %vm6255, %v6271, %v6287
  %v6304 = vsel %vm6256, %v6272, %v6288
  %v6305 = vsel %vm6257, %v6273, %v6289
  %v6306 = vsel %vm6258, %v6274, %v6290
  %v6307 = vsel %vm6259, %v6275, %v6291
  %v6308 = vsel %vm6260, %v6276, %v6292
  %v6309 = vsel %vm6261, %v6277, %v6293
  %v6310 = vsel %vm6262, %v6278, %v6294
  %6311 = vst [vmem:[%s13] sm:$0xff] %v6295
  %6312 = vst [vmem:[%s13 + $0x8] sm:$0xff] %v6296
  %6313 = vst [vmem:[%s13 + $0x10] sm:$0xff] %v6297
  %6314 = vst [vmem:[%s13 + $0x18] sm:$0xff] %v6298
  %6315 = vst [vmem:[%s13 + $0x20] sm:$0xff] %v6299
  %6316 = vst [vmem:[%s13 + $0x28] sm:$0xff] %v6300
  %6317 = vst [vmem:[%s13 + $0x30] sm:$0xff] %v6301
  %6318 = vst [vmem:[%s13 + $0x38] sm:$0xff] %v6302
  %6319 = vst [vmem:[%s13 + $0x40] sm:$0xff] %v6303
  %6320 = vst [vmem:[%s13 + $0x48] sm:$0xff] %v6304
  %6321 = vst [vmem:[%s13 + $0x50] sm:$0xff] %v6305
  %6322 = vst [vmem:[%s13 + $0x58] sm:$0xff] %v6306
  %6323 = vst [vmem:[%s13 + $0x60] sm:$0xff] %v6307
  %6324 = vst [vmem:[%s13 + $0x68] sm:$0xff] %v6308
  %6325 = vst [vmem:[%s13 + $0x70] sm:$0xff] %v6309
  %6326 = vst [vmem:[%s13 + $0x78] sm:$0xff] %v6310
  // Predicated region
  $region54: #{forward.1} parent=0 // pred_check
    _
  $region55: #{forward.1} parent=0 // pred_check_branch
    %6328 = sbr.rel (0) target = $region57
  $region56: #{forward.1} parent=0 // pred_region
    _
  $region57: #{forward.1} parent=0 // pred_fallthru
    _
  // Predicated region
  $region58: #{forward.1} parent=0 // pred_check
    _
  $region59: #{forward.1} parent=0 // pred_check_branch
    %6330 = sbr.rel (0) target = $region61
  $region60: #{forward.1} parent=0 // pred_region
    _
  $region61: #{forward.1} parent=0 // pred_fallthru
    _

</llo_original>
